<compile_context>
chip_gen: v6e
topology: v6e:2x2x1
jax: 0.10.0
libtpu: 0.0.40
codegen_flags: <defaults>
</compile_context>

<pallas_src>
import jax
import jax.numpy as jnp
from jax.experimental import pallas as pl
from jax.experimental.pallas import tpu as pltpu

HIDDEN = 512  # classifier.hidden_size default in the module


def _classifier_kernel(feat_ref, w1_ref, b1_ref, w2_ref, b2_ref, out_ref):
    """Fused: sum-pool -> Linear(2048,H) (1/HW folded) -> ReLU -> row dot -> logits.

    feat_ref: (Bt, C, HW) f32   backbone last_hidden_state, spatial flattened (NCHW order)
    w1_ref  : (C, HIDDEN) bf16  first Linear weight, stored (in, out)
    b1_ref  : (1, HIDDEN) f32
    w2_ref  : (1, HIDDEN) bf16  second Linear weight (PyTorch (out=1, in=HIDDEN) layout)
    b2_ref  : (1, 1)      f32
    out_ref : (Bt, 1)     f32
    """
    hw = feat_ref.shape[-1]
    inv_hw = jnp.float32(1.0 / hw)

    # Spatial pool: reduce over the lane axis (XLU). Sum now; fold the 1/HW
    # scale after the matmul so it touches 512 lanes per row instead of 2048.
    pooled = jnp.sum(feat_ref[...], axis=-1)                       # (Bt, C), C lane-dense

    # First linear layer on the MXU: bf16 inputs, f32 accumulation.
    h = jnp.dot(pooled.astype(jnp.bfloat16), w1_ref[...],
                preferred_element_type=jnp.float32)                # (Bt, HIDDEN)
    h = h * inv_hw + b1_ref[...]
    h = jnp.maximum(h, 0.0)                                        # ReLU
    # TODO(synk): nn.Dropout(p=0.2) is identity at inference; omitted.

    # Second linear has N=1 (degenerate for the MXU): VPU multiply + lane sum.
    logits = jnp.sum(h * w2_ref[...].astype(jnp.float32),
                     axis=-1, keepdims=True) + b2_ref[...]         # (Bt, 1)
    out_ref[...] = logits.astype(out_ref.dtype)


def fruit_classifier_forward(features_nchw, w1, b1, w2, b2, *, batch_tile=64):
    """features_nchw: (B, 2048, H, W) f32 backbone last_hidden_state.

    w1: (2048, HIDDEN) bf16   b1: (1, HIDDEN) f32
    w2: (1, HIDDEN)    bf16   b2: (1, 1)      f32
    """
    B, C, H, W = features_nchw.shape
    HW = H * W

    # Free reshape (contiguous, no transpose): NCHW -> (B, C, HW).
    feat = features_nchw.reshape(B, C, HW)

    # Batch grid: bounded VMEM + pipelining for large B; trivially grid=(1,) at B=2.
    bt = min(B, batch_tile)
    n_tiles = pl.cdiv(B, bt)
    b_pad = n_tiles * bt
    if b_pad != B:
        feat = jnp.pad(feat, ((0, b_pad - B), (0, 0), (0, 0)))

    out = pl.pallas_call(
        _classifier_kernel,
        out_shape=jax.ShapeDtypeStruct((b_pad, 1), jnp.float32),
        grid=(n_tiles,),
        in_specs=[
            pl.BlockSpec((bt, C, HW), lambda i: (i, 0, 0)),   # feat: tiled over batch
            pl.BlockSpec((C, HIDDEN), lambda i: (0, 0)),      # w1: resident
            pl.BlockSpec((1, HIDDEN), lambda i: (0, 0)),      # b1: resident
            pl.BlockSpec((1, HIDDEN), lambda i: (0, 0)),      # w2: resident
            pl.BlockSpec((1, 1), lambda i: (0, 0)),           # b2: resident
        ],
        out_specs=pl.BlockSpec((bt, 1), lambda i: (i, 0)),
        compiler_params=pltpu.CompilerParams(
            dimension_semantics=("parallel",)),
    )(feat, w1, b1, w2, b2)
    return out[:B]


if __name__ == "__main__":
    key = jax.random.PRNGKey(0)
    k_feat, k_w1, k_b1, k_w2, k_b2 = jax.random.split(key, 5)

    # ResNet-50 last_hidden_state shape for a 224x224 input.
    B, C, H, W = 2, 2048, 7, 7
    features = jax.random.normal(k_feat, (B, C, H, W), dtype=jnp.float32)

    # Deterministic synthetic classifier parameters (module shapes).
    # From a PyTorch checkpoint: w1 = classifier[0].weight.T, w2 = classifier[3].weight.
    w1 = (jax.random.normal(k_w1, (C, HIDDEN), dtype=jnp.float32) * 0.02).astype(jnp.bfloat16)
    b1 = jax.random.normal(k_b1, (1, HIDDEN), dtype=jnp.float32) * 0.02
    w2 = (jax.random.normal(k_w2, (1, HIDDEN), dtype=jnp.float32) * 0.02).astype(jnp.bfloat16)
    b2 = jax.random.normal(k_b2, (1, 1), dtype=jnp.float32) * 0.02

    logits = fruit_classifier_forward(features, w1, b1, w2, b2)
    logits = jax.block_until_ready(logits)

    # Reference in f32 using the same (bf16-rounded) weights.
    pooled = jnp.mean(features, axis=(-2, -1))                       # (B, 2048)
    h_ref = jnp.maximum(pooled @ w1.astype(jnp.float32) + b1, 0.0)
    ref = h_ref @ w2.astype(jnp.float32).T + b2                      # (B, 1)

    assert logits.shape == (B, 1), logits.shape
    assert jnp.allclose(logits, ref, atol=5e-3, rtol=5e-3), (logits, ref)

    print("KERNEL_OK")
</pallas_src>

<mosaic_0001>
module attributes {stable_mosaic.version = 11 : i64} {
  func.func @_classifier_kernel(%arg0: i32, %arg1: memref<2x2048x49xf32, #tpu.memory_space<vmem>>, %arg2: memref<2048x512xbf16, #tpu.memory_space<vmem>>, %arg3: memref<1x512xf32, #tpu.memory_space<vmem>>, %arg4: memref<1x512xbf16, #tpu.memory_space<vmem>>, %arg5: memref<1x1xf32, #tpu.memory_space<vmem>>, %arg6: memref<2x1xf32, #tpu.memory_space<vmem>>) attributes {dimension_semantics = [#tpu.dimension_semantics<parallel>], iteration_bounds = array<i64: 1>, scalar_prefetch = 0 : i64, scratch_operands = 0 : i64, tpu.core_type = #tpu.core_type<tc>, window_params = [{transform_indices = @transform_0, window_bounds = array<i64: 2, 2048, 49>}, {pipeline_mode = #tpu.pipeline_mode<synchronous>, transform_indices = @transform_1, window_bounds = array<i64: 2048, 512>}, {pipeline_mode = #tpu.pipeline_mode<synchronous>, transform_indices = @transform_2, window_bounds = array<i64: 1, 512>}, {pipeline_mode = #tpu.pipeline_mode<synchronous>, transform_indices = @transform_3, window_bounds = array<i64: 1, 512>}, {pipeline_mode = #tpu.pipeline_mode<synchronous>, transform_indices = @transform_4, window_bounds = array<i64: 1, 1>}, {transform_indices = @transform_5, window_bounds = array<i64: 2, 1>}]} {
    %c0 = arith.constant 0 : index
    %c0_0 = arith.constant 0 : index
    %c0_1 = arith.constant 0 : index
    %0 = vector.load %arg1[%c0, %c0_0, %c0_1] : memref<2x2048x49xf32, #tpu.memory_space<vmem>>, vector<2x2048x49xf32>
    %cst = arith.constant dense<0.000000e+00> : vector<2x2048xf32>
    %1 = vector.multi_reduction <add>, %0, %cst [2] : vector<2x2048x49xf32> to vector<2x2048xf32>
    %2 = arith.truncf %1 : vector<2x2048xf32> to vector<2x2048xbf16>
    %c0_2 = arith.constant 0 : index
    %c0_3 = arith.constant 0 : index
    %3 = vector.load %arg2[%c0_2, %c0_3] : memref<2048x512xbf16, #tpu.memory_space<vmem>>, vector<2048x512xbf16>
    %cst_4 = arith.constant dense<0.000000e+00> : vector<2x512xf32>
    %4 = tpu.matmul %2, %3, %cst_4 {dimension_numbers = #tpu.dot_dimension_numbers<[1], [0], [0], [1], [0, 0, 1, 1], [], []>} : vector<2x2048xbf16>, vector<2048x512xbf16>, vector<2x512xf32> -> vector<2x512xf32>
    %cst_5 = arith.constant 0.0204081628 : f32
    %5 = vector.broadcast %cst_5 : f32 to vector<2x512xf32>
    %6 = arith.mulf %4, %5 : vector<2x512xf32>
    %c0_6 = arith.constant 0 : index
    %c0_7 = arith.constant 0 : index
    %7 = vector.load %arg3[%c0_6, %c0_7] : memref<1x512xf32, #tpu.memory_space<vmem>>, vector<1x512xf32>
    %8 = vector.broadcast %7 : vector<1x512xf32> to vector<2x512xf32>
    %9 = arith.addf %6, %8 : vector<2x512xf32>
    %cst_8 = arith.constant 0.000000e+00 : f32
    %10 = vector.broadcast %cst_8 : f32 to vector<2x512xf32>
    %11 = arith.maximumf %9, %10 : vector<2x512xf32>
    %c0_9 = arith.constant 0 : index
    %c0_10 = arith.constant 0 : index
    %12 = vector.load %arg4[%c0_9, %c0_10] : memref<1x512xbf16, #tpu.memory_space<vmem>>, vector<1x512xbf16>
    %13 = arith.extf %12 : vector<1x512xbf16> to vector<1x512xf32>
    %14 = vector.broadcast %13 : vector<1x512xf32> to vector<2x512xf32>
    %15 = arith.mulf %11, %14 : vector<2x512xf32>
    %cst_11 = arith.constant dense<0.000000e+00> : vector<2xf32>
    %16 = vector.multi_reduction <add>, %15, %cst_11 [1] : vector<2x512xf32> to vector<2xf32>
    %17 = vector.shape_cast %16 : vector<2xf32> to vector<2x1xf32>
    %c0_12 = arith.constant 0 : index
    %c0_13 = arith.constant 0 : index
    %18 = vector.load %arg5[%c0_12, %c0_13] : memref<1x1xf32, #tpu.memory_space<vmem>>, vector<1x1xf32>
    %19 = vector.broadcast %18 : vector<1x1xf32> to vector<2x1xf32>
    %20 = arith.addf %17, %19 : vector<2x1xf32>
    %c0_14 = arith.constant 0 : index
    %c0_15 = arith.constant 0 : index
    %21 = vector.load %arg6[%c0_14, %c0_15] : memref<2x1xf32, #tpu.memory_space<vmem>>, vector<2x1xf32>
    tpu.vector_store %arg6[%c0_14, %c0_15], %20 {strides = array<i32>} : memref<2x1xf32, #tpu.memory_space<vmem>>, vector<2x1xf32>,
    return
  }
  func.func @transform_0(%arg0: i32) -> (i32, i32, i32) {
    %c0_i32 = arith.constant 0 : i32
    %c0_i32_0 = arith.constant 0 : i32
    %c0_i32_1 = arith.constant 0 : i32
    return %arg0, %c0_i32, %c0_i32_0 : i32, i32, i32
  }
  func.func @transform_1(%arg0: i32) -> (i32, i32) {
    %c0_i32 = arith.constant 0 : i32
    %c0_i32_0 = arith.constant 0 : i32
    %c0_i32_1 = arith.constant 0 : i32
    return %c0_i32, %c0_i32_0 : i32, i32
  }
  func.func @transform_2(%arg0: i32) -> (i32, i32) {
    %c0_i32 = arith.constant 0 : i32
    %c0_i32_0 = arith.constant 0 : i32
    %c0_i32_1 = arith.constant 0 : i32
    return %c0_i32, %c0_i32_0 : i32, i32
  }
  func.func @transform_3(%arg0: i32) -> (i32, i32) {
    %c0_i32 = arith.constant 0 : i32
    %c0_i32_0 = arith.constant 0 : i32
    %c0_i32_1 = arith.constant 0 : i32
    return %c0_i32, %c0_i32_0 : i32, i32
  }
  func.func @transform_4(%arg0: i32) -> (i32, i32) {
    %c0_i32 = arith.constant 0 : i32
    %c0_i32_0 = arith.constant 0 : i32
    %c0_i32_1 = arith.constant 0 : i32
    return %c0_i32, %c0_i32_0 : i32, i32
  }
  func.func @transform_5(%arg0: i32) -> (i32, i32) {
    %c0_i32 = arith.constant 0 : i32
    %c0_i32_0 = arith.constant 0 : i32
    return %arg0, %c0_i32 : i32, i32
  }
}

</mosaic_0001>

<llo_original>
// kernel: tpu_custom_call.1
$region0: #{tpu_custom_call.1}
  #allocation0 [shape = 'u32[]', space=smem, size = 0x4, offset = 0x4, fixed_abs, tag = 'smem constant byte address 0x4 - core index']
  #allocation1 [shape = 'u32[144,128]{1,0:T(1,128)}', space=vmem, size = 0x12000, scoped, tag = 'internal scratch']
  #allocation2 [shape = 'f32[1,1]{1,0:T(1,128)S(1)}', space=vmem, size = 0x200, scoped, tag = 'scoped memory for tpu_custom_call.1']
  %s0 = inlined_call_operand.vmem [shape: f32[2,2048,49], index: 0, kind: input, shape index: {}]
  %s1 = inlined_call_operand.vmem [shape: bf16[2048,512], index: 1, kind: input, shape index: {}]
  %s2 = inlined_call_operand.vmem [shape: f32[1,512], index: 2, kind: input, shape index: {}]
  %s3 = inlined_call_operand.vmem [shape: bf16[1,512], index: 3, kind: input, shape index: {}]
  %s4 = inlined_call_operand.<no memory space> [shape: f32[1,1], index: 4, kind: input, shape index: {}]
  %s5 = inlined_call_operand.vmem [shape: f32[2,1], index: 5, kind: output, shape index: {}]
  %s6 = sld [smem:[#allocation0]]
  $region30: #{tpu_custom_call.1} parent=0
    _
  %s8 = ssub.s32 1, %s6
  %s9 = scalar_select 0, %s8, %s6
  %v10 = vstv %s4
  %11 = vst [vmem:[#allocation2] sm:$0x1] %v10
  // Predicated region
  $region2: #{tpu_custom_call.1} parent=0 // pred_check
    _
  $region3: #{tpu_custom_call.1} parent=0 // pred_check_branch
    %13 = sbr.rel (0) target = $region5
  $region4: #{tpu_custom_call.1} parent=0 // pred_region
    _
  $region5: #{tpu_custom_call.1} parent=0 // pred_fallthru
    _
  // Predicated region
  $region6: #{tpu_custom_call.1} parent=0 // pred_check
    _
  $region7: #{tpu_custom_call.1} parent=0 // pred_check_branch
    %15 = sbr.rel (0) target = $region9
  $region8: #{tpu_custom_call.1} parent=0 // pred_region
    _
  $region9: #{tpu_custom_call.1} parent=0 // pred_fallthru
    _
  // Predicated region
  $region10: #{tpu_custom_call.1} parent=0 // pred_check
    _
  $region11: #{tpu_custom_call.1} parent=0 // pred_check_branch
    %17 = sbr.rel (0) target = $region13
  $region12: #{tpu_custom_call.1} parent=0 // pred_region
    _
  $region13: #{tpu_custom_call.1} parent=0 // pred_fallthru
    _
  // Predicated region
  $region14: #{tpu_custom_call.1} parent=0 // pred_check
    _
  $region15: #{tpu_custom_call.1} parent=0 // pred_check_branch
    %19 = sbr.rel (0) target = $region17
  $region16: #{tpu_custom_call.1} parent=0 // pred_region
    _
  $region17: #{tpu_custom_call.1} parent=0 // pred_fallthru
    _
  // Predicated region
  $region18: #{tpu_custom_call.1} parent=0 // pred_check
    _
  $region19: #{tpu_custom_call.1} parent=0 // pred_check_branch
    %21 = sbr.rel (0) target = $region21
  $region20: #{tpu_custom_call.1} parent=0 // pred_region
    _
  $region21: #{tpu_custom_call.1} parent=0 // pred_fallthru
    _
  %v22 = vld [vmem:[%s0] sm:$0xff]
  %v23 = vld [vmem:[%s0 + $0x8] sm:$0xff]
  %v24 = vld [vmem:[%s0 + $0x10] sm:$0xff]
  %v25 = vld [vmem:[%s0 + $0x18] sm:$0xff]
  %v26 = vld [vmem:[%s0 + $0x20] sm:$0xff]
  %v27 = vld [vmem:[%s0 + $0x28] sm:$0xff]
  %v28 = vld [vmem:[%s0 + $0x30] sm:$0xff]
  %v29 = vld [vmem:[%s0 + $0x38] sm:$0xff]
  %v30 = vld [vmem:[%s0 + $0x40] sm:$0xff]
  %v31 = vld [vmem:[%s0 + $0x48] sm:$0xff]
  %v32 = vld [vmem:[%s0 + $0x50] sm:$0xff]
  %v33 = vld [vmem:[%s0 + $0x58] sm:$0xff]
  %v34 = vld [vmem:[%s0 + $0x60] sm:$0xff]
  %v35 = vld [vmem:[%s0 + $0x68] sm:$0xff]
  %v36 = vld [vmem:[%s0 + $0x70] sm:$0xff]
  %v37 = vld [vmem:[%s0 + $0x78] sm:$0xff]
  %v38 = vld [vmem:[%s0 + $0x80] sm:$0xff]
  %v39 = vld [vmem:[%s0 + $0x88] sm:$0xff]
  %v40 = vld [vmem:[%s0 + $0x90] sm:$0xff]
  %v41 = vld [vmem:[%s0 + $0x98] sm:$0xff]
  %v42 = vld [vmem:[%s0 + $0xa0] sm:$0xff]
  %v43 = vld [vmem:[%s0 + $0xa8] sm:$0xff]
  %v44 = vld [vmem:[%s0 + $0xb0] sm:$0xff]
  %v45 = vld [vmem:[%s0 + $0xb8] sm:$0xff]
  %v46 = vld [vmem:[%s0 + $0xc0] sm:$0xff]
  %v47 = vld [vmem:[%s0 + $0xc8] sm:$0xff]
  %v48 = vld [vmem:[%s0 + $0xd0] sm:$0xff]
  %v49 = vld [vmem:[%s0 + $0xd8] sm:$0xff]
  %v50 = vld [vmem:[%s0 + $0xe0] sm:$0xff]
  %v51 = vld [vmem:[%s0 + $0xe8] sm:$0xff]
  %v52 = vld [vmem:[%s0 + $0xf0] sm:$0xff]
  %v53 = vld [vmem:[%s0 + $0xf8] sm:$0xff]
  %v54 = vld [vmem:[%s0 + $0x100] sm:$0xff]
  %v55 = vld [vmem:[%s0 + $0x108] sm:$0xff]
  %v56 = vld [vmem:[%s0 + $0x110] sm:$0xff]
  %v57 = vld [vmem:[%s0 + $0x118] sm:$0xff]
  %v58 = vld [vmem:[%s0 + $0x120] sm:$0xff]
  %v59 = vld [vmem:[%s0 + $0x128] sm:$0xff]
  %v60 = vld [vmem:[%s0 + $0x130] sm:$0xff]
  %v61 = vld [vmem:[%s0 + $0x138] sm:$0xff]
  %v62 = vld [vmem:[%s0 + $0x140] sm:$0xff]
  %v63 = vld [vmem:[%s0 + $0x148] sm:$0xff]
  %v64 = vld [vmem:[%s0 + $0x150] sm:$0xff]
  %v65 = vld [vmem:[%s0 + $0x158] sm:$0xff]
  %v66 = vld [vmem:[%s0 + $0x160] sm:$0xff]
  %v67 = vld [vmem:[%s0 + $0x168] sm:$0xff]
  %v68 = vld [vmem:[%s0 + $0x170] sm:$0xff]
  %v69 = vld [vmem:[%s0 + $0x178] sm:$0xff]
  %v70 = vld [vmem:[%s0 + $0x180] sm:$0xff]
  %v71 = vld [vmem:[%s0 + $0x188] sm:$0xff]
  %v72 = vld [vmem:[%s0 + $0x190] sm:$0xff]
  %v73 = vld [vmem:[%s0 + $0x198] sm:$0xff]
  %v74 = vld [vmem:[%s0 + $0x1a0] sm:$0xff]
  %v75 = vld [vmem:[%s0 + $0x1a8] sm:$0xff]
  %v76 = vld [vmem:[%s0 + $0x1b0] sm:$0xff]
  %v77 = vld [vmem:[%s0 + $0x1b8] sm:$0xff]
  %v78 = vld [vmem:[%s0 + $0x1c0] sm:$0xff]
  %v79 = vld [vmem:[%s0 + $0x1c8] sm:$0xff]
  %v80 = vld [vmem:[%s0 + $0x1d0] sm:$0xff]
  %v81 = vld [vmem:[%s0 + $0x1d8] sm:$0xff]
  %v82 = vld [vmem:[%s0 + $0x1e0] sm:$0xff]
  %v83 = vld [vmem:[%s0 + $0x1e8] sm:$0xff]
  %v84 = vld [vmem:[%s0 + $0x1f0] sm:$0xff]
  %v85 = vld [vmem:[%s0 + $0x1f8] sm:$0xff]
  %v86 = vld [vmem:[%s0 + $0x200] sm:$0xff]
  %v87 = vld [vmem:[%s0 + $0x208] sm:$0xff]
  %v88 = vld [vmem:[%s0 + $0x210] sm:$0xff]
  %v89 = vld [vmem:[%s0 + $0x218] sm:$0xff]
  %v90 = vld [vmem:[%s0 + $0x220] sm:$0xff]
  %v91 = vld [vmem:[%s0 + $0x228] sm:$0xff]
  %v92 = vld [vmem:[%s0 + $0x230] sm:$0xff]
  %v93 = vld [vmem:[%s0 + $0x238] sm:$0xff]
  %v94 = vld [vmem:[%s0 + $0x240] sm:$0xff]
  %v95 = vld [vmem:[%s0 + $0x248] sm:$0xff]
  %v96 = vld [vmem:[%s0 + $0x250] sm:$0xff]
  %v97 = vld [vmem:[%s0 + $0x258] sm:$0xff]
  %v98 = vld [vmem:[%s0 + $0x260] sm:$0xff]
  %v99 = vld [vmem:[%s0 + $0x268] sm:$0xff]
  %v100 = vld [vmem:[%s0 + $0x270] sm:$0xff]
  %v101 = vld [vmem:[%s0 + $0x278] sm:$0xff]
  %v102 = vld [vmem:[%s0 + $0x280] sm:$0xff]
  %v103 = vld [vmem:[%s0 + $0x288] sm:$0xff]
  %v104 = vld [vmem:[%s0 + $0x290] sm:$0xff]
  %v105 = vld [vmem:[%s0 + $0x298] sm:$0xff]
  %v106 = vld [vmem:[%s0 + $0x2a0] sm:$0xff]
  %v107 = vld [vmem:[%s0 + $0x2a8] sm:$0xff]
  %v108 = vld [vmem:[%s0 + $0x2b0] sm:$0xff]
  %v109 = vld [vmem:[%s0 + $0x2b8] sm:$0xff]
  %v110 = vld [vmem:[%s0 + $0x2c0] sm:$0xff]
  %v111 = vld [vmem:[%s0 + $0x2c8] sm:$0xff]
  %v112 = vld [vmem:[%s0 + $0x2d0] sm:$0xff]
  %v113 = vld [vmem:[%s0 + $0x2d8] sm:$0xff]
  %v114 = vld [vmem:[%s0 + $0x2e0] sm:$0xff]
  %v115 = vld [vmem:[%s0 + $0x2e8] sm:$0xff]
  %v116 = vld [vmem:[%s0 + $0x2f0] sm:$0xff]
  %v117 = vld [vmem:[%s0 + $0x2f8] sm:$0xff]
  %v118 = vld [vmem:[%s0 + $0x300] sm:$0xff]
  %v119 = vld [vmem:[%s0 + $0x308] sm:$0xff]
  %v120 = vld [vmem:[%s0 + $0x310] sm:$0xff]
  %v121 = vld [vmem:[%s0 + $0x318] sm:$0xff]
  %v122 = vld [vmem:[%s0 + $0x320] sm:$0xff]
  %v123 = vld [vmem:[%s0 + $0x328] sm:$0xff]
  %v124 = vld [vmem:[%s0 + $0x330] sm:$0xff]
  %v125 = vld [vmem:[%s0 + $0x338] sm:$0xff]
  %v126 = vld [vmem:[%s0 + $0x340] sm:$0xff]
  %v127 = vld [vmem:[%s0 + $0x348] sm:$0xff]
  %v128 = vld [vmem:[%s0 + $0x350] sm:$0xff]
  %v129 = vld [vmem:[%s0 + $0x358] sm:$0xff]
  %v130 = vld [vmem:[%s0 + $0x360] sm:$0xff]
  %v131 = vld [vmem:[%s0 + $0x368] sm:$0xff]
  %v132 = vld [vmem:[%s0 + $0x370] sm:$0xff]
  %v133 = vld [vmem:[%s0 + $0x378] sm:$0xff]
  %v134 = vld [vmem:[%s0 + $0x380] sm:$0xff]
  %v135 = vld [vmem:[%s0 + $0x388] sm:$0xff]
  %v136 = vld [vmem:[%s0 + $0x390] sm:$0xff]
  %v137 = vld [vmem:[%s0 + $0x398] sm:$0xff]
  %v138 = vld [vmem:[%s0 + $0x3a0] sm:$0xff]
  %v139 = vld [vmem:[%s0 + $0x3a8] sm:$0xff]
  %v140 = vld [vmem:[%s0 + $0x3b0] sm:$0xff]
  %v141 = vld [vmem:[%s0 + $0x3b8] sm:$0xff]
  %v142 = vld [vmem:[%s0 + $0x3c0] sm:$0xff]
  %v143 = vld [vmem:[%s0 + $0x3c8] sm:$0xff]
  %v144 = vld [vmem:[%s0 + $0x3d0] sm:$0xff]
  %v145 = vld [vmem:[%s0 + $0x3d8] sm:$0xff]
  %v146 = vld [vmem:[%s0 + $0x3e0] sm:$0xff]
  %v147 = vld [vmem:[%s0 + $0x3e8] sm:$0xff]
  %v148 = vld [vmem:[%s0 + $0x3f0] sm:$0xff]
  %v149 = vld [vmem:[%s0 + $0x3f8] sm:$0xff]
  %v150 = vld [vmem:[%s0 + $0x400] sm:$0xff]
  %v151 = vld [vmem:[%s0 + $0x408] sm:$0xff]
  %v152 = vld [vmem:[%s0 + $0x410] sm:$0xff]
  %v153 = vld [vmem:[%s0 + $0x418] sm:$0xff]
  %v154 = vld [vmem:[%s0 + $0x420] sm:$0xff]
  %v155 = vld [vmem:[%s0 + $0x428] sm:$0xff]
  %v156 = vld [vmem:[%s0 + $0x430] sm:$0xff]
  %v157 = vld [vmem:[%s0 + $0x438] sm:$0xff]
  %v158 = vld [vmem:[%s0 + $0x440] sm:$0xff]
  %v159 = vld [vmem:[%s0 + $0x448] sm:$0xff]
  %v160 = vld [vmem:[%s0 + $0x450] sm:$0xff]
  %v161 = vld [vmem:[%s0 + $0x458] sm:$0xff]
  %v162 = vld [vmem:[%s0 + $0x460] sm:$0xff]
  %v163 = vld [vmem:[%s0 + $0x468] sm:$0xff]
  %v164 = vld [vmem:[%s0 + $0x470] sm:$0xff]
  %v165 = vld [vmem:[%s0 + $0x478] sm:$0xff]
  %v166 = vld [vmem:[%s0 + $0x480] sm:$0xff]
  %v167 = vld [vmem:[%s0 + $0x488] sm:$0xff]
  %v168 = vld [vmem:[%s0 + $0x490] sm:$0xff]
  %v169 = vld [vmem:[%s0 + $0x498] sm:$0xff]
  %v170 = vld [vmem:[%s0 + $0x4a0] sm:$0xff]
  %v171 = vld [vmem:[%s0 + $0x4a8] sm:$0xff]
  %v172 = vld [vmem:[%s0 + $0x4b0] sm:$0xff]
  %v173 = vld [vmem:[%s0 + $0x4b8] sm:$0xff]
  %v174 = vld [vmem:[%s0 + $0x4c0] sm:$0xff]
  %v175 = vld [vmem:[%s0 + $0x4c8] sm:$0xff]
  %v176 = vld [vmem:[%s0 + $0x4d0] sm:$0xff]
  %v177 = vld [vmem:[%s0 + $0x4d8] sm:$0xff]
  %v178 = vld [vmem:[%s0 + $0x4e0] sm:$0xff]
  %v179 = vld [vmem:[%s0 + $0x4e8] sm:$0xff]
  %v180 = vld [vmem:[%s0 + $0x4f0] sm:$0xff]
  %v181 = vld [vmem:[%s0 + $0x4f8] sm:$0xff]
  %v182 = vld [vmem:[%s0 + $0x500] sm:$0xff]
  %v183 = vld [vmem:[%s0 + $0x508] sm:$0xff]
  %v184 = vld [vmem:[%s0 + $0x510] sm:$0xff]
  %v185 = vld [vmem:[%s0 + $0x518] sm:$0xff]
  %v186 = vld [vmem:[%s0 + $0x520] sm:$0xff]
  %v187 = vld [vmem:[%s0 + $0x528] sm:$0xff]
  %v188 = vld [vmem:[%s0 + $0x530] sm:$0xff]
  %v189 = vld [vmem:[%s0 + $0x538] sm:$0xff]
  %v190 = vld [vmem:[%s0 + $0x540] sm:$0xff]
  %v191 = vld [vmem:[%s0 + $0x548] sm:$0xff]
  %v192 = vld [vmem:[%s0 + $0x550] sm:$0xff]
  %v193 = vld [vmem:[%s0 + $0x558] sm:$0xff]
  %v194 = vld [vmem:[%s0 + $0x560] sm:$0xff]
  %v195 = vld [vmem:[%s0 + $0x568] sm:$0xff]
  %v196 = vld [vmem:[%s0 + $0x570] sm:$0xff]
  %v197 = vld [vmem:[%s0 + $0x578] sm:$0xff]
  %v198 = vld [vmem:[%s0 + $0x580] sm:$0xff]
  %v199 = vld [vmem:[%s0 + $0x588] sm:$0xff]
  %v200 = vld [vmem:[%s0 + $0x590] sm:$0xff]
  %v201 = vld [vmem:[%s0 + $0x598] sm:$0xff]
  %v202 = vld [vmem:[%s0 + $0x5a0] sm:$0xff]
  %v203 = vld [vmem:[%s0 + $0x5a8] sm:$0xff]
  %v204 = vld [vmem:[%s0 + $0x5b0] sm:$0xff]
  %v205 = vld [vmem:[%s0 + $0x5b8] sm:$0xff]
  %v206 = vld [vmem:[%s0 + $0x5c0] sm:$0xff]
  %v207 = vld [vmem:[%s0 + $0x5c8] sm:$0xff]
  %v208 = vld [vmem:[%s0 + $0x5d0] sm:$0xff]
  %v209 = vld [vmem:[%s0 + $0x5d8] sm:$0xff]
  %v210 = vld [vmem:[%s0 + $0x5e0] sm:$0xff]
  %v211 = vld [vmem:[%s0 + $0x5e8] sm:$0xff]
  %v212 = vld [vmem:[%s0 + $0x5f0] sm:$0xff]
  %v213 = vld [vmem:[%s0 + $0x5f8] sm:$0xff]
  %v214 = vld [vmem:[%s0 + $0x600] sm:$0xff]
  %v215 = vld [vmem:[%s0 + $0x608] sm:$0xff]
  %v216 = vld [vmem:[%s0 + $0x610] sm:$0xff]
  %v217 = vld [vmem:[%s0 + $0x618] sm:$0xff]
  %v218 = vld [vmem:[%s0 + $0x620] sm:$0xff]
  %v219 = vld [vmem:[%s0 + $0x628] sm:$0xff]
  %v220 = vld [vmem:[%s0 + $0x630] sm:$0xff]
  %v221 = vld [vmem:[%s0 + $0x638] sm:$0xff]
  %v222 = vld [vmem:[%s0 + $0x640] sm:$0xff]
  %v223 = vld [vmem:[%s0 + $0x648] sm:$0xff]
  %v224 = vld [vmem:[%s0 + $0x650] sm:$0xff]
  %v225 = vld [vmem:[%s0 + $0x658] sm:$0xff]
  %v226 = vld [vmem:[%s0 + $0x660] sm:$0xff]
  %v227 = vld [vmem:[%s0 + $0x668] sm:$0xff]
  %v228 = vld [vmem:[%s0 + $0x670] sm:$0xff]
  %v229 = vld [vmem:[%s0 + $0x678] sm:$0xff]
  %v230 = vld [vmem:[%s0 + $0x680] sm:$0xff]
  %v231 = vld [vmem:[%s0 + $0x688] sm:$0xff]
  %v232 = vld [vmem:[%s0 + $0x690] sm:$0xff]
  %v233 = vld [vmem:[%s0 + $0x698] sm:$0xff]
  %v234 = vld [vmem:[%s0 + $0x6a0] sm:$0xff]
  %v235 = vld [vmem:[%s0 + $0x6a8] sm:$0xff]
  %v236 = vld [vmem:[%s0 + $0x6b0] sm:$0xff]
  %v237 = vld [vmem:[%s0 + $0x6b8] sm:$0xff]
  %v238 = vld [vmem:[%s0 + $0x6c0] sm:$0xff]
  %v239 = vld [vmem:[%s0 + $0x6c8] sm:$0xff]
  %v240 = vld [vmem:[%s0 + $0x6d0] sm:$0xff]
  %v241 = vld [vmem:[%s0 + $0x6d8] sm:$0xff]
  %v242 = vld [vmem:[%s0 + $0x6e0] sm:$0xff]
  %v243 = vld [vmem:[%s0 + $0x6e8] sm:$0xff]
  %v244 = vld [vmem:[%s0 + $0x6f0] sm:$0xff]
  %v245 = vld [vmem:[%s0 + $0x6f8] sm:$0xff]
  %v246 = vld [vmem:[%s0 + $0x700] sm:$0xff]
  %v247 = vld [vmem:[%s0 + $0x708] sm:$0xff]
  %v248 = vld [vmem:[%s0 + $0x710] sm:$0xff]
  %v249 = vld [vmem:[%s0 + $0x718] sm:$0xff]
  %v250 = vld [vmem:[%s0 + $0x720] sm:$0xff]
  %v251 = vld [vmem:[%s0 + $0x728] sm:$0xff]
  %v252 = vld [vmem:[%s0 + $0x730] sm:$0xff]
  %v253 = vld [vmem:[%s0 + $0x738] sm:$0xff]
  %v254 = vld [vmem:[%s0 + $0x740] sm:$0xff]
  %v255 = vld [vmem:[%s0 + $0x748] sm:$0xff]
  %v256 = vld [vmem:[%s0 + $0x750] sm:$0xff]
  %v257 = vld [vmem:[%s0 + $0x758] sm:$0xff]
  %v258 = vld [vmem:[%s0 + $0x760] sm:$0xff]
  %v259 = vld [vmem:[%s0 + $0x768] sm:$0xff]
  %v260 = vld [vmem:[%s0 + $0x770] sm:$0xff]
  %v261 = vld [vmem:[%s0 + $0x778] sm:$0xff]
  %v262 = vld [vmem:[%s0 + $0x780] sm:$0xff]
  %v263 = vld [vmem:[%s0 + $0x788] sm:$0xff]
  %v264 = vld [vmem:[%s0 + $0x790] sm:$0xff]
  %v265 = vld [vmem:[%s0 + $0x798] sm:$0xff]
  %v266 = vld [vmem:[%s0 + $0x7a0] sm:$0xff]
  %v267 = vld [vmem:[%s0 + $0x7a8] sm:$0xff]
  %v268 = vld [vmem:[%s0 + $0x7b0] sm:$0xff]
  %v269 = vld [vmem:[%s0 + $0x7b8] sm:$0xff]
  %v270 = vld [vmem:[%s0 + $0x7c0] sm:$0xff]
  %v271 = vld [vmem:[%s0 + $0x7c8] sm:$0xff]
  %v272 = vld [vmem:[%s0 + $0x7d0] sm:$0xff]
  %v273 = vld [vmem:[%s0 + $0x7d8] sm:$0xff]
  %v274 = vld [vmem:[%s0 + $0x7e0] sm:$0xff]
  %v275 = vld [vmem:[%s0 + $0x7e8] sm:$0xff]
  %v276 = vld [vmem:[%s0 + $0x7f0] sm:$0xff]
  %v277 = vld [vmem:[%s0 + $0x7f8] sm:$0xff]
  %v278 = vld [vmem:[%s0 + $0x800] sm:$0xff]
  %v279 = vld [vmem:[%s0 + $0x808] sm:$0xff]
  %v280 = vld [vmem:[%s0 + $0x810] sm:$0xff]
  %v281 = vld [vmem:[%s0 + $0x818] sm:$0xff]
  %v282 = vld [vmem:[%s0 + $0x820] sm:$0xff]
  %v283 = vld [vmem:[%s0 + $0x828] sm:$0xff]
  %v284 = vld [vmem:[%s0 + $0x830] sm:$0xff]
  %v285 = vld [vmem:[%s0 + $0x838] sm:$0xff]
  %v286 = vld [vmem:[%s0 + $0x840] sm:$0xff]
  %v287 = vld [vmem:[%s0 + $0x848] sm:$0xff]
  %v288 = vld [vmem:[%s0 + $0x850] sm:$0xff]
  %v289 = vld [vmem:[%s0 + $0x858] sm:$0xff]
  %v290 = vld [vmem:[%s0 + $0x860] sm:$0xff]
  %v291 = vld [vmem:[%s0 + $0x868] sm:$0xff]
  %v292 = vld [vmem:[%s0 + $0x870] sm:$0xff]
  %v293 = vld [vmem:[%s0 + $0x878] sm:$0xff]
  %v294 = vld [vmem:[%s0 + $0x880] sm:$0xff]
  %v295 = vld [vmem:[%s0 + $0x888] sm:$0xff]
  %v296 = vld [vmem:[%s0 + $0x890] sm:$0xff]
  %v297 = vld [vmem:[%s0 + $0x898] sm:$0xff]
  %v298 = vld [vmem:[%s0 + $0x8a0] sm:$0xff]
  %v299 = vld [vmem:[%s0 + $0x8a8] sm:$0xff]
  %v300 = vld [vmem:[%s0 + $0x8b0] sm:$0xff]
  %v301 = vld [vmem:[%s0 + $0x8b8] sm:$0xff]
  %v302 = vld [vmem:[%s0 + $0x8c0] sm:$0xff]
  %v303 = vld [vmem:[%s0 + $0x8c8] sm:$0xff]
  %v304 = vld [vmem:[%s0 + $0x8d0] sm:$0xff]
  %v305 = vld [vmem:[%s0 + $0x8d8] sm:$0xff]
  %v306 = vld [vmem:[%s0 + $0x8e0] sm:$0xff]
  %v307 = vld [vmem:[%s0 + $0x8e8] sm:$0xff]
  %v308 = vld [vmem:[%s0 + $0x8f0] sm:$0xff]
  %v309 = vld [vmem:[%s0 + $0x8f8] sm:$0xff]
  %v310 = vld [vmem:[%s0 + $0x900] sm:$0xff]
  %v311 = vld [vmem:[%s0 + $0x908] sm:$0xff]
  %v312 = vld [vmem:[%s0 + $0x910] sm:$0xff]
  %v313 = vld [vmem:[%s0 + $0x918] sm:$0xff]
  %v314 = vld [vmem:[%s0 + $0x920] sm:$0xff]
  %v315 = vld [vmem:[%s0 + $0x928] sm:$0xff]
  %v316 = vld [vmem:[%s0 + $0x930] sm:$0xff]
  %v317 = vld [vmem:[%s0 + $0x938] sm:$0xff]
  %v318 = vld [vmem:[%s0 + $0x940] sm:$0xff]
  %v319 = vld [vmem:[%s0 + $0x948] sm:$0xff]
  %v320 = vld [vmem:[%s0 + $0x950] sm:$0xff]
  %v321 = vld [vmem:[%s0 + $0x958] sm:$0xff]
  %v322 = vld [vmem:[%s0 + $0x960] sm:$0xff]
  %v323 = vld [vmem:[%s0 + $0x968] sm:$0xff]
  %v324 = vld [vmem:[%s0 + $0x970] sm:$0xff]
  %v325 = vld [vmem:[%s0 + $0x978] sm:$0xff]
  %v326 = vld [vmem:[%s0 + $0x980] sm:$0xff]
  %v327 = vld [vmem:[%s0 + $0x988] sm:$0xff]
  %v328 = vld [vmem:[%s0 + $0x990] sm:$0xff]
  %v329 = vld [vmem:[%s0 + $0x998] sm:$0xff]
  %v330 = vld [vmem:[%s0 + $0x9a0] sm:$0xff]
  %v331 = vld [vmem:[%s0 + $0x9a8] sm:$0xff]
  %v332 = vld [vmem:[%s0 + $0x9b0] sm:$0xff]
  %v333 = vld [vmem:[%s0 + $0x9b8] sm:$0xff]
  %v334 = vld [vmem:[%s0 + $0x9c0] sm:$0xff]
  %v335 = vld [vmem:[%s0 + $0x9c8] sm:$0xff]
  %v336 = vld [vmem:[%s0 + $0x9d0] sm:$0xff]
  %v337 = vld [vmem:[%s0 + $0x9d8] sm:$0xff]
  %v338 = vld [vmem:[%s0 + $0x9e0] sm:$0xff]
  %v339 = vld [vmem:[%s0 + $0x9e8] sm:$0xff]
  %v340 = vld [vmem:[%s0 + $0x9f0] sm:$0xff]
  %v341 = vld [vmem:[%s0 + $0x9f8] sm:$0xff]
  %v342 = vld [vmem:[%s0 + $0xa00] sm:$0xff]
  %v343 = vld [vmem:[%s0 + $0xa08] sm:$0xff]
  %v344 = vld [vmem:[%s0 + $0xa10] sm:$0xff]
  %v345 = vld [vmem:[%s0 + $0xa18] sm:$0xff]
  %v346 = vld [vmem:[%s0 + $0xa20] sm:$0xff]
  %v347 = vld [vmem:[%s0 + $0xa28] sm:$0xff]
  %v348 = vld [vmem:[%s0 + $0xa30] sm:$0xff]
  %v349 = vld [vmem:[%s0 + $0xa38] sm:$0xff]
  %v350 = vld [vmem:[%s0 + $0xa40] sm:$0xff]
  %v351 = vld [vmem:[%s0 + $0xa48] sm:$0xff]
  %v352 = vld [vmem:[%s0 + $0xa50] sm:$0xff]
  %v353 = vld [vmem:[%s0 + $0xa58] sm:$0xff]
  %v354 = vld [vmem:[%s0 + $0xa60] sm:$0xff]
  %v355 = vld [vmem:[%s0 + $0xa68] sm:$0xff]
  %v356 = vld [vmem:[%s0 + $0xa70] sm:$0xff]
  %v357 = vld [vmem:[%s0 + $0xa78] sm:$0xff]
  %v358 = vld [vmem:[%s0 + $0xa80] sm:$0xff]
  %v359 = vld [vmem:[%s0 + $0xa88] sm:$0xff]
  %v360 = vld [vmem:[%s0 + $0xa90] sm:$0xff]
  %v361 = vld [vmem:[%s0 + $0xa98] sm:$0xff]
  %v362 = vld [vmem:[%s0 + $0xaa0] sm:$0xff]
  %v363 = vld [vmem:[%s0 + $0xaa8] sm:$0xff]
  %v364 = vld [vmem:[%s0 + $0xab0] sm:$0xff]
  %v365 = vld [vmem:[%s0 + $0xab8] sm:$0xff]
  %v366 = vld [vmem:[%s0 + $0xac0] sm:$0xff]
  %v367 = vld [vmem:[%s0 + $0xac8] sm:$0xff]
  %v368 = vld [vmem:[%s0 + $0xad0] sm:$0xff]
  %v369 = vld [vmem:[%s0 + $0xad8] sm:$0xff]
  %v370 = vld [vmem:[%s0 + $0xae0] sm:$0xff]
  %v371 = vld [vmem:[%s0 + $0xae8] sm:$0xff]
  %v372 = vld [vmem:[%s0 + $0xaf0] sm:$0xff]
  %v373 = vld [vmem:[%s0 + $0xaf8] sm:$0xff]
  %v374 = vld [vmem:[%s0 + $0xb00] sm:$0xff]
  %v375 = vld [vmem:[%s0 + $0xb08] sm:$0xff]
  %v376 = vld [vmem:[%s0 + $0xb10] sm:$0xff]
  %v377 = vld [vmem:[%s0 + $0xb18] sm:$0xff]
  %v378 = vld [vmem:[%s0 + $0xb20] sm:$0xff]
  %v379 = vld [vmem:[%s0 + $0xb28] sm:$0xff]
  %v380 = vld [vmem:[%s0 + $0xb30] sm:$0xff]
  %v381 = vld [vmem:[%s0 + $0xb38] sm:$0xff]
  %v382 = vld [vmem:[%s0 + $0xb40] sm:$0xff]
  %v383 = vld [vmem:[%s0 + $0xb48] sm:$0xff]
  %v384 = vld [vmem:[%s0 + $0xb50] sm:$0xff]
  %v385 = vld [vmem:[%s0 + $0xb58] sm:$0xff]
  %v386 = vld [vmem:[%s0 + $0xb60] sm:$0xff]
  %v387 = vld [vmem:[%s0 + $0xb68] sm:$0xff]
  %v388 = vld [vmem:[%s0 + $0xb70] sm:$0xff]
  %v389 = vld [vmem:[%s0 + $0xb78] sm:$0xff]
  %v390 = vld [vmem:[%s0 + $0xb80] sm:$0xff]
  %v391 = vld [vmem:[%s0 + $0xb88] sm:$0xff]
  %v392 = vld [vmem:[%s0 + $0xb90] sm:$0xff]
  %v393 = vld [vmem:[%s0 + $0xb98] sm:$0xff]
  %v394 = vld [vmem:[%s0 + $0xba0] sm:$0xff]
  %v395 = vld [vmem:[%s0 + $0xba8] sm:$0xff]
  %v396 = vld [vmem:[%s0 + $0xbb0] sm:$0xff]
  %v397 = vld [vmem:[%s0 + $0xbb8] sm:$0xff]
  %v398 = vld [vmem:[%s0 + $0xbc0] sm:$0xff]
  %v399 = vld [vmem:[%s0 + $0xbc8] sm:$0xff]
  %v400 = vld [vmem:[%s0 + $0xbd0] sm:$0xff]
  %v401 = vld [vmem:[%s0 + $0xbd8] sm:$0xff]
  %v402 = vld [vmem:[%s0 + $0xbe0] sm:$0xff]
  %v403 = vld [vmem:[%s0 + $0xbe8] sm:$0xff]
  %v404 = vld [vmem:[%s0 + $0xbf0] sm:$0xff]
  %v405 = vld [vmem:[%s0 + $0xbf8] sm:$0xff]
  %v406 = vld [vmem:[%s0 + $0xc00] sm:$0xff]
  %v407 = vld [vmem:[%s0 + $0xc08] sm:$0xff]
  %v408 = vld [vmem:[%s0 + $0xc10] sm:$0xff]
  %v409 = vld [vmem:[%s0 + $0xc18] sm:$0xff]
  %v410 = vld [vmem:[%s0 + $0xc20] sm:$0xff]
  %v411 = vld [vmem:[%s0 + $0xc28] sm:$0xff]
  %v412 = vld [vmem:[%s0 + $0xc30] sm:$0xff]
  %v413 = vld [vmem:[%s0 + $0xc38] sm:$0xff]
  %v414 = vld [vmem:[%s0 + $0xc40] sm:$0xff]
  %v415 = vld [vmem:[%s0 + $0xc48] sm:$0xff]
  %v416 = vld [vmem:[%s0 + $0xc50] sm:$0xff]
  %v417 = vld [vmem:[%s0 + $0xc58] sm:$0xff]
  %v418 = vld [vmem:[%s0 + $0xc60] sm:$0xff]
  %v419 = vld [vmem:[%s0 + $0xc68] sm:$0xff]
  %v420 = vld [vmem:[%s0 + $0xc70] sm:$0xff]
  %v421 = vld [vmem:[%s0 + $0xc78] sm:$0xff]
  %v422 = vld [vmem:[%s0 + $0xc80] sm:$0xff]
  %v423 = vld [vmem:[%s0 + $0xc88] sm:$0xff]
  %v424 = vld [vmem:[%s0 + $0xc90] sm:$0xff]
  %v425 = vld [vmem:[%s0 + $0xc98] sm:$0xff]
  %v426 = vld [vmem:[%s0 + $0xca0] sm:$0xff]
  %v427 = vld [vmem:[%s0 + $0xca8] sm:$0xff]
  %v428 = vld [vmem:[%s0 + $0xcb0] sm:$0xff]
  %v429 = vld [vmem:[%s0 + $0xcb8] sm:$0xff]
  %v430 = vld [vmem:[%s0 + $0xcc0] sm:$0xff]
  %v431 = vld [vmem:[%s0 + $0xcc8] sm:$0xff]
  %v432 = vld [vmem:[%s0 + $0xcd0] sm:$0xff]
  %v433 = vld [vmem:[%s0 + $0xcd8] sm:$0xff]
  %v434 = vld [vmem:[%s0 + $0xce0] sm:$0xff]
  %v435 = vld [vmem:[%s0 + $0xce8] sm:$0xff]
  %v436 = vld [vmem:[%s0 + $0xcf0] sm:$0xff]
  %v437 = vld [vmem:[%s0 + $0xcf8] sm:$0xff]
  %v438 = vld [vmem:[%s0 + $0xd00] sm:$0xff]
  %v439 = vld [vmem:[%s0 + $0xd08] sm:$0xff]
  %v440 = vld [vmem:[%s0 + $0xd10] sm:$0xff]
  %v441 = vld [vmem:[%s0 + $0xd18] sm:$0xff]
  %v442 = vld [vmem:[%s0 + $0xd20] sm:$0xff]
  %v443 = vld [vmem:[%s0 + $0xd28] sm:$0xff]
  %v444 = vld [vmem:[%s0 + $0xd30] sm:$0xff]
  %v445 = vld [vmem:[%s0 + $0xd38] sm:$0xff]
  %v446 = vld [vmem:[%s0 + $0xd40] sm:$0xff]
  %v447 = vld [vmem:[%s0 + $0xd48] sm:$0xff]
  %v448 = vld [vmem:[%s0 + $0xd50] sm:$0xff]
  %v449 = vld [vmem:[%s0 + $0xd58] sm:$0xff]
  %v450 = vld [vmem:[%s0 + $0xd60] sm:$0xff]
  %v451 = vld [vmem:[%s0 + $0xd68] sm:$0xff]
  %v452 = vld [vmem:[%s0 + $0xd70] sm:$0xff]
  %v453 = vld [vmem:[%s0 + $0xd78] sm:$0xff]
  %v454 = vld [vmem:[%s0 + $0xd80] sm:$0xff]
  %v455 = vld [vmem:[%s0 + $0xd88] sm:$0xff]
  %v456 = vld [vmem:[%s0 + $0xd90] sm:$0xff]
  %v457 = vld [vmem:[%s0 + $0xd98] sm:$0xff]
  %v458 = vld [vmem:[%s0 + $0xda0] sm:$0xff]
  %v459 = vld [vmem:[%s0 + $0xda8] sm:$0xff]
  %v460 = vld [vmem:[%s0 + $0xdb0] sm:$0xff]
  %v461 = vld [vmem:[%s0 + $0xdb8] sm:$0xff]
  %v462 = vld [vmem:[%s0 + $0xdc0] sm:$0xff]
  %v463 = vld [vmem:[%s0 + $0xdc8] sm:$0xff]
  %v464 = vld [vmem:[%s0 + $0xdd0] sm:$0xff]
  %v465 = vld [vmem:[%s0 + $0xdd8] sm:$0xff]
  %v466 = vld [vmem:[%s0 + $0xde0] sm:$0xff]
  %v467 = vld [vmem:[%s0 + $0xde8] sm:$0xff]
  %v468 = vld [vmem:[%s0 + $0xdf0] sm:$0xff]
  %v469 = vld [vmem:[%s0 + $0xdf8] sm:$0xff]
  %v470 = vld [vmem:[%s0 + $0xe00] sm:$0xff]
  %v471 = vld [vmem:[%s0 + $0xe08] sm:$0xff]
  %v472 = vld [vmem:[%s0 + $0xe10] sm:$0xff]
  %v473 = vld [vmem:[%s0 + $0xe18] sm:$0xff]
  %v474 = vld [vmem:[%s0 + $0xe20] sm:$0xff]
  %v475 = vld [vmem:[%s0 + $0xe28] sm:$0xff]
  %v476 = vld [vmem:[%s0 + $0xe30] sm:$0xff]
  %v477 = vld [vmem:[%s0 + $0xe38] sm:$0xff]
  %v478 = vld [vmem:[%s0 + $0xe40] sm:$0xff]
  %v479 = vld [vmem:[%s0 + $0xe48] sm:$0xff]
  %v480 = vld [vmem:[%s0 + $0xe50] sm:$0xff]
  %v481 = vld [vmem:[%s0 + $0xe58] sm:$0xff]
  %v482 = vld [vmem:[%s0 + $0xe60] sm:$0xff]
  %v483 = vld [vmem:[%s0 + $0xe68] sm:$0xff]
  %v484 = vld [vmem:[%s0 + $0xe70] sm:$0xff]
  %v485 = vld [vmem:[%s0 + $0xe78] sm:$0xff]
  %v486 = vld [vmem:[%s0 + $0xe80] sm:$0xff]
  %v487 = vld [vmem:[%s0 + $0xe88] sm:$0xff]
  %v488 = vld [vmem:[%s0 + $0xe90] sm:$0xff]
  %v489 = vld [vmem:[%s0 + $0xe98] sm:$0xff]
  %v490 = vld [vmem:[%s0 + $0xea0] sm:$0xff]
  %v491 = vld [vmem:[%s0 + $0xea8] sm:$0xff]
  %v492 = vld [vmem:[%s0 + $0xeb0] sm:$0xff]
  %v493 = vld [vmem:[%s0 + $0xeb8] sm:$0xff]
  %v494 = vld [vmem:[%s0 + $0xec0] sm:$0xff]
  %v495 = vld [vmem:[%s0 + $0xec8] sm:$0xff]
  %v496 = vld [vmem:[%s0 + $0xed0] sm:$0xff]
  %v497 = vld [vmem:[%s0 + $0xed8] sm:$0xff]
  %v498 = vld [vmem:[%s0 + $0xee0] sm:$0xff]
  %v499 = vld [vmem:[%s0 + $0xee8] sm:$0xff]
  %v500 = vld [vmem:[%s0 + $0xef0] sm:$0xff]
  %v501 = vld [vmem:[%s0 + $0xef8] sm:$0xff]
  %v502 = vld [vmem:[%s0 + $0xf00] sm:$0xff]
  %v503 = vld [vmem:[%s0 + $0xf08] sm:$0xff]
  %v504 = vld [vmem:[%s0 + $0xf10] sm:$0xff]
  %v505 = vld [vmem:[%s0 + $0xf18] sm:$0xff]
  %v506 = vld [vmem:[%s0 + $0xf20] sm:$0xff]
  %v507 = vld [vmem:[%s0 + $0xf28] sm:$0xff]
  %v508 = vld [vmem:[%s0 + $0xf30] sm:$0xff]
  %v509 = vld [vmem:[%s0 + $0xf38] sm:$0xff]
  %v510 = vld [vmem:[%s0 + $0xf40] sm:$0xff]
  %v511 = vld [vmem:[%s0 + $0xf48] sm:$0xff]
  %v512 = vld [vmem:[%s0 + $0xf50] sm:$0xff]
  %v513 = vld [vmem:[%s0 + $0xf58] sm:$0xff]
  %v514 = vld [vmem:[%s0 + $0xf60] sm:$0xff]
  %v515 = vld [vmem:[%s0 + $0xf68] sm:$0xff]
  %v516 = vld [vmem:[%s0 + $0xf70] sm:$0xff]
  %v517 = vld [vmem:[%s0 + $0xf78] sm:$0xff]
  %v518 = vld [vmem:[%s0 + $0xf80] sm:$0xff]
  %v519 = vld [vmem:[%s0 + $0xf88] sm:$0xff]
  %v520 = vld [vmem:[%s0 + $0xf90] sm:$0xff]
  %v521 = vld [vmem:[%s0 + $0xf98] sm:$0xff]
  %v522 = vld [vmem:[%s0 + $0xfa0] sm:$0xff]
  %v523 = vld [vmem:[%s0 + $0xfa8] sm:$0xff]
  %v524 = vld [vmem:[%s0 + $0xfb0] sm:$0xff]
  %v525 = vld [vmem:[%s0 + $0xfb8] sm:$0xff]
  %v526 = vld [vmem:[%s0 + $0xfc0] sm:$0xff]
  %v527 = vld [vmem:[%s0 + $0xfc8] sm:$0xff]
  %v528 = vld [vmem:[%s0 + $0xfd0] sm:$0xff]
  %v529 = vld [vmem:[%s0 + $0xfd8] sm:$0xff]
  %v530 = vld [vmem:[%s0 + $0xfe0] sm:$0xff]
  %v531 = vld [vmem:[%s0 + $0xfe8] sm:$0xff]
  %v532 = vld [vmem:[%s0 + $0xff0] sm:$0xff]
  %v533 = vld [vmem:[%s0 + $0xff8] sm:$0xff]
  %vm534 = vcmask 400384
  %v535 = vsel %vm534, %v22, 0.0
  %536 = vadd.xlane.f32.xlu0 %v535
  %v537 = vpop.xlane.xlu0 %536
  %v538 = vsel %vm534, %v23, 0.0
  %539 = vadd.xlane.f32.xlu0 %v538
  %v540 = vpop.xlane.xlu0 %539
  %v541 = vsel %vm534, %v24, 0.0
  %542 = vadd.xlane.f32.xlu0 %v541
  %v543 = vpop.xlane.xlu0 %542
  %v544 = vsel %vm534, %v25, 0.0
  %545 = vadd.xlane.f32.xlu0 %v544
  %v546 = vpop.xlane.xlu0 %545
  %v547 = vsel %vm534, %v26, 0.0
  %548 = vadd.xlane.f32.xlu0 %v547
  %v549 = vpop.xlane.xlu0 %548
  %v550 = vsel %vm534, %v27, 0.0
  %551 = vadd.xlane.f32.xlu0 %v550
  %v552 = vpop.xlane.xlu0 %551
  %v553 = vsel %vm534, %v28, 0.0
  %554 = vadd.xlane.f32.xlu0 %v553
  %v555 = vpop.xlane.xlu0 %554
  %v556 = vsel %vm534, %v29, 0.0
  %557 = vadd.xlane.f32.xlu0 %v556
  %v558 = vpop.xlane.xlu0 %557
  %v559 = vsel %vm534, %v30, 0.0
  %560 = vadd.xlane.f32.xlu0 %v559
  %v561 = vpop.xlane.xlu0 %560
  %v562 = vsel %vm534, %v31, 0.0
  %563 = vadd.xlane.f32.xlu0 %v562
  %v564 = vpop.xlane.xlu0 %563
  %v565 = vsel %vm534, %v32, 0.0
  %566 = vadd.xlane.f32.xlu0 %v565
  %v567 = vpop.xlane.xlu0 %566
  %v568 = vsel %vm534, %v33, 0.0
  %569 = vadd.xlane.f32.xlu0 %v568
  %v570 = vpop.xlane.xlu0 %569
  %v571 = vsel %vm534, %v34, 0.0
  %572 = vadd.xlane.f32.xlu0 %v571
  %v573 = vpop.xlane.xlu0 %572
  %v574 = vsel %vm534, %v35, 0.0
  %575 = vadd.xlane.f32.xlu0 %v574
  %v576 = vpop.xlane.xlu0 %575
  %v577 = vsel %vm534, %v36, 0.0
  %578 = vadd.xlane.f32.xlu0 %v577
  %v579 = vpop.xlane.xlu0 %578
  %v580 = vsel %vm534, %v37, 0.0
  %581 = vadd.xlane.f32.xlu0 %v580
  %v582 = vpop.xlane.xlu0 %581
  %v583 = vsel %vm534, %v38, 0.0
  %584 = vadd.xlane.f32.xlu0 %v583
  %v585 = vpop.xlane.xlu0 %584
  %v586 = vsel %vm534, %v39, 0.0
  %587 = vadd.xlane.f32.xlu0 %v586
  %v588 = vpop.xlane.xlu0 %587
  %v589 = vsel %vm534, %v40, 0.0
  %590 = vadd.xlane.f32.xlu0 %v589
  %v591 = vpop.xlane.xlu0 %590
  %v592 = vsel %vm534, %v41, 0.0
  %593 = vadd.xlane.f32.xlu0 %v592
  %v594 = vpop.xlane.xlu0 %593
  %v595 = vsel %vm534, %v42, 0.0
  %596 = vadd.xlane.f32.xlu0 %v595
  %v597 = vpop.xlane.xlu0 %596
  %v598 = vsel %vm534, %v43, 0.0
  %599 = vadd.xlane.f32.xlu0 %v598
  %v600 = vpop.xlane.xlu0 %599
  %v601 = vsel %vm534, %v44, 0.0
  %602 = vadd.xlane.f32.xlu0 %v601
  %v603 = vpop.xlane.xlu0 %602
  %v604 = vsel %vm534, %v45, 0.0
  %605 = vadd.xlane.f32.xlu0 %v604
  %v606 = vpop.xlane.xlu0 %605
  %v607 = vsel %vm534, %v46, 0.0
  %608 = vadd.xlane.f32.xlu0 %v607
  %v609 = vpop.xlane.xlu0 %608
  %v610 = vsel %vm534, %v47, 0.0
  %611 = vadd.xlane.f32.xlu0 %v610
  %v612 = vpop.xlane.xlu0 %611
  %v613 = vsel %vm534, %v48, 0.0
  %614 = vadd.xlane.f32.xlu0 %v613
  %v615 = vpop.xlane.xlu0 %614
  %v616 = vsel %vm534, %v49, 0.0
  %617 = vadd.xlane.f32.xlu0 %v616
  %v618 = vpop.xlane.xlu0 %617
  %v619 = vsel %vm534, %v50, 0.0
  %620 = vadd.xlane.f32.xlu0 %v619
  %v621 = vpop.xlane.xlu0 %620
  %v622 = vsel %vm534, %v51, 0.0
  %623 = vadd.xlane.f32.xlu0 %v622
  %v624 = vpop.xlane.xlu0 %623
  %v625 = vsel %vm534, %v52, 0.0
  %626 = vadd.xlane.f32.xlu0 %v625
  %v627 = vpop.xlane.xlu0 %626
  %v628 = vsel %vm534, %v53, 0.0
  %629 = vadd.xlane.f32.xlu0 %v628
  %v630 = vpop.xlane.xlu0 %629
  %v631 = vsel %vm534, %v54, 0.0
  %632 = vadd.xlane.f32.xlu0 %v631
  %v633 = vpop.xlane.xlu0 %632
  %v634 = vsel %vm534, %v55, 0.0
  %635 = vadd.xlane.f32.xlu0 %v634
  %v636 = vpop.xlane.xlu0 %635
  %v637 = vsel %vm534, %v56, 0.0
  %638 = vadd.xlane.f32.xlu0 %v637
  %v639 = vpop.xlane.xlu0 %638
  %v640 = vsel %vm534, %v57, 0.0
  %641 = vadd.xlane.f32.xlu0 %v640
  %v642 = vpop.xlane.xlu0 %641
  %v643 = vsel %vm534, %v58, 0.0
  %644 = vadd.xlane.f32.xlu0 %v643
  %v645 = vpop.xlane.xlu0 %644
  %v646 = vsel %vm534, %v59, 0.0
  %647 = vadd.xlane.f32.xlu0 %v646
  %v648 = vpop.xlane.xlu0 %647
  %v649 = vsel %vm534, %v60, 0.0
  %650 = vadd.xlane.f32.xlu0 %v649
  %v651 = vpop.xlane.xlu0 %650
  %v652 = vsel %vm534, %v61, 0.0
  %653 = vadd.xlane.f32.xlu0 %v652
  %v654 = vpop.xlane.xlu0 %653
  %v655 = vsel %vm534, %v62, 0.0
  %656 = vadd.xlane.f32.xlu0 %v655
  %v657 = vpop.xlane.xlu0 %656
  %v658 = vsel %vm534, %v63, 0.0
  %659 = vadd.xlane.f32.xlu0 %v658
  %v660 = vpop.xlane.xlu0 %659
  %v661 = vsel %vm534, %v64, 0.0
  %662 = vadd.xlane.f32.xlu0 %v661
  %v663 = vpop.xlane.xlu0 %662
  %v664 = vsel %vm534, %v65, 0.0
  %665 = vadd.xlane.f32.xlu0 %v664
  %v666 = vpop.xlane.xlu0 %665
  %v667 = vsel %vm534, %v66, 0.0
  %668 = vadd.xlane.f32.xlu0 %v667
  %v669 = vpop.xlane.xlu0 %668
  %v670 = vsel %vm534, %v67, 0.0
  %671 = vadd.xlane.f32.xlu0 %v670
  %v672 = vpop.xlane.xlu0 %671
  %v673 = vsel %vm534, %v68, 0.0
  %674 = vadd.xlane.f32.xlu0 %v673
  %v675 = vpop.xlane.xlu0 %674
  %v676 = vsel %vm534, %v69, 0.0
  %677 = vadd.xlane.f32.xlu0 %v676
  %v678 = vpop.xlane.xlu0 %677
  %v679 = vsel %vm534, %v70, 0.0
  %680 = vadd.xlane.f32.xlu0 %v679
  %v681 = vpop.xlane.xlu0 %680
  %v682 = vsel %vm534, %v71, 0.0
  %683 = vadd.xlane.f32.xlu0 %v682
  %v684 = vpop.xlane.xlu0 %683
  %v685 = vsel %vm534, %v72, 0.0
  %686 = vadd.xlane.f32.xlu0 %v685
  %v687 = vpop.xlane.xlu0 %686
  %v688 = vsel %vm534, %v73, 0.0
  %689 = vadd.xlane.f32.xlu0 %v688
  %v690 = vpop.xlane.xlu0 %689
  %v691 = vsel %vm534, %v74, 0.0
  %692 = vadd.xlane.f32.xlu0 %v691
  %v693 = vpop.xlane.xlu0 %692
  %v694 = vsel %vm534, %v75, 0.0
  %695 = vadd.xlane.f32.xlu0 %v694
  %v696 = vpop.xlane.xlu0 %695
  %v697 = vsel %vm534, %v76, 0.0
  %698 = vadd.xlane.f32.xlu0 %v697
  %v699 = vpop.xlane.xlu0 %698
  %v700 = vsel %vm534, %v77, 0.0
  %701 = vadd.xlane.f32.xlu0 %v700
  %v702 = vpop.xlane.xlu0 %701
  %v703 = vsel %vm534, %v78, 0.0
  %704 = vadd.xlane.f32.xlu0 %v703
  %v705 = vpop.xlane.xlu0 %704
  %v706 = vsel %vm534, %v79, 0.0
  %707 = vadd.xlane.f32.xlu0 %v706
  %v708 = vpop.xlane.xlu0 %707
  %v709 = vsel %vm534, %v80, 0.0
  %710 = vadd.xlane.f32.xlu0 %v709
  %v711 = vpop.xlane.xlu0 %710
  %v712 = vsel %vm534, %v81, 0.0
  %713 = vadd.xlane.f32.xlu0 %v712
  %v714 = vpop.xlane.xlu0 %713
  %v715 = vsel %vm534, %v82, 0.0
  %716 = vadd.xlane.f32.xlu0 %v715
  %v717 = vpop.xlane.xlu0 %716
  %v718 = vsel %vm534, %v83, 0.0
  %719 = vadd.xlane.f32.xlu0 %v718
  %v720 = vpop.xlane.xlu0 %719
  %v721 = vsel %vm534, %v84, 0.0
  %722 = vadd.xlane.f32.xlu0 %v721
  %v723 = vpop.xlane.xlu0 %722
  %v724 = vsel %vm534, %v85, 0.0
  %725 = vadd.xlane.f32.xlu0 %v724
  %v726 = vpop.xlane.xlu0 %725
  %v727 = vsel %vm534, %v86, 0.0
  %728 = vadd.xlane.f32.xlu0 %v727
  %v729 = vpop.xlane.xlu0 %728
  %v730 = vsel %vm534, %v87, 0.0
  %731 = vadd.xlane.f32.xlu0 %v730
  %v732 = vpop.xlane.xlu0 %731
  %v733 = vsel %vm534, %v88, 0.0
  %734 = vadd.xlane.f32.xlu0 %v733
  %v735 = vpop.xlane.xlu0 %734
  %v736 = vsel %vm534, %v89, 0.0
  %737 = vadd.xlane.f32.xlu0 %v736
  %v738 = vpop.xlane.xlu0 %737
  %v739 = vsel %vm534, %v90, 0.0
  %740 = vadd.xlane.f32.xlu0 %v739
  %v741 = vpop.xlane.xlu0 %740
  %v742 = vsel %vm534, %v91, 0.0
  %743 = vadd.xlane.f32.xlu0 %v742
  %v744 = vpop.xlane.xlu0 %743
  %v745 = vsel %vm534, %v92, 0.0
  %746 = vadd.xlane.f32.xlu0 %v745
  %v747 = vpop.xlane.xlu0 %746
  %v748 = vsel %vm534, %v93, 0.0
  %749 = vadd.xlane.f32.xlu0 %v748
  %v750 = vpop.xlane.xlu0 %749
  %v751 = vsel %vm534, %v94, 0.0
  %752 = vadd.xlane.f32.xlu0 %v751
  %v753 = vpop.xlane.xlu0 %752
  %v754 = vsel %vm534, %v95, 0.0
  %755 = vadd.xlane.f32.xlu0 %v754
  %v756 = vpop.xlane.xlu0 %755
  %v757 = vsel %vm534, %v96, 0.0
  %758 = vadd.xlane.f32.xlu0 %v757
  %v759 = vpop.xlane.xlu0 %758
  %v760 = vsel %vm534, %v97, 0.0
  %761 = vadd.xlane.f32.xlu0 %v760
  %v762 = vpop.xlane.xlu0 %761
  %v763 = vsel %vm534, %v98, 0.0
  %764 = vadd.xlane.f32.xlu0 %v763
  %v765 = vpop.xlane.xlu0 %764
  %v766 = vsel %vm534, %v99, 0.0
  %767 = vadd.xlane.f32.xlu0 %v766
  %v768 = vpop.xlane.xlu0 %767
  %v769 = vsel %vm534, %v100, 0.0
  %770 = vadd.xlane.f32.xlu0 %v769
  %v771 = vpop.xlane.xlu0 %770
  %v772 = vsel %vm534, %v101, 0.0
  %773 = vadd.xlane.f32.xlu0 %v772
  %v774 = vpop.xlane.xlu0 %773
  %v775 = vsel %vm534, %v102, 0.0
  %776 = vadd.xlane.f32.xlu0 %v775
  %v777 = vpop.xlane.xlu0 %776
  %v778 = vsel %vm534, %v103, 0.0
  %779 = vadd.xlane.f32.xlu0 %v778
  %v780 = vpop.xlane.xlu0 %779
  %v781 = vsel %vm534, %v104, 0.0
  %782 = vadd.xlane.f32.xlu0 %v781
  %v783 = vpop.xlane.xlu0 %782
  %v784 = vsel %vm534, %v105, 0.0
  %785 = vadd.xlane.f32.xlu0 %v784
  %v786 = vpop.xlane.xlu0 %785
  %v787 = vsel %vm534, %v106, 0.0
  %788 = vadd.xlane.f32.xlu0 %v787
  %v789 = vpop.xlane.xlu0 %788
  %v790 = vsel %vm534, %v107, 0.0
  %791 = vadd.xlane.f32.xlu0 %v790
  %v792 = vpop.xlane.xlu0 %791
  %v793 = vsel %vm534, %v108, 0.0
  %794 = vadd.xlane.f32.xlu0 %v793
  %v795 = vpop.xlane.xlu0 %794
  %v796 = vsel %vm534, %v109, 0.0
  %797 = vadd.xlane.f32.xlu0 %v796
  %v798 = vpop.xlane.xlu0 %797
  %v799 = vsel %vm534, %v110, 0.0
  %800 = vadd.xlane.f32.xlu0 %v799
  %v801 = vpop.xlane.xlu0 %800
  %v802 = vsel %vm534, %v111, 0.0
  %803 = vadd.xlane.f32.xlu0 %v802
  %v804 = vpop.xlane.xlu0 %803
  %v805 = vsel %vm534, %v112, 0.0
  %806 = vadd.xlane.f32.xlu0 %v805
  %v807 = vpop.xlane.xlu0 %806
  %v808 = vsel %vm534, %v113, 0.0
  %809 = vadd.xlane.f32.xlu0 %v808
  %v810 = vpop.xlane.xlu0 %809
  %v811 = vsel %vm534, %v114, 0.0
  %812 = vadd.xlane.f32.xlu0 %v811
  %v813 = vpop.xlane.xlu0 %812
  %v814 = vsel %vm534, %v115, 0.0
  %815 = vadd.xlane.f32.xlu0 %v814
  %v816 = vpop.xlane.xlu0 %815
  %v817 = vsel %vm534, %v116, 0.0
  %818 = vadd.xlane.f32.xlu0 %v817
  %v819 = vpop.xlane.xlu0 %818
  %v820 = vsel %vm534, %v117, 0.0
  %821 = vadd.xlane.f32.xlu0 %v820
  %v822 = vpop.xlane.xlu0 %821
  %v823 = vsel %vm534, %v118, 0.0
  %824 = vadd.xlane.f32.xlu0 %v823
  %v825 = vpop.xlane.xlu0 %824
  %v826 = vsel %vm534, %v119, 0.0
  %827 = vadd.xlane.f32.xlu0 %v826
  %v828 = vpop.xlane.xlu0 %827
  %v829 = vsel %vm534, %v120, 0.0
  %830 = vadd.xlane.f32.xlu0 %v829
  %v831 = vpop.xlane.xlu0 %830
  %v832 = vsel %vm534, %v121, 0.0
  %833 = vadd.xlane.f32.xlu0 %v832
  %v834 = vpop.xlane.xlu0 %833
  %v835 = vsel %vm534, %v122, 0.0
  %836 = vadd.xlane.f32.xlu0 %v835
  %v837 = vpop.xlane.xlu0 %836
  %v838 = vsel %vm534, %v123, 0.0
  %839 = vadd.xlane.f32.xlu0 %v838
  %v840 = vpop.xlane.xlu0 %839
  %v841 = vsel %vm534, %v124, 0.0
  %842 = vadd.xlane.f32.xlu0 %v841
  %v843 = vpop.xlane.xlu0 %842
  %v844 = vsel %vm534, %v125, 0.0
  %845 = vadd.xlane.f32.xlu0 %v844
  %v846 = vpop.xlane.xlu0 %845
  %v847 = vsel %vm534, %v126, 0.0
  %848 = vadd.xlane.f32.xlu0 %v847
  %v849 = vpop.xlane.xlu0 %848
  %v850 = vsel %vm534, %v127, 0.0
  %851 = vadd.xlane.f32.xlu0 %v850
  %v852 = vpop.xlane.xlu0 %851
  %v853 = vsel %vm534, %v128, 0.0
  %854 = vadd.xlane.f32.xlu0 %v853
  %v855 = vpop.xlane.xlu0 %854
  %v856 = vsel %vm534, %v129, 0.0
  %857 = vadd.xlane.f32.xlu0 %v856
  %v858 = vpop.xlane.xlu0 %857
  %v859 = vsel %vm534, %v130, 0.0
  %860 = vadd.xlane.f32.xlu0 %v859
  %v861 = vpop.xlane.xlu0 %860
  %v862 = vsel %vm534, %v131, 0.0
  %863 = vadd.xlane.f32.xlu0 %v862
  %v864 = vpop.xlane.xlu0 %863
  %v865 = vsel %vm534, %v132, 0.0
  %866 = vadd.xlane.f32.xlu0 %v865
  %v867 = vpop.xlane.xlu0 %866
  %v868 = vsel %vm534, %v133, 0.0
  %869 = vadd.xlane.f32.xlu0 %v868
  %v870 = vpop.xlane.xlu0 %869
  %v871 = vsel %vm534, %v134, 0.0
  %872 = vadd.xlane.f32.xlu0 %v871
  %v873 = vpop.xlane.xlu0 %872
  %v874 = vsel %vm534, %v135, 0.0
  %875 = vadd.xlane.f32.xlu0 %v874
  %v876 = vpop.xlane.xlu0 %875
  %v877 = vsel %vm534, %v136, 0.0
  %878 = vadd.xlane.f32.xlu0 %v877
  %v879 = vpop.xlane.xlu0 %878
  %v880 = vsel %vm534, %v137, 0.0
  %881 = vadd.xlane.f32.xlu0 %v880
  %v882 = vpop.xlane.xlu0 %881
  %v883 = vsel %vm534, %v138, 0.0
  %884 = vadd.xlane.f32.xlu0 %v883
  %v885 = vpop.xlane.xlu0 %884
  %v886 = vsel %vm534, %v139, 0.0
  %887 = vadd.xlane.f32.xlu0 %v886
  %v888 = vpop.xlane.xlu0 %887
  %v889 = vsel %vm534, %v140, 0.0
  %890 = vadd.xlane.f32.xlu0 %v889
  %v891 = vpop.xlane.xlu0 %890
  %v892 = vsel %vm534, %v141, 0.0
  %893 = vadd.xlane.f32.xlu0 %v892
  %v894 = vpop.xlane.xlu0 %893
  %v895 = vsel %vm534, %v142, 0.0
  %896 = vadd.xlane.f32.xlu0 %v895
  %v897 = vpop.xlane.xlu0 %896
  %v898 = vsel %vm534, %v143, 0.0
  %899 = vadd.xlane.f32.xlu0 %v898
  %v900 = vpop.xlane.xlu0 %899
  %v901 = vsel %vm534, %v144, 0.0
  %902 = vadd.xlane.f32.xlu0 %v901
  %v903 = vpop.xlane.xlu0 %902
  %v904 = vsel %vm534, %v145, 0.0
  %905 = vadd.xlane.f32.xlu0 %v904
  %v906 = vpop.xlane.xlu0 %905
  %v907 = vsel %vm534, %v146, 0.0
  %908 = vadd.xlane.f32.xlu0 %v907
  %v909 = vpop.xlane.xlu0 %908
  %v910 = vsel %vm534, %v147, 0.0
  %911 = vadd.xlane.f32.xlu0 %v910
  %v912 = vpop.xlane.xlu0 %911
  %v913 = vsel %vm534, %v148, 0.0
  %914 = vadd.xlane.f32.xlu0 %v913
  %v915 = vpop.xlane.xlu0 %914
  %v916 = vsel %vm534, %v149, 0.0
  %917 = vadd.xlane.f32.xlu0 %v916
  %v918 = vpop.xlane.xlu0 %917
  %v919 = vsel %vm534, %v150, 0.0
  %920 = vadd.xlane.f32.xlu0 %v919
  %v921 = vpop.xlane.xlu0 %920
  %v922 = vsel %vm534, %v151, 0.0
  %923 = vadd.xlane.f32.xlu0 %v922
  %v924 = vpop.xlane.xlu0 %923
  %v925 = vsel %vm534, %v152, 0.0
  %926 = vadd.xlane.f32.xlu0 %v925
  %v927 = vpop.xlane.xlu0 %926
  %v928 = vsel %vm534, %v153, 0.0
  %929 = vadd.xlane.f32.xlu0 %v928
  %v930 = vpop.xlane.xlu0 %929
  %v931 = vsel %vm534, %v154, 0.0
  %932 = vadd.xlane.f32.xlu0 %v931
  %v933 = vpop.xlane.xlu0 %932
  %v934 = vsel %vm534, %v155, 0.0
  %935 = vadd.xlane.f32.xlu0 %v934
  %v936 = vpop.xlane.xlu0 %935
  %v937 = vsel %vm534, %v156, 0.0
  %938 = vadd.xlane.f32.xlu0 %v937
  %v939 = vpop.xlane.xlu0 %938
  %v940 = vsel %vm534, %v157, 0.0
  %941 = vadd.xlane.f32.xlu0 %v940
  %v942 = vpop.xlane.xlu0 %941
  %v943 = vsel %vm534, %v158, 0.0
  %944 = vadd.xlane.f32.xlu0 %v943
  %v945 = vpop.xlane.xlu0 %944
  %v946 = vsel %vm534, %v159, 0.0
  %947 = vadd.xlane.f32.xlu0 %v946
  %v948 = vpop.xlane.xlu0 %947
  %v949 = vsel %vm534, %v160, 0.0
  %950 = vadd.xlane.f32.xlu0 %v949
  %v951 = vpop.xlane.xlu0 %950
  %v952 = vsel %vm534, %v161, 0.0
  %953 = vadd.xlane.f32.xlu0 %v952
  %v954 = vpop.xlane.xlu0 %953
  %v955 = vsel %vm534, %v162, 0.0
  %956 = vadd.xlane.f32.xlu0 %v955
  %v957 = vpop.xlane.xlu0 %956
  %v958 = vsel %vm534, %v163, 0.0
  %959 = vadd.xlane.f32.xlu0 %v958
  %v960 = vpop.xlane.xlu0 %959
  %v961 = vsel %vm534, %v164, 0.0
  %962 = vadd.xlane.f32.xlu0 %v961
  %v963 = vpop.xlane.xlu0 %962
  %v964 = vsel %vm534, %v165, 0.0
  %965 = vadd.xlane.f32.xlu0 %v964
  %v966 = vpop.xlane.xlu0 %965
  %v967 = vsel %vm534, %v166, 0.0
  %968 = vadd.xlane.f32.xlu0 %v967
  %v969 = vpop.xlane.xlu0 %968
  %v970 = vsel %vm534, %v167, 0.0
  %971 = vadd.xlane.f32.xlu0 %v970
  %v972 = vpop.xlane.xlu0 %971
  %v973 = vsel %vm534, %v168, 0.0
  %974 = vadd.xlane.f32.xlu0 %v973
  %v975 = vpop.xlane.xlu0 %974
  %v976 = vsel %vm534, %v169, 0.0
  %977 = vadd.xlane.f32.xlu0 %v976
  %v978 = vpop.xlane.xlu0 %977
  %v979 = vsel %vm534, %v170, 0.0
  %980 = vadd.xlane.f32.xlu0 %v979
  %v981 = vpop.xlane.xlu0 %980
  %v982 = vsel %vm534, %v171, 0.0
  %983 = vadd.xlane.f32.xlu0 %v982
  %v984 = vpop.xlane.xlu0 %983
  %v985 = vsel %vm534, %v172, 0.0
  %986 = vadd.xlane.f32.xlu0 %v985
  %v987 = vpop.xlane.xlu0 %986
  %v988 = vsel %vm534, %v173, 0.0
  %989 = vadd.xlane.f32.xlu0 %v988
  %v990 = vpop.xlane.xlu0 %989
  %v991 = vsel %vm534, %v174, 0.0
  %992 = vadd.xlane.f32.xlu0 %v991
  %v993 = vpop.xlane.xlu0 %992
  %v994 = vsel %vm534, %v175, 0.0
  %995 = vadd.xlane.f32.xlu0 %v994
  %v996 = vpop.xlane.xlu0 %995
  %v997 = vsel %vm534, %v176, 0.0
  %998 = vadd.xlane.f32.xlu0 %v997
  %v999 = vpop.xlane.xlu0 %998
  %v1000 = vsel %vm534, %v177, 0.0
  %1001 = vadd.xlane.f32.xlu0 %v1000
  %v1002 = vpop.xlane.xlu0 %1001
  %v1003 = vsel %vm534, %v178, 0.0
  %1004 = vadd.xlane.f32.xlu0 %v1003
  %v1005 = vpop.xlane.xlu0 %1004
  %v1006 = vsel %vm534, %v179, 0.0
  %1007 = vadd.xlane.f32.xlu0 %v1006
  %v1008 = vpop.xlane.xlu0 %1007
  %v1009 = vsel %vm534, %v180, 0.0
  %1010 = vadd.xlane.f32.xlu0 %v1009
  %v1011 = vpop.xlane.xlu0 %1010
  %v1012 = vsel %vm534, %v181, 0.0
  %1013 = vadd.xlane.f32.xlu0 %v1012
  %v1014 = vpop.xlane.xlu0 %1013
  %v1015 = vsel %vm534, %v182, 0.0
  %1016 = vadd.xlane.f32.xlu0 %v1015
  %v1017 = vpop.xlane.xlu0 %1016
  %v1018 = vsel %vm534, %v183, 0.0
  %1019 = vadd.xlane.f32.xlu0 %v1018
  %v1020 = vpop.xlane.xlu0 %1019
  %v1021 = vsel %vm534, %v184, 0.0
  %1022 = vadd.xlane.f32.xlu0 %v1021
  %v1023 = vpop.xlane.xlu0 %1022
  %v1024 = vsel %vm534, %v185, 0.0
  %1025 = vadd.xlane.f32.xlu0 %v1024
  %v1026 = vpop.xlane.xlu0 %1025
  %v1027 = vsel %vm534, %v186, 0.0
  %1028 = vadd.xlane.f32.xlu0 %v1027
  %v1029 = vpop.xlane.xlu0 %1028
  %v1030 = vsel %vm534, %v187, 0.0
  %1031 = vadd.xlane.f32.xlu0 %v1030
  %v1032 = vpop.xlane.xlu0 %1031
  %v1033 = vsel %vm534, %v188, 0.0
  %1034 = vadd.xlane.f32.xlu0 %v1033
  %v1035 = vpop.xlane.xlu0 %1034
  %v1036 = vsel %vm534, %v189, 0.0
  %1037 = vadd.xlane.f32.xlu0 %v1036
  %v1038 = vpop.xlane.xlu0 %1037
  %v1039 = vsel %vm534, %v190, 0.0
  %1040 = vadd.xlane.f32.xlu0 %v1039
  %v1041 = vpop.xlane.xlu0 %1040
  %v1042 = vsel %vm534, %v191, 0.0
  %1043 = vadd.xlane.f32.xlu0 %v1042
  %v1044 = vpop.xlane.xlu0 %1043
  %v1045 = vsel %vm534, %v192, 0.0
  %1046 = vadd.xlane.f32.xlu0 %v1045
  %v1047 = vpop.xlane.xlu0 %1046
  %v1048 = vsel %vm534, %v193, 0.0
  %1049 = vadd.xlane.f32.xlu0 %v1048
  %v1050 = vpop.xlane.xlu0 %1049
  %v1051 = vsel %vm534, %v194, 0.0
  %1052 = vadd.xlane.f32.xlu0 %v1051
  %v1053 = vpop.xlane.xlu0 %1052
  %v1054 = vsel %vm534, %v195, 0.0
  %1055 = vadd.xlane.f32.xlu0 %v1054
  %v1056 = vpop.xlane.xlu0 %1055
  %v1057 = vsel %vm534, %v196, 0.0
  %1058 = vadd.xlane.f32.xlu0 %v1057
  %v1059 = vpop.xlane.xlu0 %1058
  %v1060 = vsel %vm534, %v197, 0.0
  %1061 = vadd.xlane.f32.xlu0 %v1060
  %v1062 = vpop.xlane.xlu0 %1061
  %v1063 = vsel %vm534, %v198, 0.0
  %1064 = vadd.xlane.f32.xlu0 %v1063
  %v1065 = vpop.xlane.xlu0 %1064
  %v1066 = vsel %vm534, %v199, 0.0
  %1067 = vadd.xlane.f32.xlu0 %v1066
  %v1068 = vpop.xlane.xlu0 %1067
  %v1069 = vsel %vm534, %v200, 0.0
  %1070 = vadd.xlane.f32.xlu0 %v1069
  %v1071 = vpop.xlane.xlu0 %1070
  %v1072 = vsel %vm534, %v201, 0.0
  %1073 = vadd.xlane.f32.xlu0 %v1072
  %v1074 = vpop.xlane.xlu0 %1073
  %v1075 = vsel %vm534, %v202, 0.0
  %1076 = vadd.xlane.f32.xlu0 %v1075
  %v1077 = vpop.xlane.xlu0 %1076
  %v1078 = vsel %vm534, %v203, 0.0
  %1079 = vadd.xlane.f32.xlu0 %v1078
  %v1080 = vpop.xlane.xlu0 %1079
  %v1081 = vsel %vm534, %v204, 0.0
  %1082 = vadd.xlane.f32.xlu0 %v1081
  %v1083 = vpop.xlane.xlu0 %1082
  %v1084 = vsel %vm534, %v205, 0.0
  %1085 = vadd.xlane.f32.xlu0 %v1084
  %v1086 = vpop.xlane.xlu0 %1085
  %v1087 = vsel %vm534, %v206, 0.0
  %1088 = vadd.xlane.f32.xlu0 %v1087
  %v1089 = vpop.xlane.xlu0 %1088
  %v1090 = vsel %vm534, %v207, 0.0
  %1091 = vadd.xlane.f32.xlu0 %v1090
  %v1092 = vpop.xlane.xlu0 %1091
  %v1093 = vsel %vm534, %v208, 0.0
  %1094 = vadd.xlane.f32.xlu0 %v1093
  %v1095 = vpop.xlane.xlu0 %1094
  %v1096 = vsel %vm534, %v209, 0.0
  %1097 = vadd.xlane.f32.xlu0 %v1096
  %v1098 = vpop.xlane.xlu0 %1097
  %v1099 = vsel %vm534, %v210, 0.0
  %1100 = vadd.xlane.f32.xlu0 %v1099
  %v1101 = vpop.xlane.xlu0 %1100
  %v1102 = vsel %vm534, %v211, 0.0
  %1103 = vadd.xlane.f32.xlu0 %v1102
  %v1104 = vpop.xlane.xlu0 %1103
  %v1105 = vsel %vm534, %v212, 0.0
  %1106 = vadd.xlane.f32.xlu0 %v1105
  %v1107 = vpop.xlane.xlu0 %1106
  %v1108 = vsel %vm534, %v213, 0.0
  %1109 = vadd.xlane.f32.xlu0 %v1108
  %v1110 = vpop.xlane.xlu0 %1109
  %v1111 = vsel %vm534, %v214, 0.0
  %1112 = vadd.xlane.f32.xlu0 %v1111
  %v1113 = vpop.xlane.xlu0 %1112
  %v1114 = vsel %vm534, %v215, 0.0
  %1115 = vadd.xlane.f32.xlu0 %v1114
  %v1116 = vpop.xlane.xlu0 %1115
  %v1117 = vsel %vm534, %v216, 0.0
  %1118 = vadd.xlane.f32.xlu0 %v1117
  %v1119 = vpop.xlane.xlu0 %1118
  %v1120 = vsel %vm534, %v217, 0.0
  %1121 = vadd.xlane.f32.xlu0 %v1120
  %v1122 = vpop.xlane.xlu0 %1121
  %v1123 = vsel %vm534, %v218, 0.0
  %1124 = vadd.xlane.f32.xlu0 %v1123
  %v1125 = vpop.xlane.xlu0 %1124
  %v1126 = vsel %vm534, %v219, 0.0
  %1127 = vadd.xlane.f32.xlu0 %v1126
  %v1128 = vpop.xlane.xlu0 %1127
  %v1129 = vsel %vm534, %v220, 0.0
  %1130 = vadd.xlane.f32.xlu0 %v1129
  %v1131 = vpop.xlane.xlu0 %1130
  %v1132 = vsel %vm534, %v221, 0.0
  %1133 = vadd.xlane.f32.xlu0 %v1132
  %v1134 = vpop.xlane.xlu0 %1133
  %v1135 = vsel %vm534, %v222, 0.0
  %1136 = vadd.xlane.f32.xlu0 %v1135
  %v1137 = vpop.xlane.xlu0 %1136
  %v1138 = vsel %vm534, %v223, 0.0
  %1139 = vadd.xlane.f32.xlu0 %v1138
  %v1140 = vpop.xlane.xlu0 %1139
  %v1141 = vsel %vm534, %v224, 0.0
  %1142 = vadd.xlane.f32.xlu0 %v1141
  %v1143 = vpop.xlane.xlu0 %1142
  %v1144 = vsel %vm534, %v225, 0.0
  %1145 = vadd.xlane.f32.xlu0 %v1144
  %v1146 = vpop.xlane.xlu0 %1145
  %v1147 = vsel %vm534, %v226, 0.0
  %1148 = vadd.xlane.f32.xlu0 %v1147
  %v1149 = vpop.xlane.xlu0 %1148
  %v1150 = vsel %vm534, %v227, 0.0
  %1151 = vadd.xlane.f32.xlu0 %v1150
  %v1152 = vpop.xlane.xlu0 %1151
  %v1153 = vsel %vm534, %v228, 0.0
  %1154 = vadd.xlane.f32.xlu0 %v1153
  %v1155 = vpop.xlane.xlu0 %1154
  %v1156 = vsel %vm534, %v229, 0.0
  %1157 = vadd.xlane.f32.xlu0 %v1156
  %v1158 = vpop.xlane.xlu0 %1157
  %v1159 = vsel %vm534, %v230, 0.0
  %1160 = vadd.xlane.f32.xlu0 %v1159
  %v1161 = vpop.xlane.xlu0 %1160
  %v1162 = vsel %vm534, %v231, 0.0
  %1163 = vadd.xlane.f32.xlu0 %v1162
  %v1164 = vpop.xlane.xlu0 %1163
  %v1165 = vsel %vm534, %v232, 0.0
  %1166 = vadd.xlane.f32.xlu0 %v1165
  %v1167 = vpop.xlane.xlu0 %1166
  %v1168 = vsel %vm534, %v233, 0.0
  %1169 = vadd.xlane.f32.xlu0 %v1168
  %v1170 = vpop.xlane.xlu0 %1169
  %v1171 = vsel %vm534, %v234, 0.0
  %1172 = vadd.xlane.f32.xlu0 %v1171
  %v1173 = vpop.xlane.xlu0 %1172
  %v1174 = vsel %vm534, %v235, 0.0
  %1175 = vadd.xlane.f32.xlu0 %v1174
  %v1176 = vpop.xlane.xlu0 %1175
  %v1177 = vsel %vm534, %v236, 0.0
  %1178 = vadd.xlane.f32.xlu0 %v1177
  %v1179 = vpop.xlane.xlu0 %1178
  %v1180 = vsel %vm534, %v237, 0.0
  %1181 = vadd.xlane.f32.xlu0 %v1180
  %v1182 = vpop.xlane.xlu0 %1181
  %v1183 = vsel %vm534, %v238, 0.0
  %1184 = vadd.xlane.f32.xlu0 %v1183
  %v1185 = vpop.xlane.xlu0 %1184
  %v1186 = vsel %vm534, %v239, 0.0
  %1187 = vadd.xlane.f32.xlu0 %v1186
  %v1188 = vpop.xlane.xlu0 %1187
  %v1189 = vsel %vm534, %v240, 0.0
  %1190 = vadd.xlane.f32.xlu0 %v1189
  %v1191 = vpop.xlane.xlu0 %1190
  %v1192 = vsel %vm534, %v241, 0.0
  %1193 = vadd.xlane.f32.xlu0 %v1192
  %v1194 = vpop.xlane.xlu0 %1193
  %v1195 = vsel %vm534, %v242, 0.0
  %1196 = vadd.xlane.f32.xlu0 %v1195
  %v1197 = vpop.xlane.xlu0 %1196
  %v1198 = vsel %vm534, %v243, 0.0
  %1199 = vadd.xlane.f32.xlu0 %v1198
  %v1200 = vpop.xlane.xlu0 %1199
  %v1201 = vsel %vm534, %v244, 0.0
  %1202 = vadd.xlane.f32.xlu0 %v1201
  %v1203 = vpop.xlane.xlu0 %1202
  %v1204 = vsel %vm534, %v245, 0.0
  %1205 = vadd.xlane.f32.xlu0 %v1204
  %v1206 = vpop.xlane.xlu0 %1205
  %v1207 = vsel %vm534, %v246, 0.0
  %1208 = vadd.xlane.f32.xlu0 %v1207
  %v1209 = vpop.xlane.xlu0 %1208
  %v1210 = vsel %vm534, %v247, 0.0
  %1211 = vadd.xlane.f32.xlu0 %v1210
  %v1212 = vpop.xlane.xlu0 %1211
  %v1213 = vsel %vm534, %v248, 0.0
  %1214 = vadd.xlane.f32.xlu0 %v1213
  %v1215 = vpop.xlane.xlu0 %1214
  %v1216 = vsel %vm534, %v249, 0.0
  %1217 = vadd.xlane.f32.xlu0 %v1216
  %v1218 = vpop.xlane.xlu0 %1217
  %v1219 = vsel %vm534, %v250, 0.0
  %1220 = vadd.xlane.f32.xlu0 %v1219
  %v1221 = vpop.xlane.xlu0 %1220
  %v1222 = vsel %vm534, %v251, 0.0
  %1223 = vadd.xlane.f32.xlu0 %v1222
  %v1224 = vpop.xlane.xlu0 %1223
  %v1225 = vsel %vm534, %v252, 0.0
  %1226 = vadd.xlane.f32.xlu0 %v1225
  %v1227 = vpop.xlane.xlu0 %1226
  %v1228 = vsel %vm534, %v253, 0.0
  %1229 = vadd.xlane.f32.xlu0 %v1228
  %v1230 = vpop.xlane.xlu0 %1229
  %v1231 = vsel %vm534, %v254, 0.0
  %1232 = vadd.xlane.f32.xlu0 %v1231
  %v1233 = vpop.xlane.xlu0 %1232
  %v1234 = vsel %vm534, %v255, 0.0
  %1235 = vadd.xlane.f32.xlu0 %v1234
  %v1236 = vpop.xlane.xlu0 %1235
  %v1237 = vsel %vm534, %v256, 0.0
  %1238 = vadd.xlane.f32.xlu0 %v1237
  %v1239 = vpop.xlane.xlu0 %1238
  %v1240 = vsel %vm534, %v257, 0.0
  %1241 = vadd.xlane.f32.xlu0 %v1240
  %v1242 = vpop.xlane.xlu0 %1241
  %v1243 = vsel %vm534, %v258, 0.0
  %1244 = vadd.xlane.f32.xlu0 %v1243
  %v1245 = vpop.xlane.xlu0 %1244
  %v1246 = vsel %vm534, %v259, 0.0
  %1247 = vadd.xlane.f32.xlu0 %v1246
  %v1248 = vpop.xlane.xlu0 %1247
  %v1249 = vsel %vm534, %v260, 0.0
  %1250 = vadd.xlane.f32.xlu0 %v1249
  %v1251 = vpop.xlane.xlu0 %1250
  %v1252 = vsel %vm534, %v261, 0.0
  %1253 = vadd.xlane.f32.xlu0 %v1252
  %v1254 = vpop.xlane.xlu0 %1253
  %v1255 = vsel %vm534, %v262, 0.0
  %1256 = vadd.xlane.f32.xlu0 %v1255
  %v1257 = vpop.xlane.xlu0 %1256
  %v1258 = vsel %vm534, %v263, 0.0
  %1259 = vadd.xlane.f32.xlu0 %v1258
  %v1260 = vpop.xlane.xlu0 %1259
  %v1261 = vsel %vm534, %v264, 0.0
  %1262 = vadd.xlane.f32.xlu0 %v1261
  %v1263 = vpop.xlane.xlu0 %1262
  %v1264 = vsel %vm534, %v265, 0.0
  %1265 = vadd.xlane.f32.xlu0 %v1264
  %v1266 = vpop.xlane.xlu0 %1265
  %v1267 = vsel %vm534, %v266, 0.0
  %1268 = vadd.xlane.f32.xlu0 %v1267
  %v1269 = vpop.xlane.xlu0 %1268
  %v1270 = vsel %vm534, %v267, 0.0
  %1271 = vadd.xlane.f32.xlu0 %v1270
  %v1272 = vpop.xlane.xlu0 %1271
  %v1273 = vsel %vm534, %v268, 0.0
  %1274 = vadd.xlane.f32.xlu0 %v1273
  %v1275 = vpop.xlane.xlu0 %1274
  %v1276 = vsel %vm534, %v269, 0.0
  %1277 = vadd.xlane.f32.xlu0 %v1276
  %v1278 = vpop.xlane.xlu0 %1277
  %v1279 = vsel %vm534, %v270, 0.0
  %1280 = vadd.xlane.f32.xlu0 %v1279
  %v1281 = vpop.xlane.xlu0 %1280
  %v1282 = vsel %vm534, %v271, 0.0
  %1283 = vadd.xlane.f32.xlu0 %v1282
  %v1284 = vpop.xlane.xlu0 %1283
  %v1285 = vsel %vm534, %v272, 0.0
  %1286 = vadd.xlane.f32.xlu0 %v1285
  %v1287 = vpop.xlane.xlu0 %1286
  %v1288 = vsel %vm534, %v273, 0.0
  %1289 = vadd.xlane.f32.xlu0 %v1288
  %v1290 = vpop.xlane.xlu0 %1289
  %v1291 = vsel %vm534, %v274, 0.0
  %1292 = vadd.xlane.f32.xlu0 %v1291
  %v1293 = vpop.xlane.xlu0 %1292
  %v1294 = vsel %vm534, %v275, 0.0
  %1295 = vadd.xlane.f32.xlu0 %v1294
  %v1296 = vpop.xlane.xlu0 %1295
  %v1297 = vsel %vm534, %v276, 0.0
  %1298 = vadd.xlane.f32.xlu0 %v1297
  %v1299 = vpop.xlane.xlu0 %1298
  %v1300 = vsel %vm534, %v277, 0.0
  %1301 = vadd.xlane.f32.xlu0 %v1300
  %v1302 = vpop.xlane.xlu0 %1301
  %v1303 = vsel %vm534, %v278, 0.0
  %1304 = vadd.xlane.f32.xlu0 %v1303
  %v1305 = vpop.xlane.xlu0 %1304
  %v1306 = vsel %vm534, %v279, 0.0
  %1307 = vadd.xlane.f32.xlu0 %v1306
  %v1308 = vpop.xlane.xlu0 %1307
  %v1309 = vsel %vm534, %v280, 0.0
  %1310 = vadd.xlane.f32.xlu0 %v1309
  %v1311 = vpop.xlane.xlu0 %1310
  %v1312 = vsel %vm534, %v281, 0.0
  %1313 = vadd.xlane.f32.xlu0 %v1312
  %v1314 = vpop.xlane.xlu0 %1313
  %v1315 = vsel %vm534, %v282, 0.0
  %1316 = vadd.xlane.f32.xlu0 %v1315
  %v1317 = vpop.xlane.xlu0 %1316
  %v1318 = vsel %vm534, %v283, 0.0
  %1319 = vadd.xlane.f32.xlu0 %v1318
  %v1320 = vpop.xlane.xlu0 %1319
  %v1321 = vsel %vm534, %v284, 0.0
  %1322 = vadd.xlane.f32.xlu0 %v1321
  %v1323 = vpop.xlane.xlu0 %1322
  %v1324 = vsel %vm534, %v285, 0.0
  %1325 = vadd.xlane.f32.xlu0 %v1324
  %v1326 = vpop.xlane.xlu0 %1325
  %v1327 = vsel %vm534, %v286, 0.0
  %1328 = vadd.xlane.f32.xlu0 %v1327
  %v1329 = vpop.xlane.xlu0 %1328
  %v1330 = vsel %vm534, %v287, 0.0
  %1331 = vadd.xlane.f32.xlu0 %v1330
  %v1332 = vpop.xlane.xlu0 %1331
  %v1333 = vsel %vm534, %v288, 0.0
  %1334 = vadd.xlane.f32.xlu0 %v1333
  %v1335 = vpop.xlane.xlu0 %1334
  %v1336 = vsel %vm534, %v289, 0.0
  %1337 = vadd.xlane.f32.xlu0 %v1336
  %v1338 = vpop.xlane.xlu0 %1337
  %v1339 = vsel %vm534, %v290, 0.0
  %1340 = vadd.xlane.f32.xlu0 %v1339
  %v1341 = vpop.xlane.xlu0 %1340
  %v1342 = vsel %vm534, %v291, 0.0
  %1343 = vadd.xlane.f32.xlu0 %v1342
  %v1344 = vpop.xlane.xlu0 %1343
  %v1345 = vsel %vm534, %v292, 0.0
  %1346 = vadd.xlane.f32.xlu0 %v1345
  %v1347 = vpop.xlane.xlu0 %1346
  %v1348 = vsel %vm534, %v293, 0.0
  %1349 = vadd.xlane.f32.xlu0 %v1348
  %v1350 = vpop.xlane.xlu0 %1349
  %v1351 = vsel %vm534, %v294, 0.0
  %1352 = vadd.xlane.f32.xlu0 %v1351
  %v1353 = vpop.xlane.xlu0 %1352
  %v1354 = vsel %vm534, %v295, 0.0
  %1355 = vadd.xlane.f32.xlu0 %v1354
  %v1356 = vpop.xlane.xlu0 %1355
  %v1357 = vsel %vm534, %v296, 0.0
  %1358 = vadd.xlane.f32.xlu0 %v1357
  %v1359 = vpop.xlane.xlu0 %1358
  %v1360 = vsel %vm534, %v297, 0.0
  %1361 = vadd.xlane.f32.xlu0 %v1360
  %v1362 = vpop.xlane.xlu0 %1361
  %v1363 = vsel %vm534, %v298, 0.0
  %1364 = vadd.xlane.f32.xlu0 %v1363
  %v1365 = vpop.xlane.xlu0 %1364
  %v1366 = vsel %vm534, %v299, 0.0
  %1367 = vadd.xlane.f32.xlu0 %v1366
  %v1368 = vpop.xlane.xlu0 %1367
  %v1369 = vsel %vm534, %v300, 0.0
  %1370 = vadd.xlane.f32.xlu0 %v1369
  %v1371 = vpop.xlane.xlu0 %1370
  %v1372 = vsel %vm534, %v301, 0.0
  %1373 = vadd.xlane.f32.xlu0 %v1372
  %v1374 = vpop.xlane.xlu0 %1373
  %v1375 = vsel %vm534, %v302, 0.0
  %1376 = vadd.xlane.f32.xlu0 %v1375
  %v1377 = vpop.xlane.xlu0 %1376
  %v1378 = vsel %vm534, %v303, 0.0
  %1379 = vadd.xlane.f32.xlu0 %v1378
  %v1380 = vpop.xlane.xlu0 %1379
  %v1381 = vsel %vm534, %v304, 0.0
  %1382 = vadd.xlane.f32.xlu0 %v1381
  %v1383 = vpop.xlane.xlu0 %1382
  %v1384 = vsel %vm534, %v305, 0.0
  %1385 = vadd.xlane.f32.xlu0 %v1384
  %v1386 = vpop.xlane.xlu0 %1385
  %v1387 = vsel %vm534, %v306, 0.0
  %1388 = vadd.xlane.f32.xlu0 %v1387
  %v1389 = vpop.xlane.xlu0 %1388
  %v1390 = vsel %vm534, %v307, 0.0
  %1391 = vadd.xlane.f32.xlu0 %v1390
  %v1392 = vpop.xlane.xlu0 %1391
  %v1393 = vsel %vm534, %v308, 0.0
  %1394 = vadd.xlane.f32.xlu0 %v1393
  %v1395 = vpop.xlane.xlu0 %1394
  %v1396 = vsel %vm534, %v309, 0.0
  %1397 = vadd.xlane.f32.xlu0 %v1396
  %v1398 = vpop.xlane.xlu0 %1397
  %v1399 = vsel %vm534, %v310, 0.0
  %1400 = vadd.xlane.f32.xlu0 %v1399
  %v1401 = vpop.xlane.xlu0 %1400
  %v1402 = vsel %vm534, %v311, 0.0
  %1403 = vadd.xlane.f32.xlu0 %v1402
  %v1404 = vpop.xlane.xlu0 %1403
  %v1405 = vsel %vm534, %v312, 0.0
  %1406 = vadd.xlane.f32.xlu0 %v1405
  %v1407 = vpop.xlane.xlu0 %1406
  %v1408 = vsel %vm534, %v313, 0.0
  %1409 = vadd.xlane.f32.xlu0 %v1408
  %v1410 = vpop.xlane.xlu0 %1409
  %v1411 = vsel %vm534, %v314, 0.0
  %1412 = vadd.xlane.f32.xlu0 %v1411
  %v1413 = vpop.xlane.xlu0 %1412
  %v1414 = vsel %vm534, %v315, 0.0
  %1415 = vadd.xlane.f32.xlu0 %v1414
  %v1416 = vpop.xlane.xlu0 %1415
  %v1417 = vsel %vm534, %v316, 0.0
  %1418 = vadd.xlane.f32.xlu0 %v1417
  %v1419 = vpop.xlane.xlu0 %1418
  %v1420 = vsel %vm534, %v317, 0.0
  %1421 = vadd.xlane.f32.xlu0 %v1420
  %v1422 = vpop.xlane.xlu0 %1421
  %v1423 = vsel %vm534, %v318, 0.0
  %1424 = vadd.xlane.f32.xlu0 %v1423
  %v1425 = vpop.xlane.xlu0 %1424
  %v1426 = vsel %vm534, %v319, 0.0
  %1427 = vadd.xlane.f32.xlu0 %v1426
  %v1428 = vpop.xlane.xlu0 %1427
  %v1429 = vsel %vm534, %v320, 0.0
  %1430 = vadd.xlane.f32.xlu0 %v1429
  %v1431 = vpop.xlane.xlu0 %1430
  %v1432 = vsel %vm534, %v321, 0.0
  %1433 = vadd.xlane.f32.xlu0 %v1432
  %v1434 = vpop.xlane.xlu0 %1433
  %v1435 = vsel %vm534, %v322, 0.0
  %1436 = vadd.xlane.f32.xlu0 %v1435
  %v1437 = vpop.xlane.xlu0 %1436
  %v1438 = vsel %vm534, %v323, 0.0
  %1439 = vadd.xlane.f32.xlu0 %v1438
  %v1440 = vpop.xlane.xlu0 %1439
  %v1441 = vsel %vm534, %v324, 0.0
  %1442 = vadd.xlane.f32.xlu0 %v1441
  %v1443 = vpop.xlane.xlu0 %1442
  %v1444 = vsel %vm534, %v325, 0.0
  %1445 = vadd.xlane.f32.xlu0 %v1444
  %v1446 = vpop.xlane.xlu0 %1445
  %v1447 = vsel %vm534, %v326, 0.0
  %1448 = vadd.xlane.f32.xlu0 %v1447
  %v1449 = vpop.xlane.xlu0 %1448
  %v1450 = vsel %vm534, %v327, 0.0
  %1451 = vadd.xlane.f32.xlu0 %v1450
  %v1452 = vpop.xlane.xlu0 %1451
  %v1453 = vsel %vm534, %v328, 0.0
  %1454 = vadd.xlane.f32.xlu0 %v1453
  %v1455 = vpop.xlane.xlu0 %1454
  %v1456 = vsel %vm534, %v329, 0.0
  %1457 = vadd.xlane.f32.xlu0 %v1456
  %v1458 = vpop.xlane.xlu0 %1457
  %v1459 = vsel %vm534, %v330, 0.0
  %1460 = vadd.xlane.f32.xlu0 %v1459
  %v1461 = vpop.xlane.xlu0 %1460
  %v1462 = vsel %vm534, %v331, 0.0
  %1463 = vadd.xlane.f32.xlu0 %v1462
  %v1464 = vpop.xlane.xlu0 %1463
  %v1465 = vsel %vm534, %v332, 0.0
  %1466 = vadd.xlane.f32.xlu0 %v1465
  %v1467 = vpop.xlane.xlu0 %1466
  %v1468 = vsel %vm534, %v333, 0.0
  %1469 = vadd.xlane.f32.xlu0 %v1468
  %v1470 = vpop.xlane.xlu0 %1469
  %v1471 = vsel %vm534, %v334, 0.0
  %1472 = vadd.xlane.f32.xlu0 %v1471
  %v1473 = vpop.xlane.xlu0 %1472
  %v1474 = vsel %vm534, %v335, 0.0
  %1475 = vadd.xlane.f32.xlu0 %v1474
  %v1476 = vpop.xlane.xlu0 %1475
  %v1477 = vsel %vm534, %v336, 0.0
  %1478 = vadd.xlane.f32.xlu0 %v1477
  %v1479 = vpop.xlane.xlu0 %1478
  %v1480 = vsel %vm534, %v337, 0.0
  %1481 = vadd.xlane.f32.xlu0 %v1480
  %v1482 = vpop.xlane.xlu0 %1481
  %v1483 = vsel %vm534, %v338, 0.0
  %1484 = vadd.xlane.f32.xlu0 %v1483
  %v1485 = vpop.xlane.xlu0 %1484
  %v1486 = vsel %vm534, %v339, 0.0
  %1487 = vadd.xlane.f32.xlu0 %v1486
  %v1488 = vpop.xlane.xlu0 %1487
  %v1489 = vsel %vm534, %v340, 0.0
  %1490 = vadd.xlane.f32.xlu0 %v1489
  %v1491 = vpop.xlane.xlu0 %1490
  %v1492 = vsel %vm534, %v341, 0.0
  %1493 = vadd.xlane.f32.xlu0 %v1492
  %v1494 = vpop.xlane.xlu0 %1493
  %v1495 = vsel %vm534, %v342, 0.0
  %1496 = vadd.xlane.f32.xlu0 %v1495
  %v1497 = vpop.xlane.xlu0 %1496
  %v1498 = vsel %vm534, %v343, 0.0
  %1499 = vadd.xlane.f32.xlu0 %v1498
  %v1500 = vpop.xlane.xlu0 %1499
  %v1501 = vsel %vm534, %v344, 0.0
  %1502 = vadd.xlane.f32.xlu0 %v1501
  %v1503 = vpop.xlane.xlu0 %1502
  %v1504 = vsel %vm534, %v345, 0.0
  %1505 = vadd.xlane.f32.xlu0 %v1504
  %v1506 = vpop.xlane.xlu0 %1505
  %v1507 = vsel %vm534, %v346, 0.0
  %1508 = vadd.xlane.f32.xlu0 %v1507
  %v1509 = vpop.xlane.xlu0 %1508
  %v1510 = vsel %vm534, %v347, 0.0
  %1511 = vadd.xlane.f32.xlu0 %v1510
  %v1512 = vpop.xlane.xlu0 %1511
  %v1513 = vsel %vm534, %v348, 0.0
  %1514 = vadd.xlane.f32.xlu0 %v1513
  %v1515 = vpop.xlane.xlu0 %1514
  %v1516 = vsel %vm534, %v349, 0.0
  %1517 = vadd.xlane.f32.xlu0 %v1516
  %v1518 = vpop.xlane.xlu0 %1517
  %v1519 = vsel %vm534, %v350, 0.0
  %1520 = vadd.xlane.f32.xlu0 %v1519
  %v1521 = vpop.xlane.xlu0 %1520
  %v1522 = vsel %vm534, %v351, 0.0
  %1523 = vadd.xlane.f32.xlu0 %v1522
  %v1524 = vpop.xlane.xlu0 %1523
  %v1525 = vsel %vm534, %v352, 0.0
  %1526 = vadd.xlane.f32.xlu0 %v1525
  %v1527 = vpop.xlane.xlu0 %1526
  %v1528 = vsel %vm534, %v353, 0.0
  %1529 = vadd.xlane.f32.xlu0 %v1528
  %v1530 = vpop.xlane.xlu0 %1529
  %v1531 = vsel %vm534, %v354, 0.0
  %1532 = vadd.xlane.f32.xlu0 %v1531
  %v1533 = vpop.xlane.xlu0 %1532
  %v1534 = vsel %vm534, %v355, 0.0
  %1535 = vadd.xlane.f32.xlu0 %v1534
  %v1536 = vpop.xlane.xlu0 %1535
  %v1537 = vsel %vm534, %v356, 0.0
  %1538 = vadd.xlane.f32.xlu0 %v1537
  %v1539 = vpop.xlane.xlu0 %1538
  %v1540 = vsel %vm534, %v357, 0.0
  %1541 = vadd.xlane.f32.xlu0 %v1540
  %v1542 = vpop.xlane.xlu0 %1541
  %v1543 = vsel %vm534, %v358, 0.0
  %1544 = vadd.xlane.f32.xlu0 %v1543
  %v1545 = vpop.xlane.xlu0 %1544
  %v1546 = vsel %vm534, %v359, 0.0
  %1547 = vadd.xlane.f32.xlu0 %v1546
  %v1548 = vpop.xlane.xlu0 %1547
  %v1549 = vsel %vm534, %v360, 0.0
  %1550 = vadd.xlane.f32.xlu0 %v1549
  %v1551 = vpop.xlane.xlu0 %1550
  %v1552 = vsel %vm534, %v361, 0.0
  %1553 = vadd.xlane.f32.xlu0 %v1552
  %v1554 = vpop.xlane.xlu0 %1553
  %v1555 = vsel %vm534, %v362, 0.0
  %1556 = vadd.xlane.f32.xlu0 %v1555
  %v1557 = vpop.xlane.xlu0 %1556
  %v1558 = vsel %vm534, %v363, 0.0
  %1559 = vadd.xlane.f32.xlu0 %v1558
  %v1560 = vpop.xlane.xlu0 %1559
  %v1561 = vsel %vm534, %v364, 0.0
  %1562 = vadd.xlane.f32.xlu0 %v1561
  %v1563 = vpop.xlane.xlu0 %1562
  %v1564 = vsel %vm534, %v365, 0.0
  %1565 = vadd.xlane.f32.xlu0 %v1564
  %v1566 = vpop.xlane.xlu0 %1565
  %v1567 = vsel %vm534, %v366, 0.0
  %1568 = vadd.xlane.f32.xlu0 %v1567
  %v1569 = vpop.xlane.xlu0 %1568
  %v1570 = vsel %vm534, %v367, 0.0
  %1571 = vadd.xlane.f32.xlu0 %v1570
  %v1572 = vpop.xlane.xlu0 %1571
  %v1573 = vsel %vm534, %v368, 0.0
  %1574 = vadd.xlane.f32.xlu0 %v1573
  %v1575 = vpop.xlane.xlu0 %1574
  %v1576 = vsel %vm534, %v369, 0.0
  %1577 = vadd.xlane.f32.xlu0 %v1576
  %v1578 = vpop.xlane.xlu0 %1577
  %v1579 = vsel %vm534, %v370, 0.0
  %1580 = vadd.xlane.f32.xlu0 %v1579
  %v1581 = vpop.xlane.xlu0 %1580
  %v1582 = vsel %vm534, %v371, 0.0
  %1583 = vadd.xlane.f32.xlu0 %v1582
  %v1584 = vpop.xlane.xlu0 %1583
  %v1585 = vsel %vm534, %v372, 0.0
  %1586 = vadd.xlane.f32.xlu0 %v1585
  %v1587 = vpop.xlane.xlu0 %1586
  %v1588 = vsel %vm534, %v373, 0.0
  %1589 = vadd.xlane.f32.xlu0 %v1588
  %v1590 = vpop.xlane.xlu0 %1589
  %v1591 = vsel %vm534, %v374, 0.0
  %1592 = vadd.xlane.f32.xlu0 %v1591
  %v1593 = vpop.xlane.xlu0 %1592
  %v1594 = vsel %vm534, %v375, 0.0
  %1595 = vadd.xlane.f32.xlu0 %v1594
  %v1596 = vpop.xlane.xlu0 %1595
  %v1597 = vsel %vm534, %v376, 0.0
  %1598 = vadd.xlane.f32.xlu0 %v1597
  %v1599 = vpop.xlane.xlu0 %1598
  %v1600 = vsel %vm534, %v377, 0.0
  %1601 = vadd.xlane.f32.xlu0 %v1600
  %v1602 = vpop.xlane.xlu0 %1601
  %v1603 = vsel %vm534, %v378, 0.0
  %1604 = vadd.xlane.f32.xlu0 %v1603
  %v1605 = vpop.xlane.xlu0 %1604
  %v1606 = vsel %vm534, %v379, 0.0
  %1607 = vadd.xlane.f32.xlu0 %v1606
  %v1608 = vpop.xlane.xlu0 %1607
  %v1609 = vsel %vm534, %v380, 0.0
  %1610 = vadd.xlane.f32.xlu0 %v1609
  %v1611 = vpop.xlane.xlu0 %1610
  %v1612 = vsel %vm534, %v381, 0.0
  %1613 = vadd.xlane.f32.xlu0 %v1612
  %v1614 = vpop.xlane.xlu0 %1613
  %v1615 = vsel %vm534, %v382, 0.0
  %1616 = vadd.xlane.f32.xlu0 %v1615
  %v1617 = vpop.xlane.xlu0 %1616
  %v1618 = vsel %vm534, %v383, 0.0
  %1619 = vadd.xlane.f32.xlu0 %v1618
  %v1620 = vpop.xlane.xlu0 %1619
  %v1621 = vsel %vm534, %v384, 0.0
  %1622 = vadd.xlane.f32.xlu0 %v1621
  %v1623 = vpop.xlane.xlu0 %1622
  %v1624 = vsel %vm534, %v385, 0.0
  %1625 = vadd.xlane.f32.xlu0 %v1624
  %v1626 = vpop.xlane.xlu0 %1625
  %v1627 = vsel %vm534, %v386, 0.0
  %1628 = vadd.xlane.f32.xlu0 %v1627
  %v1629 = vpop.xlane.xlu0 %1628
  %v1630 = vsel %vm534, %v387, 0.0
  %1631 = vadd.xlane.f32.xlu0 %v1630
  %v1632 = vpop.xlane.xlu0 %1631
  %v1633 = vsel %vm534, %v388, 0.0
  %1634 = vadd.xlane.f32.xlu0 %v1633
  %v1635 = vpop.xlane.xlu0 %1634
  %v1636 = vsel %vm534, %v389, 0.0
  %1637 = vadd.xlane.f32.xlu0 %v1636
  %v1638 = vpop.xlane.xlu0 %1637
  %v1639 = vsel %vm534, %v390, 0.0
  %1640 = vadd.xlane.f32.xlu0 %v1639
  %v1641 = vpop.xlane.xlu0 %1640
  %v1642 = vsel %vm534, %v391, 0.0
  %1643 = vadd.xlane.f32.xlu0 %v1642
  %v1644 = vpop.xlane.xlu0 %1643
  %v1645 = vsel %vm534, %v392, 0.0
  %1646 = vadd.xlane.f32.xlu0 %v1645
  %v1647 = vpop.xlane.xlu0 %1646
  %v1648 = vsel %vm534, %v393, 0.0
  %1649 = vadd.xlane.f32.xlu0 %v1648
  %v1650 = vpop.xlane.xlu0 %1649
  %v1651 = vsel %vm534, %v394, 0.0
  %1652 = vadd.xlane.f32.xlu0 %v1651
  %v1653 = vpop.xlane.xlu0 %1652
  %v1654 = vsel %vm534, %v395, 0.0
  %1655 = vadd.xlane.f32.xlu0 %v1654
  %v1656 = vpop.xlane.xlu0 %1655
  %v1657 = vsel %vm534, %v396, 0.0
  %1658 = vadd.xlane.f32.xlu0 %v1657
  %v1659 = vpop.xlane.xlu0 %1658
  %v1660 = vsel %vm534, %v397, 0.0
  %1661 = vadd.xlane.f32.xlu0 %v1660
  %v1662 = vpop.xlane.xlu0 %1661
  %v1663 = vsel %vm534, %v398, 0.0
  %1664 = vadd.xlane.f32.xlu0 %v1663
  %v1665 = vpop.xlane.xlu0 %1664
  %v1666 = vsel %vm534, %v399, 0.0
  %1667 = vadd.xlane.f32.xlu0 %v1666
  %v1668 = vpop.xlane.xlu0 %1667
  %v1669 = vsel %vm534, %v400, 0.0
  %1670 = vadd.xlane.f32.xlu0 %v1669
  %v1671 = vpop.xlane.xlu0 %1670
  %v1672 = vsel %vm534, %v401, 0.0
  %1673 = vadd.xlane.f32.xlu0 %v1672
  %v1674 = vpop.xlane.xlu0 %1673
  %v1675 = vsel %vm534, %v402, 0.0
  %1676 = vadd.xlane.f32.xlu0 %v1675
  %v1677 = vpop.xlane.xlu0 %1676
  %v1678 = vsel %vm534, %v403, 0.0
  %1679 = vadd.xlane.f32.xlu0 %v1678
  %v1680 = vpop.xlane.xlu0 %1679
  %v1681 = vsel %vm534, %v404, 0.0
  %1682 = vadd.xlane.f32.xlu0 %v1681
  %v1683 = vpop.xlane.xlu0 %1682
  %v1684 = vsel %vm534, %v405, 0.0
  %1685 = vadd.xlane.f32.xlu0 %v1684
  %v1686 = vpop.xlane.xlu0 %1685
  %v1687 = vsel %vm534, %v406, 0.0
  %1688 = vadd.xlane.f32.xlu0 %v1687
  %v1689 = vpop.xlane.xlu0 %1688
  %v1690 = vsel %vm534, %v407, 0.0
  %1691 = vadd.xlane.f32.xlu0 %v1690
  %v1692 = vpop.xlane.xlu0 %1691
  %v1693 = vsel %vm534, %v408, 0.0
  %1694 = vadd.xlane.f32.xlu0 %v1693
  %v1695 = vpop.xlane.xlu0 %1694
  %v1696 = vsel %vm534, %v409, 0.0
  %1697 = vadd.xlane.f32.xlu0 %v1696
  %v1698 = vpop.xlane.xlu0 %1697
  %v1699 = vsel %vm534, %v410, 0.0
  %1700 = vadd.xlane.f32.xlu0 %v1699
  %v1701 = vpop.xlane.xlu0 %1700
  %v1702 = vsel %vm534, %v411, 0.0
  %1703 = vadd.xlane.f32.xlu0 %v1702
  %v1704 = vpop.xlane.xlu0 %1703
  %v1705 = vsel %vm534, %v412, 0.0
  %1706 = vadd.xlane.f32.xlu0 %v1705
  %v1707 = vpop.xlane.xlu0 %1706
  %v1708 = vsel %vm534, %v413, 0.0
  %1709 = vadd.xlane.f32.xlu0 %v1708
  %v1710 = vpop.xlane.xlu0 %1709
  %v1711 = vsel %vm534, %v414, 0.0
  %1712 = vadd.xlane.f32.xlu0 %v1711
  %v1713 = vpop.xlane.xlu0 %1712
  %v1714 = vsel %vm534, %v415, 0.0
  %1715 = vadd.xlane.f32.xlu0 %v1714
  %v1716 = vpop.xlane.xlu0 %1715
  %v1717 = vsel %vm534, %v416, 0.0
  %1718 = vadd.xlane.f32.xlu0 %v1717
  %v1719 = vpop.xlane.xlu0 %1718
  %v1720 = vsel %vm534, %v417, 0.0
  %1721 = vadd.xlane.f32.xlu0 %v1720
  %v1722 = vpop.xlane.xlu0 %1721
  %v1723 = vsel %vm534, %v418, 0.0
  %1724 = vadd.xlane.f32.xlu0 %v1723
  %v1725 = vpop.xlane.xlu0 %1724
  %v1726 = vsel %vm534, %v419, 0.0
  %1727 = vadd.xlane.f32.xlu0 %v1726
  %v1728 = vpop.xlane.xlu0 %1727
  %v1729 = vsel %vm534, %v420, 0.0
  %1730 = vadd.xlane.f32.xlu0 %v1729
  %v1731 = vpop.xlane.xlu0 %1730
  %v1732 = vsel %vm534, %v421, 0.0
  %1733 = vadd.xlane.f32.xlu0 %v1732
  %v1734 = vpop.xlane.xlu0 %1733
  %v1735 = vsel %vm534, %v422, 0.0
  %1736 = vadd.xlane.f32.xlu0 %v1735
  %v1737 = vpop.xlane.xlu0 %1736
  %v1738 = vsel %vm534, %v423, 0.0
  %1739 = vadd.xlane.f32.xlu0 %v1738
  %v1740 = vpop.xlane.xlu0 %1739
  %v1741 = vsel %vm534, %v424, 0.0
  %1742 = vadd.xlane.f32.xlu0 %v1741
  %v1743 = vpop.xlane.xlu0 %1742
  %v1744 = vsel %vm534, %v425, 0.0
  %1745 = vadd.xlane.f32.xlu0 %v1744
  %v1746 = vpop.xlane.xlu0 %1745
  %v1747 = vsel %vm534, %v426, 0.0
  %1748 = vadd.xlane.f32.xlu0 %v1747
  %v1749 = vpop.xlane.xlu0 %1748
  %v1750 = vsel %vm534, %v427, 0.0
  %1751 = vadd.xlane.f32.xlu0 %v1750
  %v1752 = vpop.xlane.xlu0 %1751
  %v1753 = vsel %vm534, %v428, 0.0
  %1754 = vadd.xlane.f32.xlu0 %v1753
  %v1755 = vpop.xlane.xlu0 %1754
  %v1756 = vsel %vm534, %v429, 0.0
  %1757 = vadd.xlane.f32.xlu0 %v1756
  %v1758 = vpop.xlane.xlu0 %1757
  %v1759 = vsel %vm534, %v430, 0.0
  %1760 = vadd.xlane.f32.xlu0 %v1759
  %v1761 = vpop.xlane.xlu0 %1760
  %v1762 = vsel %vm534, %v431, 0.0
  %1763 = vadd.xlane.f32.xlu0 %v1762
  %v1764 = vpop.xlane.xlu0 %1763
  %v1765 = vsel %vm534, %v432, 0.0
  %1766 = vadd.xlane.f32.xlu0 %v1765
  %v1767 = vpop.xlane.xlu0 %1766
  %v1768 = vsel %vm534, %v433, 0.0
  %1769 = vadd.xlane.f32.xlu0 %v1768
  %v1770 = vpop.xlane.xlu0 %1769
  %v1771 = vsel %vm534, %v434, 0.0
  %1772 = vadd.xlane.f32.xlu0 %v1771
  %v1773 = vpop.xlane.xlu0 %1772
  %v1774 = vsel %vm534, %v435, 0.0
  %1775 = vadd.xlane.f32.xlu0 %v1774
  %v1776 = vpop.xlane.xlu0 %1775
  %v1777 = vsel %vm534, %v436, 0.0
  %1778 = vadd.xlane.f32.xlu0 %v1777
  %v1779 = vpop.xlane.xlu0 %1778
  %v1780 = vsel %vm534, %v437, 0.0
  %1781 = vadd.xlane.f32.xlu0 %v1780
  %v1782 = vpop.xlane.xlu0 %1781
  %v1783 = vsel %vm534, %v438, 0.0
  %1784 = vadd.xlane.f32.xlu0 %v1783
  %v1785 = vpop.xlane.xlu0 %1784
  %v1786 = vsel %vm534, %v439, 0.0
  %1787 = vadd.xlane.f32.xlu0 %v1786
  %v1788 = vpop.xlane.xlu0 %1787
  %v1789 = vsel %vm534, %v440, 0.0
  %1790 = vadd.xlane.f32.xlu0 %v1789
  %v1791 = vpop.xlane.xlu0 %1790
  %v1792 = vsel %vm534, %v441, 0.0
  %1793 = vadd.xlane.f32.xlu0 %v1792
  %v1794 = vpop.xlane.xlu0 %1793
  %v1795 = vsel %vm534, %v442, 0.0
  %1796 = vadd.xlane.f32.xlu0 %v1795
  %v1797 = vpop.xlane.xlu0 %1796
  %v1798 = vsel %vm534, %v443, 0.0
  %1799 = vadd.xlane.f32.xlu0 %v1798
  %v1800 = vpop.xlane.xlu0 %1799
  %v1801 = vsel %vm534, %v444, 0.0
  %1802 = vadd.xlane.f32.xlu0 %v1801
  %v1803 = vpop.xlane.xlu0 %1802
  %v1804 = vsel %vm534, %v445, 0.0
  %1805 = vadd.xlane.f32.xlu0 %v1804
  %v1806 = vpop.xlane.xlu0 %1805
  %v1807 = vsel %vm534, %v446, 0.0
  %1808 = vadd.xlane.f32.xlu0 %v1807
  %v1809 = vpop.xlane.xlu0 %1808
  %v1810 = vsel %vm534, %v447, 0.0
  %1811 = vadd.xlane.f32.xlu0 %v1810
  %v1812 = vpop.xlane.xlu0 %1811
  %v1813 = vsel %vm534, %v448, 0.0
  %1814 = vadd.xlane.f32.xlu0 %v1813
  %v1815 = vpop.xlane.xlu0 %1814
  %v1816 = vsel %vm534, %v449, 0.0
  %1817 = vadd.xlane.f32.xlu0 %v1816
  %v1818 = vpop.xlane.xlu0 %1817
  %v1819 = vsel %vm534, %v450, 0.0
  %1820 = vadd.xlane.f32.xlu0 %v1819
  %v1821 = vpop.xlane.xlu0 %1820
  %v1822 = vsel %vm534, %v451, 0.0
  %1823 = vadd.xlane.f32.xlu0 %v1822
  %v1824 = vpop.xlane.xlu0 %1823
  %v1825 = vsel %vm534, %v452, 0.0
  %1826 = vadd.xlane.f32.xlu0 %v1825
  %v1827 = vpop.xlane.xlu0 %1826
  %v1828 = vsel %vm534, %v453, 0.0
  %1829 = vadd.xlane.f32.xlu0 %v1828
  %v1830 = vpop.xlane.xlu0 %1829
  %v1831 = vsel %vm534, %v454, 0.0
  %1832 = vadd.xlane.f32.xlu0 %v1831
  %v1833 = vpop.xlane.xlu0 %1832
  %v1834 = vsel %vm534, %v455, 0.0
  %1835 = vadd.xlane.f32.xlu0 %v1834
  %v1836 = vpop.xlane.xlu0 %1835
  %v1837 = vsel %vm534, %v456, 0.0
  %1838 = vadd.xlane.f32.xlu0 %v1837
  %v1839 = vpop.xlane.xlu0 %1838
  %v1840 = vsel %vm534, %v457, 0.0
  %1841 = vadd.xlane.f32.xlu0 %v1840
  %v1842 = vpop.xlane.xlu0 %1841
  %v1843 = vsel %vm534, %v458, 0.0
  %1844 = vadd.xlane.f32.xlu0 %v1843
  %v1845 = vpop.xlane.xlu0 %1844
  %v1846 = vsel %vm534, %v459, 0.0
  %1847 = vadd.xlane.f32.xlu0 %v1846
  %v1848 = vpop.xlane.xlu0 %1847
  %v1849 = vsel %vm534, %v460, 0.0
  %1850 = vadd.xlane.f32.xlu0 %v1849
  %v1851 = vpop.xlane.xlu0 %1850
  %v1852 = vsel %vm534, %v461, 0.0
  %1853 = vadd.xlane.f32.xlu0 %v1852
  %v1854 = vpop.xlane.xlu0 %1853
  %v1855 = vsel %vm534, %v462, 0.0
  %1856 = vadd.xlane.f32.xlu0 %v1855
  %v1857 = vpop.xlane.xlu0 %1856
  %v1858 = vsel %vm534, %v463, 0.0
  %1859 = vadd.xlane.f32.xlu0 %v1858
  %v1860 = vpop.xlane.xlu0 %1859
  %v1861 = vsel %vm534, %v464, 0.0
  %1862 = vadd.xlane.f32.xlu0 %v1861
  %v1863 = vpop.xlane.xlu0 %1862
  %v1864 = vsel %vm534, %v465, 0.0
  %1865 = vadd.xlane.f32.xlu0 %v1864
  %v1866 = vpop.xlane.xlu0 %1865
  %v1867 = vsel %vm534, %v466, 0.0
  %1868 = vadd.xlane.f32.xlu0 %v1867
  %v1869 = vpop.xlane.xlu0 %1868
  %v1870 = vsel %vm534, %v467, 0.0
  %1871 = vadd.xlane.f32.xlu0 %v1870
  %v1872 = vpop.xlane.xlu0 %1871
  %v1873 = vsel %vm534, %v468, 0.0
  %1874 = vadd.xlane.f32.xlu0 %v1873
  %v1875 = vpop.xlane.xlu0 %1874
  %v1876 = vsel %vm534, %v469, 0.0
  %1877 = vadd.xlane.f32.xlu0 %v1876
  %v1878 = vpop.xlane.xlu0 %1877
  %v1879 = vsel %vm534, %v470, 0.0
  %1880 = vadd.xlane.f32.xlu0 %v1879
  %v1881 = vpop.xlane.xlu0 %1880
  %v1882 = vsel %vm534, %v471, 0.0
  %1883 = vadd.xlane.f32.xlu0 %v1882
  %v1884 = vpop.xlane.xlu0 %1883
  %v1885 = vsel %vm534, %v472, 0.0
  %1886 = vadd.xlane.f32.xlu0 %v1885
  %v1887 = vpop.xlane.xlu0 %1886
  %v1888 = vsel %vm534, %v473, 0.0
  %1889 = vadd.xlane.f32.xlu0 %v1888
  %v1890 = vpop.xlane.xlu0 %1889
  %v1891 = vsel %vm534, %v474, 0.0
  %1892 = vadd.xlane.f32.xlu0 %v1891
  %v1893 = vpop.xlane.xlu0 %1892
  %v1894 = vsel %vm534, %v475, 0.0
  %1895 = vadd.xlane.f32.xlu0 %v1894
  %v1896 = vpop.xlane.xlu0 %1895
  %v1897 = vsel %vm534, %v476, 0.0
  %1898 = vadd.xlane.f32.xlu0 %v1897
  %v1899 = vpop.xlane.xlu0 %1898
  %v1900 = vsel %vm534, %v477, 0.0
  %1901 = vadd.xlane.f32.xlu0 %v1900
  %v1902 = vpop.xlane.xlu0 %1901
  %v1903 = vsel %vm534, %v478, 0.0
  %1904 = vadd.xlane.f32.xlu0 %v1903
  %v1905 = vpop.xlane.xlu0 %1904
  %v1906 = vsel %vm534, %v479, 0.0
  %1907 = vadd.xlane.f32.xlu0 %v1906
  %v1908 = vpop.xlane.xlu0 %1907
  %v1909 = vsel %vm534, %v480, 0.0
  %1910 = vadd.xlane.f32.xlu0 %v1909
  %v1911 = vpop.xlane.xlu0 %1910
  %v1912 = vsel %vm534, %v481, 0.0
  %1913 = vadd.xlane.f32.xlu0 %v1912
  %v1914 = vpop.xlane.xlu0 %1913
  %v1915 = vsel %vm534, %v482, 0.0
  %1916 = vadd.xlane.f32.xlu0 %v1915
  %v1917 = vpop.xlane.xlu0 %1916
  %v1918 = vsel %vm534, %v483, 0.0
  %1919 = vadd.xlane.f32.xlu0 %v1918
  %v1920 = vpop.xlane.xlu0 %1919
  %v1921 = vsel %vm534, %v484, 0.0
  %1922 = vadd.xlane.f32.xlu0 %v1921
  %v1923 = vpop.xlane.xlu0 %1922
  %v1924 = vsel %vm534, %v485, 0.0
  %1925 = vadd.xlane.f32.xlu0 %v1924
  %v1926 = vpop.xlane.xlu0 %1925
  %v1927 = vsel %vm534, %v486, 0.0
  %1928 = vadd.xlane.f32.xlu0 %v1927
  %v1929 = vpop.xlane.xlu0 %1928
  %v1930 = vsel %vm534, %v487, 0.0
  %1931 = vadd.xlane.f32.xlu0 %v1930
  %v1932 = vpop.xlane.xlu0 %1931
  %v1933 = vsel %vm534, %v488, 0.0
  %1934 = vadd.xlane.f32.xlu0 %v1933
  %v1935 = vpop.xlane.xlu0 %1934
  %v1936 = vsel %vm534, %v489, 0.0
  %1937 = vadd.xlane.f32.xlu0 %v1936
  %v1938 = vpop.xlane.xlu0 %1937
  %v1939 = vsel %vm534, %v490, 0.0
  %1940 = vadd.xlane.f32.xlu0 %v1939
  %v1941 = vpop.xlane.xlu0 %1940
  %v1942 = vsel %vm534, %v491, 0.0
  %1943 = vadd.xlane.f32.xlu0 %v1942
  %v1944 = vpop.xlane.xlu0 %1943
  %v1945 = vsel %vm534, %v492, 0.0
  %1946 = vadd.xlane.f32.xlu0 %v1945
  %v1947 = vpop.xlane.xlu0 %1946
  %v1948 = vsel %vm534, %v493, 0.0
  %1949 = vadd.xlane.f32.xlu0 %v1948
  %v1950 = vpop.xlane.xlu0 %1949
  %v1951 = vsel %vm534, %v494, 0.0
  %1952 = vadd.xlane.f32.xlu0 %v1951
  %v1953 = vpop.xlane.xlu0 %1952
  %v1954 = vsel %vm534, %v495, 0.0
  %1955 = vadd.xlane.f32.xlu0 %v1954
  %v1956 = vpop.xlane.xlu0 %1955
  %v1957 = vsel %vm534, %v496, 0.0
  %1958 = vadd.xlane.f32.xlu0 %v1957
  %v1959 = vpop.xlane.xlu0 %1958
  %v1960 = vsel %vm534, %v497, 0.0
  %1961 = vadd.xlane.f32.xlu0 %v1960
  %v1962 = vpop.xlane.xlu0 %1961
  %v1963 = vsel %vm534, %v498, 0.0
  %1964 = vadd.xlane.f32.xlu0 %v1963
  %v1965 = vpop.xlane.xlu0 %1964
  %v1966 = vsel %vm534, %v499, 0.0
  %1967 = vadd.xlane.f32.xlu0 %v1966
  %v1968 = vpop.xlane.xlu0 %1967
  %v1969 = vsel %vm534, %v500, 0.0
  %1970 = vadd.xlane.f32.xlu0 %v1969
  %v1971 = vpop.xlane.xlu0 %1970
  %v1972 = vsel %vm534, %v501, 0.0
  %1973 = vadd.xlane.f32.xlu0 %v1972
  %v1974 = vpop.xlane.xlu0 %1973
  %v1975 = vsel %vm534, %v502, 0.0
  %1976 = vadd.xlane.f32.xlu0 %v1975
  %v1977 = vpop.xlane.xlu0 %1976
  %v1978 = vsel %vm534, %v503, 0.0
  %1979 = vadd.xlane.f32.xlu0 %v1978
  %v1980 = vpop.xlane.xlu0 %1979
  %v1981 = vsel %vm534, %v504, 0.0
  %1982 = vadd.xlane.f32.xlu0 %v1981
  %v1983 = vpop.xlane.xlu0 %1982
  %v1984 = vsel %vm534, %v505, 0.0
  %1985 = vadd.xlane.f32.xlu0 %v1984
  %v1986 = vpop.xlane.xlu0 %1985
  %v1987 = vsel %vm534, %v506, 0.0
  %1988 = vadd.xlane.f32.xlu0 %v1987
  %v1989 = vpop.xlane.xlu0 %1988
  %v1990 = vsel %vm534, %v507, 0.0
  %1991 = vadd.xlane.f32.xlu0 %v1990
  %v1992 = vpop.xlane.xlu0 %1991
  %v1993 = vsel %vm534, %v508, 0.0
  %1994 = vadd.xlane.f32.xlu0 %v1993
  %v1995 = vpop.xlane.xlu0 %1994
  %v1996 = vsel %vm534, %v509, 0.0
  %1997 = vadd.xlane.f32.xlu0 %v1996
  %v1998 = vpop.xlane.xlu0 %1997
  %v1999 = vsel %vm534, %v510, 0.0
  %2000 = vadd.xlane.f32.xlu0 %v1999
  %v2001 = vpop.xlane.xlu0 %2000
  %v2002 = vsel %vm534, %v511, 0.0
  %2003 = vadd.xlane.f32.xlu0 %v2002
  %v2004 = vpop.xlane.xlu0 %2003
  %v2005 = vsel %vm534, %v512, 0.0
  %2006 = vadd.xlane.f32.xlu0 %v2005
  %v2007 = vpop.xlane.xlu0 %2006
  %v2008 = vsel %vm534, %v513, 0.0
  %2009 = vadd.xlane.f32.xlu0 %v2008
  %v2010 = vpop.xlane.xlu0 %2009
  %v2011 = vsel %vm534, %v514, 0.0
  %2012 = vadd.xlane.f32.xlu0 %v2011
  %v2013 = vpop.xlane.xlu0 %2012
  %v2014 = vsel %vm534, %v515, 0.0
  %2015 = vadd.xlane.f32.xlu0 %v2014
  %v2016 = vpop.xlane.xlu0 %2015
  %v2017 = vsel %vm534, %v516, 0.0
  %2018 = vadd.xlane.f32.xlu0 %v2017
  %v2019 = vpop.xlane.xlu0 %2018
  %v2020 = vsel %vm534, %v517, 0.0
  %2021 = vadd.xlane.f32.xlu0 %v2020
  %v2022 = vpop.xlane.xlu0 %2021
  %v2023 = vsel %vm534, %v518, 0.0
  %2024 = vadd.xlane.f32.xlu0 %v2023
  %v2025 = vpop.xlane.xlu0 %2024
  %v2026 = vsel %vm534, %v519, 0.0
  %2027 = vadd.xlane.f32.xlu0 %v2026
  %v2028 = vpop.xlane.xlu0 %2027
  %v2029 = vsel %vm534, %v520, 0.0
  %2030 = vadd.xlane.f32.xlu0 %v2029
  %v2031 = vpop.xlane.xlu0 %2030
  %v2032 = vsel %vm534, %v521, 0.0
  %2033 = vadd.xlane.f32.xlu0 %v2032
  %v2034 = vpop.xlane.xlu0 %2033
  %v2035 = vsel %vm534, %v522, 0.0
  %2036 = vadd.xlane.f32.xlu0 %v2035
  %v2037 = vpop.xlane.xlu0 %2036
  %v2038 = vsel %vm534, %v523, 0.0
  %2039 = vadd.xlane.f32.xlu0 %v2038
  %v2040 = vpop.xlane.xlu0 %2039
  %v2041 = vsel %vm534, %v524, 0.0
  %2042 = vadd.xlane.f32.xlu0 %v2041
  %v2043 = vpop.xlane.xlu0 %2042
  %v2044 = vsel %vm534, %v525, 0.0
  %2045 = vadd.xlane.f32.xlu0 %v2044
  %v2046 = vpop.xlane.xlu0 %2045
  %v2047 = vsel %vm534, %v526, 0.0
  %2048 = vadd.xlane.f32.xlu0 %v2047
  %v2049 = vpop.xlane.xlu0 %2048
  %v2050 = vsel %vm534, %v527, 0.0
  %2051 = vadd.xlane.f32.xlu0 %v2050
  %v2052 = vpop.xlane.xlu0 %2051
  %v2053 = vsel %vm534, %v528, 0.0
  %2054 = vadd.xlane.f32.xlu0 %v2053
  %v2055 = vpop.xlane.xlu0 %2054
  %v2056 = vsel %vm534, %v529, 0.0
  %2057 = vadd.xlane.f32.xlu0 %v2056
  %v2058 = vpop.xlane.xlu0 %2057
  %v2059 = vsel %vm534, %v530, 0.0
  %2060 = vadd.xlane.f32.xlu0 %v2059
  %v2061 = vpop.xlane.xlu0 %2060
  %v2062 = vsel %vm534, %v531, 0.0
  %2063 = vadd.xlane.f32.xlu0 %v2062
  %v2064 = vpop.xlane.xlu0 %2063
  %v2065 = vsel %vm534, %v532, 0.0
  %2066 = vadd.xlane.f32.xlu0 %v2065
  %v2067 = vpop.xlane.xlu0 %2066
  %v2068 = vsel %vm534, %v533, 0.0
  %2069 = vadd.xlane.f32.xlu0 %v2068
  %v2070 = vpop.xlane.xlu0 %2069
  %v2071 = vpack.c.bf16 %v540, %v537
  %v2072 = vpack.c.bf16 %v546, %v543
  %v2073 = vpack.c.bf16 %v552, %v549
  %v2074 = vpack.c.bf16 %v558, %v555
  %v2075 = vpack.c.bf16 %v564, %v561
  %v2076 = vpack.c.bf16 %v570, %v567
  %v2077 = vpack.c.bf16 %v576, %v573
  %v2078 = vpack.c.bf16 %v582, %v579
  %v2079 = vpack.c.bf16 %v588, %v585
  %v2080 = vpack.c.bf16 %v594, %v591
  %v2081 = vpack.c.bf16 %v600, %v597
  %v2082 = vpack.c.bf16 %v606, %v603
  %v2083 = vpack.c.bf16 %v612, %v609
  %v2084 = vpack.c.bf16 %v618, %v615
  %v2085 = vpack.c.bf16 %v624, %v621
  %v2086 = vpack.c.bf16 %v630, %v627
  %v2087 = vpack.c.bf16 %v636, %v633
  %v2088 = vpack.c.bf16 %v642, %v639
  %v2089 = vpack.c.bf16 %v648, %v645
  %v2090 = vpack.c.bf16 %v654, %v651
  %v2091 = vpack.c.bf16 %v660, %v657
  %v2092 = vpack.c.bf16 %v666, %v663
  %v2093 = vpack.c.bf16 %v672, %v669
  %v2094 = vpack.c.bf16 %v678, %v675
  %v2095 = vpack.c.bf16 %v684, %v681
  %v2096 = vpack.c.bf16 %v690, %v687
  %v2097 = vpack.c.bf16 %v696, %v693
  %v2098 = vpack.c.bf16 %v702, %v699
  %v2099 = vpack.c.bf16 %v708, %v705
  %v2100 = vpack.c.bf16 %v714, %v711
  %v2101 = vpack.c.bf16 %v720, %v717
  %v2102 = vpack.c.bf16 %v726, %v723
  %v2103 = vpack.c.bf16 %v732, %v729
  %v2104 = vpack.c.bf16 %v738, %v735
  %v2105 = vpack.c.bf16 %v744, %v741
  %v2106 = vpack.c.bf16 %v750, %v747
  %v2107 = vpack.c.bf16 %v756, %v753
  %v2108 = vpack.c.bf16 %v762, %v759
  %v2109 = vpack.c.bf16 %v768, %v765
  %v2110 = vpack.c.bf16 %v774, %v771
  %v2111 = vpack.c.bf16 %v780, %v777
  %v2112 = vpack.c.bf16 %v786, %v783
  %v2113 = vpack.c.bf16 %v792, %v789
  %v2114 = vpack.c.bf16 %v798, %v795
  %v2115 = vpack.c.bf16 %v804, %v801
  %v2116 = vpack.c.bf16 %v810, %v807
  %v2117 = vpack.c.bf16 %v816, %v813
  %v2118 = vpack.c.bf16 %v822, %v819
  %v2119 = vpack.c.bf16 %v828, %v825
  %v2120 = vpack.c.bf16 %v834, %v831
  %v2121 = vpack.c.bf16 %v840, %v837
  %v2122 = vpack.c.bf16 %v846, %v843
  %v2123 = vpack.c.bf16 %v852, %v849
  %v2124 = vpack.c.bf16 %v858, %v855
  %v2125 = vpack.c.bf16 %v864, %v861
  %v2126 = vpack.c.bf16 %v870, %v867
  %v2127 = vpack.c.bf16 %v876, %v873
  %v2128 = vpack.c.bf16 %v882, %v879
  %v2129 = vpack.c.bf16 %v888, %v885
  %v2130 = vpack.c.bf16 %v894, %v891
  %v2131 = vpack.c.bf16 %v900, %v897
  %v2132 = vpack.c.bf16 %v906, %v903
  %v2133 = vpack.c.bf16 %v912, %v909
  %v2134 = vpack.c.bf16 %v918, %v915
  %v2135 = vpack.c.bf16 %v924, %v921
  %v2136 = vpack.c.bf16 %v930, %v927
  %v2137 = vpack.c.bf16 %v936, %v933
  %v2138 = vpack.c.bf16 %v942, %v939
  %v2139 = vpack.c.bf16 %v948, %v945
  %v2140 = vpack.c.bf16 %v954, %v951
  %v2141 = vpack.c.bf16 %v960, %v957
  %v2142 = vpack.c.bf16 %v966, %v963
  %v2143 = vpack.c.bf16 %v972, %v969
  %v2144 = vpack.c.bf16 %v978, %v975
  %v2145 = vpack.c.bf16 %v984, %v981
  %v2146 = vpack.c.bf16 %v990, %v987
  %v2147 = vpack.c.bf16 %v996, %v993
  %v2148 = vpack.c.bf16 %v1002, %v999
  %v2149 = vpack.c.bf16 %v1008, %v1005
  %v2150 = vpack.c.bf16 %v1014, %v1011
  %v2151 = vpack.c.bf16 %v1020, %v1017
  %v2152 = vpack.c.bf16 %v1026, %v1023
  %v2153 = vpack.c.bf16 %v1032, %v1029
  %v2154 = vpack.c.bf16 %v1038, %v1035
  %v2155 = vpack.c.bf16 %v1044, %v1041
  %v2156 = vpack.c.bf16 %v1050, %v1047
  %v2157 = vpack.c.bf16 %v1056, %v1053
  %v2158 = vpack.c.bf16 %v1062, %v1059
  %v2159 = vpack.c.bf16 %v1068, %v1065
  %v2160 = vpack.c.bf16 %v1074, %v1071
  %v2161 = vpack.c.bf16 %v1080, %v1077
  %v2162 = vpack.c.bf16 %v1086, %v1083
  %v2163 = vpack.c.bf16 %v1092, %v1089
  %v2164 = vpack.c.bf16 %v1098, %v1095
  %v2165 = vpack.c.bf16 %v1104, %v1101
  %v2166 = vpack.c.bf16 %v1110, %v1107
  %v2167 = vpack.c.bf16 %v1116, %v1113
  %v2168 = vpack.c.bf16 %v1122, %v1119
  %v2169 = vpack.c.bf16 %v1128, %v1125
  %v2170 = vpack.c.bf16 %v1134, %v1131
  %v2171 = vpack.c.bf16 %v1140, %v1137
  %v2172 = vpack.c.bf16 %v1146, %v1143
  %v2173 = vpack.c.bf16 %v1152, %v1149
  %v2174 = vpack.c.bf16 %v1158, %v1155
  %v2175 = vpack.c.bf16 %v1164, %v1161
  %v2176 = vpack.c.bf16 %v1170, %v1167
  %v2177 = vpack.c.bf16 %v1176, %v1173
  %v2178 = vpack.c.bf16 %v1182, %v1179
  %v2179 = vpack.c.bf16 %v1188, %v1185
  %v2180 = vpack.c.bf16 %v1194, %v1191
  %v2181 = vpack.c.bf16 %v1200, %v1197
  %v2182 = vpack.c.bf16 %v1206, %v1203
  %v2183 = vpack.c.bf16 %v1212, %v1209
  %v2184 = vpack.c.bf16 %v1218, %v1215
  %v2185 = vpack.c.bf16 %v1224, %v1221
  %v2186 = vpack.c.bf16 %v1230, %v1227
  %v2187 = vpack.c.bf16 %v1236, %v1233
  %v2188 = vpack.c.bf16 %v1242, %v1239
  %v2189 = vpack.c.bf16 %v1248, %v1245
  %v2190 = vpack.c.bf16 %v1254, %v1251
  %v2191 = vpack.c.bf16 %v1260, %v1257
  %v2192 = vpack.c.bf16 %v1266, %v1263
  %v2193 = vpack.c.bf16 %v1272, %v1269
  %v2194 = vpack.c.bf16 %v1278, %v1275
  %v2195 = vpack.c.bf16 %v1284, %v1281
  %v2196 = vpack.c.bf16 %v1290, %v1287
  %v2197 = vpack.c.bf16 %v1296, %v1293
  %v2198 = vpack.c.bf16 %v1302, %v1299
  %v2199 = vpack.c.bf16 %v1308, %v1305
  %v2200 = vpack.c.bf16 %v1314, %v1311
  %v2201 = vpack.c.bf16 %v1320, %v1317
  %v2202 = vpack.c.bf16 %v1326, %v1323
  %v2203 = vpack.c.bf16 %v1332, %v1329
  %v2204 = vpack.c.bf16 %v1338, %v1335
  %v2205 = vpack.c.bf16 %v1344, %v1341
  %v2206 = vpack.c.bf16 %v1350, %v1347
  %v2207 = vpack.c.bf16 %v1356, %v1353
  %v2208 = vpack.c.bf16 %v1362, %v1359
  %v2209 = vpack.c.bf16 %v1368, %v1365
  %v2210 = vpack.c.bf16 %v1374, %v1371
  %v2211 = vpack.c.bf16 %v1380, %v1377
  %v2212 = vpack.c.bf16 %v1386, %v1383
  %v2213 = vpack.c.bf16 %v1392, %v1389
  %v2214 = vpack.c.bf16 %v1398, %v1395
  %v2215 = vpack.c.bf16 %v1404, %v1401
  %v2216 = vpack.c.bf16 %v1410, %v1407
  %v2217 = vpack.c.bf16 %v1416, %v1413
  %v2218 = vpack.c.bf16 %v1422, %v1419
  %v2219 = vpack.c.bf16 %v1428, %v1425
  %v2220 = vpack.c.bf16 %v1434, %v1431
  %v2221 = vpack.c.bf16 %v1440, %v1437
  %v2222 = vpack.c.bf16 %v1446, %v1443
  %v2223 = vpack.c.bf16 %v1452, %v1449
  %v2224 = vpack.c.bf16 %v1458, %v1455
  %v2225 = vpack.c.bf16 %v1464, %v1461
  %v2226 = vpack.c.bf16 %v1470, %v1467
  %v2227 = vpack.c.bf16 %v1476, %v1473
  %v2228 = vpack.c.bf16 %v1482, %v1479
  %v2229 = vpack.c.bf16 %v1488, %v1485
  %v2230 = vpack.c.bf16 %v1494, %v1491
  %v2231 = vpack.c.bf16 %v1500, %v1497
  %v2232 = vpack.c.bf16 %v1506, %v1503
  %v2233 = vpack.c.bf16 %v1512, %v1509
  %v2234 = vpack.c.bf16 %v1518, %v1515
  %v2235 = vpack.c.bf16 %v1524, %v1521
  %v2236 = vpack.c.bf16 %v1530, %v1527
  %v2237 = vpack.c.bf16 %v1536, %v1533
  %v2238 = vpack.c.bf16 %v1542, %v1539
  %v2239 = vpack.c.bf16 %v1548, %v1545
  %v2240 = vpack.c.bf16 %v1554, %v1551
  %v2241 = vpack.c.bf16 %v1560, %v1557
  %v2242 = vpack.c.bf16 %v1566, %v1563
  %v2243 = vpack.c.bf16 %v1572, %v1569
  %v2244 = vpack.c.bf16 %v1578, %v1575
  %v2245 = vpack.c.bf16 %v1584, %v1581
  %v2246 = vpack.c.bf16 %v1590, %v1587
  %v2247 = vpack.c.bf16 %v1596, %v1593
  %v2248 = vpack.c.bf16 %v1602, %v1599
  %v2249 = vpack.c.bf16 %v1608, %v1605
  %v2250 = vpack.c.bf16 %v1614, %v1611
  %v2251 = vpack.c.bf16 %v1620, %v1617
  %v2252 = vpack.c.bf16 %v1626, %v1623
  %v2253 = vpack.c.bf16 %v1632, %v1629
  %v2254 = vpack.c.bf16 %v1638, %v1635
  %v2255 = vpack.c.bf16 %v1644, %v1641
  %v2256 = vpack.c.bf16 %v1650, %v1647
  %v2257 = vpack.c.bf16 %v1656, %v1653
  %v2258 = vpack.c.bf16 %v1662, %v1659
  %v2259 = vpack.c.bf16 %v1668, %v1665
  %v2260 = vpack.c.bf16 %v1674, %v1671
  %v2261 = vpack.c.bf16 %v1680, %v1677
  %v2262 = vpack.c.bf16 %v1686, %v1683
  %v2263 = vpack.c.bf16 %v1692, %v1689
  %v2264 = vpack.c.bf16 %v1698, %v1695
  %v2265 = vpack.c.bf16 %v1704, %v1701
  %v2266 = vpack.c.bf16 %v1710, %v1707
  %v2267 = vpack.c.bf16 %v1716, %v1713
  %v2268 = vpack.c.bf16 %v1722, %v1719
  %v2269 = vpack.c.bf16 %v1728, %v1725
  %v2270 = vpack.c.bf16 %v1734, %v1731
  %v2271 = vpack.c.bf16 %v1740, %v1737
  %v2272 = vpack.c.bf16 %v1746, %v1743
  %v2273 = vpack.c.bf16 %v1752, %v1749
  %v2274 = vpack.c.bf16 %v1758, %v1755
  %v2275 = vpack.c.bf16 %v1764, %v1761
  %v2276 = vpack.c.bf16 %v1770, %v1767
  %v2277 = vpack.c.bf16 %v1776, %v1773
  %v2278 = vpack.c.bf16 %v1782, %v1779
  %v2279 = vpack.c.bf16 %v1788, %v1785
  %v2280 = vpack.c.bf16 %v1794, %v1791
  %v2281 = vpack.c.bf16 %v1800, %v1797
  %v2282 = vpack.c.bf16 %v1806, %v1803
  %v2283 = vpack.c.bf16 %v1812, %v1809
  %v2284 = vpack.c.bf16 %v1818, %v1815
  %v2285 = vpack.c.bf16 %v1824, %v1821
  %v2286 = vpack.c.bf16 %v1830, %v1827
  %v2287 = vpack.c.bf16 %v1836, %v1833
  %v2288 = vpack.c.bf16 %v1842, %v1839
  %v2289 = vpack.c.bf16 %v1848, %v1845
  %v2290 = vpack.c.bf16 %v1854, %v1851
  %v2291 = vpack.c.bf16 %v1860, %v1857
  %v2292 = vpack.c.bf16 %v1866, %v1863
  %v2293 = vpack.c.bf16 %v1872, %v1869
  %v2294 = vpack.c.bf16 %v1878, %v1875
  %v2295 = vpack.c.bf16 %v1884, %v1881
  %v2296 = vpack.c.bf16 %v1890, %v1887
  %v2297 = vpack.c.bf16 %v1896, %v1893
  %v2298 = vpack.c.bf16 %v1902, %v1899
  %v2299 = vpack.c.bf16 %v1908, %v1905
  %v2300 = vpack.c.bf16 %v1914, %v1911
  %v2301 = vpack.c.bf16 %v1920, %v1917
  %v2302 = vpack.c.bf16 %v1926, %v1923
  %v2303 = vpack.c.bf16 %v1932, %v1929
  %v2304 = vpack.c.bf16 %v1938, %v1935
  %v2305 = vpack.c.bf16 %v1944, %v1941
  %v2306 = vpack.c.bf16 %v1950, %v1947
  %v2307 = vpack.c.bf16 %v1956, %v1953
  %v2308 = vpack.c.bf16 %v1962, %v1959
  %v2309 = vpack.c.bf16 %v1968, %v1965
  %v2310 = vpack.c.bf16 %v1974, %v1971
  %v2311 = vpack.c.bf16 %v1980, %v1977
  %v2312 = vpack.c.bf16 %v1986, %v1983
  %v2313 = vpack.c.bf16 %v1992, %v1989
  %v2314 = vpack.c.bf16 %v1998, %v1995
  %v2315 = vpack.c.bf16 %v2004, %v2001
  %v2316 = vpack.c.bf16 %v2010, %v2007
  %v2317 = vpack.c.bf16 %v2016, %v2013
  %v2318 = vpack.c.bf16 %v2022, %v2019
  %v2319 = vpack.c.bf16 %v2028, %v2025
  %v2320 = vpack.c.bf16 %v2034, %v2031
  %v2321 = vpack.c.bf16 %v2040, %v2037
  %v2322 = vpack.c.bf16 %v2046, %v2043
  %v2323 = vpack.c.bf16 %v2052, %v2049
  %v2324 = vpack.c.bf16 %v2058, %v2055
  %v2325 = vpack.c.bf16 %v2064, %v2061
  %v2326 = vpack.c.bf16 %v2070, %v2067
  %v2327 = vld [vmem:[%s1] sm:$0xff]
  %v2328 = vld [vmem:[%s1 + $0x8] sm:$0xff]
  %v2329 = vld [vmem:[%s1 + $0x10] sm:$0xff]
  %v2330 = vld [vmem:[%s1 + $0x18] sm:$0xff]
  %v2331 = vld [vmem:[%s1 + $0x20] sm:$0xff]
  %v2332 = vld [vmem:[%s1 + $0x28] sm:$0xff]
  %v2333 = vld [vmem:[%s1 + $0x30] sm:$0xff]
  %v2334 = vld [vmem:[%s1 + $0x38] sm:$0xff]
  %v2335 = vld [vmem:[%s1 + $0x40] sm:$0xff]
  %v2336 = vld [vmem:[%s1 + $0x48] sm:$0xff]
  %v2337 = vld [vmem:[%s1 + $0x50] sm:$0xff]
  %v2338 = vld [vmem:[%s1 + $0x58] sm:$0xff]
  %v2339 = vld [vmem:[%s1 + $0x60] sm:$0xff]
  %v2340 = vld [vmem:[%s1 + $0x68] sm:$0xff]
  %v2341 = vld [vmem:[%s1 + $0x70] sm:$0xff]
  %v2342 = vld [vmem:[%s1 + $0x78] sm:$0xff]
  %v2343 = vld [vmem:[%s1 + $0x80] sm:$0xff]
  %v2344 = vld [vmem:[%s1 + $0x88] sm:$0xff]
  %v2345 = vld [vmem:[%s1 + $0x90] sm:$0xff]
  %v2346 = vld [vmem:[%s1 + $0x98] sm:$0xff]
  %v2347 = vld [vmem:[%s1 + $0xa0] sm:$0xff]
  %v2348 = vld [vmem:[%s1 + $0xa8] sm:$0xff]
  %v2349 = vld [vmem:[%s1 + $0xb0] sm:$0xff]
  %v2350 = vld [vmem:[%s1 + $0xb8] sm:$0xff]
  %v2351 = vld [vmem:[%s1 + $0xc0] sm:$0xff]
  %v2352 = vld [vmem:[%s1 + $0xc8] sm:$0xff]
  %v2353 = vld [vmem:[%s1 + $0xd0] sm:$0xff]
  %v2354 = vld [vmem:[%s1 + $0xd8] sm:$0xff]
  %v2355 = vld [vmem:[%s1 + $0xe0] sm:$0xff]
  %v2356 = vld [vmem:[%s1 + $0xe8] sm:$0xff]
  %v2357 = vld [vmem:[%s1 + $0xf0] sm:$0xff]
  %v2358 = vld [vmem:[%s1 + $0xf8] sm:$0xff]
  %v2359 = vld [vmem:[%s1 + $0x100] sm:$0xff]
  %v2360 = vld [vmem:[%s1 + $0x108] sm:$0xff]
  %v2361 = vld [vmem:[%s1 + $0x110] sm:$0xff]
  %v2362 = vld [vmem:[%s1 + $0x118] sm:$0xff]
  %v2363 = vld [vmem:[%s1 + $0x120] sm:$0xff]
  %v2364 = vld [vmem:[%s1 + $0x128] sm:$0xff]
  %v2365 = vld [vmem:[%s1 + $0x130] sm:$0xff]
  %v2366 = vld [vmem:[%s1 + $0x138] sm:$0xff]
  %v2367 = vld [vmem:[%s1 + $0x140] sm:$0xff]
  %v2368 = vld [vmem:[%s1 + $0x148] sm:$0xff]
  %v2369 = vld [vmem:[%s1 + $0x150] sm:$0xff]
  %v2370 = vld [vmem:[%s1 + $0x158] sm:$0xff]
  %v2371 = vld [vmem:[%s1 + $0x160] sm:$0xff]
  %v2372 = vld [vmem:[%s1 + $0x168] sm:$0xff]
  %v2373 = vld [vmem:[%s1 + $0x170] sm:$0xff]
  %v2374 = vld [vmem:[%s1 + $0x178] sm:$0xff]
  %v2375 = vld [vmem:[%s1 + $0x180] sm:$0xff]
  %v2376 = vld [vmem:[%s1 + $0x188] sm:$0xff]
  %v2377 = vld [vmem:[%s1 + $0x190] sm:$0xff]
  %v2378 = vld [vmem:[%s1 + $0x198] sm:$0xff]
  %v2379 = vld [vmem:[%s1 + $0x1a0] sm:$0xff]
  %v2380 = vld [vmem:[%s1 + $0x1a8] sm:$0xff]
  %v2381 = vld [vmem:[%s1 + $0x1b0] sm:$0xff]
  %v2382 = vld [vmem:[%s1 + $0x1b8] sm:$0xff]
  %v2383 = vld [vmem:[%s1 + $0x1c0] sm:$0xff]
  %v2384 = vld [vmem:[%s1 + $0x1c8] sm:$0xff]
  %v2385 = vld [vmem:[%s1 + $0x1d0] sm:$0xff]
  %v2386 = vld [vmem:[%s1 + $0x1d8] sm:$0xff]
  %v2387 = vld [vmem:[%s1 + $0x1e0] sm:$0xff]
  %v2388 = vld [vmem:[%s1 + $0x1e8] sm:$0xff]
  %v2389 = vld [vmem:[%s1 + $0x1f0] sm:$0xff]
  %v2390 = vld [vmem:[%s1 + $0x1f8] sm:$0xff]
  %v2391 = vld [vmem:[%s1 + $0x200] sm:$0xff]
  %v2392 = vld [vmem:[%s1 + $0x208] sm:$0xff]
  %v2393 = vld [vmem:[%s1 + $0x210] sm:$0xff]
  %v2394 = vld [vmem:[%s1 + $0x218] sm:$0xff]
  %v2395 = vld [vmem:[%s1 + $0x220] sm:$0xff]
  %v2396 = vld [vmem:[%s1 + $0x228] sm:$0xff]
  %v2397 = vld [vmem:[%s1 + $0x230] sm:$0xff]
  %v2398 = vld [vmem:[%s1 + $0x238] sm:$0xff]
  %v2399 = vld [vmem:[%s1 + $0x240] sm:$0xff]
  %v2400 = vld [vmem:[%s1 + $0x248] sm:$0xff]
  %v2401 = vld [vmem:[%s1 + $0x250] sm:$0xff]
  %v2402 = vld [vmem:[%s1 + $0x258] sm:$0xff]
  %v2403 = vld [vmem:[%s1 + $0x260] sm:$0xff]
  %v2404 = vld [vmem:[%s1 + $0x268] sm:$0xff]
  %v2405 = vld [vmem:[%s1 + $0x270] sm:$0xff]
  %v2406 = vld [vmem:[%s1 + $0x278] sm:$0xff]
  %v2407 = vld [vmem:[%s1 + $0x280] sm:$0xff]
  %v2408 = vld [vmem:[%s1 + $0x288] sm:$0xff]
  %v2409 = vld [vmem:[%s1 + $0x290] sm:$0xff]
  %v2410 = vld [vmem:[%s1 + $0x298] sm:$0xff]
  %v2411 = vld [vmem:[%s1 + $0x2a0] sm:$0xff]
  %v2412 = vld [vmem:[%s1 + $0x2a8] sm:$0xff]
  %v2413 = vld [vmem:[%s1 + $0x2b0] sm:$0xff]
  %v2414 = vld [vmem:[%s1 + $0x2b8] sm:$0xff]
  %v2415 = vld [vmem:[%s1 + $0x2c0] sm:$0xff]
  %v2416 = vld [vmem:[%s1 + $0x2c8] sm:$0xff]
  %v2417 = vld [vmem:[%s1 + $0x2d0] sm:$0xff]
  %v2418 = vld [vmem:[%s1 + $0x2d8] sm:$0xff]
  %v2419 = vld [vmem:[%s1 + $0x2e0] sm:$0xff]
  %v2420 = vld [vmem:[%s1 + $0x2e8] sm:$0xff]
  %v2421 = vld [vmem:[%s1 + $0x2f0] sm:$0xff]
  %v2422 = vld [vmem:[%s1 + $0x2f8] sm:$0xff]
  %v2423 = vld [vmem:[%s1 + $0x300] sm:$0xff]
  %v2424 = vld [vmem:[%s1 + $0x308] sm:$0xff]
  %v2425 = vld [vmem:[%s1 + $0x310] sm:$0xff]
  %v2426 = vld [vmem:[%s1 + $0x318] sm:$0xff]
  %v2427 = vld [vmem:[%s1 + $0x320] sm:$0xff]
  %v2428 = vld [vmem:[%s1 + $0x328] sm:$0xff]
  %v2429 = vld [vmem:[%s1 + $0x330] sm:$0xff]
  %v2430 = vld [vmem:[%s1 + $0x338] sm:$0xff]
  %v2431 = vld [vmem:[%s1 + $0x340] sm:$0xff]
  %v2432 = vld [vmem:[%s1 + $0x348] sm:$0xff]
  %v2433 = vld [vmem:[%s1 + $0x350] sm:$0xff]
  %v2434 = vld [vmem:[%s1 + $0x358] sm:$0xff]
  %v2435 = vld [vmem:[%s1 + $0x360] sm:$0xff]
  %v2436 = vld [vmem:[%s1 + $0x368] sm:$0xff]
  %v2437 = vld [vmem:[%s1 + $0x370] sm:$0xff]
  %v2438 = vld [vmem:[%s1 + $0x378] sm:$0xff]
  %v2439 = vld [vmem:[%s1 + $0x380] sm:$0xff]
  %v2440 = vld [vmem:[%s1 + $0x388] sm:$0xff]
  %v2441 = vld [vmem:[%s1 + $0x390] sm:$0xff]
  %v2442 = vld [vmem:[%s1 + $0x398] sm:$0xff]
  %v2443 = vld [vmem:[%s1 + $0x3a0] sm:$0xff]
  %v2444 = vld [vmem:[%s1 + $0x3a8] sm:$0xff]
  %v2445 = vld [vmem:[%s1 + $0x3b0] sm:$0xff]
  %v2446 = vld [vmem:[%s1 + $0x3b8] sm:$0xff]
  %v2447 = vld [vmem:[%s1 + $0x3c0] sm:$0xff]
  %v2448 = vld [vmem:[%s1 + $0x3c8] sm:$0xff]
  %v2449 = vld [vmem:[%s1 + $0x3d0] sm:$0xff]
  %v2450 = vld [vmem:[%s1 + $0x3d8] sm:$0xff]
  %v2451 = vld [vmem:[%s1 + $0x3e0] sm:$0xff]
  %v2452 = vld [vmem:[%s1 + $0x3e8] sm:$0xff]
  %v2453 = vld [vmem:[%s1 + $0x3f0] sm:$0xff]
  %v2454 = vld [vmem:[%s1 + $0x3f8] sm:$0xff]
  %v2455 = vld [vmem:[%s1 + $0x400] sm:$0xff]
  %v2456 = vld [vmem:[%s1 + $0x408] sm:$0xff]
  %v2457 = vld [vmem:[%s1 + $0x410] sm:$0xff]
  %v2458 = vld [vmem:[%s1 + $0x418] sm:$0xff]
  %v2459 = vld [vmem:[%s1 + $0x420] sm:$0xff]
  %v2460 = vld [vmem:[%s1 + $0x428] sm:$0xff]
  %v2461 = vld [vmem:[%s1 + $0x430] sm:$0xff]
  %v2462 = vld [vmem:[%s1 + $0x438] sm:$0xff]
  %v2463 = vld [vmem:[%s1 + $0x440] sm:$0xff]
  %v2464 = vld [vmem:[%s1 + $0x448] sm:$0xff]
  %v2465 = vld [vmem:[%s1 + $0x450] sm:$0xff]
  %v2466 = vld [vmem:[%s1 + $0x458] sm:$0xff]
  %v2467 = vld [vmem:[%s1 + $0x460] sm:$0xff]
  %v2468 = vld [vmem:[%s1 + $0x468] sm:$0xff]
  %v2469 = vld [vmem:[%s1 + $0x470] sm:$0xff]
  %v2470 = vld [vmem:[%s1 + $0x478] sm:$0xff]
  %v2471 = vld [vmem:[%s1 + $0x480] sm:$0xff]
  %v2472 = vld [vmem:[%s1 + $0x488] sm:$0xff]
  %v2473 = vld [vmem:[%s1 + $0x490] sm:$0xff]
  %v2474 = vld [vmem:[%s1 + $0x498] sm:$0xff]
  %v2475 = vld [vmem:[%s1 + $0x4a0] sm:$0xff]
  %v2476 = vld [vmem:[%s1 + $0x4a8] sm:$0xff]
  %v2477 = vld [vmem:[%s1 + $0x4b0] sm:$0xff]
  %v2478 = vld [vmem:[%s1 + $0x4b8] sm:$0xff]
  %v2479 = vld [vmem:[%s1 + $0x4c0] sm:$0xff]
  %v2480 = vld [vmem:[%s1 + $0x4c8] sm:$0xff]
  %v2481 = vld [vmem:[%s1 + $0x4d0] sm:$0xff]
  %v2482 = vld [vmem:[%s1 + $0x4d8] sm:$0xff]
  %v2483 = vld [vmem:[%s1 + $0x4e0] sm:$0xff]
  %v2484 = vld [vmem:[%s1 + $0x4e8] sm:$0xff]
  %v2485 = vld [vmem:[%s1 + $0x4f0] sm:$0xff]
  %v2486 = vld [vmem:[%s1 + $0x4f8] sm:$0xff]
  %v2487 = vld [vmem:[%s1 + $0x500] sm:$0xff]
  %v2488 = vld [vmem:[%s1 + $0x508] sm:$0xff]
  %v2489 = vld [vmem:[%s1 + $0x510] sm:$0xff]
  %v2490 = vld [vmem:[%s1 + $0x518] sm:$0xff]
  %v2491 = vld [vmem:[%s1 + $0x520] sm:$0xff]
  %v2492 = vld [vmem:[%s1 + $0x528] sm:$0xff]
  %v2493 = vld [vmem:[%s1 + $0x530] sm:$0xff]
  %v2494 = vld [vmem:[%s1 + $0x538] sm:$0xff]
  %v2495 = vld [vmem:[%s1 + $0x540] sm:$0xff]
  %v2496 = vld [vmem:[%s1 + $0x548] sm:$0xff]
  %v2497 = vld [vmem:[%s1 + $0x550] sm:$0xff]
  %v2498 = vld [vmem:[%s1 + $0x558] sm:$0xff]
  %v2499 = vld [vmem:[%s1 + $0x560] sm:$0xff]
  %v2500 = vld [vmem:[%s1 + $0x568] sm:$0xff]
  %v2501 = vld [vmem:[%s1 + $0x570] sm:$0xff]
  %v2502 = vld [vmem:[%s1 + $0x578] sm:$0xff]
  %v2503 = vld [vmem:[%s1 + $0x580] sm:$0xff]
  %v2504 = vld [vmem:[%s1 + $0x588] sm:$0xff]
  %v2505 = vld [vmem:[%s1 + $0x590] sm:$0xff]
  %v2506 = vld [vmem:[%s1 + $0x598] sm:$0xff]
  %v2507 = vld [vmem:[%s1 + $0x5a0] sm:$0xff]
  %v2508 = vld [vmem:[%s1 + $0x5a8] sm:$0xff]
  %v2509 = vld [vmem:[%s1 + $0x5b0] sm:$0xff]
  %v2510 = vld [vmem:[%s1 + $0x5b8] sm:$0xff]
  %v2511 = vld [vmem:[%s1 + $0x5c0] sm:$0xff]
  %v2512 = vld [vmem:[%s1 + $0x5c8] sm:$0xff]
  %v2513 = vld [vmem:[%s1 + $0x5d0] sm:$0xff]
  %v2514 = vld [vmem:[%s1 + $0x5d8] sm:$0xff]
  %v2515 = vld [vmem:[%s1 + $0x5e0] sm:$0xff]
  %v2516 = vld [vmem:[%s1 + $0x5e8] sm:$0xff]
  %v2517 = vld [vmem:[%s1 + $0x5f0] sm:$0xff]
  %v2518 = vld [vmem:[%s1 + $0x5f8] sm:$0xff]
  %v2519 = vld [vmem:[%s1 + $0x600] sm:$0xff]
  %v2520 = vld [vmem:[%s1 + $0x608] sm:$0xff]
  %v2521 = vld [vmem:[%s1 + $0x610] sm:$0xff]
  %v2522 = vld [vmem:[%s1 + $0x618] sm:$0xff]
  %v2523 = vld [vmem:[%s1 + $0x620] sm:$0xff]
  %v2524 = vld [vmem:[%s1 + $0x628] sm:$0xff]
  %v2525 = vld [vmem:[%s1 + $0x630] sm:$0xff]
  %v2526 = vld [vmem:[%s1 + $0x638] sm:$0xff]
  %v2527 = vld [vmem:[%s1 + $0x640] sm:$0xff]
  %v2528 = vld [vmem:[%s1 + $0x648] sm:$0xff]
  %v2529 = vld [vmem:[%s1 + $0x650] sm:$0xff]
  %v2530 = vld [vmem:[%s1 + $0x658] sm:$0xff]
  %v2531 = vld [vmem:[%s1 + $0x660] sm:$0xff]
  %v2532 = vld [vmem:[%s1 + $0x668] sm:$0xff]
  %v2533 = vld [vmem:[%s1 + $0x670] sm:$0xff]
  %v2534 = vld [vmem:[%s1 + $0x678] sm:$0xff]
  %v2535 = vld [vmem:[%s1 + $0x680] sm:$0xff]
  %v2536 = vld [vmem:[%s1 + $0x688] sm:$0xff]
  %v2537 = vld [vmem:[%s1 + $0x690] sm:$0xff]
  %v2538 = vld [vmem:[%s1 + $0x698] sm:$0xff]
  %v2539 = vld [vmem:[%s1 + $0x6a0] sm:$0xff]
  %v2540 = vld [vmem:[%s1 + $0x6a8] sm:$0xff]
  %v2541 = vld [vmem:[%s1 + $0x6b0] sm:$0xff]
  %v2542 = vld [vmem:[%s1 + $0x6b8] sm:$0xff]
  %v2543 = vld [vmem:[%s1 + $0x6c0] sm:$0xff]
  %v2544 = vld [vmem:[%s1 + $0x6c8] sm:$0xff]
  %v2545 = vld [vmem:[%s1 + $0x6d0] sm:$0xff]
  %v2546 = vld [vmem:[%s1 + $0x6d8] sm:$0xff]
  %v2547 = vld [vmem:[%s1 + $0x6e0] sm:$0xff]
  %v2548 = vld [vmem:[%s1 + $0x6e8] sm:$0xff]
  %v2549 = vld [vmem:[%s1 + $0x6f0] sm:$0xff]
  %v2550 = vld [vmem:[%s1 + $0x6f8] sm:$0xff]
  %v2551 = vld [vmem:[%s1 + $0x700] sm:$0xff]
  %v2552 = vld [vmem:[%s1 + $0x708] sm:$0xff]
  %v2553 = vld [vmem:[%s1 + $0x710] sm:$0xff]
  %v2554 = vld [vmem:[%s1 + $0x718] sm:$0xff]
  %v2555 = vld [vmem:[%s1 + $0x720] sm:$0xff]
  %v2556 = vld [vmem:[%s1 + $0x728] sm:$0xff]
  %v2557 = vld [vmem:[%s1 + $0x730] sm:$0xff]
  %v2558 = vld [vmem:[%s1 + $0x738] sm:$0xff]
  %v2559 = vld [vmem:[%s1 + $0x740] sm:$0xff]
  %v2560 = vld [vmem:[%s1 + $0x748] sm:$0xff]
  %v2561 = vld [vmem:[%s1 + $0x750] sm:$0xff]
  %v2562 = vld [vmem:[%s1 + $0x758] sm:$0xff]
  %v2563 = vld [vmem:[%s1 + $0x760] sm:$0xff]
  %v2564 = vld [vmem:[%s1 + $0x768] sm:$0xff]
  %v2565 = vld [vmem:[%s1 + $0x770] sm:$0xff]
  %v2566 = vld [vmem:[%s1 + $0x778] sm:$0xff]
  %v2567 = vld [vmem:[%s1 + $0x780] sm:$0xff]
  %v2568 = vld [vmem:[%s1 + $0x788] sm:$0xff]
  %v2569 = vld [vmem:[%s1 + $0x790] sm:$0xff]
  %v2570 = vld [vmem:[%s1 + $0x798] sm:$0xff]
  %v2571 = vld [vmem:[%s1 + $0x7a0] sm:$0xff]
  %v2572 = vld [vmem:[%s1 + $0x7a8] sm:$0xff]
  %v2573 = vld [vmem:[%s1 + $0x7b0] sm:$0xff]
  %v2574 = vld [vmem:[%s1 + $0x7b8] sm:$0xff]
  %v2575 = vld [vmem:[%s1 + $0x7c0] sm:$0xff]
  %v2576 = vld [vmem:[%s1 + $0x7c8] sm:$0xff]
  %v2577 = vld [vmem:[%s1 + $0x7d0] sm:$0xff]
  %v2578 = vld [vmem:[%s1 + $0x7d8] sm:$0xff]
  %v2579 = vld [vmem:[%s1 + $0x7e0] sm:$0xff]
  %v2580 = vld [vmem:[%s1 + $0x7e8] sm:$0xff]
  %v2581 = vld [vmem:[%s1 + $0x7f0] sm:$0xff]
  %v2582 = vld [vmem:[%s1 + $0x7f8] sm:$0xff]
  %v2583 = vld [vmem:[%s1 + $0x800] sm:$0xff]
  %v2584 = vld [vmem:[%s1 + $0x808] sm:$0xff]
  %v2585 = vld [vmem:[%s1 + $0x810] sm:$0xff]
  %v2586 = vld [vmem:[%s1 + $0x818] sm:$0xff]
  %v2587 = vld [vmem:[%s1 + $0x820] sm:$0xff]
  %v2588 = vld [vmem:[%s1 + $0x828] sm:$0xff]
  %v2589 = vld [vmem:[%s1 + $0x830] sm:$0xff]
  %v2590 = vld [vmem:[%s1 + $0x838] sm:$0xff]
  %v2591 = vld [vmem:[%s1 + $0x840] sm:$0xff]
  %v2592 = vld [vmem:[%s1 + $0x848] sm:$0xff]
  %v2593 = vld [vmem:[%s1 + $0x850] sm:$0xff]
  %v2594 = vld [vmem:[%s1 + $0x858] sm:$0xff]
  %v2595 = vld [vmem:[%s1 + $0x860] sm:$0xff]
  %v2596 = vld [vmem:[%s1 + $0x868] sm:$0xff]
  %v2597 = vld [vmem:[%s1 + $0x870] sm:$0xff]
  %v2598 = vld [vmem:[%s1 + $0x878] sm:$0xff]
  %v2599 = vld [vmem:[%s1 + $0x880] sm:$0xff]
  %v2600 = vld [vmem:[%s1 + $0x888] sm:$0xff]
  %v2601 = vld [vmem:[%s1 + $0x890] sm:$0xff]
  %v2602 = vld [vmem:[%s1 + $0x898] sm:$0xff]
  %v2603 = vld [vmem:[%s1 + $0x8a0] sm:$0xff]
  %v2604 = vld [vmem:[%s1 + $0x8a8] sm:$0xff]
  %v2605 = vld [vmem:[%s1 + $0x8b0] sm:$0xff]
  %v2606 = vld [vmem:[%s1 + $0x8b8] sm:$0xff]
  %v2607 = vld [vmem:[%s1 + $0x8c0] sm:$0xff]
  %v2608 = vld [vmem:[%s1 + $0x8c8] sm:$0xff]
  %v2609 = vld [vmem:[%s1 + $0x8d0] sm:$0xff]
  %v2610 = vld [vmem:[%s1 + $0x8d8] sm:$0xff]
  %v2611 = vld [vmem:[%s1 + $0x8e0] sm:$0xff]
  %v2612 = vld [vmem:[%s1 + $0x8e8] sm:$0xff]
  %v2613 = vld [vmem:[%s1 + $0x8f0] sm:$0xff]
  %v2614 = vld [vmem:[%s1 + $0x8f8] sm:$0xff]
  %v2615 = vld [vmem:[%s1 + $0x900] sm:$0xff]
  %v2616 = vld [vmem:[%s1 + $0x908] sm:$0xff]
  %v2617 = vld [vmem:[%s1 + $0x910] sm:$0xff]
  %v2618 = vld [vmem:[%s1 + $0x918] sm:$0xff]
  %v2619 = vld [vmem:[%s1 + $0x920] sm:$0xff]
  %v2620 = vld [vmem:[%s1 + $0x928] sm:$0xff]
  %v2621 = vld [vmem:[%s1 + $0x930] sm:$0xff]
  %v2622 = vld [vmem:[%s1 + $0x938] sm:$0xff]
  %v2623 = vld [vmem:[%s1 + $0x940] sm:$0xff]
  %v2624 = vld [vmem:[%s1 + $0x948] sm:$0xff]
  %v2625 = vld [vmem:[%s1 + $0x950] sm:$0xff]
  %v2626 = vld [vmem:[%s1 + $0x958] sm:$0xff]
  %v2627 = vld [vmem:[%s1 + $0x960] sm:$0xff]
  %v2628 = vld [vmem:[%s1 + $0x968] sm:$0xff]
  %v2629 = vld [vmem:[%s1 + $0x970] sm:$0xff]
  %v2630 = vld [vmem:[%s1 + $0x978] sm:$0xff]
  %v2631 = vld [vmem:[%s1 + $0x980] sm:$0xff]
  %v2632 = vld [vmem:[%s1 + $0x988] sm:$0xff]
  %v2633 = vld [vmem:[%s1 + $0x990] sm:$0xff]
  %v2634 = vld [vmem:[%s1 + $0x998] sm:$0xff]
  %v2635 = vld [vmem:[%s1 + $0x9a0] sm:$0xff]
  %v2636 = vld [vmem:[%s1 + $0x9a8] sm:$0xff]
  %v2637 = vld [vmem:[%s1 + $0x9b0] sm:$0xff]
  %v2638 = vld [vmem:[%s1 + $0x9b8] sm:$0xff]
  %v2639 = vld [vmem:[%s1 + $0x9c0] sm:$0xff]
  %v2640 = vld [vmem:[%s1 + $0x9c8] sm:$0xff]
  %v2641 = vld [vmem:[%s1 + $0x9d0] sm:$0xff]
  %v2642 = vld [vmem:[%s1 + $0x9d8] sm:$0xff]
  %v2643 = vld [vmem:[%s1 + $0x9e0] sm:$0xff]
  %v2644 = vld [vmem:[%s1 + $0x9e8] sm:$0xff]
  %v2645 = vld [vmem:[%s1 + $0x9f0] sm:$0xff]
  %v2646 = vld [vmem:[%s1 + $0x9f8] sm:$0xff]
  %v2647 = vld [vmem:[%s1 + $0xa00] sm:$0xff]
  %v2648 = vld [vmem:[%s1 + $0xa08] sm:$0xff]
  %v2649 = vld [vmem:[%s1 + $0xa10] sm:$0xff]
  %v2650 = vld [vmem:[%s1 + $0xa18] sm:$0xff]
  %v2651 = vld [vmem:[%s1 + $0xa20] sm:$0xff]
  %v2652 = vld [vmem:[%s1 + $0xa28] sm:$0xff]
  %v2653 = vld [vmem:[%s1 + $0xa30] sm:$0xff]
  %v2654 = vld [vmem:[%s1 + $0xa38] sm:$0xff]
  %v2655 = vld [vmem:[%s1 + $0xa40] sm:$0xff]
  %v2656 = vld [vmem:[%s1 + $0xa48] sm:$0xff]
  %v2657 = vld [vmem:[%s1 + $0xa50] sm:$0xff]
  %v2658 = vld [vmem:[%s1 + $0xa58] sm:$0xff]
  %v2659 = vld [vmem:[%s1 + $0xa60] sm:$0xff]
  %v2660 = vld [vmem:[%s1 + $0xa68] sm:$0xff]
  %v2661 = vld [vmem:[%s1 + $0xa70] sm:$0xff]
  %v2662 = vld [vmem:[%s1 + $0xa78] sm:$0xff]
  %v2663 = vld [vmem:[%s1 + $0xa80] sm:$0xff]
  %v2664 = vld [vmem:[%s1 + $0xa88] sm:$0xff]
  %v2665 = vld [vmem:[%s1 + $0xa90] sm:$0xff]
  %v2666 = vld [vmem:[%s1 + $0xa98] sm:$0xff]
  %v2667 = vld [vmem:[%s1 + $0xaa0] sm:$0xff]
  %v2668 = vld [vmem:[%s1 + $0xaa8] sm:$0xff]
  %v2669 = vld [vmem:[%s1 + $0xab0] sm:$0xff]
  %v2670 = vld [vmem:[%s1 + $0xab8] sm:$0xff]
  %v2671 = vld [vmem:[%s1 + $0xac0] sm:$0xff]
  %v2672 = vld [vmem:[%s1 + $0xac8] sm:$0xff]
  %v2673 = vld [vmem:[%s1 + $0xad0] sm:$0xff]
  %v2674 = vld [vmem:[%s1 + $0xad8] sm:$0xff]
  %v2675 = vld [vmem:[%s1 + $0xae0] sm:$0xff]
  %v2676 = vld [vmem:[%s1 + $0xae8] sm:$0xff]
  %v2677 = vld [vmem:[%s1 + $0xaf0] sm:$0xff]
  %v2678 = vld [vmem:[%s1 + $0xaf8] sm:$0xff]
  %v2679 = vld [vmem:[%s1 + $0xb00] sm:$0xff]
  %v2680 = vld [vmem:[%s1 + $0xb08] sm:$0xff]
  %v2681 = vld [vmem:[%s1 + $0xb10] sm:$0xff]
  %v2682 = vld [vmem:[%s1 + $0xb18] sm:$0xff]
  %v2683 = vld [vmem:[%s1 + $0xb20] sm:$0xff]
  %v2684 = vld [vmem:[%s1 + $0xb28] sm:$0xff]
  %v2685 = vld [vmem:[%s1 + $0xb30] sm:$0xff]
  %v2686 = vld [vmem:[%s1 + $0xb38] sm:$0xff]
  %v2687 = vld [vmem:[%s1 + $0xb40] sm:$0xff]
  %v2688 = vld [vmem:[%s1 + $0xb48] sm:$0xff]
  %v2689 = vld [vmem:[%s1 + $0xb50] sm:$0xff]
  %v2690 = vld [vmem:[%s1 + $0xb58] sm:$0xff]
  %v2691 = vld [vmem:[%s1 + $0xb60] sm:$0xff]
  %v2692 = vld [vmem:[%s1 + $0xb68] sm:$0xff]
  %v2693 = vld [vmem:[%s1 + $0xb70] sm:$0xff]
  %v2694 = vld [vmem:[%s1 + $0xb78] sm:$0xff]
  %v2695 = vld [vmem:[%s1 + $0xb80] sm:$0xff]
  %v2696 = vld [vmem:[%s1 + $0xb88] sm:$0xff]
  %v2697 = vld [vmem:[%s1 + $0xb90] sm:$0xff]
  %v2698 = vld [vmem:[%s1 + $0xb98] sm:$0xff]
  %v2699 = vld [vmem:[%s1 + $0xba0] sm:$0xff]
  %v2700 = vld [vmem:[%s1 + $0xba8] sm:$0xff]
  %v2701 = vld [vmem:[%s1 + $0xbb0] sm:$0xff]
  %v2702 = vld [vmem:[%s1 + $0xbb8] sm:$0xff]
  %v2703 = vld [vmem:[%s1 + $0xbc0] sm:$0xff]
  %v2704 = vld [vmem:[%s1 + $0xbc8] sm:$0xff]
  %v2705 = vld [vmem:[%s1 + $0xbd0] sm:$0xff]
  %v2706 = vld [vmem:[%s1 + $0xbd8] sm:$0xff]
  %v2707 = vld [vmem:[%s1 + $0xbe0] sm:$0xff]
  %v2708 = vld [vmem:[%s1 + $0xbe8] sm:$0xff]
  %v2709 = vld [vmem:[%s1 + $0xbf0] sm:$0xff]
  %v2710 = vld [vmem:[%s1 + $0xbf8] sm:$0xff]
  %v2711 = vld [vmem:[%s1 + $0xc00] sm:$0xff]
  %v2712 = vld [vmem:[%s1 + $0xc08] sm:$0xff]
  %v2713 = vld [vmem:[%s1 + $0xc10] sm:$0xff]
  %v2714 = vld [vmem:[%s1 + $0xc18] sm:$0xff]
  %v2715 = vld [vmem:[%s1 + $0xc20] sm:$0xff]
  %v2716 = vld [vmem:[%s1 + $0xc28] sm:$0xff]
  %v2717 = vld [vmem:[%s1 + $0xc30] sm:$0xff]
  %v2718 = vld [vmem:[%s1 + $0xc38] sm:$0xff]
  %v2719 = vld [vmem:[%s1 + $0xc40] sm:$0xff]
  %v2720 = vld [vmem:[%s1 + $0xc48] sm:$0xff]
  %v2721 = vld [vmem:[%s1 + $0xc50] sm:$0xff]
  %v2722 = vld [vmem:[%s1 + $0xc58] sm:$0xff]
  %v2723 = vld [vmem:[%s1 + $0xc60] sm:$0xff]
  %v2724 = vld [vmem:[%s1 + $0xc68] sm:$0xff]
  %v2725 = vld [vmem:[%s1 + $0xc70] sm:$0xff]
  %v2726 = vld [vmem:[%s1 + $0xc78] sm:$0xff]
  %v2727 = vld [vmem:[%s1 + $0xc80] sm:$0xff]
  %v2728 = vld [vmem:[%s1 + $0xc88] sm:$0xff]
  %v2729 = vld [vmem:[%s1 + $0xc90] sm:$0xff]
  %v2730 = vld [vmem:[%s1 + $0xc98] sm:$0xff]
  %v2731 = vld [vmem:[%s1 + $0xca0] sm:$0xff]
  %v2732 = vld [vmem:[%s1 + $0xca8] sm:$0xff]
  %v2733 = vld [vmem:[%s1 + $0xcb0] sm:$0xff]
  %v2734 = vld [vmem:[%s1 + $0xcb8] sm:$0xff]
  %v2735 = vld [vmem:[%s1 + $0xcc0] sm:$0xff]
  %v2736 = vld [vmem:[%s1 + $0xcc8] sm:$0xff]
  %v2737 = vld [vmem:[%s1 + $0xcd0] sm:$0xff]
  %v2738 = vld [vmem:[%s1 + $0xcd8] sm:$0xff]
  %v2739 = vld [vmem:[%s1 + $0xce0] sm:$0xff]
  %v2740 = vld [vmem:[%s1 + $0xce8] sm:$0xff]
  %v2741 = vld [vmem:[%s1 + $0xcf0] sm:$0xff]
  %v2742 = vld [vmem:[%s1 + $0xcf8] sm:$0xff]
  %v2743 = vld [vmem:[%s1 + $0xd00] sm:$0xff]
  %v2744 = vld [vmem:[%s1 + $0xd08] sm:$0xff]
  %v2745 = vld [vmem:[%s1 + $0xd10] sm:$0xff]
  %v2746 = vld [vmem:[%s1 + $0xd18] sm:$0xff]
  %v2747 = vld [vmem:[%s1 + $0xd20] sm:$0xff]
  %v2748 = vld [vmem:[%s1 + $0xd28] sm:$0xff]
  %v2749 = vld [vmem:[%s1 + $0xd30] sm:$0xff]
  %v2750 = vld [vmem:[%s1 + $0xd38] sm:$0xff]
  %v2751 = vld [vmem:[%s1 + $0xd40] sm:$0xff]
  %v2752 = vld [vmem:[%s1 + $0xd48] sm:$0xff]
  %v2753 = vld [vmem:[%s1 + $0xd50] sm:$0xff]
  %v2754 = vld [vmem:[%s1 + $0xd58] sm:$0xff]
  %v2755 = vld [vmem:[%s1 + $0xd60] sm:$0xff]
  %v2756 = vld [vmem:[%s1 + $0xd68] sm:$0xff]
  %v2757 = vld [vmem:[%s1 + $0xd70] sm:$0xff]
  %v2758 = vld [vmem:[%s1 + $0xd78] sm:$0xff]
  %v2759 = vld [vmem:[%s1 + $0xd80] sm:$0xff]
  %v2760 = vld [vmem:[%s1 + $0xd88] sm:$0xff]
  %v2761 = vld [vmem:[%s1 + $0xd90] sm:$0xff]
  %v2762 = vld [vmem:[%s1 + $0xd98] sm:$0xff]
  %v2763 = vld [vmem:[%s1 + $0xda0] sm:$0xff]
  %v2764 = vld [vmem:[%s1 + $0xda8] sm:$0xff]
  %v2765 = vld [vmem:[%s1 + $0xdb0] sm:$0xff]
  %v2766 = vld [vmem:[%s1 + $0xdb8] sm:$0xff]
  %v2767 = vld [vmem:[%s1 + $0xdc0] sm:$0xff]
  %v2768 = vld [vmem:[%s1 + $0xdc8] sm:$0xff]
  %v2769 = vld [vmem:[%s1 + $0xdd0] sm:$0xff]
  %v2770 = vld [vmem:[%s1 + $0xdd8] sm:$0xff]
  %v2771 = vld [vmem:[%s1 + $0xde0] sm:$0xff]
  %v2772 = vld [vmem:[%s1 + $0xde8] sm:$0xff]
  %v2773 = vld [vmem:[%s1 + $0xdf0] sm:$0xff]
  %v2774 = vld [vmem:[%s1 + $0xdf8] sm:$0xff]
  %v2775 = vld [vmem:[%s1 + $0xe00] sm:$0xff]
  %v2776 = vld [vmem:[%s1 + $0xe08] sm:$0xff]
  %v2777 = vld [vmem:[%s1 + $0xe10] sm:$0xff]
  %v2778 = vld [vmem:[%s1 + $0xe18] sm:$0xff]
  %v2779 = vld [vmem:[%s1 + $0xe20] sm:$0xff]
  %v2780 = vld [vmem:[%s1 + $0xe28] sm:$0xff]
  %v2781 = vld [vmem:[%s1 + $0xe30] sm:$0xff]
  %v2782 = vld [vmem:[%s1 + $0xe38] sm:$0xff]
  %v2783 = vld [vmem:[%s1 + $0xe40] sm:$0xff]
  %v2784 = vld [vmem:[%s1 + $0xe48] sm:$0xff]
  %v2785 = vld [vmem:[%s1 + $0xe50] sm:$0xff]
  %v2786 = vld [vmem:[%s1 + $0xe58] sm:$0xff]
  %v2787 = vld [vmem:[%s1 + $0xe60] sm:$0xff]
  %v2788 = vld [vmem:[%s1 + $0xe68] sm:$0xff]
  %v2789 = vld [vmem:[%s1 + $0xe70] sm:$0xff]
  %v2790 = vld [vmem:[%s1 + $0xe78] sm:$0xff]
  %v2791 = vld [vmem:[%s1 + $0xe80] sm:$0xff]
  %v2792 = vld [vmem:[%s1 + $0xe88] sm:$0xff]
  %v2793 = vld [vmem:[%s1 + $0xe90] sm:$0xff]
  %v2794 = vld [vmem:[%s1 + $0xe98] sm:$0xff]
  %v2795 = vld [vmem:[%s1 + $0xea0] sm:$0xff]
  %v2796 = vld [vmem:[%s1 + $0xea8] sm:$0xff]
  %v2797 = vld [vmem:[%s1 + $0xeb0] sm:$0xff]
  %v2798 = vld [vmem:[%s1 + $0xeb8] sm:$0xff]
  %v2799 = vld [vmem:[%s1 + $0xec0] sm:$0xff]
  %v2800 = vld [vmem:[%s1 + $0xec8] sm:$0xff]
  %v2801 = vld [vmem:[%s1 + $0xed0] sm:$0xff]
  %v2802 = vld [vmem:[%s1 + $0xed8] sm:$0xff]
  %v2803 = vld [vmem:[%s1 + $0xee0] sm:$0xff]
  %v2804 = vld [vmem:[%s1 + $0xee8] sm:$0xff]
  %v2805 = vld [vmem:[%s1 + $0xef0] sm:$0xff]
  %v2806 = vld [vmem:[%s1 + $0xef8] sm:$0xff]
  %v2807 = vld [vmem:[%s1 + $0xf00] sm:$0xff]
  %v2808 = vld [vmem:[%s1 + $0xf08] sm:$0xff]
  %v2809 = vld [vmem:[%s1 + $0xf10] sm:$0xff]
  %v2810 = vld [vmem:[%s1 + $0xf18] sm:$0xff]
  %v2811 = vld [vmem:[%s1 + $0xf20] sm:$0xff]
  %v2812 = vld [vmem:[%s1 + $0xf28] sm:$0xff]
  %v2813 = vld [vmem:[%s1 + $0xf30] sm:$0xff]
  %v2814 = vld [vmem:[%s1 + $0xf38] sm:$0xff]
  %v2815 = vld [vmem:[%s1 + $0xf40] sm:$0xff]
  %v2816 = vld [vmem:[%s1 + $0xf48] sm:$0xff]
  %v2817 = vld [vmem:[%s1 + $0xf50] sm:$0xff]
  %v2818 = vld [vmem:[%s1 + $0xf58] sm:$0xff]
  %v2819 = vld [vmem:[%s1 + $0xf60] sm:$0xff]
  %v2820 = vld [vmem:[%s1 + $0xf68] sm:$0xff]
  %v2821 = vld [vmem:[%s1 + $0xf70] sm:$0xff]
  %v2822 = vld [vmem:[%s1 + $0xf78] sm:$0xff]
  %v2823 = vld [vmem:[%s1 + $0xf80] sm:$0xff]
  %v2824 = vld [vmem:[%s1 + $0xf88] sm:$0xff]
  %v2825 = vld [vmem:[%s1 + $0xf90] sm:$0xff]
  %v2826 = vld [vmem:[%s1 + $0xf98] sm:$0xff]
  %v2827 = vld [vmem:[%s1 + $0xfa0] sm:$0xff]
  %v2828 = vld [vmem:[%s1 + $0xfa8] sm:$0xff]
  %v2829 = vld [vmem:[%s1 + $0xfb0] sm:$0xff]
  %v2830 = vld [vmem:[%s1 + $0xfb8] sm:$0xff]
  %v2831 = vld [vmem:[%s1 + $0xfc0] sm:$0xff]
  %v2832 = vld [vmem:[%s1 + $0xfc8] sm:$0xff]
  %v2833 = vld [vmem:[%s1 + $0xfd0] sm:$0xff]
  %v2834 = vld [vmem:[%s1 + $0xfd8] sm:$0xff]
  %v2835 = vld [vmem:[%s1 + $0xfe0] sm:$0xff]
  %v2836 = vld [vmem:[%s1 + $0xfe8] sm:$0xff]
  %v2837 = vld [vmem:[%s1 + $0xff0] sm:$0xff]
  %v2838 = vld [vmem:[%s1 + $0xff8] sm:$0xff]
  %v3095 = vunpack.c.l.b16 %v2071
  %v3096 = vunpack.c.h.b16 %v2071
  %v3097 = vunpack.c.l.b16 %v2072
  %v3098 = vunpack.c.h.b16 %v2072
  %v3099 = vunpack.c.l.b16 %v2073
  %v3100 = vunpack.c.h.b16 %v2073
  %v3101 = vunpack.c.l.b16 %v2074
  %v3102 = vunpack.c.h.b16 %v2074
  %v3103 = vunpack.c.l.b16 %v2075
  %v3104 = vunpack.c.h.b16 %v2075
  %v3105 = vunpack.c.l.b16 %v2076
  %v3106 = vunpack.c.h.b16 %v2076
  %v3107 = vunpack.c.l.b16 %v2077
  %v3108 = vunpack.c.h.b16 %v2077
  %v3109 = vunpack.c.l.b16 %v2078
  %v3110 = vunpack.c.h.b16 %v2078
  %v3111 = vunpack.c.l.b16 %v2079
  %v3112 = vunpack.c.h.b16 %v2079
  %v3113 = vunpack.c.l.b16 %v2080
  %v3114 = vunpack.c.h.b16 %v2080
  %v3115 = vunpack.c.l.b16 %v2081
  %v3116 = vunpack.c.h.b16 %v2081
  %v3117 = vunpack.c.l.b16 %v2082
  %v3118 = vunpack.c.h.b16 %v2082
  %v3119 = vunpack.c.l.b16 %v2083
  %v3120 = vunpack.c.h.b16 %v2083
  %v3121 = vunpack.c.l.b16 %v2084
  %v3122 = vunpack.c.h.b16 %v2084
  %v3123 = vunpack.c.l.b16 %v2085
  %v3124 = vunpack.c.h.b16 %v2085
  %v3125 = vunpack.c.l.b16 %v2086
  %v3126 = vunpack.c.h.b16 %v2086
  %v3127 = vunpack.c.l.b16 %v2087
  %v3128 = vunpack.c.h.b16 %v2087
  %v3129 = vunpack.c.l.b16 %v2088
  %v3130 = vunpack.c.h.b16 %v2088
  %v3131 = vunpack.c.l.b16 %v2089
  %v3132 = vunpack.c.h.b16 %v2089
  %v3133 = vunpack.c.l.b16 %v2090
  %v3134 = vunpack.c.h.b16 %v2090
  %v3135 = vunpack.c.l.b16 %v2091
  %v3136 = vunpack.c.h.b16 %v2091
  %v3137 = vunpack.c.l.b16 %v2092
  %v3138 = vunpack.c.h.b16 %v2092
  %v3139 = vunpack.c.l.b16 %v2093
  %v3140 = vunpack.c.h.b16 %v2093
  %v3141 = vunpack.c.l.b16 %v2094
  %v3142 = vunpack.c.h.b16 %v2094
  %v3143 = vunpack.c.l.b16 %v2095
  %v3144 = vunpack.c.h.b16 %v2095
  %v3145 = vunpack.c.l.b16 %v2096
  %v3146 = vunpack.c.h.b16 %v2096
  %v3147 = vunpack.c.l.b16 %v2097
  %v3148 = vunpack.c.h.b16 %v2097
  %v3149 = vunpack.c.l.b16 %v2098
  %v3150 = vunpack.c.h.b16 %v2098
  %v3151 = vunpack.c.l.b16 %v2099
  %v3152 = vunpack.c.h.b16 %v2099
  %v3153 = vunpack.c.l.b16 %v2100
  %v3154 = vunpack.c.h.b16 %v2100
  %v3155 = vunpack.c.l.b16 %v2101
  %v3156 = vunpack.c.h.b16 %v2101
  %v3157 = vunpack.c.l.b16 %v2102
  %v3158 = vunpack.c.h.b16 %v2102
  %v3159 = vunpack.c.l.b16 %v2103
  %v3160 = vunpack.c.h.b16 %v2103
  %v3161 = vunpack.c.l.b16 %v2104
  %v3162 = vunpack.c.h.b16 %v2104
  %v3163 = vunpack.c.l.b16 %v2105
  %v3164 = vunpack.c.h.b16 %v2105
  %v3165 = vunpack.c.l.b16 %v2106
  %v3166 = vunpack.c.h.b16 %v2106
  %v3167 = vunpack.c.l.b16 %v2107
  %v3168 = vunpack.c.h.b16 %v2107
  %v3169 = vunpack.c.l.b16 %v2108
  %v3170 = vunpack.c.h.b16 %v2108
  %v3171 = vunpack.c.l.b16 %v2109
  %v3172 = vunpack.c.h.b16 %v2109
  %v3173 = vunpack.c.l.b16 %v2110
  %v3174 = vunpack.c.h.b16 %v2110
  %v3175 = vunpack.c.l.b16 %v2111
  %v3176 = vunpack.c.h.b16 %v2111
  %v3177 = vunpack.c.l.b16 %v2112
  %v3178 = vunpack.c.h.b16 %v2112
  %v3179 = vunpack.c.l.b16 %v2113
  %v3180 = vunpack.c.h.b16 %v2113
  %v3181 = vunpack.c.l.b16 %v2114
  %v3182 = vunpack.c.h.b16 %v2114
  %v3183 = vunpack.c.l.b16 %v2115
  %v3184 = vunpack.c.h.b16 %v2115
  %v3185 = vunpack.c.l.b16 %v2116
  %v3186 = vunpack.c.h.b16 %v2116
  %v3187 = vunpack.c.l.b16 %v2117
  %v3188 = vunpack.c.h.b16 %v2117
  %v3189 = vunpack.c.l.b16 %v2118
  %v3190 = vunpack.c.h.b16 %v2118
  %v3191 = vunpack.c.l.b16 %v2119
  %v3192 = vunpack.c.h.b16 %v2119
  %v3193 = vunpack.c.l.b16 %v2120
  %v3194 = vunpack.c.h.b16 %v2120
  %v3195 = vunpack.c.l.b16 %v2121
  %v3196 = vunpack.c.h.b16 %v2121
  %v3197 = vunpack.c.l.b16 %v2122
  %v3198 = vunpack.c.h.b16 %v2122
  %v3199 = vunpack.c.l.b16 %v2123
  %v3200 = vunpack.c.h.b16 %v2123
  %v3201 = vunpack.c.l.b16 %v2124
  %v3202 = vunpack.c.h.b16 %v2124
  %v3203 = vunpack.c.l.b16 %v2125
  %v3204 = vunpack.c.h.b16 %v2125
  %v3205 = vunpack.c.l.b16 %v2126
  %v3206 = vunpack.c.h.b16 %v2126
  %v3207 = vunpack.c.l.b16 %v2127
  %v3208 = vunpack.c.h.b16 %v2127
  %v3209 = vunpack.c.l.b16 %v2128
  %v3210 = vunpack.c.h.b16 %v2128
  %v3211 = vunpack.c.l.b16 %v2129
  %v3212 = vunpack.c.h.b16 %v2129
  %v3213 = vunpack.c.l.b16 %v2130
  %v3214 = vunpack.c.h.b16 %v2130
  %v3215 = vunpack.c.l.b16 %v2131
  %v3216 = vunpack.c.h.b16 %v2131
  %v3217 = vunpack.c.l.b16 %v2132
  %v3218 = vunpack.c.h.b16 %v2132
  %v3219 = vunpack.c.l.b16 %v2133
  %v3220 = vunpack.c.h.b16 %v2133
  %v3221 = vunpack.c.l.b16 %v2134
  %v3222 = vunpack.c.h.b16 %v2134
  %v3223 = vunpack.c.l.b16 %v2135
  %v3224 = vunpack.c.h.b16 %v2135
  %v3225 = vunpack.c.l.b16 %v2136
  %v3226 = vunpack.c.h.b16 %v2136
  %v3227 = vunpack.c.l.b16 %v2137
  %v3228 = vunpack.c.h.b16 %v2137
  %v3229 = vunpack.c.l.b16 %v2138
  %v3230 = vunpack.c.h.b16 %v2138
  %v3231 = vunpack.c.l.b16 %v2139
  %v3232 = vunpack.c.h.b16 %v2139
  %v3233 = vunpack.c.l.b16 %v2140
  %v3234 = vunpack.c.h.b16 %v2140
  %v3235 = vunpack.c.l.b16 %v2141
  %v3236 = vunpack.c.h.b16 %v2141
  %v3237 = vunpack.c.l.b16 %v2142
  %v3238 = vunpack.c.h.b16 %v2142
  %v3239 = vunpack.c.l.b16 %v2143
  %v3240 = vunpack.c.h.b16 %v2143
  %v3241 = vunpack.c.l.b16 %v2144
  %v3242 = vunpack.c.h.b16 %v2144
  %v3243 = vunpack.c.l.b16 %v2145
  %v3244 = vunpack.c.h.b16 %v2145
  %v3245 = vunpack.c.l.b16 %v2146
  %v3246 = vunpack.c.h.b16 %v2146
  %v3247 = vunpack.c.l.b16 %v2147
  %v3248 = vunpack.c.h.b16 %v2147
  %v3249 = vunpack.c.l.b16 %v2148
  %v3250 = vunpack.c.h.b16 %v2148
  %v3251 = vunpack.c.l.b16 %v2149
  %v3252 = vunpack.c.h.b16 %v2149
  %v3253 = vunpack.c.l.b16 %v2150
  %v3254 = vunpack.c.h.b16 %v2150
  %v3255 = vunpack.c.l.b16 %v2151
  %v3256 = vunpack.c.h.b16 %v2151
  %v3257 = vunpack.c.l.b16 %v2152
  %v3258 = vunpack.c.h.b16 %v2152
  %v3259 = vunpack.c.l.b16 %v2153
  %v3260 = vunpack.c.h.b16 %v2153
  %v3261 = vunpack.c.l.b16 %v2154
  %v3262 = vunpack.c.h.b16 %v2154
  %v3263 = vunpack.c.l.b16 %v2155
  %v3264 = vunpack.c.h.b16 %v2155
  %v3265 = vunpack.c.l.b16 %v2156
  %v3266 = vunpack.c.h.b16 %v2156
  %v3267 = vunpack.c.l.b16 %v2157
  %v3268 = vunpack.c.h.b16 %v2157
  %v3269 = vunpack.c.l.b16 %v2158
  %v3270 = vunpack.c.h.b16 %v2158
  %v3271 = vunpack.c.l.b16 %v2159
  %v3272 = vunpack.c.h.b16 %v2159
  %v3273 = vunpack.c.l.b16 %v2160
  %v3274 = vunpack.c.h.b16 %v2160
  %v3275 = vunpack.c.l.b16 %v2161
  %v3276 = vunpack.c.h.b16 %v2161
  %v3277 = vunpack.c.l.b16 %v2162
  %v3278 = vunpack.c.h.b16 %v2162
  %v3279 = vunpack.c.l.b16 %v2163
  %v3280 = vunpack.c.h.b16 %v2163
  %v3281 = vunpack.c.l.b16 %v2164
  %v3282 = vunpack.c.h.b16 %v2164
  %v3283 = vunpack.c.l.b16 %v2165
  %v3284 = vunpack.c.h.b16 %v2165
  %v3285 = vunpack.c.l.b16 %v2166
  %v3286 = vunpack.c.h.b16 %v2166
  %v3287 = vunpack.c.l.b16 %v2167
  %v3288 = vunpack.c.h.b16 %v2167
  %v3289 = vunpack.c.l.b16 %v2168
  %v3290 = vunpack.c.h.b16 %v2168
  %v3291 = vunpack.c.l.b16 %v2169
  %v3292 = vunpack.c.h.b16 %v2169
  %v3293 = vunpack.c.l.b16 %v2170
  %v3294 = vunpack.c.h.b16 %v2170
  %v3295 = vunpack.c.l.b16 %v2171
  %v3296 = vunpack.c.h.b16 %v2171
  %v3297 = vunpack.c.l.b16 %v2172
  %v3298 = vunpack.c.h.b16 %v2172
  %v3299 = vunpack.c.l.b16 %v2173
  %v3300 = vunpack.c.h.b16 %v2173
  %v3301 = vunpack.c.l.b16 %v2174
  %v3302 = vunpack.c.h.b16 %v2174
  %v3303 = vunpack.c.l.b16 %v2175
  %v3304 = vunpack.c.h.b16 %v2175
  %v3305 = vunpack.c.l.b16 %v2176
  %v3306 = vunpack.c.h.b16 %v2176
  %v3307 = vunpack.c.l.b16 %v2177
  %v3308 = vunpack.c.h.b16 %v2177
  %v3309 = vunpack.c.l.b16 %v2178
  %v3310 = vunpack.c.h.b16 %v2178
  %v3311 = vunpack.c.l.b16 %v2179
  %v3312 = vunpack.c.h.b16 %v2179
  %v3313 = vunpack.c.l.b16 %v2180
  %v3314 = vunpack.c.h.b16 %v2180
  %v3315 = vunpack.c.l.b16 %v2181
  %v3316 = vunpack.c.h.b16 %v2181
  %v3317 = vunpack.c.l.b16 %v2182
  %v3318 = vunpack.c.h.b16 %v2182
  %v3319 = vunpack.c.l.b16 %v2183
  %v3320 = vunpack.c.h.b16 %v2183
  %v3321 = vunpack.c.l.b16 %v2184
  %v3322 = vunpack.c.h.b16 %v2184
  %v3323 = vunpack.c.l.b16 %v2185
  %v3324 = vunpack.c.h.b16 %v2185
  %v3325 = vunpack.c.l.b16 %v2186
  %v3326 = vunpack.c.h.b16 %v2186
  %v3327 = vunpack.c.l.b16 %v2187
  %v3328 = vunpack.c.h.b16 %v2187
  %v3329 = vunpack.c.l.b16 %v2188
  %v3330 = vunpack.c.h.b16 %v2188
  %v3331 = vunpack.c.l.b16 %v2189
  %v3332 = vunpack.c.h.b16 %v2189
  %v3333 = vunpack.c.l.b16 %v2190
  %v3334 = vunpack.c.h.b16 %v2190
  %v3335 = vunpack.c.l.b16 %v2191
  %v3336 = vunpack.c.h.b16 %v2191
  %v3337 = vunpack.c.l.b16 %v2192
  %v3338 = vunpack.c.h.b16 %v2192
  %v3339 = vunpack.c.l.b16 %v2193
  %v3340 = vunpack.c.h.b16 %v2193
  %v3341 = vunpack.c.l.b16 %v2194
  %v3342 = vunpack.c.h.b16 %v2194
  %v3343 = vunpack.c.l.b16 %v2195
  %v3344 = vunpack.c.h.b16 %v2195
  %v3345 = vunpack.c.l.b16 %v2196
  %v3346 = vunpack.c.h.b16 %v2196
  %v3347 = vunpack.c.l.b16 %v2197
  %v3348 = vunpack.c.h.b16 %v2197
  %v3349 = vunpack.c.l.b16 %v2198
  %v3350 = vunpack.c.h.b16 %v2198
  %v3351 = vunpack.c.l.b16 %v2199
  %v3352 = vunpack.c.h.b16 %v2199
  %v3353 = vunpack.c.l.b16 %v2200
  %v3354 = vunpack.c.h.b16 %v2200
  %v3355 = vunpack.c.l.b16 %v2201
  %v3356 = vunpack.c.h.b16 %v2201
  %v3357 = vunpack.c.l.b16 %v2202
  %v3358 = vunpack.c.h.b16 %v2202
  %v3359 = vunpack.c.l.b16 %v2203
  %v3360 = vunpack.c.h.b16 %v2203
  %v3361 = vunpack.c.l.b16 %v2204
  %v3362 = vunpack.c.h.b16 %v2204
  %v3363 = vunpack.c.l.b16 %v2205
  %v3364 = vunpack.c.h.b16 %v2205
  %v3365 = vunpack.c.l.b16 %v2206
  %v3366 = vunpack.c.h.b16 %v2206
  %v3367 = vunpack.c.l.b16 %v2207
  %v3368 = vunpack.c.h.b16 %v2207
  %v3369 = vunpack.c.l.b16 %v2208
  %v3370 = vunpack.c.h.b16 %v2208
  %v3371 = vunpack.c.l.b16 %v2209
  %v3372 = vunpack.c.h.b16 %v2209
  %v3373 = vunpack.c.l.b16 %v2210
  %v3374 = vunpack.c.h.b16 %v2210
  %v3375 = vunpack.c.l.b16 %v2211
  %v3376 = vunpack.c.h.b16 %v2211
  %v3377 = vunpack.c.l.b16 %v2212
  %v3378 = vunpack.c.h.b16 %v2212
  %v3379 = vunpack.c.l.b16 %v2213
  %v3380 = vunpack.c.h.b16 %v2213
  %v3381 = vunpack.c.l.b16 %v2214
  %v3382 = vunpack.c.h.b16 %v2214
  %v3383 = vunpack.c.l.b16 %v2215
  %v3384 = vunpack.c.h.b16 %v2215
  %v3385 = vunpack.c.l.b16 %v2216
  %v3386 = vunpack.c.h.b16 %v2216
  %v3387 = vunpack.c.l.b16 %v2217
  %v3388 = vunpack.c.h.b16 %v2217
  %v3389 = vunpack.c.l.b16 %v2218
  %v3390 = vunpack.c.h.b16 %v2218
  %v3391 = vunpack.c.l.b16 %v2219
  %v3392 = vunpack.c.h.b16 %v2219
  %v3393 = vunpack.c.l.b16 %v2220
  %v3394 = vunpack.c.h.b16 %v2220
  %v3395 = vunpack.c.l.b16 %v2221
  %v3396 = vunpack.c.h.b16 %v2221
  %v3397 = vunpack.c.l.b16 %v2222
  %v3398 = vunpack.c.h.b16 %v2222
  %v3399 = vunpack.c.l.b16 %v2223
  %v3400 = vunpack.c.h.b16 %v2223
  %v3401 = vunpack.c.l.b16 %v2224
  %v3402 = vunpack.c.h.b16 %v2224
  %v3403 = vunpack.c.l.b16 %v2225
  %v3404 = vunpack.c.h.b16 %v2225
  %v3405 = vunpack.c.l.b16 %v2226
  %v3406 = vunpack.c.h.b16 %v2226
  %v3407 = vunpack.c.l.b16 %v2227
  %v3408 = vunpack.c.h.b16 %v2227
  %v3409 = vunpack.c.l.b16 %v2228
  %v3410 = vunpack.c.h.b16 %v2228
  %v3411 = vunpack.c.l.b16 %v2229
  %v3412 = vunpack.c.h.b16 %v2229
  %v3413 = vunpack.c.l.b16 %v2230
  %v3414 = vunpack.c.h.b16 %v2230
  %v3415 = vunpack.c.l.b16 %v2231
  %v3416 = vunpack.c.h.b16 %v2231
  %v3417 = vunpack.c.l.b16 %v2232
  %v3418 = vunpack.c.h.b16 %v2232
  %v3419 = vunpack.c.l.b16 %v2233
  %v3420 = vunpack.c.h.b16 %v2233
  %v3421 = vunpack.c.l.b16 %v2234
  %v3422 = vunpack.c.h.b16 %v2234
  %v3423 = vunpack.c.l.b16 %v2235
  %v3424 = vunpack.c.h.b16 %v2235
  %v3425 = vunpack.c.l.b16 %v2236
  %v3426 = vunpack.c.h.b16 %v2236
  %v3427 = vunpack.c.l.b16 %v2237
  %v3428 = vunpack.c.h.b16 %v2237
  %v3429 = vunpack.c.l.b16 %v2238
  %v3430 = vunpack.c.h.b16 %v2238
  %v3431 = vunpack.c.l.b16 %v2239
  %v3432 = vunpack.c.h.b16 %v2239
  %v3433 = vunpack.c.l.b16 %v2240
  %v3434 = vunpack.c.h.b16 %v2240
  %v3435 = vunpack.c.l.b16 %v2241
  %v3436 = vunpack.c.h.b16 %v2241
  %v3437 = vunpack.c.l.b16 %v2242
  %v3438 = vunpack.c.h.b16 %v2242
  %v3439 = vunpack.c.l.b16 %v2243
  %v3440 = vunpack.c.h.b16 %v2243
  %v3441 = vunpack.c.l.b16 %v2244
  %v3442 = vunpack.c.h.b16 %v2244
  %v3443 = vunpack.c.l.b16 %v2245
  %v3444 = vunpack.c.h.b16 %v2245
  %v3445 = vunpack.c.l.b16 %v2246
  %v3446 = vunpack.c.h.b16 %v2246
  %v3447 = vunpack.c.l.b16 %v2247
  %v3448 = vunpack.c.h.b16 %v2247
  %v3449 = vunpack.c.l.b16 %v2248
  %v3450 = vunpack.c.h.b16 %v2248
  %v3451 = vunpack.c.l.b16 %v2249
  %v3452 = vunpack.c.h.b16 %v2249
  %v3453 = vunpack.c.l.b16 %v2250
  %v3454 = vunpack.c.h.b16 %v2250
  %v3455 = vunpack.c.l.b16 %v2251
  %v3456 = vunpack.c.h.b16 %v2251
  %v3457 = vunpack.c.l.b16 %v2252
  %v3458 = vunpack.c.h.b16 %v2252
  %v3459 = vunpack.c.l.b16 %v2253
  %v3460 = vunpack.c.h.b16 %v2253
  %v3461 = vunpack.c.l.b16 %v2254
  %v3462 = vunpack.c.h.b16 %v2254
  %v3463 = vunpack.c.l.b16 %v2255
  %v3464 = vunpack.c.h.b16 %v2255
  %v3465 = vunpack.c.l.b16 %v2256
  %v3466 = vunpack.c.h.b16 %v2256
  %v3467 = vunpack.c.l.b16 %v2257
  %v3468 = vunpack.c.h.b16 %v2257
  %v3469 = vunpack.c.l.b16 %v2258
  %v3470 = vunpack.c.h.b16 %v2258
  %v3471 = vunpack.c.l.b16 %v2259
  %v3472 = vunpack.c.h.b16 %v2259
  %v3473 = vunpack.c.l.b16 %v2260
  %v3474 = vunpack.c.h.b16 %v2260
  %v3475 = vunpack.c.l.b16 %v2261
  %v3476 = vunpack.c.h.b16 %v2261
  %v3477 = vunpack.c.l.b16 %v2262
  %v3478 = vunpack.c.h.b16 %v2262
  %v3479 = vunpack.c.l.b16 %v2263
  %v3480 = vunpack.c.h.b16 %v2263
  %v3481 = vunpack.c.l.b16 %v2264
  %v3482 = vunpack.c.h.b16 %v2264
  %v3483 = vunpack.c.l.b16 %v2265
  %v3484 = vunpack.c.h.b16 %v2265
  %v3485 = vunpack.c.l.b16 %v2266
  %v3486 = vunpack.c.h.b16 %v2266
  %v3487 = vunpack.c.l.b16 %v2267
  %v3488 = vunpack.c.h.b16 %v2267
  %v3489 = vunpack.c.l.b16 %v2268
  %v3490 = vunpack.c.h.b16 %v2268
  %v3491 = vunpack.c.l.b16 %v2269
  %v3492 = vunpack.c.h.b16 %v2269
  %v3493 = vunpack.c.l.b16 %v2270
  %v3494 = vunpack.c.h.b16 %v2270
  %v3495 = vunpack.c.l.b16 %v2271
  %v3496 = vunpack.c.h.b16 %v2271
  %v3497 = vunpack.c.l.b16 %v2272
  %v3498 = vunpack.c.h.b16 %v2272
  %v3499 = vunpack.c.l.b16 %v2273
  %v3500 = vunpack.c.h.b16 %v2273
  %v3501 = vunpack.c.l.b16 %v2274
  %v3502 = vunpack.c.h.b16 %v2274
  %v3503 = vunpack.c.l.b16 %v2275
  %v3504 = vunpack.c.h.b16 %v2275
  %v3505 = vunpack.c.l.b16 %v2276
  %v3506 = vunpack.c.h.b16 %v2276
  %v3507 = vunpack.c.l.b16 %v2277
  %v3508 = vunpack.c.h.b16 %v2277
  %v3509 = vunpack.c.l.b16 %v2278
  %v3510 = vunpack.c.h.b16 %v2278
  %v3511 = vunpack.c.l.b16 %v2279
  %v3512 = vunpack.c.h.b16 %v2279
  %v3513 = vunpack.c.l.b16 %v2280
  %v3514 = vunpack.c.h.b16 %v2280
  %v3515 = vunpack.c.l.b16 %v2281
  %v3516 = vunpack.c.h.b16 %v2281
  %v3517 = vunpack.c.l.b16 %v2282
  %v3518 = vunpack.c.h.b16 %v2282
  %v3519 = vunpack.c.l.b16 %v2283
  %v3520 = vunpack.c.h.b16 %v2283
  %v3521 = vunpack.c.l.b16 %v2284
  %v3522 = vunpack.c.h.b16 %v2284
  %v3523 = vunpack.c.l.b16 %v2285
  %v3524 = vunpack.c.h.b16 %v2285
  %v3525 = vunpack.c.l.b16 %v2286
  %v3526 = vunpack.c.h.b16 %v2286
  %v3527 = vunpack.c.l.b16 %v2287
  %v3528 = vunpack.c.h.b16 %v2287
  %v3529 = vunpack.c.l.b16 %v2288
  %v3530 = vunpack.c.h.b16 %v2288
  %v3531 = vunpack.c.l.b16 %v2289
  %v3532 = vunpack.c.h.b16 %v2289
  %v3533 = vunpack.c.l.b16 %v2290
  %v3534 = vunpack.c.h.b16 %v2290
  %v3535 = vunpack.c.l.b16 %v2291
  %v3536 = vunpack.c.h.b16 %v2291
  %v3537 = vunpack.c.l.b16 %v2292
  %v3538 = vunpack.c.h.b16 %v2292
  %v3539 = vunpack.c.l.b16 %v2293
  %v3540 = vunpack.c.h.b16 %v2293
  %v3541 = vunpack.c.l.b16 %v2294
  %v3542 = vunpack.c.h.b16 %v2294
  %v3543 = vunpack.c.l.b16 %v2295
  %v3544 = vunpack.c.h.b16 %v2295
  %v3545 = vunpack.c.l.b16 %v2296
  %v3546 = vunpack.c.h.b16 %v2296
  %v3547 = vunpack.c.l.b16 %v2297
  %v3548 = vunpack.c.h.b16 %v2297
  %v3549 = vunpack.c.l.b16 %v2298
  %v3550 = vunpack.c.h.b16 %v2298
  %v3551 = vunpack.c.l.b16 %v2299
  %v3552 = vunpack.c.h.b16 %v2299
  %v3553 = vunpack.c.l.b16 %v2300
  %v3554 = vunpack.c.h.b16 %v2300
  %v3555 = vunpack.c.l.b16 %v2301
  %v3556 = vunpack.c.h.b16 %v2301
  %v3557 = vunpack.c.l.b16 %v2302
  %v3558 = vunpack.c.h.b16 %v2302
  %v3559 = vunpack.c.l.b16 %v2303
  %v3560 = vunpack.c.h.b16 %v2303
  %v3561 = vunpack.c.l.b16 %v2304
  %v3562 = vunpack.c.h.b16 %v2304
  %v3563 = vunpack.c.l.b16 %v2305
  %v3564 = vunpack.c.h.b16 %v2305
  %v3565 = vunpack.c.l.b16 %v2306
  %v3566 = vunpack.c.h.b16 %v2306
  %v3567 = vunpack.c.l.b16 %v2307
  %v3568 = vunpack.c.h.b16 %v2307
  %v3569 = vunpack.c.l.b16 %v2308
  %v3570 = vunpack.c.h.b16 %v2308
  %v3571 = vunpack.c.l.b16 %v2309
  %v3572 = vunpack.c.h.b16 %v2309
  %v3573 = vunpack.c.l.b16 %v2310
  %v3574 = vunpack.c.h.b16 %v2310
  %v3575 = vunpack.c.l.b16 %v2311
  %v3576 = vunpack.c.h.b16 %v2311
  %v3577 = vunpack.c.l.b16 %v2312
  %v3578 = vunpack.c.h.b16 %v2312
  %v3579 = vunpack.c.l.b16 %v2313
  %v3580 = vunpack.c.h.b16 %v2313
  %v3581 = vunpack.c.l.b16 %v2314
  %v3582 = vunpack.c.h.b16 %v2314
  %v3583 = vunpack.c.l.b16 %v2315
  %v3584 = vunpack.c.h.b16 %v2315
  %v3585 = vunpack.c.l.b16 %v2316
  %v3586 = vunpack.c.h.b16 %v2316
  %v3587 = vunpack.c.l.b16 %v2317
  %v3588 = vunpack.c.h.b16 %v2317
  %v3589 = vunpack.c.l.b16 %v2318
  %v3590 = vunpack.c.h.b16 %v2318
  %v3591 = vunpack.c.l.b16 %v2319
  %v3592 = vunpack.c.h.b16 %v2319
  %v3593 = vunpack.c.l.b16 %v2320
  %v3594 = vunpack.c.h.b16 %v2320
  %v3595 = vunpack.c.l.b16 %v2321
  %v3596 = vunpack.c.h.b16 %v2321
  %v3597 = vunpack.c.l.b16 %v2322
  %v3598 = vunpack.c.h.b16 %v2322
  %v3599 = vunpack.c.l.b16 %v2323
  %v3600 = vunpack.c.h.b16 %v2323
  %v3601 = vunpack.c.l.b16 %v2324
  %v3602 = vunpack.c.h.b16 %v2324
  %v3603 = vunpack.c.l.b16 %v2325
  %v3604 = vunpack.c.h.b16 %v2325
  %v3605 = vunpack.c.l.b16 %v2326
  %v3606 = vunpack.c.h.b16 %v2326
  %v3607 = vlaneseq
  %v3608 = vand.u32 %v3607, 127
  %v3609 = vlaneseq
  %v3610 = vshrl.u32 %v3609, 7
  %v3611 = vsub.s32 %v3608, %v3610
  %v3612 = vrot.slane %v3095, %v3611
  %v3613 = vadd.s32 %v3608, 4294967288
  %v3614 = vlaneseq
  %v3615 = vshrl.u32 %v3614, 7
  %v3616 = vsub.s32 %v3613, %v3615
  %v3617 = vrot.slane %v3096, %v3616
  %vm3618 = vcmask 130112
  %v3619 = vsel %vm3618, %v3617, %v3612
  %v3620 = vadd.s32 %v3608, 4294967280
  %v3621 = vlaneseq
  %v3622 = vshrl.u32 %v3621, 7
  %v3623 = vsub.s32 %v3620, %v3622
  %v3624 = vrot.slane %v3097, %v3623
  %vm3625 = vcmask 195712
  %v3626 = vsel %vm3625, %v3624, %v3619
  %v3627 = vadd.s32 %v3608, 4294967272
  %v3628 = vlaneseq
  %v3629 = vshrl.u32 %v3628, 7
  %v3630 = vsub.s32 %v3627, %v3629
  %v3631 = vrot.slane %v3098, %v3630
  %vm3632 = vcmask 261312
  %v3633 = vsel %vm3632, %v3631, %v3626
  %v3634 = vadd.s32 %v3608, 4294967264
  %v3635 = vlaneseq
  %v3636 = vshrl.u32 %v3635, 7
  %v3637 = vsub.s32 %v3634, %v3636
  %v3638 = vrot.slane %v3099, %v3637
  %vm3639 = vcmask 326912
  %v3640 = vsel %vm3639, %v3638, %v3633
  %v3641 = vadd.s32 %v3608, 4294967256
  %v3642 = vlaneseq
  %v3643 = vshrl.u32 %v3642, 7
  %v3644 = vsub.s32 %v3641, %v3643
  %v3645 = vrot.slane %v3100, %v3644
  %vm3646 = vcmask 392512
  %v3647 = vsel %vm3646, %v3645, %v3640
  %v3648 = vadd.s32 %v3608, 4294967248
  %v3649 = vlaneseq
  %v3650 = vshrl.u32 %v3649, 7
  %v3651 = vsub.s32 %v3648, %v3650
  %v3652 = vrot.slane %v3101, %v3651
  %vm3653 = vcmask 458112
  %v3654 = vsel %vm3653, %v3652, %v3647
  %v3655 = vadd.s32 %v3608, 4294967240
  %v3656 = vlaneseq
  %v3657 = vshrl.u32 %v3656, 7
  %v3658 = vsub.s32 %v3655, %v3657
  %v3659 = vrot.slane %v3102, %v3658
  %vm3660 = vcmask 523712
  %v3661 = vsel %vm3660, %v3659, %v3654
  %v3662 = vadd.s32 %v3608, 4294967232
  %v3663 = vlaneseq
  %v3664 = vshrl.u32 %v3663, 7
  %v3665 = vsub.s32 %v3662, %v3664
  %v3666 = vrot.slane %v3103, %v3665
  %vm3667 = vcmask 589312
  %v3668 = vsel %vm3667, %v3666, %v3661
  %v3669 = vadd.s32 %v3608, 4294967224
  %v3670 = vlaneseq
  %v3671 = vshrl.u32 %v3670, 7
  %v3672 = vsub.s32 %v3669, %v3671
  %v3673 = vrot.slane %v3104, %v3672
  %vm3674 = vcmask 654912
  %v3675 = vsel %vm3674, %v3673, %v3668
  %v3676 = vadd.s32 %v3608, 4294967216
  %v3677 = vlaneseq
  %v3678 = vshrl.u32 %v3677, 7
  %v3679 = vsub.s32 %v3676, %v3678
  %v3680 = vrot.slane %v3105, %v3679
  %vm3681 = vcmask 720512
  %v3682 = vsel %vm3681, %v3680, %v3675
  %v3683 = vadd.s32 %v3608, 4294967208
  %v3684 = vlaneseq
  %v3685 = vshrl.u32 %v3684, 7
  %v3686 = vsub.s32 %v3683, %v3685
  %v3687 = vrot.slane %v3106, %v3686
  %vm3688 = vcmask 786112
  %v3689 = vsel %vm3688, %v3687, %v3682
  %v3690 = vadd.s32 %v3608, 4294967200
  %v3691 = vlaneseq
  %v3692 = vshrl.u32 %v3691, 7
  %v3693 = vsub.s32 %v3690, %v3692
  %v3694 = vrot.slane %v3107, %v3693
  %vm3695 = vcmask 851712
  %v3696 = vsel %vm3695, %v3694, %v3689
  %v3697 = vadd.s32 %v3608, 4294967192
  %v3698 = vlaneseq
  %v3699 = vshrl.u32 %v3698, 7
  %v3700 = vsub.s32 %v3697, %v3699
  %v3701 = vrot.slane %v3108, %v3700
  %vm3702 = vcmask 917312
  %v3703 = vsel %vm3702, %v3701, %v3696
  %v3704 = vadd.s32 %v3608, 4294967184
  %v3705 = vlaneseq
  %v3706 = vshrl.u32 %v3705, 7
  %v3707 = vsub.s32 %v3704, %v3706
  %v3708 = vrot.slane %v3109, %v3707
  %vm3709 = vcmask 982912
  %v3710 = vsel %vm3709, %v3708, %v3703
  %v3711 = vadd.s32 %v3608, 4294967176
  %v3712 = vlaneseq
  %v3713 = vshrl.u32 %v3712, 7
  %v3714 = vsub.s32 %v3711, %v3713
  %v3715 = vrot.slane %v3110, %v3714
  %vm3716 = vcmask 1048512
  %v3717 = vsel %vm3716, %v3715, %v3710
  %v3718 = vlaneseq
  %v3719 = vshrl.u32 %v3718, 7
  %v3720 = vsub.s32 %v3608, %v3719
  %v3721 = vrot.slane %v3111, %v3720
  %v3722 = vlaneseq
  %v3723 = vshrl.u32 %v3722, 7
  %v3724 = vsub.s32 %v3613, %v3723
  %v3725 = vrot.slane %v3112, %v3724
  %v3726 = vsel %vm3618, %v3725, %v3721
  %v3727 = vlaneseq
  %v3728 = vshrl.u32 %v3727, 7
  %v3729 = vsub.s32 %v3620, %v3728
  %v3730 = vrot.slane %v3113, %v3729
  %v3731 = vsel %vm3625, %v3730, %v3726
  %v3732 = vlaneseq
  %v3733 = vshrl.u32 %v3732, 7
  %v3734 = vsub.s32 %v3627, %v3733
  %v3735 = vrot.slane %v3114, %v3734
  %v3736 = vsel %vm3632, %v3735, %v3731
  %v3737 = vlaneseq
  %v3738 = vshrl.u32 %v3737, 7
  %v3739 = vsub.s32 %v3634, %v3738
  %v3740 = vrot.slane %v3115, %v3739
  %v3741 = vsel %vm3639, %v3740, %v3736
  %v3742 = vlaneseq
  %v3743 = vshrl.u32 %v3742, 7
  %v3744 = vsub.s32 %v3641, %v3743
  %v3745 = vrot.slane %v3116, %v3744
  %v3746 = vsel %vm3646, %v3745, %v3741
  %v3747 = vlaneseq
  %v3748 = vshrl.u32 %v3747, 7
  %v3749 = vsub.s32 %v3648, %v3748
  %v3750 = vrot.slane %v3117, %v3749
  %v3751 = vsel %vm3653, %v3750, %v3746
  %v3752 = vlaneseq
  %v3753 = vshrl.u32 %v3752, 7
  %v3754 = vsub.s32 %v3655, %v3753
  %v3755 = vrot.slane %v3118, %v3754
  %v3756 = vsel %vm3660, %v3755, %v3751
  %v3757 = vlaneseq
  %v3758 = vshrl.u32 %v3757, 7
  %v3759 = vsub.s32 %v3662, %v3758
  %v3760 = vrot.slane %v3119, %v3759
  %v3761 = vsel %vm3667, %v3760, %v3756
  %v3762 = vlaneseq
  %v3763 = vshrl.u32 %v3762, 7
  %v3764 = vsub.s32 %v3669, %v3763
  %v3765 = vrot.slane %v3120, %v3764
  %v3766 = vsel %vm3674, %v3765, %v3761
  %v3767 = vlaneseq
  %v3768 = vshrl.u32 %v3767, 7
  %v3769 = vsub.s32 %v3676, %v3768
  %v3770 = vrot.slane %v3121, %v3769
  %v3771 = vsel %vm3681, %v3770, %v3766
  %v3772 = vlaneseq
  %v3773 = vshrl.u32 %v3772, 7
  %v3774 = vsub.s32 %v3683, %v3773
  %v3775 = vrot.slane %v3122, %v3774
  %v3776 = vsel %vm3688, %v3775, %v3771
  %v3777 = vlaneseq
  %v3778 = vshrl.u32 %v3777, 7
  %v3779 = vsub.s32 %v3690, %v3778
  %v3780 = vrot.slane %v3123, %v3779
  %v3781 = vsel %vm3695, %v3780, %v3776
  %v3782 = vlaneseq
  %v3783 = vshrl.u32 %v3782, 7
  %v3784 = vsub.s32 %v3697, %v3783
  %v3785 = vrot.slane %v3124, %v3784
  %v3786 = vsel %vm3702, %v3785, %v3781
  %v3787 = vlaneseq
  %v3788 = vshrl.u32 %v3787, 7
  %v3789 = vsub.s32 %v3704, %v3788
  %v3790 = vrot.slane %v3125, %v3789
  %v3791 = vsel %vm3709, %v3790, %v3786
  %v3792 = vlaneseq
  %v3793 = vshrl.u32 %v3792, 7
  %v3794 = vsub.s32 %v3711, %v3793
  %v3795 = vrot.slane %v3126, %v3794
  %v3796 = vsel %vm3716, %v3795, %v3791
  %v3797 = vlaneseq
  %v3798 = vshrl.u32 %v3797, 7
  %v3799 = vsub.s32 %v3608, %v3798
  %v3800 = vrot.slane %v3127, %v3799
  %v3801 = vlaneseq
  %v3802 = vshrl.u32 %v3801, 7
  %v3803 = vsub.s32 %v3613, %v3802
  %v3804 = vrot.slane %v3128, %v3803
  %v3805 = vsel %vm3618, %v3804, %v3800
  %v3806 = vlaneseq
  %v3807 = vshrl.u32 %v3806, 7
  %v3808 = vsub.s32 %v3620, %v3807
  %v3809 = vrot.slane %v3129, %v3808
  %v3810 = vsel %vm3625, %v3809, %v3805
  %v3811 = vlaneseq
  %v3812 = vshrl.u32 %v3811, 7
  %v3813 = vsub.s32 %v3627, %v3812
  %v3814 = vrot.slane %v3130, %v3813
  %v3815 = vsel %vm3632, %v3814, %v3810
  %v3816 = vlaneseq
  %v3817 = vshrl.u32 %v3816, 7
  %v3818 = vsub.s32 %v3634, %v3817
  %v3819 = vrot.slane %v3131, %v3818
  %v3820 = vsel %vm3639, %v3819, %v3815
  %v3821 = vlaneseq
  %v3822 = vshrl.u32 %v3821, 7
  %v3823 = vsub.s32 %v3641, %v3822
  %v3824 = vrot.slane %v3132, %v3823
  %v3825 = vsel %vm3646, %v3824, %v3820
  %v3826 = vlaneseq
  %v3827 = vshrl.u32 %v3826, 7
  %v3828 = vsub.s32 %v3648, %v3827
  %v3829 = vrot.slane %v3133, %v3828
  %v3830 = vsel %vm3653, %v3829, %v3825
  %v3831 = vlaneseq
  %v3832 = vshrl.u32 %v3831, 7
  %v3833 = vsub.s32 %v3655, %v3832
  %v3834 = vrot.slane %v3134, %v3833
  %v3835 = vsel %vm3660, %v3834, %v3830
  %v3836 = vlaneseq
  %v3837 = vshrl.u32 %v3836, 7
  %v3838 = vsub.s32 %v3662, %v3837
  %v3839 = vrot.slane %v3135, %v3838
  %v3840 = vsel %vm3667, %v3839, %v3835
  %v3841 = vlaneseq
  %v3842 = vshrl.u32 %v3841, 7
  %v3843 = vsub.s32 %v3669, %v3842
  %v3844 = vrot.slane %v3136, %v3843
  %v3845 = vsel %vm3674, %v3844, %v3840
  %v3846 = vlaneseq
  %v3847 = vshrl.u32 %v3846, 7
  %v3848 = vsub.s32 %v3676, %v3847
  %v3849 = vrot.slane %v3137, %v3848
  %v3850 = vsel %vm3681, %v3849, %v3845
  %v3851 = vlaneseq
  %v3852 = vshrl.u32 %v3851, 7
  %v3853 = vsub.s32 %v3683, %v3852
  %v3854 = vrot.slane %v3138, %v3853
  %v3855 = vsel %vm3688, %v3854, %v3850
  %v3856 = vlaneseq
  %v3857 = vshrl.u32 %v3856, 7
  %v3858 = vsub.s32 %v3690, %v3857
  %v3859 = vrot.slane %v3139, %v3858
  %v3860 = vsel %vm3695, %v3859, %v3855
  %v3861 = vlaneseq
  %v3862 = vshrl.u32 %v3861, 7
  %v3863 = vsub.s32 %v3697, %v3862
  %v3864 = vrot.slane %v3140, %v3863
  %v3865 = vsel %vm3702, %v3864, %v3860
  %v3866 = vlaneseq
  %v3867 = vshrl.u32 %v3866, 7
  %v3868 = vsub.s32 %v3704, %v3867
  %v3869 = vrot.slane %v3141, %v3868
  %v3870 = vsel %vm3709, %v3869, %v3865
  %v3871 = vlaneseq
  %v3872 = vshrl.u32 %v3871, 7
  %v3873 = vsub.s32 %v3711, %v3872
  %v3874 = vrot.slane %v3142, %v3873
  %v3875 = vsel %vm3716, %v3874, %v3870
  %v3876 = vlaneseq
  %v3877 = vshrl.u32 %v3876, 7
  %v3878 = vsub.s32 %v3608, %v3877
  %v3879 = vrot.slane %v3143, %v3878
  %v3880 = vlaneseq
  %v3881 = vshrl.u32 %v3880, 7
  %v3882 = vsub.s32 %v3613, %v3881
  %v3883 = vrot.slane %v3144, %v3882
  %v3884 = vsel %vm3618, %v3883, %v3879
  %v3885 = vlaneseq
  %v3886 = vshrl.u32 %v3885, 7
  %v3887 = vsub.s32 %v3620, %v3886
  %v3888 = vrot.slane %v3145, %v3887
  %v3889 = vsel %vm3625, %v3888, %v3884
  %v3890 = vlaneseq
  %v3891 = vshrl.u32 %v3890, 7
  %v3892 = vsub.s32 %v3627, %v3891
  %v3893 = vrot.slane %v3146, %v3892
  %v3894 = vsel %vm3632, %v3893, %v3889
  %v3895 = vlaneseq
  %v3896 = vshrl.u32 %v3895, 7
  %v3897 = vsub.s32 %v3634, %v3896
  %v3898 = vrot.slane %v3147, %v3897
  %v3899 = vsel %vm3639, %v3898, %v3894
  %v3900 = vlaneseq
  %v3901 = vshrl.u32 %v3900, 7
  %v3902 = vsub.s32 %v3641, %v3901
  %v3903 = vrot.slane %v3148, %v3902
  %v3904 = vsel %vm3646, %v3903, %v3899
  %v3905 = vlaneseq
  %v3906 = vshrl.u32 %v3905, 7
  %v3907 = vsub.s32 %v3648, %v3906
  %v3908 = vrot.slane %v3149, %v3907
  %v3909 = vsel %vm3653, %v3908, %v3904
  %v3910 = vlaneseq
  %v3911 = vshrl.u32 %v3910, 7
  %v3912 = vsub.s32 %v3655, %v3911
  %v3913 = vrot.slane %v3150, %v3912
  %v3914 = vsel %vm3660, %v3913, %v3909
  %v3915 = vlaneseq
  %v3916 = vshrl.u32 %v3915, 7
  %v3917 = vsub.s32 %v3662, %v3916
  %v3918 = vrot.slane %v3151, %v3917
  %v3919 = vsel %vm3667, %v3918, %v3914
  %v3920 = vlaneseq
  %v3921 = vshrl.u32 %v3920, 7
  %v3922 = vsub.s32 %v3669, %v3921
  %v3923 = vrot.slane %v3152, %v3922
  %v3924 = vsel %vm3674, %v3923, %v3919
  %v3925 = vlaneseq
  %v3926 = vshrl.u32 %v3925, 7
  %v3927 = vsub.s32 %v3676, %v3926
  %v3928 = vrot.slane %v3153, %v3927
  %v3929 = vsel %vm3681, %v3928, %v3924
  %v3930 = vlaneseq
  %v3931 = vshrl.u32 %v3930, 7
  %v3932 = vsub.s32 %v3683, %v3931
  %v3933 = vrot.slane %v3154, %v3932
  %v3934 = vsel %vm3688, %v3933, %v3929
  %v3935 = vlaneseq
  %v3936 = vshrl.u32 %v3935, 7
  %v3937 = vsub.s32 %v3690, %v3936
  %v3938 = vrot.slane %v3155, %v3937
  %v3939 = vsel %vm3695, %v3938, %v3934
  %v3940 = vlaneseq
  %v3941 = vshrl.u32 %v3940, 7
  %v3942 = vsub.s32 %v3697, %v3941
  %v3943 = vrot.slane %v3156, %v3942
  %v3944 = vsel %vm3702, %v3943, %v3939
  %v3945 = vlaneseq
  %v3946 = vshrl.u32 %v3945, 7
  %v3947 = vsub.s32 %v3704, %v3946
  %v3948 = vrot.slane %v3157, %v3947
  %v3949 = vsel %vm3709, %v3948, %v3944
  %v3950 = vlaneseq
  %v3951 = vshrl.u32 %v3950, 7
  %v3952 = vsub.s32 %v3711, %v3951
  %v3953 = vrot.slane %v3158, %v3952
  %v3954 = vsel %vm3716, %v3953, %v3949
  %v3955 = vlaneseq
  %v3956 = vshrl.u32 %v3955, 7
  %v3957 = vsub.s32 %v3608, %v3956
  %v3958 = vrot.slane %v3159, %v3957
  %v3959 = vlaneseq
  %v3960 = vshrl.u32 %v3959, 7
  %v3961 = vsub.s32 %v3613, %v3960
  %v3962 = vrot.slane %v3160, %v3961
  %v3963 = vsel %vm3618, %v3962, %v3958
  %v3964 = vlaneseq
  %v3965 = vshrl.u32 %v3964, 7
  %v3966 = vsub.s32 %v3620, %v3965
  %v3967 = vrot.slane %v3161, %v3966
  %v3968 = vsel %vm3625, %v3967, %v3963
  %v3969 = vlaneseq
  %v3970 = vshrl.u32 %v3969, 7
  %v3971 = vsub.s32 %v3627, %v3970
  %v3972 = vrot.slane %v3162, %v3971
  %v3973 = vsel %vm3632, %v3972, %v3968
  %v3974 = vlaneseq
  %v3975 = vshrl.u32 %v3974, 7
  %v3976 = vsub.s32 %v3634, %v3975
  %v3977 = vrot.slane %v3163, %v3976
  %v3978 = vsel %vm3639, %v3977, %v3973
  %v3979 = vlaneseq
  %v3980 = vshrl.u32 %v3979, 7
  %v3981 = vsub.s32 %v3641, %v3980
  %v3982 = vrot.slane %v3164, %v3981
  %v3983 = vsel %vm3646, %v3982, %v3978
  %v3984 = vlaneseq
  %v3985 = vshrl.u32 %v3984, 7
  %v3986 = vsub.s32 %v3648, %v3985
  %v3987 = vrot.slane %v3165, %v3986
  %v3988 = vsel %vm3653, %v3987, %v3983
  %v3989 = vlaneseq
  %v3990 = vshrl.u32 %v3989, 7
  %v3991 = vsub.s32 %v3655, %v3990
  %v3992 = vrot.slane %v3166, %v3991
  %v3993 = vsel %vm3660, %v3992, %v3988
  %v3994 = vlaneseq
  %v3995 = vshrl.u32 %v3994, 7
  %v3996 = vsub.s32 %v3662, %v3995
  %v3997 = vrot.slane %v3167, %v3996
  %v3998 = vsel %vm3667, %v3997, %v3993
  %v3999 = vlaneseq
  %v4000 = vshrl.u32 %v3999, 7
  %v4001 = vsub.s32 %v3669, %v4000
  %v4002 = vrot.slane %v3168, %v4001
  %v4003 = vsel %vm3674, %v4002, %v3998
  %v4004 = vlaneseq
  %v4005 = vshrl.u32 %v4004, 7
  %v4006 = vsub.s32 %v3676, %v4005
  %v4007 = vrot.slane %v3169, %v4006
  %v4008 = vsel %vm3681, %v4007, %v4003
  %v4009 = vlaneseq
  %v4010 = vshrl.u32 %v4009, 7
  %v4011 = vsub.s32 %v3683, %v4010
  %v4012 = vrot.slane %v3170, %v4011
  %v4013 = vsel %vm3688, %v4012, %v4008
  %v4014 = vlaneseq
  %v4015 = vshrl.u32 %v4014, 7
  %v4016 = vsub.s32 %v3690, %v4015
  %v4017 = vrot.slane %v3171, %v4016
  %v4018 = vsel %vm3695, %v4017, %v4013
  %v4019 = vlaneseq
  %v4020 = vshrl.u32 %v4019, 7
  %v4021 = vsub.s32 %v3697, %v4020
  %v4022 = vrot.slane %v3172, %v4021
  %v4023 = vsel %vm3702, %v4022, %v4018
  %v4024 = vlaneseq
  %v4025 = vshrl.u32 %v4024, 7
  %v4026 = vsub.s32 %v3704, %v4025
  %v4027 = vrot.slane %v3173, %v4026
  %v4028 = vsel %vm3709, %v4027, %v4023
  %v4029 = vlaneseq
  %v4030 = vshrl.u32 %v4029, 7
  %v4031 = vsub.s32 %v3711, %v4030
  %v4032 = vrot.slane %v3174, %v4031
  %v4033 = vsel %vm3716, %v4032, %v4028
  %v4034 = vlaneseq
  %v4035 = vshrl.u32 %v4034, 7
  %v4036 = vsub.s32 %v3608, %v4035
  %v4037 = vrot.slane %v3175, %v4036
  %v4038 = vlaneseq
  %v4039 = vshrl.u32 %v4038, 7
  %v4040 = vsub.s32 %v3613, %v4039
  %v4041 = vrot.slane %v3176, %v4040
  %v4042 = vsel %vm3618, %v4041, %v4037
  %v4043 = vlaneseq
  %v4044 = vshrl.u32 %v4043, 7
  %v4045 = vsub.s32 %v3620, %v4044
  %v4046 = vrot.slane %v3177, %v4045
  %v4047 = vsel %vm3625, %v4046, %v4042
  %v4048 = vlaneseq
  %v4049 = vshrl.u32 %v4048, 7
  %v4050 = vsub.s32 %v3627, %v4049
  %v4051 = vrot.slane %v3178, %v4050
  %v4052 = vsel %vm3632, %v4051, %v4047
  %v4053 = vlaneseq
  %v4054 = vshrl.u32 %v4053, 7
  %v4055 = vsub.s32 %v3634, %v4054
  %v4056 = vrot.slane %v3179, %v4055
  %v4057 = vsel %vm3639, %v4056, %v4052
  %v4058 = vlaneseq
  %v4059 = vshrl.u32 %v4058, 7
  %v4060 = vsub.s32 %v3641, %v4059
  %v4061 = vrot.slane %v3180, %v4060
  %v4062 = vsel %vm3646, %v4061, %v4057
  %v4063 = vlaneseq
  %v4064 = vshrl.u32 %v4063, 7
  %v4065 = vsub.s32 %v3648, %v4064
  %v4066 = vrot.slane %v3181, %v4065
  %v4067 = vsel %vm3653, %v4066, %v4062
  %v4068 = vlaneseq
  %v4069 = vshrl.u32 %v4068, 7
  %v4070 = vsub.s32 %v3655, %v4069
  %v4071 = vrot.slane %v3182, %v4070
  %v4072 = vsel %vm3660, %v4071, %v4067
  %v4073 = vlaneseq
  %v4074 = vshrl.u32 %v4073, 7
  %v4075 = vsub.s32 %v3662, %v4074
  %v4076 = vrot.slane %v3183, %v4075
  %v4077 = vsel %vm3667, %v4076, %v4072
  %v4078 = vlaneseq
  %v4079 = vshrl.u32 %v4078, 7
  %v4080 = vsub.s32 %v3669, %v4079
  %v4081 = vrot.slane %v3184, %v4080
  %v4082 = vsel %vm3674, %v4081, %v4077
  %v4083 = vlaneseq
  %v4084 = vshrl.u32 %v4083, 7
  %v4085 = vsub.s32 %v3676, %v4084
  %v4086 = vrot.slane %v3185, %v4085
  %v4087 = vsel %vm3681, %v4086, %v4082
  %v4088 = vlaneseq
  %v4089 = vshrl.u32 %v4088, 7
  %v4090 = vsub.s32 %v3683, %v4089
  %v4091 = vrot.slane %v3186, %v4090
  %v4092 = vsel %vm3688, %v4091, %v4087
  %v4093 = vlaneseq
  %v4094 = vshrl.u32 %v4093, 7
  %v4095 = vsub.s32 %v3690, %v4094
  %v4096 = vrot.slane %v3187, %v4095
  %v4097 = vsel %vm3695, %v4096, %v4092
  %v4098 = vlaneseq
  %v4099 = vshrl.u32 %v4098, 7
  %v4100 = vsub.s32 %v3697, %v4099
  %v4101 = vrot.slane %v3188, %v4100
  %v4102 = vsel %vm3702, %v4101, %v4097
  %v4103 = vlaneseq
  %v4104 = vshrl.u32 %v4103, 7
  %v4105 = vsub.s32 %v3704, %v4104
  %v4106 = vrot.slane %v3189, %v4105
  %v4107 = vsel %vm3709, %v4106, %v4102
  %v4108 = vlaneseq
  %v4109 = vshrl.u32 %v4108, 7
  %v4110 = vsub.s32 %v3711, %v4109
  %v4111 = vrot.slane %v3190, %v4110
  %v4112 = vsel %vm3716, %v4111, %v4107
  %v4113 = vlaneseq
  %v4114 = vshrl.u32 %v4113, 7
  %v4115 = vsub.s32 %v3608, %v4114
  %v4116 = vrot.slane %v3191, %v4115
  %v4117 = vlaneseq
  %v4118 = vshrl.u32 %v4117, 7
  %v4119 = vsub.s32 %v3613, %v4118
  %v4120 = vrot.slane %v3192, %v4119
  %v4121 = vsel %vm3618, %v4120, %v4116
  %v4122 = vlaneseq
  %v4123 = vshrl.u32 %v4122, 7
  %v4124 = vsub.s32 %v3620, %v4123
  %v4125 = vrot.slane %v3193, %v4124
  %v4126 = vsel %vm3625, %v4125, %v4121
  %v4127 = vlaneseq
  %v4128 = vshrl.u32 %v4127, 7
  %v4129 = vsub.s32 %v3627, %v4128
  %v4130 = vrot.slane %v3194, %v4129
  %v4131 = vsel %vm3632, %v4130, %v4126
  %v4132 = vlaneseq
  %v4133 = vshrl.u32 %v4132, 7
  %v4134 = vsub.s32 %v3634, %v4133
  %v4135 = vrot.slane %v3195, %v4134
  %v4136 = vsel %vm3639, %v4135, %v4131
  %v4137 = vlaneseq
  %v4138 = vshrl.u32 %v4137, 7
  %v4139 = vsub.s32 %v3641, %v4138
  %v4140 = vrot.slane %v3196, %v4139
  %v4141 = vsel %vm3646, %v4140, %v4136
  %v4142 = vlaneseq
  %v4143 = vshrl.u32 %v4142, 7
  %v4144 = vsub.s32 %v3648, %v4143
  %v4145 = vrot.slane %v3197, %v4144
  %v4146 = vsel %vm3653, %v4145, %v4141
  %v4147 = vlaneseq
  %v4148 = vshrl.u32 %v4147, 7
  %v4149 = vsub.s32 %v3655, %v4148
  %v4150 = vrot.slane %v3198, %v4149
  %v4151 = vsel %vm3660, %v4150, %v4146
  %v4152 = vlaneseq
  %v4153 = vshrl.u32 %v4152, 7
  %v4154 = vsub.s32 %v3662, %v4153
  %v4155 = vrot.slane %v3199, %v4154
  %v4156 = vsel %vm3667, %v4155, %v4151
  %v4157 = vlaneseq
  %v4158 = vshrl.u32 %v4157, 7
  %v4159 = vsub.s32 %v3669, %v4158
  %v4160 = vrot.slane %v3200, %v4159
  %v4161 = vsel %vm3674, %v4160, %v4156
  %v4162 = vlaneseq
  %v4163 = vshrl.u32 %v4162, 7
  %v4164 = vsub.s32 %v3676, %v4163
  %v4165 = vrot.slane %v3201, %v4164
  %v4166 = vsel %vm3681, %v4165, %v4161
  %v4167 = vlaneseq
  %v4168 = vshrl.u32 %v4167, 7
  %v4169 = vsub.s32 %v3683, %v4168
  %v4170 = vrot.slane %v3202, %v4169
  %v4171 = vsel %vm3688, %v4170, %v4166
  %v4172 = vlaneseq
  %v4173 = vshrl.u32 %v4172, 7
  %v4174 = vsub.s32 %v3690, %v4173
  %v4175 = vrot.slane %v3203, %v4174
  %v4176 = vsel %vm3695, %v4175, %v4171
  %v4177 = vlaneseq
  %v4178 = vshrl.u32 %v4177, 7
  %v4179 = vsub.s32 %v3697, %v4178
  %v4180 = vrot.slane %v3204, %v4179
  %v4181 = vsel %vm3702, %v4180, %v4176
  %v4182 = vlaneseq
  %v4183 = vshrl.u32 %v4182, 7
  %v4184 = vsub.s32 %v3704, %v4183
  %v4185 = vrot.slane %v3205, %v4184
  %v4186 = vsel %vm3709, %v4185, %v4181
  %v4187 = vlaneseq
  %v4188 = vshrl.u32 %v4187, 7
  %v4189 = vsub.s32 %v3711, %v4188
  %v4190 = vrot.slane %v3206, %v4189
  %v4191 = vsel %vm3716, %v4190, %v4186
  %v4192 = vlaneseq
  %v4193 = vshrl.u32 %v4192, 7
  %v4194 = vsub.s32 %v3608, %v4193
  %v4195 = vrot.slane %v3207, %v4194
  %v4196 = vlaneseq
  %v4197 = vshrl.u32 %v4196, 7
  %v4198 = vsub.s32 %v3613, %v4197
  %v4199 = vrot.slane %v3208, %v4198
  %v4200 = vsel %vm3618, %v4199, %v4195
  %v4201 = vlaneseq
  %v4202 = vshrl.u32 %v4201, 7
  %v4203 = vsub.s32 %v3620, %v4202
  %v4204 = vrot.slane %v3209, %v4203
  %v4205 = vsel %vm3625, %v4204, %v4200
  %v4206 = vlaneseq
  %v4207 = vshrl.u32 %v4206, 7
  %v4208 = vsub.s32 %v3627, %v4207
  %v4209 = vrot.slane %v3210, %v4208
  %v4210 = vsel %vm3632, %v4209, %v4205
  %v4211 = vlaneseq
  %v4212 = vshrl.u32 %v4211, 7
  %v4213 = vsub.s32 %v3634, %v4212
  %v4214 = vrot.slane %v3211, %v4213
  %v4215 = vsel %vm3639, %v4214, %v4210
  %v4216 = vlaneseq
  %v4217 = vshrl.u32 %v4216, 7
  %v4218 = vsub.s32 %v3641, %v4217
  %v4219 = vrot.slane %v3212, %v4218
  %v4220 = vsel %vm3646, %v4219, %v4215
  %v4221 = vlaneseq
  %v4222 = vshrl.u32 %v4221, 7
  %v4223 = vsub.s32 %v3648, %v4222
  %v4224 = vrot.slane %v3213, %v4223
  %v4225 = vsel %vm3653, %v4224, %v4220
  %v4226 = vlaneseq
  %v4227 = vshrl.u32 %v4226, 7
  %v4228 = vsub.s32 %v3655, %v4227
  %v4229 = vrot.slane %v3214, %v4228
  %v4230 = vsel %vm3660, %v4229, %v4225
  %v4231 = vlaneseq
  %v4232 = vshrl.u32 %v4231, 7
  %v4233 = vsub.s32 %v3662, %v4232
  %v4234 = vrot.slane %v3215, %v4233
  %v4235 = vsel %vm3667, %v4234, %v4230
  %v4236 = vlaneseq
  %v4237 = vshrl.u32 %v4236, 7
  %v4238 = vsub.s32 %v3669, %v4237
  %v4239 = vrot.slane %v3216, %v4238
  %v4240 = vsel %vm3674, %v4239, %v4235
  %v4241 = vlaneseq
  %v4242 = vshrl.u32 %v4241, 7
  %v4243 = vsub.s32 %v3676, %v4242
  %v4244 = vrot.slane %v3217, %v4243
  %v4245 = vsel %vm3681, %v4244, %v4240
  %v4246 = vlaneseq
  %v4247 = vshrl.u32 %v4246, 7
  %v4248 = vsub.s32 %v3683, %v4247
  %v4249 = vrot.slane %v3218, %v4248
  %v4250 = vsel %vm3688, %v4249, %v4245
  %v4251 = vlaneseq
  %v4252 = vshrl.u32 %v4251, 7
  %v4253 = vsub.s32 %v3690, %v4252
  %v4254 = vrot.slane %v3219, %v4253
  %v4255 = vsel %vm3695, %v4254, %v4250
  %v4256 = vlaneseq
  %v4257 = vshrl.u32 %v4256, 7
  %v4258 = vsub.s32 %v3697, %v4257
  %v4259 = vrot.slane %v3220, %v4258
  %v4260 = vsel %vm3702, %v4259, %v4255
  %v4261 = vlaneseq
  %v4262 = vshrl.u32 %v4261, 7
  %v4263 = vsub.s32 %v3704, %v4262
  %v4264 = vrot.slane %v3221, %v4263
  %v4265 = vsel %vm3709, %v4264, %v4260
  %v4266 = vlaneseq
  %v4267 = vshrl.u32 %v4266, 7
  %v4268 = vsub.s32 %v3711, %v4267
  %v4269 = vrot.slane %v3222, %v4268
  %v4270 = vsel %vm3716, %v4269, %v4265
  %v4271 = vlaneseq
  %v4272 = vshrl.u32 %v4271, 7
  %v4273 = vsub.s32 %v3608, %v4272
  %v4274 = vrot.slane %v3223, %v4273
  %v4275 = vlaneseq
  %v4276 = vshrl.u32 %v4275, 7
  %v4277 = vsub.s32 %v3613, %v4276
  %v4278 = vrot.slane %v3224, %v4277
  %v4279 = vsel %vm3618, %v4278, %v4274
  %v4280 = vlaneseq
  %v4281 = vshrl.u32 %v4280, 7
  %v4282 = vsub.s32 %v3620, %v4281
  %v4283 = vrot.slane %v3225, %v4282
  %v4284 = vsel %vm3625, %v4283, %v4279
  %v4285 = vlaneseq
  %v4286 = vshrl.u32 %v4285, 7
  %v4287 = vsub.s32 %v3627, %v4286
  %v4288 = vrot.slane %v3226, %v4287
  %v4289 = vsel %vm3632, %v4288, %v4284
  %v4290 = vlaneseq
  %v4291 = vshrl.u32 %v4290, 7
  %v4292 = vsub.s32 %v3634, %v4291
  %v4293 = vrot.slane %v3227, %v4292
  %v4294 = vsel %vm3639, %v4293, %v4289
  %v4295 = vlaneseq
  %v4296 = vshrl.u32 %v4295, 7
  %v4297 = vsub.s32 %v3641, %v4296
  %v4298 = vrot.slane %v3228, %v4297
  %v4299 = vsel %vm3646, %v4298, %v4294
  %v4300 = vlaneseq
  %v4301 = vshrl.u32 %v4300, 7
  %v4302 = vsub.s32 %v3648, %v4301
  %v4303 = vrot.slane %v3229, %v4302
  %v4304 = vsel %vm3653, %v4303, %v4299
  %v4305 = vlaneseq
  %v4306 = vshrl.u32 %v4305, 7
  %v4307 = vsub.s32 %v3655, %v4306
  %v4308 = vrot.slane %v3230, %v4307
  %v4309 = vsel %vm3660, %v4308, %v4304
  %v4310 = vlaneseq
  %v4311 = vshrl.u32 %v4310, 7
  %v4312 = vsub.s32 %v3662, %v4311
  %v4313 = vrot.slane %v3231, %v4312
  %v4314 = vsel %vm3667, %v4313, %v4309
  %v4315 = vlaneseq
  %v4316 = vshrl.u32 %v4315, 7
  %v4317 = vsub.s32 %v3669, %v4316
  %v4318 = vrot.slane %v3232, %v4317
  %v4319 = vsel %vm3674, %v4318, %v4314
  %v4320 = vlaneseq
  %v4321 = vshrl.u32 %v4320, 7
  %v4322 = vsub.s32 %v3676, %v4321
  %v4323 = vrot.slane %v3233, %v4322
  %v4324 = vsel %vm3681, %v4323, %v4319
  %v4325 = vlaneseq
  %v4326 = vshrl.u32 %v4325, 7
  %v4327 = vsub.s32 %v3683, %v4326
  %v4328 = vrot.slane %v3234, %v4327
  %v4329 = vsel %vm3688, %v4328, %v4324
  %v4330 = vlaneseq
  %v4331 = vshrl.u32 %v4330, 7
  %v4332 = vsub.s32 %v3690, %v4331
  %v4333 = vrot.slane %v3235, %v4332
  %v4334 = vsel %vm3695, %v4333, %v4329
  %v4335 = vlaneseq
  %v4336 = vshrl.u32 %v4335, 7
  %v4337 = vsub.s32 %v3697, %v4336
  %v4338 = vrot.slane %v3236, %v4337
  %v4339 = vsel %vm3702, %v4338, %v4334
  %v4340 = vlaneseq
  %v4341 = vshrl.u32 %v4340, 7
  %v4342 = vsub.s32 %v3704, %v4341
  %v4343 = vrot.slane %v3237, %v4342
  %v4344 = vsel %vm3709, %v4343, %v4339
  %v4345 = vlaneseq
  %v4346 = vshrl.u32 %v4345, 7
  %v4347 = vsub.s32 %v3711, %v4346
  %v4348 = vrot.slane %v3238, %v4347
  %v4349 = vsel %vm3716, %v4348, %v4344
  %v4350 = vlaneseq
  %v4351 = vshrl.u32 %v4350, 7
  %v4352 = vsub.s32 %v3608, %v4351
  %v4353 = vrot.slane %v3239, %v4352
  %v4354 = vlaneseq
  %v4355 = vshrl.u32 %v4354, 7
  %v4356 = vsub.s32 %v3613, %v4355
  %v4357 = vrot.slane %v3240, %v4356
  %v4358 = vsel %vm3618, %v4357, %v4353
  %v4359 = vlaneseq
  %v4360 = vshrl.u32 %v4359, 7
  %v4361 = vsub.s32 %v3620, %v4360
  %v4362 = vrot.slane %v3241, %v4361
  %v4363 = vsel %vm3625, %v4362, %v4358
  %v4364 = vlaneseq
  %v4365 = vshrl.u32 %v4364, 7
  %v4366 = vsub.s32 %v3627, %v4365
  %v4367 = vrot.slane %v3242, %v4366
  %v4368 = vsel %vm3632, %v4367, %v4363
  %v4369 = vlaneseq
  %v4370 = vshrl.u32 %v4369, 7
  %v4371 = vsub.s32 %v3634, %v4370
  %v4372 = vrot.slane %v3243, %v4371
  %v4373 = vsel %vm3639, %v4372, %v4368
  %v4374 = vlaneseq
  %v4375 = vshrl.u32 %v4374, 7
  %v4376 = vsub.s32 %v3641, %v4375
  %v4377 = vrot.slane %v3244, %v4376
  %v4378 = vsel %vm3646, %v4377, %v4373
  %v4379 = vlaneseq
  %v4380 = vshrl.u32 %v4379, 7
  %v4381 = vsub.s32 %v3648, %v4380
  %v4382 = vrot.slane %v3245, %v4381
  %v4383 = vsel %vm3653, %v4382, %v4378
  %v4384 = vlaneseq
  %v4385 = vshrl.u32 %v4384, 7
  %v4386 = vsub.s32 %v3655, %v4385
  %v4387 = vrot.slane %v3246, %v4386
  %v4388 = vsel %vm3660, %v4387, %v4383
  %v4389 = vlaneseq
  %v4390 = vshrl.u32 %v4389, 7
  %v4391 = vsub.s32 %v3662, %v4390
  %v4392 = vrot.slane %v3247, %v4391
  %v4393 = vsel %vm3667, %v4392, %v4388
  %v4394 = vlaneseq
  %v4395 = vshrl.u32 %v4394, 7
  %v4396 = vsub.s32 %v3669, %v4395
  %v4397 = vrot.slane %v3248, %v4396
  %v4398 = vsel %vm3674, %v4397, %v4393
  %v4399 = vlaneseq
  %v4400 = vshrl.u32 %v4399, 7
  %v4401 = vsub.s32 %v3676, %v4400
  %v4402 = vrot.slane %v3249, %v4401
  %v4403 = vsel %vm3681, %v4402, %v4398
  %v4404 = vlaneseq
  %v4405 = vshrl.u32 %v4404, 7
  %v4406 = vsub.s32 %v3683, %v4405
  %v4407 = vrot.slane %v3250, %v4406
  %v4408 = vsel %vm3688, %v4407, %v4403
  %v4409 = vlaneseq
  %v4410 = vshrl.u32 %v4409, 7
  %v4411 = vsub.s32 %v3690, %v4410
  %v4412 = vrot.slane %v3251, %v4411
  %v4413 = vsel %vm3695, %v4412, %v4408
  %v4414 = vlaneseq
  %v4415 = vshrl.u32 %v4414, 7
  %v4416 = vsub.s32 %v3697, %v4415
  %v4417 = vrot.slane %v3252, %v4416
  %v4418 = vsel %vm3702, %v4417, %v4413
  %v4419 = vlaneseq
  %v4420 = vshrl.u32 %v4419, 7
  %v4421 = vsub.s32 %v3704, %v4420
  %v4422 = vrot.slane %v3253, %v4421
  %v4423 = vsel %vm3709, %v4422, %v4418
  %v4424 = vlaneseq
  %v4425 = vshrl.u32 %v4424, 7
  %v4426 = vsub.s32 %v3711, %v4425
  %v4427 = vrot.slane %v3254, %v4426
  %v4428 = vsel %vm3716, %v4427, %v4423
  %v4429 = vlaneseq
  %v4430 = vshrl.u32 %v4429, 7
  %v4431 = vsub.s32 %v3608, %v4430
  %v4432 = vrot.slane %v3255, %v4431
  %v4433 = vlaneseq
  %v4434 = vshrl.u32 %v4433, 7
  %v4435 = vsub.s32 %v3613, %v4434
  %v4436 = vrot.slane %v3256, %v4435
  %v4437 = vsel %vm3618, %v4436, %v4432
  %v4438 = vlaneseq
  %v4439 = vshrl.u32 %v4438, 7
  %v4440 = vsub.s32 %v3620, %v4439
  %v4441 = vrot.slane %v3257, %v4440
  %v4442 = vsel %vm3625, %v4441, %v4437
  %v4443 = vlaneseq
  %v4444 = vshrl.u32 %v4443, 7
  %v4445 = vsub.s32 %v3627, %v4444
  %v4446 = vrot.slane %v3258, %v4445
  %v4447 = vsel %vm3632, %v4446, %v4442
  %v4448 = vlaneseq
  %v4449 = vshrl.u32 %v4448, 7
  %v4450 = vsub.s32 %v3634, %v4449
  %v4451 = vrot.slane %v3259, %v4450
  %v4452 = vsel %vm3639, %v4451, %v4447
  %v4453 = vlaneseq
  %v4454 = vshrl.u32 %v4453, 7
  %v4455 = vsub.s32 %v3641, %v4454
  %v4456 = vrot.slane %v3260, %v4455
  %v4457 = vsel %vm3646, %v4456, %v4452
  %v4458 = vlaneseq
  %v4459 = vshrl.u32 %v4458, 7
  %v4460 = vsub.s32 %v3648, %v4459
  %v4461 = vrot.slane %v3261, %v4460
  %v4462 = vsel %vm3653, %v4461, %v4457
  %v4463 = vlaneseq
  %v4464 = vshrl.u32 %v4463, 7
  %v4465 = vsub.s32 %v3655, %v4464
  %v4466 = vrot.slane %v3262, %v4465
  %v4467 = vsel %vm3660, %v4466, %v4462
  %v4468 = vlaneseq
  %v4469 = vshrl.u32 %v4468, 7
  %v4470 = vsub.s32 %v3662, %v4469
  %v4471 = vrot.slane %v3263, %v4470
  %v4472 = vsel %vm3667, %v4471, %v4467
  %v4473 = vlaneseq
  %v4474 = vshrl.u32 %v4473, 7
  %v4475 = vsub.s32 %v3669, %v4474
  %v4476 = vrot.slane %v3264, %v4475
  %v4477 = vsel %vm3674, %v4476, %v4472
  %v4478 = vlaneseq
  %v4479 = vshrl.u32 %v4478, 7
  %v4480 = vsub.s32 %v3676, %v4479
  %v4481 = vrot.slane %v3265, %v4480
  %v4482 = vsel %vm3681, %v4481, %v4477
  %v4483 = vlaneseq
  %v4484 = vshrl.u32 %v4483, 7
  %v4485 = vsub.s32 %v3683, %v4484
  %v4486 = vrot.slane %v3266, %v4485
  %v4487 = vsel %vm3688, %v4486, %v4482
  %v4488 = vlaneseq
  %v4489 = vshrl.u32 %v4488, 7
  %v4490 = vsub.s32 %v3690, %v4489
  %v4491 = vrot.slane %v3267, %v4490
  %v4492 = vsel %vm3695, %v4491, %v4487
  %v4493 = vlaneseq
  %v4494 = vshrl.u32 %v4493, 7
  %v4495 = vsub.s32 %v3697, %v4494
  %v4496 = vrot.slane %v3268, %v4495
  %v4497 = vsel %vm3702, %v4496, %v4492
  %v4498 = vlaneseq
  %v4499 = vshrl.u32 %v4498, 7
  %v4500 = vsub.s32 %v3704, %v4499
  %v4501 = vrot.slane %v3269, %v4500
  %v4502 = vsel %vm3709, %v4501, %v4497
  %v4503 = vlaneseq
  %v4504 = vshrl.u32 %v4503, 7
  %v4505 = vsub.s32 %v3711, %v4504
  %v4506 = vrot.slane %v3270, %v4505
  %v4507 = vsel %vm3716, %v4506, %v4502
  %v4508 = vlaneseq
  %v4509 = vshrl.u32 %v4508, 7
  %v4510 = vsub.s32 %v3608, %v4509
  %v4511 = vrot.slane %v3271, %v4510
  %v4512 = vlaneseq
  %v4513 = vshrl.u32 %v4512, 7
  %v4514 = vsub.s32 %v3613, %v4513
  %v4515 = vrot.slane %v3272, %v4514
  %v4516 = vsel %vm3618, %v4515, %v4511
  %v4517 = vlaneseq
  %v4518 = vshrl.u32 %v4517, 7
  %v4519 = vsub.s32 %v3620, %v4518
  %v4520 = vrot.slane %v3273, %v4519
  %v4521 = vsel %vm3625, %v4520, %v4516
  %v4522 = vlaneseq
  %v4523 = vshrl.u32 %v4522, 7
  %v4524 = vsub.s32 %v3627, %v4523
  %v4525 = vrot.slane %v3274, %v4524
  %v4526 = vsel %vm3632, %v4525, %v4521
  %v4527 = vlaneseq
  %v4528 = vshrl.u32 %v4527, 7
  %v4529 = vsub.s32 %v3634, %v4528
  %v4530 = vrot.slane %v3275, %v4529
  %v4531 = vsel %vm3639, %v4530, %v4526
  %v4532 = vlaneseq
  %v4533 = vshrl.u32 %v4532, 7
  %v4534 = vsub.s32 %v3641, %v4533
  %v4535 = vrot.slane %v3276, %v4534
  %v4536 = vsel %vm3646, %v4535, %v4531
  %v4537 = vlaneseq
  %v4538 = vshrl.u32 %v4537, 7
  %v4539 = vsub.s32 %v3648, %v4538
  %v4540 = vrot.slane %v3277, %v4539
  %v4541 = vsel %vm3653, %v4540, %v4536
  %v4542 = vlaneseq
  %v4543 = vshrl.u32 %v4542, 7
  %v4544 = vsub.s32 %v3655, %v4543
  %v4545 = vrot.slane %v3278, %v4544
  %v4546 = vsel %vm3660, %v4545, %v4541
  %v4547 = vlaneseq
  %v4548 = vshrl.u32 %v4547, 7
  %v4549 = vsub.s32 %v3662, %v4548
  %v4550 = vrot.slane %v3279, %v4549
  %v4551 = vsel %vm3667, %v4550, %v4546
  %v4552 = vlaneseq
  %v4553 = vshrl.u32 %v4552, 7
  %v4554 = vsub.s32 %v3669, %v4553
  %v4555 = vrot.slane %v3280, %v4554
  %v4556 = vsel %vm3674, %v4555, %v4551
  %v4557 = vlaneseq
  %v4558 = vshrl.u32 %v4557, 7
  %v4559 = vsub.s32 %v3676, %v4558
  %v4560 = vrot.slane %v3281, %v4559
  %v4561 = vsel %vm3681, %v4560, %v4556
  %v4562 = vlaneseq
  %v4563 = vshrl.u32 %v4562, 7
  %v4564 = vsub.s32 %v3683, %v4563
  %v4565 = vrot.slane %v3282, %v4564
  %v4566 = vsel %vm3688, %v4565, %v4561
  %v4567 = vlaneseq
  %v4568 = vshrl.u32 %v4567, 7
  %v4569 = vsub.s32 %v3690, %v4568
  %v4570 = vrot.slane %v3283, %v4569
  %v4571 = vsel %vm3695, %v4570, %v4566
  %v4572 = vlaneseq
  %v4573 = vshrl.u32 %v4572, 7
  %v4574 = vsub.s32 %v3697, %v4573
  %v4575 = vrot.slane %v3284, %v4574
  %v4576 = vsel %vm3702, %v4575, %v4571
  %v4577 = vlaneseq
  %v4578 = vshrl.u32 %v4577, 7
  %v4579 = vsub.s32 %v3704, %v4578
  %v4580 = vrot.slane %v3285, %v4579
  %v4581 = vsel %vm3709, %v4580, %v4576
  %v4582 = vlaneseq
  %v4583 = vshrl.u32 %v4582, 7
  %v4584 = vsub.s32 %v3711, %v4583
  %v4585 = vrot.slane %v3286, %v4584
  %v4586 = vsel %vm3716, %v4585, %v4581
  %v4587 = vlaneseq
  %v4588 = vshrl.u32 %v4587, 7
  %v4589 = vsub.s32 %v3608, %v4588
  %v4590 = vrot.slane %v3287, %v4589
  %v4591 = vlaneseq
  %v4592 = vshrl.u32 %v4591, 7
  %v4593 = vsub.s32 %v3613, %v4592
  %v4594 = vrot.slane %v3288, %v4593
  %v4595 = vsel %vm3618, %v4594, %v4590
  %v4596 = vlaneseq
  %v4597 = vshrl.u32 %v4596, 7
  %v4598 = vsub.s32 %v3620, %v4597
  %v4599 = vrot.slane %v3289, %v4598
  %v4600 = vsel %vm3625, %v4599, %v4595
  %v4601 = vlaneseq
  %v4602 = vshrl.u32 %v4601, 7
  %v4603 = vsub.s32 %v3627, %v4602
  %v4604 = vrot.slane %v3290, %v4603
  %v4605 = vsel %vm3632, %v4604, %v4600
  %v4606 = vlaneseq
  %v4607 = vshrl.u32 %v4606, 7
  %v4608 = vsub.s32 %v3634, %v4607
  %v4609 = vrot.slane %v3291, %v4608
  %v4610 = vsel %vm3639, %v4609, %v4605
  %v4611 = vlaneseq
  %v4612 = vshrl.u32 %v4611, 7
  %v4613 = vsub.s32 %v3641, %v4612
  %v4614 = vrot.slane %v3292, %v4613
  %v4615 = vsel %vm3646, %v4614, %v4610
  %v4616 = vlaneseq
  %v4617 = vshrl.u32 %v4616, 7
  %v4618 = vsub.s32 %v3648, %v4617
  %v4619 = vrot.slane %v3293, %v4618
  %v4620 = vsel %vm3653, %v4619, %v4615
  %v4621 = vlaneseq
  %v4622 = vshrl.u32 %v4621, 7
  %v4623 = vsub.s32 %v3655, %v4622
  %v4624 = vrot.slane %v3294, %v4623
  %v4625 = vsel %vm3660, %v4624, %v4620
  %v4626 = vlaneseq
  %v4627 = vshrl.u32 %v4626, 7
  %v4628 = vsub.s32 %v3662, %v4627
  %v4629 = vrot.slane %v3295, %v4628
  %v4630 = vsel %vm3667, %v4629, %v4625
  %v4631 = vlaneseq
  %v4632 = vshrl.u32 %v4631, 7
  %v4633 = vsub.s32 %v3669, %v4632
  %v4634 = vrot.slane %v3296, %v4633
  %v4635 = vsel %vm3674, %v4634, %v4630
  %v4636 = vlaneseq
  %v4637 = vshrl.u32 %v4636, 7
  %v4638 = vsub.s32 %v3676, %v4637
  %v4639 = vrot.slane %v3297, %v4638
  %v4640 = vsel %vm3681, %v4639, %v4635
  %v4641 = vlaneseq
  %v4642 = vshrl.u32 %v4641, 7
  %v4643 = vsub.s32 %v3683, %v4642
  %v4644 = vrot.slane %v3298, %v4643
  %v4645 = vsel %vm3688, %v4644, %v4640
  %v4646 = vlaneseq
  %v4647 = vshrl.u32 %v4646, 7
  %v4648 = vsub.s32 %v3690, %v4647
  %v4649 = vrot.slane %v3299, %v4648
  %v4650 = vsel %vm3695, %v4649, %v4645
  %v4651 = vlaneseq
  %v4652 = vshrl.u32 %v4651, 7
  %v4653 = vsub.s32 %v3697, %v4652
  %v4654 = vrot.slane %v3300, %v4653
  %v4655 = vsel %vm3702, %v4654, %v4650
  %v4656 = vlaneseq
  %v4657 = vshrl.u32 %v4656, 7
  %v4658 = vsub.s32 %v3704, %v4657
  %v4659 = vrot.slane %v3301, %v4658
  %v4660 = vsel %vm3709, %v4659, %v4655
  %v4661 = vlaneseq
  %v4662 = vshrl.u32 %v4661, 7
  %v4663 = vsub.s32 %v3711, %v4662
  %v4664 = vrot.slane %v3302, %v4663
  %v4665 = vsel %vm3716, %v4664, %v4660
  %v4666 = vlaneseq
  %v4667 = vshrl.u32 %v4666, 7
  %v4668 = vsub.s32 %v3608, %v4667
  %v4669 = vrot.slane %v3303, %v4668
  %v4670 = vlaneseq
  %v4671 = vshrl.u32 %v4670, 7
  %v4672 = vsub.s32 %v3613, %v4671
  %v4673 = vrot.slane %v3304, %v4672
  %v4674 = vsel %vm3618, %v4673, %v4669
  %v4675 = vlaneseq
  %v4676 = vshrl.u32 %v4675, 7
  %v4677 = vsub.s32 %v3620, %v4676
  %v4678 = vrot.slane %v3305, %v4677
  %v4679 = vsel %vm3625, %v4678, %v4674
  %v4680 = vlaneseq
  %v4681 = vshrl.u32 %v4680, 7
  %v4682 = vsub.s32 %v3627, %v4681
  %v4683 = vrot.slane %v3306, %v4682
  %v4684 = vsel %vm3632, %v4683, %v4679
  %v4685 = vlaneseq
  %v4686 = vshrl.u32 %v4685, 7
  %v4687 = vsub.s32 %v3634, %v4686
  %v4688 = vrot.slane %v3307, %v4687
  %v4689 = vsel %vm3639, %v4688, %v4684
  %v4690 = vlaneseq
  %v4691 = vshrl.u32 %v4690, 7
  %v4692 = vsub.s32 %v3641, %v4691
  %v4693 = vrot.slane %v3308, %v4692
  %v4694 = vsel %vm3646, %v4693, %v4689
  %v4695 = vlaneseq
  %v4696 = vshrl.u32 %v4695, 7
  %v4697 = vsub.s32 %v3648, %v4696
  %v4698 = vrot.slane %v3309, %v4697
  %v4699 = vsel %vm3653, %v4698, %v4694
  %v4700 = vlaneseq
  %v4701 = vshrl.u32 %v4700, 7
  %v4702 = vsub.s32 %v3655, %v4701
  %v4703 = vrot.slane %v3310, %v4702
  %v4704 = vsel %vm3660, %v4703, %v4699
  %v4705 = vlaneseq
  %v4706 = vshrl.u32 %v4705, 7
  %v4707 = vsub.s32 %v3662, %v4706
  %v4708 = vrot.slane %v3311, %v4707
  %v4709 = vsel %vm3667, %v4708, %v4704
  %v4710 = vlaneseq
  %v4711 = vshrl.u32 %v4710, 7
  %v4712 = vsub.s32 %v3669, %v4711
  %v4713 = vrot.slane %v3312, %v4712
  %v4714 = vsel %vm3674, %v4713, %v4709
  %v4715 = vlaneseq
  %v4716 = vshrl.u32 %v4715, 7
  %v4717 = vsub.s32 %v3676, %v4716
  %v4718 = vrot.slane %v3313, %v4717
  %v4719 = vsel %vm3681, %v4718, %v4714
  %v4720 = vlaneseq
  %v4721 = vshrl.u32 %v4720, 7
  %v4722 = vsub.s32 %v3683, %v4721
  %v4723 = vrot.slane %v3314, %v4722
  %v4724 = vsel %vm3688, %v4723, %v4719
  %v4725 = vlaneseq
  %v4726 = vshrl.u32 %v4725, 7
  %v4727 = vsub.s32 %v3690, %v4726
  %v4728 = vrot.slane %v3315, %v4727
  %v4729 = vsel %vm3695, %v4728, %v4724
  %v4730 = vlaneseq
  %v4731 = vshrl.u32 %v4730, 7
  %v4732 = vsub.s32 %v3697, %v4731
  %v4733 = vrot.slane %v3316, %v4732
  %v4734 = vsel %vm3702, %v4733, %v4729
  %v4735 = vlaneseq
  %v4736 = vshrl.u32 %v4735, 7
  %v4737 = vsub.s32 %v3704, %v4736
  %v4738 = vrot.slane %v3317, %v4737
  %v4739 = vsel %vm3709, %v4738, %v4734
  %v4740 = vlaneseq
  %v4741 = vshrl.u32 %v4740, 7
  %v4742 = vsub.s32 %v3711, %v4741
  %v4743 = vrot.slane %v3318, %v4742
  %v4744 = vsel %vm3716, %v4743, %v4739
  %v4745 = vlaneseq
  %v4746 = vshrl.u32 %v4745, 7
  %v4747 = vsub.s32 %v3608, %v4746
  %v4748 = vrot.slane %v3319, %v4747
  %v4749 = vlaneseq
  %v4750 = vshrl.u32 %v4749, 7
  %v4751 = vsub.s32 %v3613, %v4750
  %v4752 = vrot.slane %v3320, %v4751
  %v4753 = vsel %vm3618, %v4752, %v4748
  %v4754 = vlaneseq
  %v4755 = vshrl.u32 %v4754, 7
  %v4756 = vsub.s32 %v3620, %v4755
  %v4757 = vrot.slane %v3321, %v4756
  %v4758 = vsel %vm3625, %v4757, %v4753
  %v4759 = vlaneseq
  %v4760 = vshrl.u32 %v4759, 7
  %v4761 = vsub.s32 %v3627, %v4760
  %v4762 = vrot.slane %v3322, %v4761
  %v4763 = vsel %vm3632, %v4762, %v4758
  %v4764 = vlaneseq
  %v4765 = vshrl.u32 %v4764, 7
  %v4766 = vsub.s32 %v3634, %v4765
  %v4767 = vrot.slane %v3323, %v4766
  %v4768 = vsel %vm3639, %v4767, %v4763
  %v4769 = vlaneseq
  %v4770 = vshrl.u32 %v4769, 7
  %v4771 = vsub.s32 %v3641, %v4770
  %v4772 = vrot.slane %v3324, %v4771
  %v4773 = vsel %vm3646, %v4772, %v4768
  %v4774 = vlaneseq
  %v4775 = vshrl.u32 %v4774, 7
  %v4776 = vsub.s32 %v3648, %v4775
  %v4777 = vrot.slane %v3325, %v4776
  %v4778 = vsel %vm3653, %v4777, %v4773
  %v4779 = vlaneseq
  %v4780 = vshrl.u32 %v4779, 7
  %v4781 = vsub.s32 %v3655, %v4780
  %v4782 = vrot.slane %v3326, %v4781
  %v4783 = vsel %vm3660, %v4782, %v4778
  %v4784 = vlaneseq
  %v4785 = vshrl.u32 %v4784, 7
  %v4786 = vsub.s32 %v3662, %v4785
  %v4787 = vrot.slane %v3327, %v4786
  %v4788 = vsel %vm3667, %v4787, %v4783
  %v4789 = vlaneseq
  %v4790 = vshrl.u32 %v4789, 7
  %v4791 = vsub.s32 %v3669, %v4790
  %v4792 = vrot.slane %v3328, %v4791
  %v4793 = vsel %vm3674, %v4792, %v4788
  %v4794 = vlaneseq
  %v4795 = vshrl.u32 %v4794, 7
  %v4796 = vsub.s32 %v3676, %v4795
  %v4797 = vrot.slane %v3329, %v4796
  %v4798 = vsel %vm3681, %v4797, %v4793
  %v4799 = vlaneseq
  %v4800 = vshrl.u32 %v4799, 7
  %v4801 = vsub.s32 %v3683, %v4800
  %v4802 = vrot.slane %v3330, %v4801
  %v4803 = vsel %vm3688, %v4802, %v4798
  %v4804 = vlaneseq
  %v4805 = vshrl.u32 %v4804, 7
  %v4806 = vsub.s32 %v3690, %v4805
  %v4807 = vrot.slane %v3331, %v4806
  %v4808 = vsel %vm3695, %v4807, %v4803
  %v4809 = vlaneseq
  %v4810 = vshrl.u32 %v4809, 7
  %v4811 = vsub.s32 %v3697, %v4810
  %v4812 = vrot.slane %v3332, %v4811
  %v4813 = vsel %vm3702, %v4812, %v4808
  %v4814 = vlaneseq
  %v4815 = vshrl.u32 %v4814, 7
  %v4816 = vsub.s32 %v3704, %v4815
  %v4817 = vrot.slane %v3333, %v4816
  %v4818 = vsel %vm3709, %v4817, %v4813
  %v4819 = vlaneseq
  %v4820 = vshrl.u32 %v4819, 7
  %v4821 = vsub.s32 %v3711, %v4820
  %v4822 = vrot.slane %v3334, %v4821
  %v4823 = vsel %vm3716, %v4822, %v4818
  %v4824 = vlaneseq
  %v4825 = vshrl.u32 %v4824, 7
  %v4826 = vsub.s32 %v3608, %v4825
  %v4827 = vrot.slane %v3335, %v4826
  %v4828 = vlaneseq
  %v4829 = vshrl.u32 %v4828, 7
  %v4830 = vsub.s32 %v3613, %v4829
  %v4831 = vrot.slane %v3336, %v4830
  %v4832 = vsel %vm3618, %v4831, %v4827
  %v4833 = vlaneseq
  %v4834 = vshrl.u32 %v4833, 7
  %v4835 = vsub.s32 %v3620, %v4834
  %v4836 = vrot.slane %v3337, %v4835
  %v4837 = vsel %vm3625, %v4836, %v4832
  %v4838 = vlaneseq
  %v4839 = vshrl.u32 %v4838, 7
  %v4840 = vsub.s32 %v3627, %v4839
  %v4841 = vrot.slane %v3338, %v4840
  %v4842 = vsel %vm3632, %v4841, %v4837
  %v4843 = vlaneseq
  %v4844 = vshrl.u32 %v4843, 7
  %v4845 = vsub.s32 %v3634, %v4844
  %v4846 = vrot.slane %v3339, %v4845
  %v4847 = vsel %vm3639, %v4846, %v4842
  %v4848 = vlaneseq
  %v4849 = vshrl.u32 %v4848, 7
  %v4850 = vsub.s32 %v3641, %v4849
  %v4851 = vrot.slane %v3340, %v4850
  %v4852 = vsel %vm3646, %v4851, %v4847
  %v4853 = vlaneseq
  %v4854 = vshrl.u32 %v4853, 7
  %v4855 = vsub.s32 %v3648, %v4854
  %v4856 = vrot.slane %v3341, %v4855
  %v4857 = vsel %vm3653, %v4856, %v4852
  %v4858 = vlaneseq
  %v4859 = vshrl.u32 %v4858, 7
  %v4860 = vsub.s32 %v3655, %v4859
  %v4861 = vrot.slane %v3342, %v4860
  %v4862 = vsel %vm3660, %v4861, %v4857
  %v4863 = vlaneseq
  %v4864 = vshrl.u32 %v4863, 7
  %v4865 = vsub.s32 %v3662, %v4864
  %v4866 = vrot.slane %v3343, %v4865
  %v4867 = vsel %vm3667, %v4866, %v4862
  %v4868 = vlaneseq
  %v4869 = vshrl.u32 %v4868, 7
  %v4870 = vsub.s32 %v3669, %v4869
  %v4871 = vrot.slane %v3344, %v4870
  %v4872 = vsel %vm3674, %v4871, %v4867
  %v4873 = vlaneseq
  %v4874 = vshrl.u32 %v4873, 7
  %v4875 = vsub.s32 %v3676, %v4874
  %v4876 = vrot.slane %v3345, %v4875
  %v4877 = vsel %vm3681, %v4876, %v4872
  %v4878 = vlaneseq
  %v4879 = vshrl.u32 %v4878, 7
  %v4880 = vsub.s32 %v3683, %v4879
  %v4881 = vrot.slane %v3346, %v4880
  %v4882 = vsel %vm3688, %v4881, %v4877
  %v4883 = vlaneseq
  %v4884 = vshrl.u32 %v4883, 7
  %v4885 = vsub.s32 %v3690, %v4884
  %v4886 = vrot.slane %v3347, %v4885
  %v4887 = vsel %vm3695, %v4886, %v4882
  %v4888 = vlaneseq
  %v4889 = vshrl.u32 %v4888, 7
  %v4890 = vsub.s32 %v3697, %v4889
  %v4891 = vrot.slane %v3348, %v4890
  %v4892 = vsel %vm3702, %v4891, %v4887
  %v4893 = vlaneseq
  %v4894 = vshrl.u32 %v4893, 7
  %v4895 = vsub.s32 %v3704, %v4894
  %v4896 = vrot.slane %v3349, %v4895
  %v4897 = vsel %vm3709, %v4896, %v4892
  %v4898 = vlaneseq
  %v4899 = vshrl.u32 %v4898, 7
  %v4900 = vsub.s32 %v3711, %v4899
  %v4901 = vrot.slane %v3350, %v4900
  %v4902 = vsel %vm3716, %v4901, %v4897
  %v4903 = vlaneseq
  %v4904 = vshrl.u32 %v4903, 7
  %v4905 = vsub.s32 %v3608, %v4904
  %v4906 = vrot.slane %v3351, %v4905
  %v4907 = vlaneseq
  %v4908 = vshrl.u32 %v4907, 7
  %v4909 = vsub.s32 %v3613, %v4908
  %v4910 = vrot.slane %v3352, %v4909
  %v4911 = vsel %vm3618, %v4910, %v4906
  %v4912 = vlaneseq
  %v4913 = vshrl.u32 %v4912, 7
  %v4914 = vsub.s32 %v3620, %v4913
  %v4915 = vrot.slane %v3353, %v4914
  %v4916 = vsel %vm3625, %v4915, %v4911
  %v4917 = vlaneseq
  %v4918 = vshrl.u32 %v4917, 7
  %v4919 = vsub.s32 %v3627, %v4918
  %v4920 = vrot.slane %v3354, %v4919
  %v4921 = vsel %vm3632, %v4920, %v4916
  %v4922 = vlaneseq
  %v4923 = vshrl.u32 %v4922, 7
  %v4924 = vsub.s32 %v3634, %v4923
  %v4925 = vrot.slane %v3355, %v4924
  %v4926 = vsel %vm3639, %v4925, %v4921
  %v4927 = vlaneseq
  %v4928 = vshrl.u32 %v4927, 7
  %v4929 = vsub.s32 %v3641, %v4928
  %v4930 = vrot.slane %v3356, %v4929
  %v4931 = vsel %vm3646, %v4930, %v4926
  %v4932 = vlaneseq
  %v4933 = vshrl.u32 %v4932, 7
  %v4934 = vsub.s32 %v3648, %v4933
  %v4935 = vrot.slane %v3357, %v4934
  %v4936 = vsel %vm3653, %v4935, %v4931
  %v4937 = vlaneseq
  %v4938 = vshrl.u32 %v4937, 7
  %v4939 = vsub.s32 %v3655, %v4938
  %v4940 = vrot.slane %v3358, %v4939
  %v4941 = vsel %vm3660, %v4940, %v4936
  %v4942 = vlaneseq
  %v4943 = vshrl.u32 %v4942, 7
  %v4944 = vsub.s32 %v3662, %v4943
  %v4945 = vrot.slane %v3359, %v4944
  %v4946 = vsel %vm3667, %v4945, %v4941
  %v4947 = vlaneseq
  %v4948 = vshrl.u32 %v4947, 7
  %v4949 = vsub.s32 %v3669, %v4948
  %v4950 = vrot.slane %v3360, %v4949
  %v4951 = vsel %vm3674, %v4950, %v4946
  %v4952 = vlaneseq
  %v4953 = vshrl.u32 %v4952, 7
  %v4954 = vsub.s32 %v3676, %v4953
  %v4955 = vrot.slane %v3361, %v4954
  %v4956 = vsel %vm3681, %v4955, %v4951
  %v4957 = vlaneseq
  %v4958 = vshrl.u32 %v4957, 7
  %v4959 = vsub.s32 %v3683, %v4958
  %v4960 = vrot.slane %v3362, %v4959
  %v4961 = vsel %vm3688, %v4960, %v4956
  %v4962 = vlaneseq
  %v4963 = vshrl.u32 %v4962, 7
  %v4964 = vsub.s32 %v3690, %v4963
  %v4965 = vrot.slane %v3363, %v4964
  %v4966 = vsel %vm3695, %v4965, %v4961
  %v4967 = vlaneseq
  %v4968 = vshrl.u32 %v4967, 7
  %v4969 = vsub.s32 %v3697, %v4968
  %v4970 = vrot.slane %v3364, %v4969
  %v4971 = vsel %vm3702, %v4970, %v4966
  %v4972 = vlaneseq
  %v4973 = vshrl.u32 %v4972, 7
  %v4974 = vsub.s32 %v3704, %v4973
  %v4975 = vrot.slane %v3365, %v4974
  %v4976 = vsel %vm3709, %v4975, %v4971
  %v4977 = vlaneseq
  %v4978 = vshrl.u32 %v4977, 7
  %v4979 = vsub.s32 %v3711, %v4978
  %v4980 = vrot.slane %v3366, %v4979
  %v4981 = vsel %vm3716, %v4980, %v4976
  %v4982 = vlaneseq
  %v4983 = vshrl.u32 %v4982, 7
  %v4984 = vsub.s32 %v3608, %v4983
  %v4985 = vrot.slane %v3367, %v4984
  %v4986 = vlaneseq
  %v4987 = vshrl.u32 %v4986, 7
  %v4988 = vsub.s32 %v3613, %v4987
  %v4989 = vrot.slane %v3368, %v4988
  %v4990 = vsel %vm3618, %v4989, %v4985
  %v4991 = vlaneseq
  %v4992 = vshrl.u32 %v4991, 7
  %v4993 = vsub.s32 %v3620, %v4992
  %v4994 = vrot.slane %v3369, %v4993
  %v4995 = vsel %vm3625, %v4994, %v4990
  %v4996 = vlaneseq
  %v4997 = vshrl.u32 %v4996, 7
  %v4998 = vsub.s32 %v3627, %v4997
  %v4999 = vrot.slane %v3370, %v4998
  %v5000 = vsel %vm3632, %v4999, %v4995
  %v5001 = vlaneseq
  %v5002 = vshrl.u32 %v5001, 7
  %v5003 = vsub.s32 %v3634, %v5002
  %v5004 = vrot.slane %v3371, %v5003
  %v5005 = vsel %vm3639, %v5004, %v5000
  %v5006 = vlaneseq
  %v5007 = vshrl.u32 %v5006, 7
  %v5008 = vsub.s32 %v3641, %v5007
  %v5009 = vrot.slane %v3372, %v5008
  %v5010 = vsel %vm3646, %v5009, %v5005
  %v5011 = vlaneseq
  %v5012 = vshrl.u32 %v5011, 7
  %v5013 = vsub.s32 %v3648, %v5012
  %v5014 = vrot.slane %v3373, %v5013
  %v5015 = vsel %vm3653, %v5014, %v5010
  %v5016 = vlaneseq
  %v5017 = vshrl.u32 %v5016, 7
  %v5018 = vsub.s32 %v3655, %v5017
  %v5019 = vrot.slane %v3374, %v5018
  %v5020 = vsel %vm3660, %v5019, %v5015
  %v5021 = vlaneseq
  %v5022 = vshrl.u32 %v5021, 7
  %v5023 = vsub.s32 %v3662, %v5022
  %v5024 = vrot.slane %v3375, %v5023
  %v5025 = vsel %vm3667, %v5024, %v5020
  %v5026 = vlaneseq
  %v5027 = vshrl.u32 %v5026, 7
  %v5028 = vsub.s32 %v3669, %v5027
  %v5029 = vrot.slane %v3376, %v5028
  %v5030 = vsel %vm3674, %v5029, %v5025
  %v5031 = vlaneseq
  %v5032 = vshrl.u32 %v5031, 7
  %v5033 = vsub.s32 %v3676, %v5032
  %v5034 = vrot.slane %v3377, %v5033
  %v5035 = vsel %vm3681, %v5034, %v5030
  %v5036 = vlaneseq
  %v5037 = vshrl.u32 %v5036, 7
  %v5038 = vsub.s32 %v3683, %v5037
  %v5039 = vrot.slane %v3378, %v5038
  %v5040 = vsel %vm3688, %v5039, %v5035
  %v5041 = vlaneseq
  %v5042 = vshrl.u32 %v5041, 7
  %v5043 = vsub.s32 %v3690, %v5042
  %v5044 = vrot.slane %v3379, %v5043
  %v5045 = vsel %vm3695, %v5044, %v5040
  %v5046 = vlaneseq
  %v5047 = vshrl.u32 %v5046, 7
  %v5048 = vsub.s32 %v3697, %v5047
  %v5049 = vrot.slane %v3380, %v5048
  %v5050 = vsel %vm3702, %v5049, %v5045
  %v5051 = vlaneseq
  %v5052 = vshrl.u32 %v5051, 7
  %v5053 = vsub.s32 %v3704, %v5052
  %v5054 = vrot.slane %v3381, %v5053
  %v5055 = vsel %vm3709, %v5054, %v5050
  %v5056 = vlaneseq
  %v5057 = vshrl.u32 %v5056, 7
  %v5058 = vsub.s32 %v3711, %v5057
  %v5059 = vrot.slane %v3382, %v5058
  %v5060 = vsel %vm3716, %v5059, %v5055
  %v5061 = vlaneseq
  %v5062 = vshrl.u32 %v5061, 7
  %v5063 = vsub.s32 %v3608, %v5062
  %v5064 = vrot.slane %v3383, %v5063
  %v5065 = vlaneseq
  %v5066 = vshrl.u32 %v5065, 7
  %v5067 = vsub.s32 %v3613, %v5066
  %v5068 = vrot.slane %v3384, %v5067
  %v5069 = vsel %vm3618, %v5068, %v5064
  %v5070 = vlaneseq
  %v5071 = vshrl.u32 %v5070, 7
  %v5072 = vsub.s32 %v3620, %v5071
  %v5073 = vrot.slane %v3385, %v5072
  %v5074 = vsel %vm3625, %v5073, %v5069
  %v5075 = vlaneseq
  %v5076 = vshrl.u32 %v5075, 7
  %v5077 = vsub.s32 %v3627, %v5076
  %v5078 = vrot.slane %v3386, %v5077
  %v5079 = vsel %vm3632, %v5078, %v5074
  %v5080 = vlaneseq
  %v5081 = vshrl.u32 %v5080, 7
  %v5082 = vsub.s32 %v3634, %v5081
  %v5083 = vrot.slane %v3387, %v5082
  %v5084 = vsel %vm3639, %v5083, %v5079
  %v5085 = vlaneseq
  %v5086 = vshrl.u32 %v5085, 7
  %v5087 = vsub.s32 %v3641, %v5086
  %v5088 = vrot.slane %v3388, %v5087
  %v5089 = vsel %vm3646, %v5088, %v5084
  %v5090 = vlaneseq
  %v5091 = vshrl.u32 %v5090, 7
  %v5092 = vsub.s32 %v3648, %v5091
  %v5093 = vrot.slane %v3389, %v5092
  %v5094 = vsel %vm3653, %v5093, %v5089
  %v5095 = vlaneseq
  %v5096 = vshrl.u32 %v5095, 7
  %v5097 = vsub.s32 %v3655, %v5096
  %v5098 = vrot.slane %v3390, %v5097
  %v5099 = vsel %vm3660, %v5098, %v5094
  %v5100 = vlaneseq
  %v5101 = vshrl.u32 %v5100, 7
  %v5102 = vsub.s32 %v3662, %v5101
  %v5103 = vrot.slane %v3391, %v5102
  %v5104 = vsel %vm3667, %v5103, %v5099
  %v5105 = vlaneseq
  %v5106 = vshrl.u32 %v5105, 7
  %v5107 = vsub.s32 %v3669, %v5106
  %v5108 = vrot.slane %v3392, %v5107
  %v5109 = vsel %vm3674, %v5108, %v5104
  %v5110 = vlaneseq
  %v5111 = vshrl.u32 %v5110, 7
  %v5112 = vsub.s32 %v3676, %v5111
  %v5113 = vrot.slane %v3393, %v5112
  %v5114 = vsel %vm3681, %v5113, %v5109
  %v5115 = vlaneseq
  %v5116 = vshrl.u32 %v5115, 7
  %v5117 = vsub.s32 %v3683, %v5116
  %v5118 = vrot.slane %v3394, %v5117
  %v5119 = vsel %vm3688, %v5118, %v5114
  %v5120 = vlaneseq
  %v5121 = vshrl.u32 %v5120, 7
  %v5122 = vsub.s32 %v3690, %v5121
  %v5123 = vrot.slane %v3395, %v5122
  %v5124 = vsel %vm3695, %v5123, %v5119
  %v5125 = vlaneseq
  %v5126 = vshrl.u32 %v5125, 7
  %v5127 = vsub.s32 %v3697, %v5126
  %v5128 = vrot.slane %v3396, %v5127
  %v5129 = vsel %vm3702, %v5128, %v5124
  %v5130 = vlaneseq
  %v5131 = vshrl.u32 %v5130, 7
  %v5132 = vsub.s32 %v3704, %v5131
  %v5133 = vrot.slane %v3397, %v5132
  %v5134 = vsel %vm3709, %v5133, %v5129
  %v5135 = vlaneseq
  %v5136 = vshrl.u32 %v5135, 7
  %v5137 = vsub.s32 %v3711, %v5136
  %v5138 = vrot.slane %v3398, %v5137
  %v5139 = vsel %vm3716, %v5138, %v5134
  %v5140 = vlaneseq
  %v5141 = vshrl.u32 %v5140, 7
  %v5142 = vsub.s32 %v3608, %v5141
  %v5143 = vrot.slane %v3399, %v5142
  %v5144 = vlaneseq
  %v5145 = vshrl.u32 %v5144, 7
  %v5146 = vsub.s32 %v3613, %v5145
  %v5147 = vrot.slane %v3400, %v5146
  %v5148 = vsel %vm3618, %v5147, %v5143
  %v5149 = vlaneseq
  %v5150 = vshrl.u32 %v5149, 7
  %v5151 = vsub.s32 %v3620, %v5150
  %v5152 = vrot.slane %v3401, %v5151
  %v5153 = vsel %vm3625, %v5152, %v5148
  %v5154 = vlaneseq
  %v5155 = vshrl.u32 %v5154, 7
  %v5156 = vsub.s32 %v3627, %v5155
  %v5157 = vrot.slane %v3402, %v5156
  %v5158 = vsel %vm3632, %v5157, %v5153
  %v5159 = vlaneseq
  %v5160 = vshrl.u32 %v5159, 7
  %v5161 = vsub.s32 %v3634, %v5160
  %v5162 = vrot.slane %v3403, %v5161
  %v5163 = vsel %vm3639, %v5162, %v5158
  %v5164 = vlaneseq
  %v5165 = vshrl.u32 %v5164, 7
  %v5166 = vsub.s32 %v3641, %v5165
  %v5167 = vrot.slane %v3404, %v5166
  %v5168 = vsel %vm3646, %v5167, %v5163
  %v5169 = vlaneseq
  %v5170 = vshrl.u32 %v5169, 7
  %v5171 = vsub.s32 %v3648, %v5170
  %v5172 = vrot.slane %v3405, %v5171
  %v5173 = vsel %vm3653, %v5172, %v5168
  %v5174 = vlaneseq
  %v5175 = vshrl.u32 %v5174, 7
  %v5176 = vsub.s32 %v3655, %v5175
  %v5177 = vrot.slane %v3406, %v5176
  %v5178 = vsel %vm3660, %v5177, %v5173
  %v5179 = vlaneseq
  %v5180 = vshrl.u32 %v5179, 7
  %v5181 = vsub.s32 %v3662, %v5180
  %v5182 = vrot.slane %v3407, %v5181
  %v5183 = vsel %vm3667, %v5182, %v5178
  %v5184 = vlaneseq
  %v5185 = vshrl.u32 %v5184, 7
  %v5186 = vsub.s32 %v3669, %v5185
  %v5187 = vrot.slane %v3408, %v5186
  %v5188 = vsel %vm3674, %v5187, %v5183
  %v5189 = vlaneseq
  %v5190 = vshrl.u32 %v5189, 7
  %v5191 = vsub.s32 %v3676, %v5190
  %v5192 = vrot.slane %v3409, %v5191
  %v5193 = vsel %vm3681, %v5192, %v5188
  %v5194 = vlaneseq
  %v5195 = vshrl.u32 %v5194, 7
  %v5196 = vsub.s32 %v3683, %v5195
  %v5197 = vrot.slane %v3410, %v5196
  %v5198 = vsel %vm3688, %v5197, %v5193
  %v5199 = vlaneseq
  %v5200 = vshrl.u32 %v5199, 7
  %v5201 = vsub.s32 %v3690, %v5200
  %v5202 = vrot.slane %v3411, %v5201
  %v5203 = vsel %vm3695, %v5202, %v5198
  %v5204 = vlaneseq
  %v5205 = vshrl.u32 %v5204, 7
  %v5206 = vsub.s32 %v3697, %v5205
  %v5207 = vrot.slane %v3412, %v5206
  %v5208 = vsel %vm3702, %v5207, %v5203
  %v5209 = vlaneseq
  %v5210 = vshrl.u32 %v5209, 7
  %v5211 = vsub.s32 %v3704, %v5210
  %v5212 = vrot.slane %v3413, %v5211
  %v5213 = vsel %vm3709, %v5212, %v5208
  %v5214 = vlaneseq
  %v5215 = vshrl.u32 %v5214, 7
  %v5216 = vsub.s32 %v3711, %v5215
  %v5217 = vrot.slane %v3414, %v5216
  %v5218 = vsel %vm3716, %v5217, %v5213
  %v5219 = vlaneseq
  %v5220 = vshrl.u32 %v5219, 7
  %v5221 = vsub.s32 %v3608, %v5220
  %v5222 = vrot.slane %v3415, %v5221
  %v5223 = vlaneseq
  %v5224 = vshrl.u32 %v5223, 7
  %v5225 = vsub.s32 %v3613, %v5224
  %v5226 = vrot.slane %v3416, %v5225
  %v5227 = vsel %vm3618, %v5226, %v5222
  %v5228 = vlaneseq
  %v5229 = vshrl.u32 %v5228, 7
  %v5230 = vsub.s32 %v3620, %v5229
  %v5231 = vrot.slane %v3417, %v5230
  %v5232 = vsel %vm3625, %v5231, %v5227
  %v5233 = vlaneseq
  %v5234 = vshrl.u32 %v5233, 7
  %v5235 = vsub.s32 %v3627, %v5234
  %v5236 = vrot.slane %v3418, %v5235
  %v5237 = vsel %vm3632, %v5236, %v5232
  %v5238 = vlaneseq
  %v5239 = vshrl.u32 %v5238, 7
  %v5240 = vsub.s32 %v3634, %v5239
  %v5241 = vrot.slane %v3419, %v5240
  %v5242 = vsel %vm3639, %v5241, %v5237
  %v5243 = vlaneseq
  %v5244 = vshrl.u32 %v5243, 7
  %v5245 = vsub.s32 %v3641, %v5244
  %v5246 = vrot.slane %v3420, %v5245
  %v5247 = vsel %vm3646, %v5246, %v5242
  %v5248 = vlaneseq
  %v5249 = vshrl.u32 %v5248, 7
  %v5250 = vsub.s32 %v3648, %v5249
  %v5251 = vrot.slane %v3421, %v5250
  %v5252 = vsel %vm3653, %v5251, %v5247
  %v5253 = vlaneseq
  %v5254 = vshrl.u32 %v5253, 7
  %v5255 = vsub.s32 %v3655, %v5254
  %v5256 = vrot.slane %v3422, %v5255
  %v5257 = vsel %vm3660, %v5256, %v5252
  %v5258 = vlaneseq
  %v5259 = vshrl.u32 %v5258, 7
  %v5260 = vsub.s32 %v3662, %v5259
  %v5261 = vrot.slane %v3423, %v5260
  %v5262 = vsel %vm3667, %v5261, %v5257
  %v5263 = vlaneseq
  %v5264 = vshrl.u32 %v5263, 7
  %v5265 = vsub.s32 %v3669, %v5264
  %v5266 = vrot.slane %v3424, %v5265
  %v5267 = vsel %vm3674, %v5266, %v5262
  %v5268 = vlaneseq
  %v5269 = vshrl.u32 %v5268, 7
  %v5270 = vsub.s32 %v3676, %v5269
  %v5271 = vrot.slane %v3425, %v5270
  %v5272 = vsel %vm3681, %v5271, %v5267
  %v5273 = vlaneseq
  %v5274 = vshrl.u32 %v5273, 7
  %v5275 = vsub.s32 %v3683, %v5274
  %v5276 = vrot.slane %v3426, %v5275
  %v5277 = vsel %vm3688, %v5276, %v5272
  %v5278 = vlaneseq
  %v5279 = vshrl.u32 %v5278, 7
  %v5280 = vsub.s32 %v3690, %v5279
  %v5281 = vrot.slane %v3427, %v5280
  %v5282 = vsel %vm3695, %v5281, %v5277
  %v5283 = vlaneseq
  %v5284 = vshrl.u32 %v5283, 7
  %v5285 = vsub.s32 %v3697, %v5284
  %v5286 = vrot.slane %v3428, %v5285
  %v5287 = vsel %vm3702, %v5286, %v5282
  %v5288 = vlaneseq
  %v5289 = vshrl.u32 %v5288, 7
  %v5290 = vsub.s32 %v3704, %v5289
  %v5291 = vrot.slane %v3429, %v5290
  %v5292 = vsel %vm3709, %v5291, %v5287
  %v5293 = vlaneseq
  %v5294 = vshrl.u32 %v5293, 7
  %v5295 = vsub.s32 %v3711, %v5294
  %v5296 = vrot.slane %v3430, %v5295
  %v5297 = vsel %vm3716, %v5296, %v5292
  %v5298 = vlaneseq
  %v5299 = vshrl.u32 %v5298, 7
  %v5300 = vsub.s32 %v3608, %v5299
  %v5301 = vrot.slane %v3431, %v5300
  %v5302 = vlaneseq
  %v5303 = vshrl.u32 %v5302, 7
  %v5304 = vsub.s32 %v3613, %v5303
  %v5305 = vrot.slane %v3432, %v5304
  %v5306 = vsel %vm3618, %v5305, %v5301
  %v5307 = vlaneseq
  %v5308 = vshrl.u32 %v5307, 7
  %v5309 = vsub.s32 %v3620, %v5308
  %v5310 = vrot.slane %v3433, %v5309
  %v5311 = vsel %vm3625, %v5310, %v5306
  %v5312 = vlaneseq
  %v5313 = vshrl.u32 %v5312, 7
  %v5314 = vsub.s32 %v3627, %v5313
  %v5315 = vrot.slane %v3434, %v5314
  %v5316 = vsel %vm3632, %v5315, %v5311
  %v5317 = vlaneseq
  %v5318 = vshrl.u32 %v5317, 7
  %v5319 = vsub.s32 %v3634, %v5318
  %v5320 = vrot.slane %v3435, %v5319
  %v5321 = vsel %vm3639, %v5320, %v5316
  %v5322 = vlaneseq
  %v5323 = vshrl.u32 %v5322, 7
  %v5324 = vsub.s32 %v3641, %v5323
  %v5325 = vrot.slane %v3436, %v5324
  %v5326 = vsel %vm3646, %v5325, %v5321
  %v5327 = vlaneseq
  %v5328 = vshrl.u32 %v5327, 7
  %v5329 = vsub.s32 %v3648, %v5328
  %v5330 = vrot.slane %v3437, %v5329
  %v5331 = vsel %vm3653, %v5330, %v5326
  %v5332 = vlaneseq
  %v5333 = vshrl.u32 %v5332, 7
  %v5334 = vsub.s32 %v3655, %v5333
  %v5335 = vrot.slane %v3438, %v5334
  %v5336 = vsel %vm3660, %v5335, %v5331
  %v5337 = vlaneseq
  %v5338 = vshrl.u32 %v5337, 7
  %v5339 = vsub.s32 %v3662, %v5338
  %v5340 = vrot.slane %v3439, %v5339
  %v5341 = vsel %vm3667, %v5340, %v5336
  %v5342 = vlaneseq
  %v5343 = vshrl.u32 %v5342, 7
  %v5344 = vsub.s32 %v3669, %v5343
  %v5345 = vrot.slane %v3440, %v5344
  %v5346 = vsel %vm3674, %v5345, %v5341
  %v5347 = vlaneseq
  %v5348 = vshrl.u32 %v5347, 7
  %v5349 = vsub.s32 %v3676, %v5348
  %v5350 = vrot.slane %v3441, %v5349
  %v5351 = vsel %vm3681, %v5350, %v5346
  %v5352 = vlaneseq
  %v5353 = vshrl.u32 %v5352, 7
  %v5354 = vsub.s32 %v3683, %v5353
  %v5355 = vrot.slane %v3442, %v5354
  %v5356 = vsel %vm3688, %v5355, %v5351
  %v5357 = vlaneseq
  %v5358 = vshrl.u32 %v5357, 7
  %v5359 = vsub.s32 %v3690, %v5358
  %v5360 = vrot.slane %v3443, %v5359
  %v5361 = vsel %vm3695, %v5360, %v5356
  %v5362 = vlaneseq
  %v5363 = vshrl.u32 %v5362, 7
  %v5364 = vsub.s32 %v3697, %v5363
  %v5365 = vrot.slane %v3444, %v5364
  %v5366 = vsel %vm3702, %v5365, %v5361
  %v5367 = vlaneseq
  %v5368 = vshrl.u32 %v5367, 7
  %v5369 = vsub.s32 %v3704, %v5368
  %v5370 = vrot.slane %v3445, %v5369
  %v5371 = vsel %vm3709, %v5370, %v5366
  %v5372 = vlaneseq
  %v5373 = vshrl.u32 %v5372, 7
  %v5374 = vsub.s32 %v3711, %v5373
  %v5375 = vrot.slane %v3446, %v5374
  %v5376 = vsel %vm3716, %v5375, %v5371
  %v5377 = vlaneseq
  %v5378 = vshrl.u32 %v5377, 7
  %v5379 = vsub.s32 %v3608, %v5378
  %v5380 = vrot.slane %v3447, %v5379
  %v5381 = vlaneseq
  %v5382 = vshrl.u32 %v5381, 7
  %v5383 = vsub.s32 %v3613, %v5382
  %v5384 = vrot.slane %v3448, %v5383
  %v5385 = vsel %vm3618, %v5384, %v5380
  %v5386 = vlaneseq
  %v5387 = vshrl.u32 %v5386, 7
  %v5388 = vsub.s32 %v3620, %v5387
  %v5389 = vrot.slane %v3449, %v5388
  %v5390 = vsel %vm3625, %v5389, %v5385
  %v5391 = vlaneseq
  %v5392 = vshrl.u32 %v5391, 7
  %v5393 = vsub.s32 %v3627, %v5392
  %v5394 = vrot.slane %v3450, %v5393
  %v5395 = vsel %vm3632, %v5394, %v5390
  %v5396 = vlaneseq
  %v5397 = vshrl.u32 %v5396, 7
  %v5398 = vsub.s32 %v3634, %v5397
  %v5399 = vrot.slane %v3451, %v5398
  %v5400 = vsel %vm3639, %v5399, %v5395
  %v5401 = vlaneseq
  %v5402 = vshrl.u32 %v5401, 7
  %v5403 = vsub.s32 %v3641, %v5402
  %v5404 = vrot.slane %v3452, %v5403
  %v5405 = vsel %vm3646, %v5404, %v5400
  %v5406 = vlaneseq
  %v5407 = vshrl.u32 %v5406, 7
  %v5408 = vsub.s32 %v3648, %v5407
  %v5409 = vrot.slane %v3453, %v5408
  %v5410 = vsel %vm3653, %v5409, %v5405
  %v5411 = vlaneseq
  %v5412 = vshrl.u32 %v5411, 7
  %v5413 = vsub.s32 %v3655, %v5412
  %v5414 = vrot.slane %v3454, %v5413
  %v5415 = vsel %vm3660, %v5414, %v5410
  %v5416 = vlaneseq
  %v5417 = vshrl.u32 %v5416, 7
  %v5418 = vsub.s32 %v3662, %v5417
  %v5419 = vrot.slane %v3455, %v5418
  %v5420 = vsel %vm3667, %v5419, %v5415
  %v5421 = vlaneseq
  %v5422 = vshrl.u32 %v5421, 7
  %v5423 = vsub.s32 %v3669, %v5422
  %v5424 = vrot.slane %v3456, %v5423
  %v5425 = vsel %vm3674, %v5424, %v5420
  %v5426 = vlaneseq
  %v5427 = vshrl.u32 %v5426, 7
  %v5428 = vsub.s32 %v3676, %v5427
  %v5429 = vrot.slane %v3457, %v5428
  %v5430 = vsel %vm3681, %v5429, %v5425
  %v5431 = vlaneseq
  %v5432 = vshrl.u32 %v5431, 7
  %v5433 = vsub.s32 %v3683, %v5432
  %v5434 = vrot.slane %v3458, %v5433
  %v5435 = vsel %vm3688, %v5434, %v5430
  %v5436 = vlaneseq
  %v5437 = vshrl.u32 %v5436, 7
  %v5438 = vsub.s32 %v3690, %v5437
  %v5439 = vrot.slane %v3459, %v5438
  %v5440 = vsel %vm3695, %v5439, %v5435
  %v5441 = vlaneseq
  %v5442 = vshrl.u32 %v5441, 7
  %v5443 = vsub.s32 %v3697, %v5442
  %v5444 = vrot.slane %v3460, %v5443
  %v5445 = vsel %vm3702, %v5444, %v5440
  %v5446 = vlaneseq
  %v5447 = vshrl.u32 %v5446, 7
  %v5448 = vsub.s32 %v3704, %v5447
  %v5449 = vrot.slane %v3461, %v5448
  %v5450 = vsel %vm3709, %v5449, %v5445
  %v5451 = vlaneseq
  %v5452 = vshrl.u32 %v5451, 7
  %v5453 = vsub.s32 %v3711, %v5452
  %v5454 = vrot.slane %v3462, %v5453
  %v5455 = vsel %vm3716, %v5454, %v5450
  %v5456 = vlaneseq
  %v5457 = vshrl.u32 %v5456, 7
  %v5458 = vsub.s32 %v3608, %v5457
  %v5459 = vrot.slane %v3463, %v5458
  %v5460 = vlaneseq
  %v5461 = vshrl.u32 %v5460, 7
  %v5462 = vsub.s32 %v3613, %v5461
  %v5463 = vrot.slane %v3464, %v5462
  %v5464 = vsel %vm3618, %v5463, %v5459
  %v5465 = vlaneseq
  %v5466 = vshrl.u32 %v5465, 7
  %v5467 = vsub.s32 %v3620, %v5466
  %v5468 = vrot.slane %v3465, %v5467
  %v5469 = vsel %vm3625, %v5468, %v5464
  %v5470 = vlaneseq
  %v5471 = vshrl.u32 %v5470, 7
  %v5472 = vsub.s32 %v3627, %v5471
  %v5473 = vrot.slane %v3466, %v5472
  %v5474 = vsel %vm3632, %v5473, %v5469
  %v5475 = vlaneseq
  %v5476 = vshrl.u32 %v5475, 7
  %v5477 = vsub.s32 %v3634, %v5476
  %v5478 = vrot.slane %v3467, %v5477
  %v5479 = vsel %vm3639, %v5478, %v5474
  %v5480 = vlaneseq
  %v5481 = vshrl.u32 %v5480, 7
  %v5482 = vsub.s32 %v3641, %v5481
  %v5483 = vrot.slane %v3468, %v5482
  %v5484 = vsel %vm3646, %v5483, %v5479
  %v5485 = vlaneseq
  %v5486 = vshrl.u32 %v5485, 7
  %v5487 = vsub.s32 %v3648, %v5486
  %v5488 = vrot.slane %v3469, %v5487
  %v5489 = vsel %vm3653, %v5488, %v5484
  %v5490 = vlaneseq
  %v5491 = vshrl.u32 %v5490, 7
  %v5492 = vsub.s32 %v3655, %v5491
  %v5493 = vrot.slane %v3470, %v5492
  %v5494 = vsel %vm3660, %v5493, %v5489
  %v5495 = vlaneseq
  %v5496 = vshrl.u32 %v5495, 7
  %v5497 = vsub.s32 %v3662, %v5496
  %v5498 = vrot.slane %v3471, %v5497
  %v5499 = vsel %vm3667, %v5498, %v5494
  %v5500 = vlaneseq
  %v5501 = vshrl.u32 %v5500, 7
  %v5502 = vsub.s32 %v3669, %v5501
  %v5503 = vrot.slane %v3472, %v5502
  %v5504 = vsel %vm3674, %v5503, %v5499
  %v5505 = vlaneseq
  %v5506 = vshrl.u32 %v5505, 7
  %v5507 = vsub.s32 %v3676, %v5506
  %v5508 = vrot.slane %v3473, %v5507
  %v5509 = vsel %vm3681, %v5508, %v5504
  %v5510 = vlaneseq
  %v5511 = vshrl.u32 %v5510, 7
  %v5512 = vsub.s32 %v3683, %v5511
  %v5513 = vrot.slane %v3474, %v5512
  %v5514 = vsel %vm3688, %v5513, %v5509
  %v5515 = vlaneseq
  %v5516 = vshrl.u32 %v5515, 7
  %v5517 = vsub.s32 %v3690, %v5516
  %v5518 = vrot.slane %v3475, %v5517
  %v5519 = vsel %vm3695, %v5518, %v5514
  %v5520 = vlaneseq
  %v5521 = vshrl.u32 %v5520, 7
  %v5522 = vsub.s32 %v3697, %v5521
  %v5523 = vrot.slane %v3476, %v5522
  %v5524 = vsel %vm3702, %v5523, %v5519
  %v5525 = vlaneseq
  %v5526 = vshrl.u32 %v5525, 7
  %v5527 = vsub.s32 %v3704, %v5526
  %v5528 = vrot.slane %v3477, %v5527
  %v5529 = vsel %vm3709, %v5528, %v5524
  %v5530 = vlaneseq
  %v5531 = vshrl.u32 %v5530, 7
  %v5532 = vsub.s32 %v3711, %v5531
  %v5533 = vrot.slane %v3478, %v5532
  %v5534 = vsel %vm3716, %v5533, %v5529
  %v5535 = vlaneseq
  %v5536 = vshrl.u32 %v5535, 7
  %v5537 = vsub.s32 %v3608, %v5536
  %v5538 = vrot.slane %v3479, %v5537
  %v5539 = vlaneseq
  %v5540 = vshrl.u32 %v5539, 7
  %v5541 = vsub.s32 %v3613, %v5540
  %v5542 = vrot.slane %v3480, %v5541
  %v5543 = vsel %vm3618, %v5542, %v5538
  %v5544 = vlaneseq
  %v5545 = vshrl.u32 %v5544, 7
  %v5546 = vsub.s32 %v3620, %v5545
  %v5547 = vrot.slane %v3481, %v5546
  %v5548 = vsel %vm3625, %v5547, %v5543
  %v5549 = vlaneseq
  %v5550 = vshrl.u32 %v5549, 7
  %v5551 = vsub.s32 %v3627, %v5550
  %v5552 = vrot.slane %v3482, %v5551
  %v5553 = vsel %vm3632, %v5552, %v5548
  %v5554 = vlaneseq
  %v5555 = vshrl.u32 %v5554, 7
  %v5556 = vsub.s32 %v3634, %v5555
  %v5557 = vrot.slane %v3483, %v5556
  %v5558 = vsel %vm3639, %v5557, %v5553
  %v5559 = vlaneseq
  %v5560 = vshrl.u32 %v5559, 7
  %v5561 = vsub.s32 %v3641, %v5560
  %v5562 = vrot.slane %v3484, %v5561
  %v5563 = vsel %vm3646, %v5562, %v5558
  %v5564 = vlaneseq
  %v5565 = vshrl.u32 %v5564, 7
  %v5566 = vsub.s32 %v3648, %v5565
  %v5567 = vrot.slane %v3485, %v5566
  %v5568 = vsel %vm3653, %v5567, %v5563
  %v5569 = vlaneseq
  %v5570 = vshrl.u32 %v5569, 7
  %v5571 = vsub.s32 %v3655, %v5570
  %v5572 = vrot.slane %v3486, %v5571
  %v5573 = vsel %vm3660, %v5572, %v5568
  %v5574 = vlaneseq
  %v5575 = vshrl.u32 %v5574, 7
  %v5576 = vsub.s32 %v3662, %v5575
  %v5577 = vrot.slane %v3487, %v5576
  %v5578 = vsel %vm3667, %v5577, %v5573
  %v5579 = vlaneseq
  %v5580 = vshrl.u32 %v5579, 7
  %v5581 = vsub.s32 %v3669, %v5580
  %v5582 = vrot.slane %v3488, %v5581
  %v5583 = vsel %vm3674, %v5582, %v5578
  %v5584 = vlaneseq
  %v5585 = vshrl.u32 %v5584, 7
  %v5586 = vsub.s32 %v3676, %v5585
  %v5587 = vrot.slane %v3489, %v5586
  %v5588 = vsel %vm3681, %v5587, %v5583
  %v5589 = vlaneseq
  %v5590 = vshrl.u32 %v5589, 7
  %v5591 = vsub.s32 %v3683, %v5590
  %v5592 = vrot.slane %v3490, %v5591
  %v5593 = vsel %vm3688, %v5592, %v5588
  %v5594 = vlaneseq
  %v5595 = vshrl.u32 %v5594, 7
  %v5596 = vsub.s32 %v3690, %v5595
  %v5597 = vrot.slane %v3491, %v5596
  %v5598 = vsel %vm3695, %v5597, %v5593
  %v5599 = vlaneseq
  %v5600 = vshrl.u32 %v5599, 7
  %v5601 = vsub.s32 %v3697, %v5600
  %v5602 = vrot.slane %v3492, %v5601
  %v5603 = vsel %vm3702, %v5602, %v5598
  %v5604 = vlaneseq
  %v5605 = vshrl.u32 %v5604, 7
  %v5606 = vsub.s32 %v3704, %v5605
  %v5607 = vrot.slane %v3493, %v5606
  %v5608 = vsel %vm3709, %v5607, %v5603
  %v5609 = vlaneseq
  %v5610 = vshrl.u32 %v5609, 7
  %v5611 = vsub.s32 %v3711, %v5610
  %v5612 = vrot.slane %v3494, %v5611
  %v5613 = vsel %vm3716, %v5612, %v5608
  %v5614 = vlaneseq
  %v5615 = vshrl.u32 %v5614, 7
  %v5616 = vsub.s32 %v3608, %v5615
  %v5617 = vrot.slane %v3495, %v5616
  %v5618 = vlaneseq
  %v5619 = vshrl.u32 %v5618, 7
  %v5620 = vsub.s32 %v3613, %v5619
  %v5621 = vrot.slane %v3496, %v5620
  %v5622 = vsel %vm3618, %v5621, %v5617
  %v5623 = vlaneseq
  %v5624 = vshrl.u32 %v5623, 7
  %v5625 = vsub.s32 %v3620, %v5624
  %v5626 = vrot.slane %v3497, %v5625
  %v5627 = vsel %vm3625, %v5626, %v5622
  %v5628 = vlaneseq
  %v5629 = vshrl.u32 %v5628, 7
  %v5630 = vsub.s32 %v3627, %v5629
  %v5631 = vrot.slane %v3498, %v5630
  %v5632 = vsel %vm3632, %v5631, %v5627
  %v5633 = vlaneseq
  %v5634 = vshrl.u32 %v5633, 7
  %v5635 = vsub.s32 %v3634, %v5634
  %v5636 = vrot.slane %v3499, %v5635
  %v5637 = vsel %vm3639, %v5636, %v5632
  %v5638 = vlaneseq
  %v5639 = vshrl.u32 %v5638, 7
  %v5640 = vsub.s32 %v3641, %v5639
  %v5641 = vrot.slane %v3500, %v5640
  %v5642 = vsel %vm3646, %v5641, %v5637
  %v5643 = vlaneseq
  %v5644 = vshrl.u32 %v5643, 7
  %v5645 = vsub.s32 %v3648, %v5644
  %v5646 = vrot.slane %v3501, %v5645
  %v5647 = vsel %vm3653, %v5646, %v5642
  %v5648 = vlaneseq
  %v5649 = vshrl.u32 %v5648, 7
  %v5650 = vsub.s32 %v3655, %v5649
  %v5651 = vrot.slane %v3502, %v5650
  %v5652 = vsel %vm3660, %v5651, %v5647
  %v5653 = vlaneseq
  %v5654 = vshrl.u32 %v5653, 7
  %v5655 = vsub.s32 %v3662, %v5654
  %v5656 = vrot.slane %v3503, %v5655
  %v5657 = vsel %vm3667, %v5656, %v5652
  %v5658 = vlaneseq
  %v5659 = vshrl.u32 %v5658, 7
  %v5660 = vsub.s32 %v3669, %v5659
  %v5661 = vrot.slane %v3504, %v5660
  %v5662 = vsel %vm3674, %v5661, %v5657
  %v5663 = vlaneseq
  %v5664 = vshrl.u32 %v5663, 7
  %v5665 = vsub.s32 %v3676, %v5664
  %v5666 = vrot.slane %v3505, %v5665
  %v5667 = vsel %vm3681, %v5666, %v5662
  %v5668 = vlaneseq
  %v5669 = vshrl.u32 %v5668, 7
  %v5670 = vsub.s32 %v3683, %v5669
  %v5671 = vrot.slane %v3506, %v5670
  %v5672 = vsel %vm3688, %v5671, %v5667
  %v5673 = vlaneseq
  %v5674 = vshrl.u32 %v5673, 7
  %v5675 = vsub.s32 %v3690, %v5674
  %v5676 = vrot.slane %v3507, %v5675
  %v5677 = vsel %vm3695, %v5676, %v5672
  %v5678 = vlaneseq
  %v5679 = vshrl.u32 %v5678, 7
  %v5680 = vsub.s32 %v3697, %v5679
  %v5681 = vrot.slane %v3508, %v5680
  %v5682 = vsel %vm3702, %v5681, %v5677
  %v5683 = vlaneseq
  %v5684 = vshrl.u32 %v5683, 7
  %v5685 = vsub.s32 %v3704, %v5684
  %v5686 = vrot.slane %v3509, %v5685
  %v5687 = vsel %vm3709, %v5686, %v5682
  %v5688 = vlaneseq
  %v5689 = vshrl.u32 %v5688, 7
  %v5690 = vsub.s32 %v3711, %v5689
  %v5691 = vrot.slane %v3510, %v5690
  %v5692 = vsel %vm3716, %v5691, %v5687
  %v5693 = vlaneseq
  %v5694 = vshrl.u32 %v5693, 7
  %v5695 = vsub.s32 %v3608, %v5694
  %v5696 = vrot.slane %v3511, %v5695
  %v5697 = vlaneseq
  %v5698 = vshrl.u32 %v5697, 7
  %v5699 = vsub.s32 %v3613, %v5698
  %v5700 = vrot.slane %v3512, %v5699
  %v5701 = vsel %vm3618, %v5700, %v5696
  %v5702 = vlaneseq
  %v5703 = vshrl.u32 %v5702, 7
  %v5704 = vsub.s32 %v3620, %v5703
  %v5705 = vrot.slane %v3513, %v5704
  %v5706 = vsel %vm3625, %v5705, %v5701
  %v5707 = vlaneseq
  %v5708 = vshrl.u32 %v5707, 7
  %v5709 = vsub.s32 %v3627, %v5708
  %v5710 = vrot.slane %v3514, %v5709
  %v5711 = vsel %vm3632, %v5710, %v5706
  %v5712 = vlaneseq
  %v5713 = vshrl.u32 %v5712, 7
  %v5714 = vsub.s32 %v3634, %v5713
  %v5715 = vrot.slane %v3515, %v5714
  %v5716 = vsel %vm3639, %v5715, %v5711
  %v5717 = vlaneseq
  %v5718 = vshrl.u32 %v5717, 7
  %v5719 = vsub.s32 %v3641, %v5718
  %v5720 = vrot.slane %v3516, %v5719
  %v5721 = vsel %vm3646, %v5720, %v5716
  %v5722 = vlaneseq
  %v5723 = vshrl.u32 %v5722, 7
  %v5724 = vsub.s32 %v3648, %v5723
  %v5725 = vrot.slane %v3517, %v5724
  %v5726 = vsel %vm3653, %v5725, %v5721
  %v5727 = vlaneseq
  %v5728 = vshrl.u32 %v5727, 7
  %v5729 = vsub.s32 %v3655, %v5728
  %v5730 = vrot.slane %v3518, %v5729
  %v5731 = vsel %vm3660, %v5730, %v5726
  %v5732 = vlaneseq
  %v5733 = vshrl.u32 %v5732, 7
  %v5734 = vsub.s32 %v3662, %v5733
  %v5735 = vrot.slane %v3519, %v5734
  %v5736 = vsel %vm3667, %v5735, %v5731
  %v5737 = vlaneseq
  %v5738 = vshrl.u32 %v5737, 7
  %v5739 = vsub.s32 %v3669, %v5738
  %v5740 = vrot.slane %v3520, %v5739
  %v5741 = vsel %vm3674, %v5740, %v5736
  %v5742 = vlaneseq
  %v5743 = vshrl.u32 %v5742, 7
  %v5744 = vsub.s32 %v3676, %v5743
  %v5745 = vrot.slane %v3521, %v5744
  %v5746 = vsel %vm3681, %v5745, %v5741
  %v5747 = vlaneseq
  %v5748 = vshrl.u32 %v5747, 7
  %v5749 = vsub.s32 %v3683, %v5748
  %v5750 = vrot.slane %v3522, %v5749
  %v5751 = vsel %vm3688, %v5750, %v5746
  %v5752 = vlaneseq
  %v5753 = vshrl.u32 %v5752, 7
  %v5754 = vsub.s32 %v3690, %v5753
  %v5755 = vrot.slane %v3523, %v5754
  %v5756 = vsel %vm3695, %v5755, %v5751
  %v5757 = vlaneseq
  %v5758 = vshrl.u32 %v5757, 7
  %v5759 = vsub.s32 %v3697, %v5758
  %v5760 = vrot.slane %v3524, %v5759
  %v5761 = vsel %vm3702, %v5760, %v5756
  %v5762 = vlaneseq
  %v5763 = vshrl.u32 %v5762, 7
  %v5764 = vsub.s32 %v3704, %v5763
  %v5765 = vrot.slane %v3525, %v5764
  %v5766 = vsel %vm3709, %v5765, %v5761
  %v5767 = vlaneseq
  %v5768 = vshrl.u32 %v5767, 7
  %v5769 = vsub.s32 %v3711, %v5768
  %v5770 = vrot.slane %v3526, %v5769
  %v5771 = vsel %vm3716, %v5770, %v5766
  %v5772 = vlaneseq
  %v5773 = vshrl.u32 %v5772, 7
  %v5774 = vsub.s32 %v3608, %v5773
  %v5775 = vrot.slane %v3527, %v5774
  %v5776 = vlaneseq
  %v5777 = vshrl.u32 %v5776, 7
  %v5778 = vsub.s32 %v3613, %v5777
  %v5779 = vrot.slane %v3528, %v5778
  %v5780 = vsel %vm3618, %v5779, %v5775
  %v5781 = vlaneseq
  %v5782 = vshrl.u32 %v5781, 7
  %v5783 = vsub.s32 %v3620, %v5782
  %v5784 = vrot.slane %v3529, %v5783
  %v5785 = vsel %vm3625, %v5784, %v5780
  %v5786 = vlaneseq
  %v5787 = vshrl.u32 %v5786, 7
  %v5788 = vsub.s32 %v3627, %v5787
  %v5789 = vrot.slane %v3530, %v5788
  %v5790 = vsel %vm3632, %v5789, %v5785
  %v5791 = vlaneseq
  %v5792 = vshrl.u32 %v5791, 7
  %v5793 = vsub.s32 %v3634, %v5792
  %v5794 = vrot.slane %v3531, %v5793
  %v5795 = vsel %vm3639, %v5794, %v5790
  %v5796 = vlaneseq
  %v5797 = vshrl.u32 %v5796, 7
  %v5798 = vsub.s32 %v3641, %v5797
  %v5799 = vrot.slane %v3532, %v5798
  %v5800 = vsel %vm3646, %v5799, %v5795
  %v5801 = vlaneseq
  %v5802 = vshrl.u32 %v5801, 7
  %v5803 = vsub.s32 %v3648, %v5802
  %v5804 = vrot.slane %v3533, %v5803
  %v5805 = vsel %vm3653, %v5804, %v5800
  %v5806 = vlaneseq
  %v5807 = vshrl.u32 %v5806, 7
  %v5808 = vsub.s32 %v3655, %v5807
  %v5809 = vrot.slane %v3534, %v5808
  %v5810 = vsel %vm3660, %v5809, %v5805
  %v5811 = vlaneseq
  %v5812 = vshrl.u32 %v5811, 7
  %v5813 = vsub.s32 %v3662, %v5812
  %v5814 = vrot.slane %v3535, %v5813
  %v5815 = vsel %vm3667, %v5814, %v5810
  %v5816 = vlaneseq
  %v5817 = vshrl.u32 %v5816, 7
  %v5818 = vsub.s32 %v3669, %v5817
  %v5819 = vrot.slane %v3536, %v5818
  %v5820 = vsel %vm3674, %v5819, %v5815
  %v5821 = vlaneseq
  %v5822 = vshrl.u32 %v5821, 7
  %v5823 = vsub.s32 %v3676, %v5822
  %v5824 = vrot.slane %v3537, %v5823
  %v5825 = vsel %vm3681, %v5824, %v5820
  %v5826 = vlaneseq
  %v5827 = vshrl.u32 %v5826, 7
  %v5828 = vsub.s32 %v3683, %v5827
  %v5829 = vrot.slane %v3538, %v5828
  %v5830 = vsel %vm3688, %v5829, %v5825
  %v5831 = vlaneseq
  %v5832 = vshrl.u32 %v5831, 7
  %v5833 = vsub.s32 %v3690, %v5832
  %v5834 = vrot.slane %v3539, %v5833
  %v5835 = vsel %vm3695, %v5834, %v5830
  %v5836 = vlaneseq
  %v5837 = vshrl.u32 %v5836, 7
  %v5838 = vsub.s32 %v3697, %v5837
  %v5839 = vrot.slane %v3540, %v5838
  %v5840 = vsel %vm3702, %v5839, %v5835
  %v5841 = vlaneseq
  %v5842 = vshrl.u32 %v5841, 7
  %v5843 = vsub.s32 %v3704, %v5842
  %v5844 = vrot.slane %v3541, %v5843
  %v5845 = vsel %vm3709, %v5844, %v5840
  %v5846 = vlaneseq
  %v5847 = vshrl.u32 %v5846, 7
  %v5848 = vsub.s32 %v3711, %v5847
  %v5849 = vrot.slane %v3542, %v5848
  %v5850 = vsel %vm3716, %v5849, %v5845
  %v5851 = vlaneseq
  %v5852 = vshrl.u32 %v5851, 7
  %v5853 = vsub.s32 %v3608, %v5852
  %v5854 = vrot.slane %v3543, %v5853
  %v5855 = vlaneseq
  %v5856 = vshrl.u32 %v5855, 7
  %v5857 = vsub.s32 %v3613, %v5856
  %v5858 = vrot.slane %v3544, %v5857
  %v5859 = vsel %vm3618, %v5858, %v5854
  %v5860 = vlaneseq
  %v5861 = vshrl.u32 %v5860, 7
  %v5862 = vsub.s32 %v3620, %v5861
  %v5863 = vrot.slane %v3545, %v5862
  %v5864 = vsel %vm3625, %v5863, %v5859
  %v5865 = vlaneseq
  %v5866 = vshrl.u32 %v5865, 7
  %v5867 = vsub.s32 %v3627, %v5866
  %v5868 = vrot.slane %v3546, %v5867
  %v5869 = vsel %vm3632, %v5868, %v5864
  %v5870 = vlaneseq
  %v5871 = vshrl.u32 %v5870, 7
  %v5872 = vsub.s32 %v3634, %v5871
  %v5873 = vrot.slane %v3547, %v5872
  %v5874 = vsel %vm3639, %v5873, %v5869
  %v5875 = vlaneseq
  %v5876 = vshrl.u32 %v5875, 7
  %v5877 = vsub.s32 %v3641, %v5876
  %v5878 = vrot.slane %v3548, %v5877
  %v5879 = vsel %vm3646, %v5878, %v5874
  %v5880 = vlaneseq
  %v5881 = vshrl.u32 %v5880, 7
  %v5882 = vsub.s32 %v3648, %v5881
  %v5883 = vrot.slane %v3549, %v5882
  %v5884 = vsel %vm3653, %v5883, %v5879
  %v5885 = vlaneseq
  %v5886 = vshrl.u32 %v5885, 7
  %v5887 = vsub.s32 %v3655, %v5886
  %v5888 = vrot.slane %v3550, %v5887
  %v5889 = vsel %vm3660, %v5888, %v5884
  %v5890 = vlaneseq
  %v5891 = vshrl.u32 %v5890, 7
  %v5892 = vsub.s32 %v3662, %v5891
  %v5893 = vrot.slane %v3551, %v5892
  %v5894 = vsel %vm3667, %v5893, %v5889
  %v5895 = vlaneseq
  %v5896 = vshrl.u32 %v5895, 7
  %v5897 = vsub.s32 %v3669, %v5896
  %v5898 = vrot.slane %v3552, %v5897
  %v5899 = vsel %vm3674, %v5898, %v5894
  %v5900 = vlaneseq
  %v5901 = vshrl.u32 %v5900, 7
  %v5902 = vsub.s32 %v3676, %v5901
  %v5903 = vrot.slane %v3553, %v5902
  %v5904 = vsel %vm3681, %v5903, %v5899
  %v5905 = vlaneseq
  %v5906 = vshrl.u32 %v5905, 7
  %v5907 = vsub.s32 %v3683, %v5906
  %v5908 = vrot.slane %v3554, %v5907
  %v5909 = vsel %vm3688, %v5908, %v5904
  %v5910 = vlaneseq
  %v5911 = vshrl.u32 %v5910, 7
  %v5912 = vsub.s32 %v3690, %v5911
  %v5913 = vrot.slane %v3555, %v5912
  %v5914 = vsel %vm3695, %v5913, %v5909
  %v5915 = vlaneseq
  %v5916 = vshrl.u32 %v5915, 7
  %v5917 = vsub.s32 %v3697, %v5916
  %v5918 = vrot.slane %v3556, %v5917
  %v5919 = vsel %vm3702, %v5918, %v5914
  %v5920 = vlaneseq
  %v5921 = vshrl.u32 %v5920, 7
  %v5922 = vsub.s32 %v3704, %v5921
  %v5923 = vrot.slane %v3557, %v5922
  %v5924 = vsel %vm3709, %v5923, %v5919
  %v5925 = vlaneseq
  %v5926 = vshrl.u32 %v5925, 7
  %v5927 = vsub.s32 %v3711, %v5926
  %v5928 = vrot.slane %v3558, %v5927
  %v5929 = vsel %vm3716, %v5928, %v5924
  %v5930 = vlaneseq
  %v5931 = vshrl.u32 %v5930, 7
  %v5932 = vsub.s32 %v3608, %v5931
  %v5933 = vrot.slane %v3559, %v5932
  %v5934 = vlaneseq
  %v5935 = vshrl.u32 %v5934, 7
  %v5936 = vsub.s32 %v3613, %v5935
  %v5937 = vrot.slane %v3560, %v5936
  %v5938 = vsel %vm3618, %v5937, %v5933
  %v5939 = vlaneseq
  %v5940 = vshrl.u32 %v5939, 7
  %v5941 = vsub.s32 %v3620, %v5940
  %v5942 = vrot.slane %v3561, %v5941
  %v5943 = vsel %vm3625, %v5942, %v5938
  %v5944 = vlaneseq
  %v5945 = vshrl.u32 %v5944, 7
  %v5946 = vsub.s32 %v3627, %v5945
  %v5947 = vrot.slane %v3562, %v5946
  %v5948 = vsel %vm3632, %v5947, %v5943
  %v5949 = vlaneseq
  %v5950 = vshrl.u32 %v5949, 7
  %v5951 = vsub.s32 %v3634, %v5950
  %v5952 = vrot.slane %v3563, %v5951
  %v5953 = vsel %vm3639, %v5952, %v5948
  %v5954 = vlaneseq
  %v5955 = vshrl.u32 %v5954, 7
  %v5956 = vsub.s32 %v3641, %v5955
  %v5957 = vrot.slane %v3564, %v5956
  %v5958 = vsel %vm3646, %v5957, %v5953
  %v5959 = vlaneseq
  %v5960 = vshrl.u32 %v5959, 7
  %v5961 = vsub.s32 %v3648, %v5960
  %v5962 = vrot.slane %v3565, %v5961
  %v5963 = vsel %vm3653, %v5962, %v5958
  %v5964 = vlaneseq
  %v5965 = vshrl.u32 %v5964, 7
  %v5966 = vsub.s32 %v3655, %v5965
  %v5967 = vrot.slane %v3566, %v5966
  %v5968 = vsel %vm3660, %v5967, %v5963
  %v5969 = vlaneseq
  %v5970 = vshrl.u32 %v5969, 7
  %v5971 = vsub.s32 %v3662, %v5970
  %v5972 = vrot.slane %v3567, %v5971
  %v5973 = vsel %vm3667, %v5972, %v5968
  %v5974 = vlaneseq
  %v5975 = vshrl.u32 %v5974, 7
  %v5976 = vsub.s32 %v3669, %v5975
  %v5977 = vrot.slane %v3568, %v5976
  %v5978 = vsel %vm3674, %v5977, %v5973
  %v5979 = vlaneseq
  %v5980 = vshrl.u32 %v5979, 7
  %v5981 = vsub.s32 %v3676, %v5980
  %v5982 = vrot.slane %v3569, %v5981
  %v5983 = vsel %vm3681, %v5982, %v5978
  %v5984 = vlaneseq
  %v5985 = vshrl.u32 %v5984, 7
  %v5986 = vsub.s32 %v3683, %v5985
  %v5987 = vrot.slane %v3570, %v5986
  %v5988 = vsel %vm3688, %v5987, %v5983
  %v5989 = vlaneseq
  %v5990 = vshrl.u32 %v5989, 7
  %v5991 = vsub.s32 %v3690, %v5990
  %v5992 = vrot.slane %v3571, %v5991
  %v5993 = vsel %vm3695, %v5992, %v5988
  %v5994 = vlaneseq
  %v5995 = vshrl.u32 %v5994, 7
  %v5996 = vsub.s32 %v3697, %v5995
  %v5997 = vrot.slane %v3572, %v5996
  %v5998 = vsel %vm3702, %v5997, %v5993
  %v5999 = vlaneseq
  %v6000 = vshrl.u32 %v5999, 7
  %v6001 = vsub.s32 %v3704, %v6000
  %v6002 = vrot.slane %v3573, %v6001
  %v6003 = vsel %vm3709, %v6002, %v5998
  %v6004 = vlaneseq
  %v6005 = vshrl.u32 %v6004, 7
  %v6006 = vsub.s32 %v3711, %v6005
  %v6007 = vrot.slane %v3574, %v6006
  %v6008 = vsel %vm3716, %v6007, %v6003
  %v6009 = vlaneseq
  %v6010 = vshrl.u32 %v6009, 7
  %v6011 = vsub.s32 %v3608, %v6010
  %v6012 = vrot.slane %v3575, %v6011
  %v6013 = vlaneseq
  %v6014 = vshrl.u32 %v6013, 7
  %v6015 = vsub.s32 %v3613, %v6014
  %v6016 = vrot.slane %v3576, %v6015
  %v6017 = vsel %vm3618, %v6016, %v6012
  %v6018 = vlaneseq
  %v6019 = vshrl.u32 %v6018, 7
  %v6020 = vsub.s32 %v3620, %v6019
  %v6021 = vrot.slane %v3577, %v6020
  %v6022 = vsel %vm3625, %v6021, %v6017
  %v6023 = vlaneseq
  %v6024 = vshrl.u32 %v6023, 7
  %v6025 = vsub.s32 %v3627, %v6024
  %v6026 = vrot.slane %v3578, %v6025
  %v6027 = vsel %vm3632, %v6026, %v6022
  %v6028 = vlaneseq
  %v6029 = vshrl.u32 %v6028, 7
  %v6030 = vsub.s32 %v3634, %v6029
  %v6031 = vrot.slane %v3579, %v6030
  %v6032 = vsel %vm3639, %v6031, %v6027
  %v6033 = vlaneseq
  %v6034 = vshrl.u32 %v6033, 7
  %v6035 = vsub.s32 %v3641, %v6034
  %v6036 = vrot.slane %v3580, %v6035
  %v6037 = vsel %vm3646, %v6036, %v6032
  %v6038 = vlaneseq
  %v6039 = vshrl.u32 %v6038, 7
  %v6040 = vsub.s32 %v3648, %v6039
  %v6041 = vrot.slane %v3581, %v6040
  %v6042 = vsel %vm3653, %v6041, %v6037
  %v6043 = vlaneseq
  %v6044 = vshrl.u32 %v6043, 7
  %v6045 = vsub.s32 %v3655, %v6044
  %v6046 = vrot.slane %v3582, %v6045
  %v6047 = vsel %vm3660, %v6046, %v6042
  %v6048 = vlaneseq
  %v6049 = vshrl.u32 %v6048, 7
  %v6050 = vsub.s32 %v3662, %v6049
  %v6051 = vrot.slane %v3583, %v6050
  %v6052 = vsel %vm3667, %v6051, %v6047
  %v6053 = vlaneseq
  %v6054 = vshrl.u32 %v6053, 7
  %v6055 = vsub.s32 %v3669, %v6054
  %v6056 = vrot.slane %v3584, %v6055
  %v6057 = vsel %vm3674, %v6056, %v6052
  %v6058 = vlaneseq
  %v6059 = vshrl.u32 %v6058, 7
  %v6060 = vsub.s32 %v3676, %v6059
  %v6061 = vrot.slane %v3585, %v6060
  %v6062 = vsel %vm3681, %v6061, %v6057
  %v6063 = vlaneseq
  %v6064 = vshrl.u32 %v6063, 7
  %v6065 = vsub.s32 %v3683, %v6064
  %v6066 = vrot.slane %v3586, %v6065
  %v6067 = vsel %vm3688, %v6066, %v6062
  %v6068 = vlaneseq
  %v6069 = vshrl.u32 %v6068, 7
  %v6070 = vsub.s32 %v3690, %v6069
  %v6071 = vrot.slane %v3587, %v6070
  %v6072 = vsel %vm3695, %v6071, %v6067
  %v6073 = vlaneseq
  %v6074 = vshrl.u32 %v6073, 7
  %v6075 = vsub.s32 %v3697, %v6074
  %v6076 = vrot.slane %v3588, %v6075
  %v6077 = vsel %vm3702, %v6076, %v6072
  %v6078 = vlaneseq
  %v6079 = vshrl.u32 %v6078, 7
  %v6080 = vsub.s32 %v3704, %v6079
  %v6081 = vrot.slane %v3589, %v6080
  %v6082 = vsel %vm3709, %v6081, %v6077
  %v6083 = vlaneseq
  %v6084 = vshrl.u32 %v6083, 7
  %v6085 = vsub.s32 %v3711, %v6084
  %v6086 = vrot.slane %v3590, %v6085
  %v6087 = vsel %vm3716, %v6086, %v6082
  %v6088 = vlaneseq
  %v6089 = vshrl.u32 %v6088, 7
  %v6090 = vsub.s32 %v3608, %v6089
  %v6091 = vrot.slane %v3591, %v6090
  %v6092 = vlaneseq
  %v6093 = vshrl.u32 %v6092, 7
  %v6094 = vsub.s32 %v3613, %v6093
  %v6095 = vrot.slane %v3592, %v6094
  %v6096 = vsel %vm3618, %v6095, %v6091
  %v6097 = vlaneseq
  %v6098 = vshrl.u32 %v6097, 7
  %v6099 = vsub.s32 %v3620, %v6098
  %v6100 = vrot.slane %v3593, %v6099
  %v6101 = vsel %vm3625, %v6100, %v6096
  %v6102 = vlaneseq
  %v6103 = vshrl.u32 %v6102, 7
  %v6104 = vsub.s32 %v3627, %v6103
  %v6105 = vrot.slane %v3594, %v6104
  %v6106 = vsel %vm3632, %v6105, %v6101
  %v6107 = vlaneseq
  %v6108 = vshrl.u32 %v6107, 7
  %v6109 = vsub.s32 %v3634, %v6108
  %v6110 = vrot.slane %v3595, %v6109
  %v6111 = vsel %vm3639, %v6110, %v6106
  %v6112 = vlaneseq
  %v6113 = vshrl.u32 %v6112, 7
  %v6114 = vsub.s32 %v3641, %v6113
  %v6115 = vrot.slane %v3596, %v6114
  %v6116 = vsel %vm3646, %v6115, %v6111
  %v6117 = vlaneseq
  %v6118 = vshrl.u32 %v6117, 7
  %v6119 = vsub.s32 %v3648, %v6118
  %v6120 = vrot.slane %v3597, %v6119
  %v6121 = vsel %vm3653, %v6120, %v6116
  %v6122 = vlaneseq
  %v6123 = vshrl.u32 %v6122, 7
  %v6124 = vsub.s32 %v3655, %v6123
  %v6125 = vrot.slane %v3598, %v6124
  %v6126 = vsel %vm3660, %v6125, %v6121
  %v6127 = vlaneseq
  %v6128 = vshrl.u32 %v6127, 7
  %v6129 = vsub.s32 %v3662, %v6128
  %v6130 = vrot.slane %v3599, %v6129
  %v6131 = vsel %vm3667, %v6130, %v6126
  %v6132 = vlaneseq
  %v6133 = vshrl.u32 %v6132, 7
  %v6134 = vsub.s32 %v3669, %v6133
  %v6135 = vrot.slane %v3600, %v6134
  %v6136 = vsel %vm3674, %v6135, %v6131
  %v6137 = vlaneseq
  %v6138 = vshrl.u32 %v6137, 7
  %v6139 = vsub.s32 %v3676, %v6138
  %v6140 = vrot.slane %v3601, %v6139
  %v6141 = vsel %vm3681, %v6140, %v6136
  %v6142 = vlaneseq
  %v6143 = vshrl.u32 %v6142, 7
  %v6144 = vsub.s32 %v3683, %v6143
  %v6145 = vrot.slane %v3602, %v6144
  %v6146 = vsel %vm3688, %v6145, %v6141
  %v6147 = vlaneseq
  %v6148 = vshrl.u32 %v6147, 7
  %v6149 = vsub.s32 %v3690, %v6148
  %v6150 = vrot.slane %v3603, %v6149
  %v6151 = vsel %vm3695, %v6150, %v6146
  %v6152 = vlaneseq
  %v6153 = vshrl.u32 %v6152, 7
  %v6154 = vsub.s32 %v3697, %v6153
  %v6155 = vrot.slane %v3604, %v6154
  %v6156 = vsel %vm3702, %v6155, %v6151
  %v6157 = vlaneseq
  %v6158 = vshrl.u32 %v6157, 7
  %v6159 = vsub.s32 %v3704, %v6158
  %v6160 = vrot.slane %v3605, %v6159
  %v6161 = vsel %vm3709, %v6160, %v6156
  %v6162 = vlaneseq
  %v6163 = vshrl.u32 %v6162, 7
  %v6164 = vsub.s32 %v3711, %v6163
  %v6165 = vrot.slane %v3606, %v6164
  %v6166 = vsel %vm3716, %v6165, %v6161
  %vm6167 = vcmask 1041409
  %v6168 = vsel %vm6167, %v4981, %v3717
  %v6169 = vsel %vm6167, %v5060, %v3796
  %v6170 = vsel %vm6167, %v5139, %v3875
  %v6171 = vsel %vm6167, %v5218, %v3954
  %v6172 = vsel %vm6167, %v5297, %v4033
  %v6173 = vsel %vm6167, %v5376, %v4112
  %v6174 = vsel %vm6167, %v5455, %v4191
  %v6175 = vsel %vm6167, %v5534, %v4270
  %v6176 = vsel %vm6167, %v5613, %v4349
  %v6177 = vsel %vm6167, %v5692, %v4428
  %v6178 = vsel %vm6167, %v5771, %v4507
  %v6179 = vsel %vm6167, %v5850, %v4586
  %v6180 = vsel %vm6167, %v5929, %v4665
  %v6181 = vsel %vm6167, %v6008, %v4744
  %v6182 = vsel %vm6167, %v6087, %v4823
  %v6183 = vsel %vm6167, %v6166, %v4902
  %v6184 = vpack.c.b16 %v6168, %v6168
  %v6185 = vpack.c.b16 %v6169, %v6169
  %v6186 = vpack.c.b16 %v6170, %v6170
  %v6187 = vpack.c.b16 %v6171, %v6171
  %v6188 = vpack.c.b16 %v6172, %v6172
  %v6189 = vpack.c.b16 %v6173, %v6173
  %v6190 = vpack.c.b16 %v6174, %v6174
  %v6191 = vpack.c.b16 %v6175, %v6175
  %v6192 = vpack.c.b16 %v6176, %v6176
  %v6193 = vpack.c.b16 %v6177, %v6177
  %v6194 = vpack.c.b16 %v6178, %v6178
  %v6195 = vpack.c.b16 %v6179, %v6179
  %v6196 = vpack.c.b16 %v6180, %v6180
  %v6197 = vpack.c.b16 %v6181, %v6181
  %v6198 = vpack.c.b16 %v6182, %v6182
  %v6199 = vpack.c.b16 %v6183, %v6183
  %v6728 = vunpack.c.l.b16 %v2327
  %v6729 = vunpack.c.h.b16 %v2327
  %v6730 = vunpack.c.l.b16 %v2328
  %v6731 = vunpack.c.h.b16 %v2328
  %v6732 = vunpack.c.l.b16 %v2329
  %v6733 = vunpack.c.h.b16 %v2329
  %v6734 = vunpack.c.l.b16 %v2330
  %v6735 = vunpack.c.h.b16 %v2330
  %v6736 = vunpack.c.l.b16 %v2331
  %v6737 = vunpack.c.h.b16 %v2331
  %v6738 = vunpack.c.l.b16 %v2332
  %v6739 = vunpack.c.h.b16 %v2332
  %v6740 = vunpack.c.l.b16 %v2333
  %v6741 = vunpack.c.h.b16 %v2333
  %v6742 = vunpack.c.l.b16 %v2334
  %v6743 = vunpack.c.h.b16 %v2334
  %v6744 = vunpack.c.l.b16 %v2335
  %v6745 = vunpack.c.h.b16 %v2335
  %v6746 = vunpack.c.l.b16 %v2336
  %v6747 = vunpack.c.h.b16 %v2336
  %v6748 = vunpack.c.l.b16 %v2337
  %v6749 = vunpack.c.h.b16 %v2337
  %v6750 = vunpack.c.l.b16 %v2338
  %v6751 = vunpack.c.h.b16 %v2338
  %v6752 = vunpack.c.l.b16 %v2339
  %v6753 = vunpack.c.h.b16 %v2339
  %v6754 = vunpack.c.l.b16 %v2340
  %v6755 = vunpack.c.h.b16 %v2340
  %v6756 = vunpack.c.l.b16 %v2341
  %v6757 = vunpack.c.h.b16 %v2341
  %v6758 = vunpack.c.l.b16 %v2342
  %v6759 = vunpack.c.h.b16 %v2342
  %v6760 = vunpack.c.l.b16 %v2343
  %v6761 = vunpack.c.h.b16 %v2343
  %v6762 = vunpack.c.l.b16 %v2344
  %v6763 = vunpack.c.h.b16 %v2344
  %v6764 = vunpack.c.l.b16 %v2345
  %v6765 = vunpack.c.h.b16 %v2345
  %v6766 = vunpack.c.l.b16 %v2346
  %v6767 = vunpack.c.h.b16 %v2346
  %v6768 = vunpack.c.l.b16 %v2347
  %v6769 = vunpack.c.h.b16 %v2347
  %v6770 = vunpack.c.l.b16 %v2348
  %v6771 = vunpack.c.h.b16 %v2348
  %v6772 = vunpack.c.l.b16 %v2349
  %v6773 = vunpack.c.h.b16 %v2349
  %v6774 = vunpack.c.l.b16 %v2350
  %v6775 = vunpack.c.h.b16 %v2350
  %v6776 = vunpack.c.l.b16 %v2351
  %v6777 = vunpack.c.h.b16 %v2351
  %v6778 = vunpack.c.l.b16 %v2352
  %v6779 = vunpack.c.h.b16 %v2352
  %v6780 = vunpack.c.l.b16 %v2353
  %v6781 = vunpack.c.h.b16 %v2353
  %v6782 = vunpack.c.l.b16 %v2354
  %v6783 = vunpack.c.h.b16 %v2354
  %v6784 = vunpack.c.l.b16 %v2355
  %v6785 = vunpack.c.h.b16 %v2355
  %v6786 = vunpack.c.l.b16 %v2356
  %v6787 = vunpack.c.h.b16 %v2356
  %v6788 = vunpack.c.l.b16 %v2357
  %v6789 = vunpack.c.h.b16 %v2357
  %v6790 = vunpack.c.l.b16 %v2358
  %v6791 = vunpack.c.h.b16 %v2358
  %v6792 = vunpack.c.l.b16 %v2359
  %v6793 = vunpack.c.h.b16 %v2359
  %v6794 = vunpack.c.l.b16 %v2360
  %v6795 = vunpack.c.h.b16 %v2360
  %v6796 = vunpack.c.l.b16 %v2361
  %v6797 = vunpack.c.h.b16 %v2361
  %v6798 = vunpack.c.l.b16 %v2362
  %v6799 = vunpack.c.h.b16 %v2362
  %v6800 = vunpack.c.l.b16 %v2363
  %v6801 = vunpack.c.h.b16 %v2363
  %v6802 = vunpack.c.l.b16 %v2364
  %v6803 = vunpack.c.h.b16 %v2364
  %v6804 = vunpack.c.l.b16 %v2365
  %v6805 = vunpack.c.h.b16 %v2365
  %v6806 = vunpack.c.l.b16 %v2366
  %v6807 = vunpack.c.h.b16 %v2366
  %v6808 = vunpack.c.l.b16 %v2367
  %v6809 = vunpack.c.h.b16 %v2367
  %v6810 = vunpack.c.l.b16 %v2368
  %v6811 = vunpack.c.h.b16 %v2368
  %v6812 = vunpack.c.l.b16 %v2369
  %v6813 = vunpack.c.h.b16 %v2369
  %v6814 = vunpack.c.l.b16 %v2370
  %v6815 = vunpack.c.h.b16 %v2370
  %v6816 = vunpack.c.l.b16 %v2371
  %v6817 = vunpack.c.h.b16 %v2371
  %v6818 = vunpack.c.l.b16 %v2372
  %v6819 = vunpack.c.h.b16 %v2372
  %v6820 = vunpack.c.l.b16 %v2373
  %v6821 = vunpack.c.h.b16 %v2373
  %v6822 = vunpack.c.l.b16 %v2374
  %v6823 = vunpack.c.h.b16 %v2374
  %v6824 = vunpack.c.l.b16 %v2375
  %v6825 = vunpack.c.h.b16 %v2375
  %v6826 = vunpack.c.l.b16 %v2376
  %v6827 = vunpack.c.h.b16 %v2376
  %v6828 = vunpack.c.l.b16 %v2377
  %v6829 = vunpack.c.h.b16 %v2377
  %v6830 = vunpack.c.l.b16 %v2378
  %v6831 = vunpack.c.h.b16 %v2378
  %v6832 = vunpack.c.l.b16 %v2379
  %v6833 = vunpack.c.h.b16 %v2379
  %v6834 = vunpack.c.l.b16 %v2380
  %v6835 = vunpack.c.h.b16 %v2380
  %v6836 = vunpack.c.l.b16 %v2381
  %v6837 = vunpack.c.h.b16 %v2381
  %v6838 = vunpack.c.l.b16 %v2382
  %v6839 = vunpack.c.h.b16 %v2382
  %v6840 = vunpack.c.l.b16 %v2383
  %v6841 = vunpack.c.h.b16 %v2383
  %v6842 = vunpack.c.l.b16 %v2384
  %v6843 = vunpack.c.h.b16 %v2384
  %v6844 = vunpack.c.l.b16 %v2385
  %v6845 = vunpack.c.h.b16 %v2385
  %v6846 = vunpack.c.l.b16 %v2386
  %v6847 = vunpack.c.h.b16 %v2386
  %v6848 = vunpack.c.l.b16 %v2387
  %v6849 = vunpack.c.h.b16 %v2387
  %v6850 = vunpack.c.l.b16 %v2388
  %v6851 = vunpack.c.h.b16 %v2388
  %v6852 = vunpack.c.l.b16 %v2389
  %v6853 = vunpack.c.h.b16 %v2389
  %v6854 = vunpack.c.l.b16 %v2390
  %v6855 = vunpack.c.h.b16 %v2390
  %v6856 = vunpack.c.l.b16 %v2391
  %v6857 = vunpack.c.h.b16 %v2391
  %v6858 = vunpack.c.l.b16 %v2392
  %v6859 = vunpack.c.h.b16 %v2392
  %v6860 = vunpack.c.l.b16 %v2393
  %v6861 = vunpack.c.h.b16 %v2393
  %v6862 = vunpack.c.l.b16 %v2394
  %v6863 = vunpack.c.h.b16 %v2394
  %v6864 = vunpack.c.l.b16 %v2395
  %v6865 = vunpack.c.h.b16 %v2395
  %v6866 = vunpack.c.l.b16 %v2396
  %v6867 = vunpack.c.h.b16 %v2396
  %v6868 = vunpack.c.l.b16 %v2397
  %v6869 = vunpack.c.h.b16 %v2397
  %v6870 = vunpack.c.l.b16 %v2398
  %v6871 = vunpack.c.h.b16 %v2398
  %v6872 = vunpack.c.l.b16 %v2399
  %v6873 = vunpack.c.h.b16 %v2399
  %v6874 = vunpack.c.l.b16 %v2400
  %v6875 = vunpack.c.h.b16 %v2400
  %v6876 = vunpack.c.l.b16 %v2401
  %v6877 = vunpack.c.h.b16 %v2401
  %v6878 = vunpack.c.l.b16 %v2402
  %v6879 = vunpack.c.h.b16 %v2402
  %v6880 = vunpack.c.l.b16 %v2403
  %v6881 = vunpack.c.h.b16 %v2403
  %v6882 = vunpack.c.l.b16 %v2404
  %v6883 = vunpack.c.h.b16 %v2404
  %v6884 = vunpack.c.l.b16 %v2405
  %v6885 = vunpack.c.h.b16 %v2405
  %v6886 = vunpack.c.l.b16 %v2406
  %v6887 = vunpack.c.h.b16 %v2406
  %v6888 = vunpack.c.l.b16 %v2407
  %v6889 = vunpack.c.h.b16 %v2407
  %v6890 = vunpack.c.l.b16 %v2408
  %v6891 = vunpack.c.h.b16 %v2408
  %v6892 = vunpack.c.l.b16 %v2409
  %v6893 = vunpack.c.h.b16 %v2409
  %v6894 = vunpack.c.l.b16 %v2410
  %v6895 = vunpack.c.h.b16 %v2410
  %v6896 = vunpack.c.l.b16 %v2411
  %v6897 = vunpack.c.h.b16 %v2411
  %v6898 = vunpack.c.l.b16 %v2412
  %v6899 = vunpack.c.h.b16 %v2412
  %v6900 = vunpack.c.l.b16 %v2413
  %v6901 = vunpack.c.h.b16 %v2413
  %v6902 = vunpack.c.l.b16 %v2414
  %v6903 = vunpack.c.h.b16 %v2414
  %v6904 = vunpack.c.l.b16 %v2415
  %v6905 = vunpack.c.h.b16 %v2415
  %v6906 = vunpack.c.l.b16 %v2416
  %v6907 = vunpack.c.h.b16 %v2416
  %v6908 = vunpack.c.l.b16 %v2417
  %v6909 = vunpack.c.h.b16 %v2417
  %v6910 = vunpack.c.l.b16 %v2418
  %v6911 = vunpack.c.h.b16 %v2418
  %v6912 = vunpack.c.l.b16 %v2419
  %v6913 = vunpack.c.h.b16 %v2419
  %v6914 = vunpack.c.l.b16 %v2420
  %v6915 = vunpack.c.h.b16 %v2420
  %v6916 = vunpack.c.l.b16 %v2421
  %v6917 = vunpack.c.h.b16 %v2421
  %v6918 = vunpack.c.l.b16 %v2422
  %v6919 = vunpack.c.h.b16 %v2422
  %v6920 = vunpack.c.l.b16 %v2423
  %v6921 = vunpack.c.h.b16 %v2423
  %v6922 = vunpack.c.l.b16 %v2424
  %v6923 = vunpack.c.h.b16 %v2424
  %v6924 = vunpack.c.l.b16 %v2425
  %v6925 = vunpack.c.h.b16 %v2425
  %v6926 = vunpack.c.l.b16 %v2426
  %v6927 = vunpack.c.h.b16 %v2426
  %v6928 = vunpack.c.l.b16 %v2427
  %v6929 = vunpack.c.h.b16 %v2427
  %v6930 = vunpack.c.l.b16 %v2428
  %v6931 = vunpack.c.h.b16 %v2428
  %v6932 = vunpack.c.l.b16 %v2429
  %v6933 = vunpack.c.h.b16 %v2429
  %v6934 = vunpack.c.l.b16 %v2430
  %v6935 = vunpack.c.h.b16 %v2430
  %v6936 = vunpack.c.l.b16 %v2431
  %v6937 = vunpack.c.h.b16 %v2431
  %v6938 = vunpack.c.l.b16 %v2432
  %v6939 = vunpack.c.h.b16 %v2432
  %v6940 = vunpack.c.l.b16 %v2433
  %v6941 = vunpack.c.h.b16 %v2433
  %v6942 = vunpack.c.l.b16 %v2434
  %v6943 = vunpack.c.h.b16 %v2434
  %v6944 = vunpack.c.l.b16 %v2435
  %v6945 = vunpack.c.h.b16 %v2435
  %v6946 = vunpack.c.l.b16 %v2436
  %v6947 = vunpack.c.h.b16 %v2436
  %v6948 = vunpack.c.l.b16 %v2437
  %v6949 = vunpack.c.h.b16 %v2437
  %v6950 = vunpack.c.l.b16 %v2438
  %v6951 = vunpack.c.h.b16 %v2438
  %v6952 = vunpack.c.l.b16 %v2439
  %v6953 = vunpack.c.h.b16 %v2439
  %v6954 = vunpack.c.l.b16 %v2440
  %v6955 = vunpack.c.h.b16 %v2440
  %v6956 = vunpack.c.l.b16 %v2441
  %v6957 = vunpack.c.h.b16 %v2441
  %v6958 = vunpack.c.l.b16 %v2442
  %v6959 = vunpack.c.h.b16 %v2442
  %v6960 = vunpack.c.l.b16 %v2443
  %v6961 = vunpack.c.h.b16 %v2443
  %v6962 = vunpack.c.l.b16 %v2444
  %v6963 = vunpack.c.h.b16 %v2444
  %v6964 = vunpack.c.l.b16 %v2445
  %v6965 = vunpack.c.h.b16 %v2445
  %v6966 = vunpack.c.l.b16 %v2446
  %v6967 = vunpack.c.h.b16 %v2446
  %v6968 = vunpack.c.l.b16 %v2447
  %v6969 = vunpack.c.h.b16 %v2447
  %v6970 = vunpack.c.l.b16 %v2448
  %v6971 = vunpack.c.h.b16 %v2448
  %v6972 = vunpack.c.l.b16 %v2449
  %v6973 = vunpack.c.h.b16 %v2449
  %v6974 = vunpack.c.l.b16 %v2450
  %v6975 = vunpack.c.h.b16 %v2450
  %v6976 = vunpack.c.l.b16 %v2451
  %v6977 = vunpack.c.h.b16 %v2451
  %v6978 = vunpack.c.l.b16 %v2452
  %v6979 = vunpack.c.h.b16 %v2452
  %v6980 = vunpack.c.l.b16 %v2453
  %v6981 = vunpack.c.h.b16 %v2453
  %v6982 = vunpack.c.l.b16 %v2454
  %v6983 = vunpack.c.h.b16 %v2454
  %v6984 = vunpack.c.l.b16 %v2455
  %v6985 = vunpack.c.h.b16 %v2455
  %v6986 = vunpack.c.l.b16 %v2456
  %v6987 = vunpack.c.h.b16 %v2456
  %v6988 = vunpack.c.l.b16 %v2457
  %v6989 = vunpack.c.h.b16 %v2457
  %v6990 = vunpack.c.l.b16 %v2458
  %v6991 = vunpack.c.h.b16 %v2458
  %v6992 = vunpack.c.l.b16 %v2459
  %v6993 = vunpack.c.h.b16 %v2459
  %v6994 = vunpack.c.l.b16 %v2460
  %v6995 = vunpack.c.h.b16 %v2460
  %v6996 = vunpack.c.l.b16 %v2461
  %v6997 = vunpack.c.h.b16 %v2461
  %v6998 = vunpack.c.l.b16 %v2462
  %v6999 = vunpack.c.h.b16 %v2462
  %v7000 = vunpack.c.l.b16 %v2463
  %v7001 = vunpack.c.h.b16 %v2463
  %v7002 = vunpack.c.l.b16 %v2464
  %v7003 = vunpack.c.h.b16 %v2464
  %v7004 = vunpack.c.l.b16 %v2465
  %v7005 = vunpack.c.h.b16 %v2465
  %v7006 = vunpack.c.l.b16 %v2466
  %v7007 = vunpack.c.h.b16 %v2466
  %v7008 = vunpack.c.l.b16 %v2467
  %v7009 = vunpack.c.h.b16 %v2467
  %v7010 = vunpack.c.l.b16 %v2468
  %v7011 = vunpack.c.h.b16 %v2468
  %v7012 = vunpack.c.l.b16 %v2469
  %v7013 = vunpack.c.h.b16 %v2469
  %v7014 = vunpack.c.l.b16 %v2470
  %v7015 = vunpack.c.h.b16 %v2470
  %v7016 = vunpack.c.l.b16 %v2471
  %v7017 = vunpack.c.h.b16 %v2471
  %v7018 = vunpack.c.l.b16 %v2472
  %v7019 = vunpack.c.h.b16 %v2472
  %v7020 = vunpack.c.l.b16 %v2473
  %v7021 = vunpack.c.h.b16 %v2473
  %v7022 = vunpack.c.l.b16 %v2474
  %v7023 = vunpack.c.h.b16 %v2474
  %v7024 = vunpack.c.l.b16 %v2475
  %v7025 = vunpack.c.h.b16 %v2475
  %v7026 = vunpack.c.l.b16 %v2476
  %v7027 = vunpack.c.h.b16 %v2476
  %v7028 = vunpack.c.l.b16 %v2477
  %v7029 = vunpack.c.h.b16 %v2477
  %v7030 = vunpack.c.l.b16 %v2478
  %v7031 = vunpack.c.h.b16 %v2478
  %v7032 = vunpack.c.l.b16 %v2479
  %v7033 = vunpack.c.h.b16 %v2479
  %v7034 = vunpack.c.l.b16 %v2480
  %v7035 = vunpack.c.h.b16 %v2480
  %v7036 = vunpack.c.l.b16 %v2481
  %v7037 = vunpack.c.h.b16 %v2481
  %v7038 = vunpack.c.l.b16 %v2482
  %v7039 = vunpack.c.h.b16 %v2482
  %v7040 = vunpack.c.l.b16 %v2483
  %v7041 = vunpack.c.h.b16 %v2483
  %v7042 = vunpack.c.l.b16 %v2484
  %v7043 = vunpack.c.h.b16 %v2484
  %v7044 = vunpack.c.l.b16 %v2485
  %v7045 = vunpack.c.h.b16 %v2485
  %v7046 = vunpack.c.l.b16 %v2486
  %v7047 = vunpack.c.h.b16 %v2486
  %v7048 = vunpack.c.l.b16 %v2487
  %v7049 = vunpack.c.h.b16 %v2487
  %v7050 = vunpack.c.l.b16 %v2488
  %v7051 = vunpack.c.h.b16 %v2488
  %v7052 = vunpack.c.l.b16 %v2489
  %v7053 = vunpack.c.h.b16 %v2489
  %v7054 = vunpack.c.l.b16 %v2490
  %v7055 = vunpack.c.h.b16 %v2490
  %v7056 = vunpack.c.l.b16 %v2491
  %v7057 = vunpack.c.h.b16 %v2491
  %v7058 = vunpack.c.l.b16 %v2492
  %v7059 = vunpack.c.h.b16 %v2492
  %v7060 = vunpack.c.l.b16 %v2493
  %v7061 = vunpack.c.h.b16 %v2493
  %v7062 = vunpack.c.l.b16 %v2494
  %v7063 = vunpack.c.h.b16 %v2494
  %v7064 = vunpack.c.l.b16 %v2495
  %v7065 = vunpack.c.h.b16 %v2495
  %v7066 = vunpack.c.l.b16 %v2496
  %v7067 = vunpack.c.h.b16 %v2496
  %v7068 = vunpack.c.l.b16 %v2497
  %v7069 = vunpack.c.h.b16 %v2497
  %v7070 = vunpack.c.l.b16 %v2498
  %v7071 = vunpack.c.h.b16 %v2498
  %v7072 = vunpack.c.l.b16 %v2499
  %v7073 = vunpack.c.h.b16 %v2499
  %v7074 = vunpack.c.l.b16 %v2500
  %v7075 = vunpack.c.h.b16 %v2500
  %v7076 = vunpack.c.l.b16 %v2501
  %v7077 = vunpack.c.h.b16 %v2501
  %v7078 = vunpack.c.l.b16 %v2502
  %v7079 = vunpack.c.h.b16 %v2502
  %v7080 = vunpack.c.l.b16 %v2503
  %v7081 = vunpack.c.h.b16 %v2503
  %v7082 = vunpack.c.l.b16 %v2504
  %v7083 = vunpack.c.h.b16 %v2504
  %v7084 = vunpack.c.l.b16 %v2505
  %v7085 = vunpack.c.h.b16 %v2505
  %v7086 = vunpack.c.l.b16 %v2506
  %v7087 = vunpack.c.h.b16 %v2506
  %v7088 = vunpack.c.l.b16 %v2507
  %v7089 = vunpack.c.h.b16 %v2507
  %v7090 = vunpack.c.l.b16 %v2508
  %v7091 = vunpack.c.h.b16 %v2508
  %v7092 = vunpack.c.l.b16 %v2509
  %v7093 = vunpack.c.h.b16 %v2509
  %v7094 = vunpack.c.l.b16 %v2510
  %v7095 = vunpack.c.h.b16 %v2510
  %v7096 = vunpack.c.l.b16 %v2511
  %v7097 = vunpack.c.h.b16 %v2511
  %v7098 = vunpack.c.l.b16 %v2512
  %v7099 = vunpack.c.h.b16 %v2512
  %v7100 = vunpack.c.l.b16 %v2513
  %v7101 = vunpack.c.h.b16 %v2513
  %v7102 = vunpack.c.l.b16 %v2514
  %v7103 = vunpack.c.h.b16 %v2514
  %v7104 = vunpack.c.l.b16 %v2515
  %v7105 = vunpack.c.h.b16 %v2515
  %v7106 = vunpack.c.l.b16 %v2516
  %v7107 = vunpack.c.h.b16 %v2516
  %v7108 = vunpack.c.l.b16 %v2517
  %v7109 = vunpack.c.h.b16 %v2517
  %v7110 = vunpack.c.l.b16 %v2518
  %v7111 = vunpack.c.h.b16 %v2518
  %v7112 = vunpack.c.l.b16 %v2519
  %v7113 = vunpack.c.h.b16 %v2519
  %v7114 = vunpack.c.l.b16 %v2520
  %v7115 = vunpack.c.h.b16 %v2520
  %v7116 = vunpack.c.l.b16 %v2521
  %v7117 = vunpack.c.h.b16 %v2521
  %v7118 = vunpack.c.l.b16 %v2522
  %v7119 = vunpack.c.h.b16 %v2522
  %v7120 = vunpack.c.l.b16 %v2523
  %v7121 = vunpack.c.h.b16 %v2523
  %v7122 = vunpack.c.l.b16 %v2524
  %v7123 = vunpack.c.h.b16 %v2524
  %v7124 = vunpack.c.l.b16 %v2525
  %v7125 = vunpack.c.h.b16 %v2525
  %v7126 = vunpack.c.l.b16 %v2526
  %v7127 = vunpack.c.h.b16 %v2526
  %v7128 = vunpack.c.l.b16 %v2527
  %v7129 = vunpack.c.h.b16 %v2527
  %v7130 = vunpack.c.l.b16 %v2528
  %v7131 = vunpack.c.h.b16 %v2528
  %v7132 = vunpack.c.l.b16 %v2529
  %v7133 = vunpack.c.h.b16 %v2529
  %v7134 = vunpack.c.l.b16 %v2530
  %v7135 = vunpack.c.h.b16 %v2530
  %v7136 = vunpack.c.l.b16 %v2531
  %v7137 = vunpack.c.h.b16 %v2531
  %v7138 = vunpack.c.l.b16 %v2532
  %v7139 = vunpack.c.h.b16 %v2532
  %v7140 = vunpack.c.l.b16 %v2533
  %v7141 = vunpack.c.h.b16 %v2533
  %v7142 = vunpack.c.l.b16 %v2534
  %v7143 = vunpack.c.h.b16 %v2534
  %v7144 = vunpack.c.l.b16 %v2535
  %v7145 = vunpack.c.h.b16 %v2535
  %v7146 = vunpack.c.l.b16 %v2536
  %v7147 = vunpack.c.h.b16 %v2536
  %v7148 = vunpack.c.l.b16 %v2537
  %v7149 = vunpack.c.h.b16 %v2537
  %v7150 = vunpack.c.l.b16 %v2538
  %v7151 = vunpack.c.h.b16 %v2538
  %v7152 = vunpack.c.l.b16 %v2539
  %v7153 = vunpack.c.h.b16 %v2539
  %v7154 = vunpack.c.l.b16 %v2540
  %v7155 = vunpack.c.h.b16 %v2540
  %v7156 = vunpack.c.l.b16 %v2541
  %v7157 = vunpack.c.h.b16 %v2541
  %v7158 = vunpack.c.l.b16 %v2542
  %v7159 = vunpack.c.h.b16 %v2542
  %v7160 = vunpack.c.l.b16 %v2543
  %v7161 = vunpack.c.h.b16 %v2543
  %v7162 = vunpack.c.l.b16 %v2544
  %v7163 = vunpack.c.h.b16 %v2544
  %v7164 = vunpack.c.l.b16 %v2545
  %v7165 = vunpack.c.h.b16 %v2545
  %v7166 = vunpack.c.l.b16 %v2546
  %v7167 = vunpack.c.h.b16 %v2546
  %v7168 = vunpack.c.l.b16 %v2547
  %v7169 = vunpack.c.h.b16 %v2547
  %v7170 = vunpack.c.l.b16 %v2548
  %v7171 = vunpack.c.h.b16 %v2548
  %v7172 = vunpack.c.l.b16 %v2549
  %v7173 = vunpack.c.h.b16 %v2549
  %v7174 = vunpack.c.l.b16 %v2550
  %v7175 = vunpack.c.h.b16 %v2550
  %v7176 = vunpack.c.l.b16 %v2551
  %v7177 = vunpack.c.h.b16 %v2551
  %v7178 = vunpack.c.l.b16 %v2552
  %v7179 = vunpack.c.h.b16 %v2552
  %v7180 = vunpack.c.l.b16 %v2553
  %v7181 = vunpack.c.h.b16 %v2553
  %v7182 = vunpack.c.l.b16 %v2554
  %v7183 = vunpack.c.h.b16 %v2554
  %v7184 = vunpack.c.l.b16 %v2555
  %v7185 = vunpack.c.h.b16 %v2555
  %v7186 = vunpack.c.l.b16 %v2556
  %v7187 = vunpack.c.h.b16 %v2556
  %v7188 = vunpack.c.l.b16 %v2557
  %v7189 = vunpack.c.h.b16 %v2557
  %v7190 = vunpack.c.l.b16 %v2558
  %v7191 = vunpack.c.h.b16 %v2558
  %v7192 = vunpack.c.l.b16 %v2559
  %v7193 = vunpack.c.h.b16 %v2559
  %v7194 = vunpack.c.l.b16 %v2560
  %v7195 = vunpack.c.h.b16 %v2560
  %v7196 = vunpack.c.l.b16 %v2561
  %v7197 = vunpack.c.h.b16 %v2561
  %v7198 = vunpack.c.l.b16 %v2562
  %v7199 = vunpack.c.h.b16 %v2562
  %v7200 = vunpack.c.l.b16 %v2563
  %v7201 = vunpack.c.h.b16 %v2563
  %v7202 = vunpack.c.l.b16 %v2564
  %v7203 = vunpack.c.h.b16 %v2564
  %v7204 = vunpack.c.l.b16 %v2565
  %v7205 = vunpack.c.h.b16 %v2565
  %v7206 = vunpack.c.l.b16 %v2566
  %v7207 = vunpack.c.h.b16 %v2566
  %v7208 = vunpack.c.l.b16 %v2567
  %v7209 = vunpack.c.h.b16 %v2567
  %v7210 = vunpack.c.l.b16 %v2568
  %v7211 = vunpack.c.h.b16 %v2568
  %v7212 = vunpack.c.l.b16 %v2569
  %v7213 = vunpack.c.h.b16 %v2569
  %v7214 = vunpack.c.l.b16 %v2570
  %v7215 = vunpack.c.h.b16 %v2570
  %v7216 = vunpack.c.l.b16 %v2571
  %v7217 = vunpack.c.h.b16 %v2571
  %v7218 = vunpack.c.l.b16 %v2572
  %v7219 = vunpack.c.h.b16 %v2572
  %v7220 = vunpack.c.l.b16 %v2573
  %v7221 = vunpack.c.h.b16 %v2573
  %v7222 = vunpack.c.l.b16 %v2574
  %v7223 = vunpack.c.h.b16 %v2574
  %v7224 = vunpack.c.l.b16 %v2575
  %v7225 = vunpack.c.h.b16 %v2575
  %v7226 = vunpack.c.l.b16 %v2576
  %v7227 = vunpack.c.h.b16 %v2576
  %v7228 = vunpack.c.l.b16 %v2577
  %v7229 = vunpack.c.h.b16 %v2577
  %v7230 = vunpack.c.l.b16 %v2578
  %v7231 = vunpack.c.h.b16 %v2578
  %v7232 = vunpack.c.l.b16 %v2579
  %v7233 = vunpack.c.h.b16 %v2579
  %v7234 = vunpack.c.l.b16 %v2580
  %v7235 = vunpack.c.h.b16 %v2580
  %v7236 = vunpack.c.l.b16 %v2581
  %v7237 = vunpack.c.h.b16 %v2581
  %v7238 = vunpack.c.l.b16 %v2582
  %v7239 = vunpack.c.h.b16 %v2582
  %v7240 = vunpack.c.l.b16 %v2583
  %v7241 = vunpack.c.h.b16 %v2583
  %v7242 = vunpack.c.l.b16 %v2584
  %v7243 = vunpack.c.h.b16 %v2584
  %v7244 = vunpack.c.l.b16 %v2585
  %v7245 = vunpack.c.h.b16 %v2585
  %v7246 = vunpack.c.l.b16 %v2586
  %v7247 = vunpack.c.h.b16 %v2586
  %v7248 = vunpack.c.l.b16 %v2587
  %v7249 = vunpack.c.h.b16 %v2587
  %v7250 = vunpack.c.l.b16 %v2588
  %v7251 = vunpack.c.h.b16 %v2588
  %v7252 = vunpack.c.l.b16 %v2589
  %v7253 = vunpack.c.h.b16 %v2589
  %v7254 = vunpack.c.l.b16 %v2590
  %v7255 = vunpack.c.h.b16 %v2590
  %v7256 = vunpack.c.l.b16 %v2591
  %v7257 = vunpack.c.h.b16 %v2591
  %v7258 = vunpack.c.l.b16 %v2592
  %v7259 = vunpack.c.h.b16 %v2592
  %v7260 = vunpack.c.l.b16 %v2593
  %v7261 = vunpack.c.h.b16 %v2593
  %v7262 = vunpack.c.l.b16 %v2594
  %v7263 = vunpack.c.h.b16 %v2594
  %v7264 = vunpack.c.l.b16 %v2595
  %v7265 = vunpack.c.h.b16 %v2595
  %v7266 = vunpack.c.l.b16 %v2596
  %v7267 = vunpack.c.h.b16 %v2596
  %v7268 = vunpack.c.l.b16 %v2597
  %v7269 = vunpack.c.h.b16 %v2597
  %v7270 = vunpack.c.l.b16 %v2598
  %v7271 = vunpack.c.h.b16 %v2598
  %v7272 = vunpack.c.l.b16 %v2599
  %v7273 = vunpack.c.h.b16 %v2599
  %v7274 = vunpack.c.l.b16 %v2600
  %v7275 = vunpack.c.h.b16 %v2600
  %v7276 = vunpack.c.l.b16 %v2601
  %v7277 = vunpack.c.h.b16 %v2601
  %v7278 = vunpack.c.l.b16 %v2602
  %v7279 = vunpack.c.h.b16 %v2602
  %v7280 = vunpack.c.l.b16 %v2603
  %v7281 = vunpack.c.h.b16 %v2603
  %v7282 = vunpack.c.l.b16 %v2604
  %v7283 = vunpack.c.h.b16 %v2604
  %v7284 = vunpack.c.l.b16 %v2605
  %v7285 = vunpack.c.h.b16 %v2605
  %v7286 = vunpack.c.l.b16 %v2606
  %v7287 = vunpack.c.h.b16 %v2606
  %v7288 = vunpack.c.l.b16 %v2607
  %v7289 = vunpack.c.h.b16 %v2607
  %v7290 = vunpack.c.l.b16 %v2608
  %v7291 = vunpack.c.h.b16 %v2608
  %v7292 = vunpack.c.l.b16 %v2609
  %v7293 = vunpack.c.h.b16 %v2609
  %v7294 = vunpack.c.l.b16 %v2610
  %v7295 = vunpack.c.h.b16 %v2610
  %v7296 = vunpack.c.l.b16 %v2611
  %v7297 = vunpack.c.h.b16 %v2611
  %v7298 = vunpack.c.l.b16 %v2612
  %v7299 = vunpack.c.h.b16 %v2612
  %v7300 = vunpack.c.l.b16 %v2613
  %v7301 = vunpack.c.h.b16 %v2613
  %v7302 = vunpack.c.l.b16 %v2614
  %v7303 = vunpack.c.h.b16 %v2614
  %v7304 = vunpack.c.l.b16 %v2615
  %v7305 = vunpack.c.h.b16 %v2615
  %v7306 = vunpack.c.l.b16 %v2616
  %v7307 = vunpack.c.h.b16 %v2616
  %v7308 = vunpack.c.l.b16 %v2617
  %v7309 = vunpack.c.h.b16 %v2617
  %v7310 = vunpack.c.l.b16 %v2618
  %v7311 = vunpack.c.h.b16 %v2618
  %v7312 = vunpack.c.l.b16 %v2619
  %v7313 = vunpack.c.h.b16 %v2619
  %v7314 = vunpack.c.l.b16 %v2620
  %v7315 = vunpack.c.h.b16 %v2620
  %v7316 = vunpack.c.l.b16 %v2621
  %v7317 = vunpack.c.h.b16 %v2621
  %v7318 = vunpack.c.l.b16 %v2622
  %v7319 = vunpack.c.h.b16 %v2622
  %v7320 = vunpack.c.l.b16 %v2623
  %v7321 = vunpack.c.h.b16 %v2623
  %v7322 = vunpack.c.l.b16 %v2624
  %v7323 = vunpack.c.h.b16 %v2624
  %v7324 = vunpack.c.l.b16 %v2625
  %v7325 = vunpack.c.h.b16 %v2625
  %v7326 = vunpack.c.l.b16 %v2626
  %v7327 = vunpack.c.h.b16 %v2626
  %v7328 = vunpack.c.l.b16 %v2627
  %v7329 = vunpack.c.h.b16 %v2627
  %v7330 = vunpack.c.l.b16 %v2628
  %v7331 = vunpack.c.h.b16 %v2628
  %v7332 = vunpack.c.l.b16 %v2629
  %v7333 = vunpack.c.h.b16 %v2629
  %v7334 = vunpack.c.l.b16 %v2630
  %v7335 = vunpack.c.h.b16 %v2630
  %v7336 = vunpack.c.l.b16 %v2631
  %v7337 = vunpack.c.h.b16 %v2631
  %v7338 = vunpack.c.l.b16 %v2632
  %v7339 = vunpack.c.h.b16 %v2632
  %v7340 = vunpack.c.l.b16 %v2633
  %v7341 = vunpack.c.h.b16 %v2633
  %v7342 = vunpack.c.l.b16 %v2634
  %v7343 = vunpack.c.h.b16 %v2634
  %v7344 = vunpack.c.l.b16 %v2635
  %v7345 = vunpack.c.h.b16 %v2635
  %v7346 = vunpack.c.l.b16 %v2636
  %v7347 = vunpack.c.h.b16 %v2636
  %v7348 = vunpack.c.l.b16 %v2637
  %v7349 = vunpack.c.h.b16 %v2637
  %v7350 = vunpack.c.l.b16 %v2638
  %v7351 = vunpack.c.h.b16 %v2638
  %v7352 = vunpack.c.l.b16 %v2639
  %v7353 = vunpack.c.h.b16 %v2639
  %v7354 = vunpack.c.l.b16 %v2640
  %v7355 = vunpack.c.h.b16 %v2640
  %v7356 = vunpack.c.l.b16 %v2641
  %v7357 = vunpack.c.h.b16 %v2641
  %v7358 = vunpack.c.l.b16 %v2642
  %v7359 = vunpack.c.h.b16 %v2642
  %v7360 = vunpack.c.l.b16 %v2643
  %v7361 = vunpack.c.h.b16 %v2643
  %v7362 = vunpack.c.l.b16 %v2644
  %v7363 = vunpack.c.h.b16 %v2644
  %v7364 = vunpack.c.l.b16 %v2645
  %v7365 = vunpack.c.h.b16 %v2645
  %v7366 = vunpack.c.l.b16 %v2646
  %v7367 = vunpack.c.h.b16 %v2646
  %v7368 = vunpack.c.l.b16 %v2647
  %v7369 = vunpack.c.h.b16 %v2647
  %v7370 = vunpack.c.l.b16 %v2648
  %v7371 = vunpack.c.h.b16 %v2648
  %v7372 = vunpack.c.l.b16 %v2649
  %v7373 = vunpack.c.h.b16 %v2649
  %v7374 = vunpack.c.l.b16 %v2650
  %v7375 = vunpack.c.h.b16 %v2650
  %v7376 = vunpack.c.l.b16 %v2651
  %v7377 = vunpack.c.h.b16 %v2651
  %v7378 = vunpack.c.l.b16 %v2652
  %v7379 = vunpack.c.h.b16 %v2652
  %v7380 = vunpack.c.l.b16 %v2653
  %v7381 = vunpack.c.h.b16 %v2653
  %v7382 = vunpack.c.l.b16 %v2654
  %v7383 = vunpack.c.h.b16 %v2654
  %v7384 = vunpack.c.l.b16 %v2655
  %v7385 = vunpack.c.h.b16 %v2655
  %v7386 = vunpack.c.l.b16 %v2656
  %v7387 = vunpack.c.h.b16 %v2656
  %v7388 = vunpack.c.l.b16 %v2657
  %v7389 = vunpack.c.h.b16 %v2657
  %v7390 = vunpack.c.l.b16 %v2658
  %v7391 = vunpack.c.h.b16 %v2658
  %v7392 = vunpack.c.l.b16 %v2659
  %v7393 = vunpack.c.h.b16 %v2659
  %v7394 = vunpack.c.l.b16 %v2660
  %v7395 = vunpack.c.h.b16 %v2660
  %v7396 = vunpack.c.l.b16 %v2661
  %v7397 = vunpack.c.h.b16 %v2661
  %v7398 = vunpack.c.l.b16 %v2662
  %v7399 = vunpack.c.h.b16 %v2662
  %v7400 = vunpack.c.l.b16 %v2663
  %v7401 = vunpack.c.h.b16 %v2663
  %v7402 = vunpack.c.l.b16 %v2664
  %v7403 = vunpack.c.h.b16 %v2664
  %v7404 = vunpack.c.l.b16 %v2665
  %v7405 = vunpack.c.h.b16 %v2665
  %v7406 = vunpack.c.l.b16 %v2666
  %v7407 = vunpack.c.h.b16 %v2666
  %v7408 = vunpack.c.l.b16 %v2667
  %v7409 = vunpack.c.h.b16 %v2667
  %v7410 = vunpack.c.l.b16 %v2668
  %v7411 = vunpack.c.h.b16 %v2668
  %v7412 = vunpack.c.l.b16 %v2669
  %v7413 = vunpack.c.h.b16 %v2669
  %v7414 = vunpack.c.l.b16 %v2670
  %v7415 = vunpack.c.h.b16 %v2670
  %v7416 = vunpack.c.l.b16 %v2671
  %v7417 = vunpack.c.h.b16 %v2671
  %v7418 = vunpack.c.l.b16 %v2672
  %v7419 = vunpack.c.h.b16 %v2672
  %v7420 = vunpack.c.l.b16 %v2673
  %v7421 = vunpack.c.h.b16 %v2673
  %v7422 = vunpack.c.l.b16 %v2674
  %v7423 = vunpack.c.h.b16 %v2674
  %v7424 = vunpack.c.l.b16 %v2675
  %v7425 = vunpack.c.h.b16 %v2675
  %v7426 = vunpack.c.l.b16 %v2676
  %v7427 = vunpack.c.h.b16 %v2676
  %v7428 = vunpack.c.l.b16 %v2677
  %v7429 = vunpack.c.h.b16 %v2677
  %v7430 = vunpack.c.l.b16 %v2678
  %v7431 = vunpack.c.h.b16 %v2678
  %v7432 = vunpack.c.l.b16 %v2679
  %v7433 = vunpack.c.h.b16 %v2679
  %v7434 = vunpack.c.l.b16 %v2680
  %v7435 = vunpack.c.h.b16 %v2680
  %v7436 = vunpack.c.l.b16 %v2681
  %v7437 = vunpack.c.h.b16 %v2681
  %v7438 = vunpack.c.l.b16 %v2682
  %v7439 = vunpack.c.h.b16 %v2682
  %v7440 = vunpack.c.l.b16 %v2683
  %v7441 = vunpack.c.h.b16 %v2683
  %v7442 = vunpack.c.l.b16 %v2684
  %v7443 = vunpack.c.h.b16 %v2684
  %v7444 = vunpack.c.l.b16 %v2685
  %v7445 = vunpack.c.h.b16 %v2685
  %v7446 = vunpack.c.l.b16 %v2686
  %v7447 = vunpack.c.h.b16 %v2686
  %v7448 = vunpack.c.l.b16 %v2687
  %v7449 = vunpack.c.h.b16 %v2687
  %v7450 = vunpack.c.l.b16 %v2688
  %v7451 = vunpack.c.h.b16 %v2688
  %v7452 = vunpack.c.l.b16 %v2689
  %v7453 = vunpack.c.h.b16 %v2689
  %v7454 = vunpack.c.l.b16 %v2690
  %v7455 = vunpack.c.h.b16 %v2690
  %v7456 = vunpack.c.l.b16 %v2691
  %v7457 = vunpack.c.h.b16 %v2691
  %v7458 = vunpack.c.l.b16 %v2692
  %v7459 = vunpack.c.h.b16 %v2692
  %v7460 = vunpack.c.l.b16 %v2693
  %v7461 = vunpack.c.h.b16 %v2693
  %v7462 = vunpack.c.l.b16 %v2694
  %v7463 = vunpack.c.h.b16 %v2694
  %v7464 = vunpack.c.l.b16 %v2695
  %v7465 = vunpack.c.h.b16 %v2695
  %v7466 = vunpack.c.l.b16 %v2696
  %v7467 = vunpack.c.h.b16 %v2696
  %v7468 = vunpack.c.l.b16 %v2697
  %v7469 = vunpack.c.h.b16 %v2697
  %v7470 = vunpack.c.l.b16 %v2698
  %v7471 = vunpack.c.h.b16 %v2698
  %v7472 = vunpack.c.l.b16 %v2699
  %v7473 = vunpack.c.h.b16 %v2699
  %v7474 = vunpack.c.l.b16 %v2700
  %v7475 = vunpack.c.h.b16 %v2700
  %v7476 = vunpack.c.l.b16 %v2701
  %v7477 = vunpack.c.h.b16 %v2701
  %v7478 = vunpack.c.l.b16 %v2702
  %v7479 = vunpack.c.h.b16 %v2702
  %v7480 = vunpack.c.l.b16 %v2703
  %v7481 = vunpack.c.h.b16 %v2703
  %v7482 = vunpack.c.l.b16 %v2704
  %v7483 = vunpack.c.h.b16 %v2704
  %v7484 = vunpack.c.l.b16 %v2705
  %v7485 = vunpack.c.h.b16 %v2705
  %v7486 = vunpack.c.l.b16 %v2706
  %v7487 = vunpack.c.h.b16 %v2706
  %v7488 = vunpack.c.l.b16 %v2707
  %v7489 = vunpack.c.h.b16 %v2707
  %v7490 = vunpack.c.l.b16 %v2708
  %v7491 = vunpack.c.h.b16 %v2708
  %v7492 = vunpack.c.l.b16 %v2709
  %v7493 = vunpack.c.h.b16 %v2709
  %v7494 = vunpack.c.l.b16 %v2710
  %v7495 = vunpack.c.h.b16 %v2710
  %v7496 = vunpack.c.l.b16 %v2711
  %v7497 = vunpack.c.h.b16 %v2711
  %v7498 = vunpack.c.l.b16 %v2712
  %v7499 = vunpack.c.h.b16 %v2712
  %v7500 = vunpack.c.l.b16 %v2713
  %v7501 = vunpack.c.h.b16 %v2713
  %v7502 = vunpack.c.l.b16 %v2714
  %v7503 = vunpack.c.h.b16 %v2714
  %v7504 = vunpack.c.l.b16 %v2715
  %v7505 = vunpack.c.h.b16 %v2715
  %v7506 = vunpack.c.l.b16 %v2716
  %v7507 = vunpack.c.h.b16 %v2716
  %v7508 = vunpack.c.l.b16 %v2717
  %v7509 = vunpack.c.h.b16 %v2717
  %v7510 = vunpack.c.l.b16 %v2718
  %v7511 = vunpack.c.h.b16 %v2718
  %v7512 = vunpack.c.l.b16 %v2719
  %v7513 = vunpack.c.h.b16 %v2719
  %v7514 = vunpack.c.l.b16 %v2720
  %v7515 = vunpack.c.h.b16 %v2720
  %v7516 = vunpack.c.l.b16 %v2721
  %v7517 = vunpack.c.h.b16 %v2721
  %v7518 = vunpack.c.l.b16 %v2722
  %v7519 = vunpack.c.h.b16 %v2722
  %v7520 = vunpack.c.l.b16 %v2723
  %v7521 = vunpack.c.h.b16 %v2723
  %v7522 = vunpack.c.l.b16 %v2724
  %v7523 = vunpack.c.h.b16 %v2724
  %v7524 = vunpack.c.l.b16 %v2725
  %v7525 = vunpack.c.h.b16 %v2725
  %v7526 = vunpack.c.l.b16 %v2726
  %v7527 = vunpack.c.h.b16 %v2726
  %v7528 = vunpack.c.l.b16 %v2727
  %v7529 = vunpack.c.h.b16 %v2727
  %v7530 = vunpack.c.l.b16 %v2728
  %v7531 = vunpack.c.h.b16 %v2728
  %v7532 = vunpack.c.l.b16 %v2729
  %v7533 = vunpack.c.h.b16 %v2729
  %v7534 = vunpack.c.l.b16 %v2730
  %v7535 = vunpack.c.h.b16 %v2730
  %v7536 = vunpack.c.l.b16 %v2731
  %v7537 = vunpack.c.h.b16 %v2731
  %v7538 = vunpack.c.l.b16 %v2732
  %v7539 = vunpack.c.h.b16 %v2732
  %v7540 = vunpack.c.l.b16 %v2733
  %v7541 = vunpack.c.h.b16 %v2733
  %v7542 = vunpack.c.l.b16 %v2734
  %v7543 = vunpack.c.h.b16 %v2734
  %v7544 = vunpack.c.l.b16 %v2735
  %v7545 = vunpack.c.h.b16 %v2735
  %v7546 = vunpack.c.l.b16 %v2736
  %v7547 = vunpack.c.h.b16 %v2736
  %v7548 = vunpack.c.l.b16 %v2737
  %v7549 = vunpack.c.h.b16 %v2737
  %v7550 = vunpack.c.l.b16 %v2738
  %v7551 = vunpack.c.h.b16 %v2738
  %v7552 = vunpack.c.l.b16 %v2739
  %v7553 = vunpack.c.h.b16 %v2739
  %v7554 = vunpack.c.l.b16 %v2740
  %v7555 = vunpack.c.h.b16 %v2740
  %v7556 = vunpack.c.l.b16 %v2741
  %v7557 = vunpack.c.h.b16 %v2741
  %v7558 = vunpack.c.l.b16 %v2742
  %v7559 = vunpack.c.h.b16 %v2742
  %v7560 = vunpack.c.l.b16 %v2743
  %v7561 = vunpack.c.h.b16 %v2743
  %v7562 = vunpack.c.l.b16 %v2744
  %v7563 = vunpack.c.h.b16 %v2744
  %v7564 = vunpack.c.l.b16 %v2745
  %v7565 = vunpack.c.h.b16 %v2745
  %v7566 = vunpack.c.l.b16 %v2746
  %v7567 = vunpack.c.h.b16 %v2746
  %v7568 = vunpack.c.l.b16 %v2747
  %v7569 = vunpack.c.h.b16 %v2747
  %v7570 = vunpack.c.l.b16 %v2748
  %v7571 = vunpack.c.h.b16 %v2748
  %v7572 = vunpack.c.l.b16 %v2749
  %v7573 = vunpack.c.h.b16 %v2749
  %v7574 = vunpack.c.l.b16 %v2750
  %v7575 = vunpack.c.h.b16 %v2750
  %v7576 = vunpack.c.l.b16 %v2751
  %v7577 = vunpack.c.h.b16 %v2751
  %v7578 = vunpack.c.l.b16 %v2752
  %v7579 = vunpack.c.h.b16 %v2752
  %v7580 = vunpack.c.l.b16 %v2753
  %v7581 = vunpack.c.h.b16 %v2753
  %v7582 = vunpack.c.l.b16 %v2754
  %v7583 = vunpack.c.h.b16 %v2754
  %v7584 = vunpack.c.l.b16 %v2755
  %v7585 = vunpack.c.h.b16 %v2755
  %v7586 = vunpack.c.l.b16 %v2756
  %v7587 = vunpack.c.h.b16 %v2756
  %v7588 = vunpack.c.l.b16 %v2757
  %v7589 = vunpack.c.h.b16 %v2757
  %v7590 = vunpack.c.l.b16 %v2758
  %v7591 = vunpack.c.h.b16 %v2758
  %v7592 = vunpack.c.l.b16 %v2759
  %v7593 = vunpack.c.h.b16 %v2759
  %v7594 = vunpack.c.l.b16 %v2760
  %v7595 = vunpack.c.h.b16 %v2760
  %v7596 = vunpack.c.l.b16 %v2761
  %v7597 = vunpack.c.h.b16 %v2761
  %v7598 = vunpack.c.l.b16 %v2762
  %v7599 = vunpack.c.h.b16 %v2762
  %v7600 = vunpack.c.l.b16 %v2763
  %v7601 = vunpack.c.h.b16 %v2763
  %v7602 = vunpack.c.l.b16 %v2764
  %v7603 = vunpack.c.h.b16 %v2764
  %v7604 = vunpack.c.l.b16 %v2765
  %v7605 = vunpack.c.h.b16 %v2765
  %v7606 = vunpack.c.l.b16 %v2766
  %v7607 = vunpack.c.h.b16 %v2766
  %v7608 = vunpack.c.l.b16 %v2767
  %v7609 = vunpack.c.h.b16 %v2767
  %v7610 = vunpack.c.l.b16 %v2768
  %v7611 = vunpack.c.h.b16 %v2768
  %v7612 = vunpack.c.l.b16 %v2769
  %v7613 = vunpack.c.h.b16 %v2769
  %v7614 = vunpack.c.l.b16 %v2770
  %v7615 = vunpack.c.h.b16 %v2770
  %v7616 = vunpack.c.l.b16 %v2771
  %v7617 = vunpack.c.h.b16 %v2771
  %v7618 = vunpack.c.l.b16 %v2772
  %v7619 = vunpack.c.h.b16 %v2772
  %v7620 = vunpack.c.l.b16 %v2773
  %v7621 = vunpack.c.h.b16 %v2773
  %v7622 = vunpack.c.l.b16 %v2774
  %v7623 = vunpack.c.h.b16 %v2774
  %v7624 = vunpack.c.l.b16 %v2775
  %v7625 = vunpack.c.h.b16 %v2775
  %v7626 = vunpack.c.l.b16 %v2776
  %v7627 = vunpack.c.h.b16 %v2776
  %v7628 = vunpack.c.l.b16 %v2777
  %v7629 = vunpack.c.h.b16 %v2777
  %v7630 = vunpack.c.l.b16 %v2778
  %v7631 = vunpack.c.h.b16 %v2778
  %v7632 = vunpack.c.l.b16 %v2779
  %v7633 = vunpack.c.h.b16 %v2779
  %v7634 = vunpack.c.l.b16 %v2780
  %v7635 = vunpack.c.h.b16 %v2780
  %v7636 = vunpack.c.l.b16 %v2781
  %v7637 = vunpack.c.h.b16 %v2781
  %v7638 = vunpack.c.l.b16 %v2782
  %v7639 = vunpack.c.h.b16 %v2782
  %v7640 = vunpack.c.l.b16 %v2783
  %v7641 = vunpack.c.h.b16 %v2783
  %v7642 = vunpack.c.l.b16 %v2784
  %v7643 = vunpack.c.h.b16 %v2784
  %v7644 = vunpack.c.l.b16 %v2785
  %v7645 = vunpack.c.h.b16 %v2785
  %v7646 = vunpack.c.l.b16 %v2786
  %v7647 = vunpack.c.h.b16 %v2786
  %v7648 = vunpack.c.l.b16 %v2787
  %v7649 = vunpack.c.h.b16 %v2787
  %v7650 = vunpack.c.l.b16 %v2788
  %v7651 = vunpack.c.h.b16 %v2788
  %v7652 = vunpack.c.l.b16 %v2789
  %v7653 = vunpack.c.h.b16 %v2789
  %v7654 = vunpack.c.l.b16 %v2790
  %v7655 = vunpack.c.h.b16 %v2790
  %v7656 = vunpack.c.l.b16 %v2791
  %v7657 = vunpack.c.h.b16 %v2791
  %v7658 = vunpack.c.l.b16 %v2792
  %v7659 = vunpack.c.h.b16 %v2792
  %v7660 = vunpack.c.l.b16 %v2793
  %v7661 = vunpack.c.h.b16 %v2793
  %v7662 = vunpack.c.l.b16 %v2794
  %v7663 = vunpack.c.h.b16 %v2794
  %v7664 = vunpack.c.l.b16 %v2795
  %v7665 = vunpack.c.h.b16 %v2795
  %v7666 = vunpack.c.l.b16 %v2796
  %v7667 = vunpack.c.h.b16 %v2796
  %v7668 = vunpack.c.l.b16 %v2797
  %v7669 = vunpack.c.h.b16 %v2797
  %v7670 = vunpack.c.l.b16 %v2798
  %v7671 = vunpack.c.h.b16 %v2798
  %v7672 = vunpack.c.l.b16 %v2799
  %v7673 = vunpack.c.h.b16 %v2799
  %v7674 = vunpack.c.l.b16 %v2800
  %v7675 = vunpack.c.h.b16 %v2800
  %v7676 = vunpack.c.l.b16 %v2801
  %v7677 = vunpack.c.h.b16 %v2801
  %v7678 = vunpack.c.l.b16 %v2802
  %v7679 = vunpack.c.h.b16 %v2802
  %v7680 = vunpack.c.l.b16 %v2803
  %v7681 = vunpack.c.h.b16 %v2803
  %v7682 = vunpack.c.l.b16 %v2804
  %v7683 = vunpack.c.h.b16 %v2804
  %v7684 = vunpack.c.l.b16 %v2805
  %v7685 = vunpack.c.h.b16 %v2805
  %v7686 = vunpack.c.l.b16 %v2806
  %v7687 = vunpack.c.h.b16 %v2806
  %v7688 = vunpack.c.l.b16 %v2807
  %v7689 = vunpack.c.h.b16 %v2807
  %v7690 = vunpack.c.l.b16 %v2808
  %v7691 = vunpack.c.h.b16 %v2808
  %v7692 = vunpack.c.l.b16 %v2809
  %v7693 = vunpack.c.h.b16 %v2809
  %v7694 = vunpack.c.l.b16 %v2810
  %v7695 = vunpack.c.h.b16 %v2810
  %v7696 = vunpack.c.l.b16 %v2811
  %v7697 = vunpack.c.h.b16 %v2811
  %v7698 = vunpack.c.l.b16 %v2812
  %v7699 = vunpack.c.h.b16 %v2812
  %v7700 = vunpack.c.l.b16 %v2813
  %v7701 = vunpack.c.h.b16 %v2813
  %v7702 = vunpack.c.l.b16 %v2814
  %v7703 = vunpack.c.h.b16 %v2814
  %v7704 = vunpack.c.l.b16 %v2815
  %v7705 = vunpack.c.h.b16 %v2815
  %v7706 = vunpack.c.l.b16 %v2816
  %v7707 = vunpack.c.h.b16 %v2816
  %v7708 = vunpack.c.l.b16 %v2817
  %v7709 = vunpack.c.h.b16 %v2817
  %v7710 = vunpack.c.l.b16 %v2818
  %v7711 = vunpack.c.h.b16 %v2818
  %v7712 = vunpack.c.l.b16 %v2819
  %v7713 = vunpack.c.h.b16 %v2819
  %v7714 = vunpack.c.l.b16 %v2820
  %v7715 = vunpack.c.h.b16 %v2820
  %v7716 = vunpack.c.l.b16 %v2821
  %v7717 = vunpack.c.h.b16 %v2821
  %v7718 = vunpack.c.l.b16 %v2822
  %v7719 = vunpack.c.h.b16 %v2822
  %v7720 = vunpack.c.l.b16 %v2823
  %v7721 = vunpack.c.h.b16 %v2823
  %v7722 = vunpack.c.l.b16 %v2824
  %v7723 = vunpack.c.h.b16 %v2824
  %v7724 = vunpack.c.l.b16 %v2825
  %v7725 = vunpack.c.h.b16 %v2825
  %v7726 = vunpack.c.l.b16 %v2826
  %v7727 = vunpack.c.h.b16 %v2826
  %v7728 = vunpack.c.l.b16 %v2827
  %v7729 = vunpack.c.h.b16 %v2827
  %v7730 = vunpack.c.l.b16 %v2828
  %v7731 = vunpack.c.h.b16 %v2828
  %v7732 = vunpack.c.l.b16 %v2829
  %v7733 = vunpack.c.h.b16 %v2829
  %v7734 = vunpack.c.l.b16 %v2830
  %v7735 = vunpack.c.h.b16 %v2830
  %v7736 = vunpack.c.l.b16 %v2831
  %v7737 = vunpack.c.h.b16 %v2831
  %v7738 = vunpack.c.l.b16 %v2832
  %v7739 = vunpack.c.h.b16 %v2832
  %v7740 = vunpack.c.l.b16 %v2833
  %v7741 = vunpack.c.h.b16 %v2833
  %v7742 = vunpack.c.l.b16 %v2834
  %v7743 = vunpack.c.h.b16 %v2834
  %v7744 = vunpack.c.l.b16 %v2835
  %v7745 = vunpack.c.h.b16 %v2835
  %v7746 = vunpack.c.l.b16 %v2836
  %v7747 = vunpack.c.h.b16 %v2836
  %v7748 = vunpack.c.l.b16 %v2837
  %v7749 = vunpack.c.h.b16 %v2837
  %v7750 = vunpack.c.l.b16 %v2838
  %v7751 = vunpack.c.h.b16 %v2838
  %v7752 = vpack.c.b16 %v6732, %v6728
  %v7753 = vpack.c.b16 %v6733, %v6729
  %v7754 = vpack.c.b16 %v6734, %v6730
  %v7755 = vpack.c.b16 %v6735, %v6731
  %v7756 = vpack.c.b16 %v6740, %v6736
  %v7757 = vpack.c.b16 %v6741, %v6737
  %v7758 = vpack.c.b16 %v6742, %v6738
  %v7759 = vpack.c.b16 %v6743, %v6739
  %v7760 = vpack.c.b16 %v6748, %v6744
  %v7761 = vpack.c.b16 %v6749, %v6745
  %v7762 = vpack.c.b16 %v6750, %v6746
  %v7763 = vpack.c.b16 %v6751, %v6747
  %v7764 = vpack.c.b16 %v6756, %v6752
  %v7765 = vpack.c.b16 %v6757, %v6753
  %v7766 = vpack.c.b16 %v6758, %v6754
  %v7767 = vpack.c.b16 %v6759, %v6755
  %v7768 = vpack.c.b16 %v6764, %v6760
  %v7769 = vpack.c.b16 %v6765, %v6761
  %v7770 = vpack.c.b16 %v6766, %v6762
  %v7771 = vpack.c.b16 %v6767, %v6763
  %v7772 = vpack.c.b16 %v6772, %v6768
  %v7773 = vpack.c.b16 %v6773, %v6769
  %v7774 = vpack.c.b16 %v6774, %v6770
  %v7775 = vpack.c.b16 %v6775, %v6771
  %v7776 = vpack.c.b16 %v6780, %v6776
  %v7777 = vpack.c.b16 %v6781, %v6777
  %v7778 = vpack.c.b16 %v6782, %v6778
  %v7779 = vpack.c.b16 %v6783, %v6779
  %v7780 = vpack.c.b16 %v6788, %v6784
  %v7781 = vpack.c.b16 %v6789, %v6785
  %v7782 = vpack.c.b16 %v6790, %v6786
  %v7783 = vpack.c.b16 %v6791, %v6787
  %v7784 = vpack.c.b16 %v6796, %v6792
  %v7785 = vpack.c.b16 %v6797, %v6793
  %v7786 = vpack.c.b16 %v6798, %v6794
  %v7787 = vpack.c.b16 %v6799, %v6795
  %v7788 = vpack.c.b16 %v6804, %v6800
  %v7789 = vpack.c.b16 %v6805, %v6801
  %v7790 = vpack.c.b16 %v6806, %v6802
  %v7791 = vpack.c.b16 %v6807, %v6803
  %v7792 = vpack.c.b16 %v6812, %v6808
  %v7793 = vpack.c.b16 %v6813, %v6809
  %v7794 = vpack.c.b16 %v6814, %v6810
  %v7795 = vpack.c.b16 %v6815, %v6811
  %v7796 = vpack.c.b16 %v6820, %v6816
  %v7797 = vpack.c.b16 %v6821, %v6817
  %v7798 = vpack.c.b16 %v6822, %v6818
  %v7799 = vpack.c.b16 %v6823, %v6819
  %v7800 = vpack.c.b16 %v6828, %v6824
  %v7801 = vpack.c.b16 %v6829, %v6825
  %v7802 = vpack.c.b16 %v6830, %v6826
  %v7803 = vpack.c.b16 %v6831, %v6827
  %v7804 = vpack.c.b16 %v6836, %v6832
  %v7805 = vpack.c.b16 %v6837, %v6833
  %v7806 = vpack.c.b16 %v6838, %v6834
  %v7807 = vpack.c.b16 %v6839, %v6835
  %v7808 = vpack.c.b16 %v6844, %v6840
  %v7809 = vpack.c.b16 %v6845, %v6841
  %v7810 = vpack.c.b16 %v6846, %v6842
  %v7811 = vpack.c.b16 %v6847, %v6843
  %v7812 = vpack.c.b16 %v6852, %v6848
  %v7813 = vpack.c.b16 %v6853, %v6849
  %v7814 = vpack.c.b16 %v6854, %v6850
  %v7815 = vpack.c.b16 %v6855, %v6851
  %v7816 = vpack.c.b16 %v6860, %v6856
  %v7817 = vpack.c.b16 %v6861, %v6857
  %v7818 = vpack.c.b16 %v6862, %v6858
  %v7819 = vpack.c.b16 %v6863, %v6859
  %v7820 = vpack.c.b16 %v6868, %v6864
  %v7821 = vpack.c.b16 %v6869, %v6865
  %v7822 = vpack.c.b16 %v6870, %v6866
  %v7823 = vpack.c.b16 %v6871, %v6867
  %v7824 = vpack.c.b16 %v6876, %v6872
  %v7825 = vpack.c.b16 %v6877, %v6873
  %v7826 = vpack.c.b16 %v6878, %v6874
  %v7827 = vpack.c.b16 %v6879, %v6875
  %v7828 = vpack.c.b16 %v6884, %v6880
  %v7829 = vpack.c.b16 %v6885, %v6881
  %v7830 = vpack.c.b16 %v6886, %v6882
  %v7831 = vpack.c.b16 %v6887, %v6883
  %v7832 = vpack.c.b16 %v6892, %v6888
  %v7833 = vpack.c.b16 %v6893, %v6889
  %v7834 = vpack.c.b16 %v6894, %v6890
  %v7835 = vpack.c.b16 %v6895, %v6891
  %v7836 = vpack.c.b16 %v6900, %v6896
  %v7837 = vpack.c.b16 %v6901, %v6897
  %v7838 = vpack.c.b16 %v6902, %v6898
  %v7839 = vpack.c.b16 %v6903, %v6899
  %v7840 = vpack.c.b16 %v6908, %v6904
  %v7841 = vpack.c.b16 %v6909, %v6905
  %v7842 = vpack.c.b16 %v6910, %v6906
  %v7843 = vpack.c.b16 %v6911, %v6907
  %v7844 = vpack.c.b16 %v6916, %v6912
  %v7845 = vpack.c.b16 %v6917, %v6913
  %v7846 = vpack.c.b16 %v6918, %v6914
  %v7847 = vpack.c.b16 %v6919, %v6915
  %v7848 = vpack.c.b16 %v6924, %v6920
  %v7849 = vpack.c.b16 %v6925, %v6921
  %v7850 = vpack.c.b16 %v6926, %v6922
  %v7851 = vpack.c.b16 %v6927, %v6923
  %v7852 = vpack.c.b16 %v6932, %v6928
  %v7853 = vpack.c.b16 %v6933, %v6929
  %v7854 = vpack.c.b16 %v6934, %v6930
  %v7855 = vpack.c.b16 %v6935, %v6931
  %v7856 = vpack.c.b16 %v6940, %v6936
  %v7857 = vpack.c.b16 %v6941, %v6937
  %v7858 = vpack.c.b16 %v6942, %v6938
  %v7859 = vpack.c.b16 %v6943, %v6939
  %v7860 = vpack.c.b16 %v6948, %v6944
  %v7861 = vpack.c.b16 %v6949, %v6945
  %v7862 = vpack.c.b16 %v6950, %v6946
  %v7863 = vpack.c.b16 %v6951, %v6947
  %v7864 = vpack.c.b16 %v6956, %v6952
  %v7865 = vpack.c.b16 %v6957, %v6953
  %v7866 = vpack.c.b16 %v6958, %v6954
  %v7867 = vpack.c.b16 %v6959, %v6955
  %v7868 = vpack.c.b16 %v6964, %v6960
  %v7869 = vpack.c.b16 %v6965, %v6961
  %v7870 = vpack.c.b16 %v6966, %v6962
  %v7871 = vpack.c.b16 %v6967, %v6963
  %v7872 = vpack.c.b16 %v6972, %v6968
  %v7873 = vpack.c.b16 %v6973, %v6969
  %v7874 = vpack.c.b16 %v6974, %v6970
  %v7875 = vpack.c.b16 %v6975, %v6971
  %v7876 = vpack.c.b16 %v6980, %v6976
  %v7877 = vpack.c.b16 %v6981, %v6977
  %v7878 = vpack.c.b16 %v6982, %v6978
  %v7879 = vpack.c.b16 %v6983, %v6979
  %v7880 = vpack.c.b16 %v6988, %v6984
  %v7881 = vpack.c.b16 %v6989, %v6985
  %v7882 = vpack.c.b16 %v6990, %v6986
  %v7883 = vpack.c.b16 %v6991, %v6987
  %v7884 = vpack.c.b16 %v6996, %v6992
  %v7885 = vpack.c.b16 %v6997, %v6993
  %v7886 = vpack.c.b16 %v6998, %v6994
  %v7887 = vpack.c.b16 %v6999, %v6995
  %v7888 = vpack.c.b16 %v7004, %v7000
  %v7889 = vpack.c.b16 %v7005, %v7001
  %v7890 = vpack.c.b16 %v7006, %v7002
  %v7891 = vpack.c.b16 %v7007, %v7003
  %v7892 = vpack.c.b16 %v7012, %v7008
  %v7893 = vpack.c.b16 %v7013, %v7009
  %v7894 = vpack.c.b16 %v7014, %v7010
  %v7895 = vpack.c.b16 %v7015, %v7011
  %v7896 = vpack.c.b16 %v7020, %v7016
  %v7897 = vpack.c.b16 %v7021, %v7017
  %v7898 = vpack.c.b16 %v7022, %v7018
  %v7899 = vpack.c.b16 %v7023, %v7019
  %v7900 = vpack.c.b16 %v7028, %v7024
  %v7901 = vpack.c.b16 %v7029, %v7025
  %v7902 = vpack.c.b16 %v7030, %v7026
  %v7903 = vpack.c.b16 %v7031, %v7027
  %v7904 = vpack.c.b16 %v7036, %v7032
  %v7905 = vpack.c.b16 %v7037, %v7033
  %v7906 = vpack.c.b16 %v7038, %v7034
  %v7907 = vpack.c.b16 %v7039, %v7035
  %v7908 = vpack.c.b16 %v7044, %v7040
  %v7909 = vpack.c.b16 %v7045, %v7041
  %v7910 = vpack.c.b16 %v7046, %v7042
  %v7911 = vpack.c.b16 %v7047, %v7043
  %v7912 = vpack.c.b16 %v7052, %v7048
  %v7913 = vpack.c.b16 %v7053, %v7049
  %v7914 = vpack.c.b16 %v7054, %v7050
  %v7915 = vpack.c.b16 %v7055, %v7051
  %v7916 = vpack.c.b16 %v7060, %v7056
  %v7917 = vpack.c.b16 %v7061, %v7057
  %v7918 = vpack.c.b16 %v7062, %v7058
  %v7919 = vpack.c.b16 %v7063, %v7059
  %v7920 = vpack.c.b16 %v7068, %v7064
  %v7921 = vpack.c.b16 %v7069, %v7065
  %v7922 = vpack.c.b16 %v7070, %v7066
  %v7923 = vpack.c.b16 %v7071, %v7067
  %v7924 = vpack.c.b16 %v7076, %v7072
  %v7925 = vpack.c.b16 %v7077, %v7073
  %v7926 = vpack.c.b16 %v7078, %v7074
  %v7927 = vpack.c.b16 %v7079, %v7075
  %v7928 = vpack.c.b16 %v7084, %v7080
  %v7929 = vpack.c.b16 %v7085, %v7081
  %v7930 = vpack.c.b16 %v7086, %v7082
  %v7931 = vpack.c.b16 %v7087, %v7083
  %v7932 = vpack.c.b16 %v7092, %v7088
  %v7933 = vpack.c.b16 %v7093, %v7089
  %v7934 = vpack.c.b16 %v7094, %v7090
  %v7935 = vpack.c.b16 %v7095, %v7091
  %v7936 = vpack.c.b16 %v7100, %v7096
  %v7937 = vpack.c.b16 %v7101, %v7097
  %v7938 = vpack.c.b16 %v7102, %v7098
  %v7939 = vpack.c.b16 %v7103, %v7099
  %v7940 = vpack.c.b16 %v7108, %v7104
  %v7941 = vpack.c.b16 %v7109, %v7105
  %v7942 = vpack.c.b16 %v7110, %v7106
  %v7943 = vpack.c.b16 %v7111, %v7107
  %v7944 = vpack.c.b16 %v7116, %v7112
  %v7945 = vpack.c.b16 %v7117, %v7113
  %v7946 = vpack.c.b16 %v7118, %v7114
  %v7947 = vpack.c.b16 %v7119, %v7115
  %v7948 = vpack.c.b16 %v7124, %v7120
  %v7949 = vpack.c.b16 %v7125, %v7121
  %v7950 = vpack.c.b16 %v7126, %v7122
  %v7951 = vpack.c.b16 %v7127, %v7123
  %v7952 = vpack.c.b16 %v7132, %v7128
  %v7953 = vpack.c.b16 %v7133, %v7129
  %v7954 = vpack.c.b16 %v7134, %v7130
  %v7955 = vpack.c.b16 %v7135, %v7131
  %v7956 = vpack.c.b16 %v7140, %v7136
  %v7957 = vpack.c.b16 %v7141, %v7137
  %v7958 = vpack.c.b16 %v7142, %v7138
  %v7959 = vpack.c.b16 %v7143, %v7139
  %v7960 = vpack.c.b16 %v7148, %v7144
  %v7961 = vpack.c.b16 %v7149, %v7145
  %v7962 = vpack.c.b16 %v7150, %v7146
  %v7963 = vpack.c.b16 %v7151, %v7147
  %v7964 = vpack.c.b16 %v7156, %v7152
  %v7965 = vpack.c.b16 %v7157, %v7153
  %v7966 = vpack.c.b16 %v7158, %v7154
  %v7967 = vpack.c.b16 %v7159, %v7155
  %v7968 = vpack.c.b16 %v7164, %v7160
  %v7969 = vpack.c.b16 %v7165, %v7161
  %v7970 = vpack.c.b16 %v7166, %v7162
  %v7971 = vpack.c.b16 %v7167, %v7163
  %v7972 = vpack.c.b16 %v7172, %v7168
  %v7973 = vpack.c.b16 %v7173, %v7169
  %v7974 = vpack.c.b16 %v7174, %v7170
  %v7975 = vpack.c.b16 %v7175, %v7171
  %v7976 = vpack.c.b16 %v7180, %v7176
  %v7977 = vpack.c.b16 %v7181, %v7177
  %v7978 = vpack.c.b16 %v7182, %v7178
  %v7979 = vpack.c.b16 %v7183, %v7179
  %v7980 = vpack.c.b16 %v7188, %v7184
  %v7981 = vpack.c.b16 %v7189, %v7185
  %v7982 = vpack.c.b16 %v7190, %v7186
  %v7983 = vpack.c.b16 %v7191, %v7187
  %v7984 = vpack.c.b16 %v7196, %v7192
  %v7985 = vpack.c.b16 %v7197, %v7193
  %v7986 = vpack.c.b16 %v7198, %v7194
  %v7987 = vpack.c.b16 %v7199, %v7195
  %v7988 = vpack.c.b16 %v7204, %v7200
  %v7989 = vpack.c.b16 %v7205, %v7201
  %v7990 = vpack.c.b16 %v7206, %v7202
  %v7991 = vpack.c.b16 %v7207, %v7203
  %v7992 = vpack.c.b16 %v7212, %v7208
  %v7993 = vpack.c.b16 %v7213, %v7209
  %v7994 = vpack.c.b16 %v7214, %v7210
  %v7995 = vpack.c.b16 %v7215, %v7211
  %v7996 = vpack.c.b16 %v7220, %v7216
  %v7997 = vpack.c.b16 %v7221, %v7217
  %v7998 = vpack.c.b16 %v7222, %v7218
  %v7999 = vpack.c.b16 %v7223, %v7219
  %v8000 = vpack.c.b16 %v7228, %v7224
  %v8001 = vpack.c.b16 %v7229, %v7225
  %v8002 = vpack.c.b16 %v7230, %v7226
  %v8003 = vpack.c.b16 %v7231, %v7227
  %v8004 = vpack.c.b16 %v7236, %v7232
  %v8005 = vpack.c.b16 %v7237, %v7233
  %v8006 = vpack.c.b16 %v7238, %v7234
  %v8007 = vpack.c.b16 %v7239, %v7235
  %v8008 = vpack.c.b16 %v7244, %v7240
  %v8009 = vpack.c.b16 %v7245, %v7241
  %v8010 = vpack.c.b16 %v7246, %v7242
  %v8011 = vpack.c.b16 %v7247, %v7243
  %v8012 = vpack.c.b16 %v7252, %v7248
  %v8013 = vpack.c.b16 %v7253, %v7249
  %v8014 = vpack.c.b16 %v7254, %v7250
  %v8015 = vpack.c.b16 %v7255, %v7251
  %v8016 = vpack.c.b16 %v7260, %v7256
  %v8017 = vpack.c.b16 %v7261, %v7257
  %v8018 = vpack.c.b16 %v7262, %v7258
  %v8019 = vpack.c.b16 %v7263, %v7259
  %v8020 = vpack.c.b16 %v7268, %v7264
  %v8021 = vpack.c.b16 %v7269, %v7265
  %v8022 = vpack.c.b16 %v7270, %v7266
  %v8023 = vpack.c.b16 %v7271, %v7267
  %v8024 = vpack.c.b16 %v7276, %v7272
  %v8025 = vpack.c.b16 %v7277, %v7273
  %v8026 = vpack.c.b16 %v7278, %v7274
  %v8027 = vpack.c.b16 %v7279, %v7275
  %v8028 = vpack.c.b16 %v7284, %v7280
  %v8029 = vpack.c.b16 %v7285, %v7281
  %v8030 = vpack.c.b16 %v7286, %v7282
  %v8031 = vpack.c.b16 %v7287, %v7283
  %v8032 = vpack.c.b16 %v7292, %v7288
  %v8033 = vpack.c.b16 %v7293, %v7289
  %v8034 = vpack.c.b16 %v7294, %v7290
  %v8035 = vpack.c.b16 %v7295, %v7291
  %v8036 = vpack.c.b16 %v7300, %v7296
  %v8037 = vpack.c.b16 %v7301, %v7297
  %v8038 = vpack.c.b16 %v7302, %v7298
  %v8039 = vpack.c.b16 %v7303, %v7299
  %v8040 = vpack.c.b16 %v7308, %v7304
  %v8041 = vpack.c.b16 %v7309, %v7305
  %v8042 = vpack.c.b16 %v7310, %v7306
  %v8043 = vpack.c.b16 %v7311, %v7307
  %v8044 = vpack.c.b16 %v7316, %v7312
  %v8045 = vpack.c.b16 %v7317, %v7313
  %v8046 = vpack.c.b16 %v7318, %v7314
  %v8047 = vpack.c.b16 %v7319, %v7315
  %v8048 = vpack.c.b16 %v7324, %v7320
  %v8049 = vpack.c.b16 %v7325, %v7321
  %v8050 = vpack.c.b16 %v7326, %v7322
  %v8051 = vpack.c.b16 %v7327, %v7323
  %v8052 = vpack.c.b16 %v7332, %v7328
  %v8053 = vpack.c.b16 %v7333, %v7329
  %v8054 = vpack.c.b16 %v7334, %v7330
  %v8055 = vpack.c.b16 %v7335, %v7331
  %v8056 = vpack.c.b16 %v7340, %v7336
  %v8057 = vpack.c.b16 %v7341, %v7337
  %v8058 = vpack.c.b16 %v7342, %v7338
  %v8059 = vpack.c.b16 %v7343, %v7339
  %v8060 = vpack.c.b16 %v7348, %v7344
  %v8061 = vpack.c.b16 %v7349, %v7345
  %v8062 = vpack.c.b16 %v7350, %v7346
  %v8063 = vpack.c.b16 %v7351, %v7347
  %v8064 = vpack.c.b16 %v7356, %v7352
  %v8065 = vpack.c.b16 %v7357, %v7353
  %v8066 = vpack.c.b16 %v7358, %v7354
  %v8067 = vpack.c.b16 %v7359, %v7355
  %v8068 = vpack.c.b16 %v7364, %v7360
  %v8069 = vpack.c.b16 %v7365, %v7361
  %v8070 = vpack.c.b16 %v7366, %v7362
  %v8071 = vpack.c.b16 %v7367, %v7363
  %v8072 = vpack.c.b16 %v7372, %v7368
  %v8073 = vpack.c.b16 %v7373, %v7369
  %v8074 = vpack.c.b16 %v7374, %v7370
  %v8075 = vpack.c.b16 %v7375, %v7371
  %v8076 = vpack.c.b16 %v7380, %v7376
  %v8077 = vpack.c.b16 %v7381, %v7377
  %v8078 = vpack.c.b16 %v7382, %v7378
  %v8079 = vpack.c.b16 %v7383, %v7379
  %v8080 = vpack.c.b16 %v7388, %v7384
  %v8081 = vpack.c.b16 %v7389, %v7385
  %v8082 = vpack.c.b16 %v7390, %v7386
  %v8083 = vpack.c.b16 %v7391, %v7387
  %v8084 = vpack.c.b16 %v7396, %v7392
  %v8085 = vpack.c.b16 %v7397, %v7393
  %v8086 = vpack.c.b16 %v7398, %v7394
  %v8087 = vpack.c.b16 %v7399, %v7395
  %v8088 = vpack.c.b16 %v7404, %v7400
  %v8089 = vpack.c.b16 %v7405, %v7401
  %v8090 = vpack.c.b16 %v7406, %v7402
  %v8091 = vpack.c.b16 %v7407, %v7403
  %v8092 = vpack.c.b16 %v7412, %v7408
  %v8093 = vpack.c.b16 %v7413, %v7409
  %v8094 = vpack.c.b16 %v7414, %v7410
  %v8095 = vpack.c.b16 %v7415, %v7411
  %v8096 = vpack.c.b16 %v7420, %v7416
  %v8097 = vpack.c.b16 %v7421, %v7417
  %v8098 = vpack.c.b16 %v7422, %v7418
  %v8099 = vpack.c.b16 %v7423, %v7419
  %v8100 = vpack.c.b16 %v7428, %v7424
  %v8101 = vpack.c.b16 %v7429, %v7425
  %v8102 = vpack.c.b16 %v7430, %v7426
  %v8103 = vpack.c.b16 %v7431, %v7427
  %v8104 = vpack.c.b16 %v7436, %v7432
  %v8105 = vpack.c.b16 %v7437, %v7433
  %v8106 = vpack.c.b16 %v7438, %v7434
  %v8107 = vpack.c.b16 %v7439, %v7435
  %v8108 = vpack.c.b16 %v7444, %v7440
  %v8109 = vpack.c.b16 %v7445, %v7441
  %v8110 = vpack.c.b16 %v7446, %v7442
  %v8111 = vpack.c.b16 %v7447, %v7443
  %v8112 = vpack.c.b16 %v7452, %v7448
  %v8113 = vpack.c.b16 %v7453, %v7449
  %v8114 = vpack.c.b16 %v7454, %v7450
  %v8115 = vpack.c.b16 %v7455, %v7451
  %v8116 = vpack.c.b16 %v7460, %v7456
  %v8117 = vpack.c.b16 %v7461, %v7457
  %v8118 = vpack.c.b16 %v7462, %v7458
  %v8119 = vpack.c.b16 %v7463, %v7459
  %v8120 = vpack.c.b16 %v7468, %v7464
  %v8121 = vpack.c.b16 %v7469, %v7465
  %v8122 = vpack.c.b16 %v7470, %v7466
  %v8123 = vpack.c.b16 %v7471, %v7467
  %v8124 = vpack.c.b16 %v7476, %v7472
  %v8125 = vpack.c.b16 %v7477, %v7473
  %v8126 = vpack.c.b16 %v7478, %v7474
  %v8127 = vpack.c.b16 %v7479, %v7475
  %v8128 = vpack.c.b16 %v7484, %v7480
  %v8129 = vpack.c.b16 %v7485, %v7481
  %v8130 = vpack.c.b16 %v7486, %v7482
  %v8131 = vpack.c.b16 %v7487, %v7483
  %v8132 = vpack.c.b16 %v7492, %v7488
  %v8133 = vpack.c.b16 %v7493, %v7489
  %v8134 = vpack.c.b16 %v7494, %v7490
  %v8135 = vpack.c.b16 %v7495, %v7491
  %v8136 = vpack.c.b16 %v7500, %v7496
  %v8137 = vpack.c.b16 %v7501, %v7497
  %v8138 = vpack.c.b16 %v7502, %v7498
  %v8139 = vpack.c.b16 %v7503, %v7499
  %v8140 = vpack.c.b16 %v7508, %v7504
  %v8141 = vpack.c.b16 %v7509, %v7505
  %v8142 = vpack.c.b16 %v7510, %v7506
  %v8143 = vpack.c.b16 %v7511, %v7507
  %v8144 = vpack.c.b16 %v7516, %v7512
  %v8145 = vpack.c.b16 %v7517, %v7513
  %v8146 = vpack.c.b16 %v7518, %v7514
  %v8147 = vpack.c.b16 %v7519, %v7515
  %v8148 = vpack.c.b16 %v7524, %v7520
  %v8149 = vpack.c.b16 %v7525, %v7521
  %v8150 = vpack.c.b16 %v7526, %v7522
  %v8151 = vpack.c.b16 %v7527, %v7523
  %v8152 = vpack.c.b16 %v7532, %v7528
  %v8153 = vpack.c.b16 %v7533, %v7529
  %v8154 = vpack.c.b16 %v7534, %v7530
  %v8155 = vpack.c.b16 %v7535, %v7531
  %v8156 = vpack.c.b16 %v7540, %v7536
  %v8157 = vpack.c.b16 %v7541, %v7537
  %v8158 = vpack.c.b16 %v7542, %v7538
  %v8159 = vpack.c.b16 %v7543, %v7539
  %v8160 = vpack.c.b16 %v7548, %v7544
  %v8161 = vpack.c.b16 %v7549, %v7545
  %v8162 = vpack.c.b16 %v7550, %v7546
  %v8163 = vpack.c.b16 %v7551, %v7547
  %v8164 = vpack.c.b16 %v7556, %v7552
  %v8165 = vpack.c.b16 %v7557, %v7553
  %v8166 = vpack.c.b16 %v7558, %v7554
  %v8167 = vpack.c.b16 %v7559, %v7555
  %v8168 = vpack.c.b16 %v7564, %v7560
  %v8169 = vpack.c.b16 %v7565, %v7561
  %v8170 = vpack.c.b16 %v7566, %v7562
  %v8171 = vpack.c.b16 %v7567, %v7563
  %v8172 = vpack.c.b16 %v7572, %v7568
  %v8173 = vpack.c.b16 %v7573, %v7569
  %v8174 = vpack.c.b16 %v7574, %v7570
  %v8175 = vpack.c.b16 %v7575, %v7571
  %v8176 = vpack.c.b16 %v7580, %v7576
  %v8177 = vpack.c.b16 %v7581, %v7577
  %v8178 = vpack.c.b16 %v7582, %v7578
  %v8179 = vpack.c.b16 %v7583, %v7579
  %v8180 = vpack.c.b16 %v7588, %v7584
  %v8181 = vpack.c.b16 %v7589, %v7585
  %v8182 = vpack.c.b16 %v7590, %v7586
  %v8183 = vpack.c.b16 %v7591, %v7587
  %v8184 = vpack.c.b16 %v7596, %v7592
  %v8185 = vpack.c.b16 %v7597, %v7593
  %v8186 = vpack.c.b16 %v7598, %v7594
  %v8187 = vpack.c.b16 %v7599, %v7595
  %v8188 = vpack.c.b16 %v7604, %v7600
  %v8189 = vpack.c.b16 %v7605, %v7601
  %v8190 = vpack.c.b16 %v7606, %v7602
  %v8191 = vpack.c.b16 %v7607, %v7603
  %v8192 = vpack.c.b16 %v7612, %v7608
  %v8193 = vpack.c.b16 %v7613, %v7609
  %v8194 = vpack.c.b16 %v7614, %v7610
  %v8195 = vpack.c.b16 %v7615, %v7611
  %v8196 = vpack.c.b16 %v7620, %v7616
  %v8197 = vpack.c.b16 %v7621, %v7617
  %v8198 = vpack.c.b16 %v7622, %v7618
  %v8199 = vpack.c.b16 %v7623, %v7619
  %v8200 = vpack.c.b16 %v7628, %v7624
  %v8201 = vpack.c.b16 %v7629, %v7625
  %v8202 = vpack.c.b16 %v7630, %v7626
  %v8203 = vpack.c.b16 %v7631, %v7627
  %v8204 = vpack.c.b16 %v7636, %v7632
  %v8205 = vpack.c.b16 %v7637, %v7633
  %v8206 = vpack.c.b16 %v7638, %v7634
  %v8207 = vpack.c.b16 %v7639, %v7635
  %v8208 = vpack.c.b16 %v7644, %v7640
  %v8209 = vpack.c.b16 %v7645, %v7641
  %v8210 = vpack.c.b16 %v7646, %v7642
  %v8211 = vpack.c.b16 %v7647, %v7643
  %v8212 = vpack.c.b16 %v7652, %v7648
  %v8213 = vpack.c.b16 %v7653, %v7649
  %v8214 = vpack.c.b16 %v7654, %v7650
  %v8215 = vpack.c.b16 %v7655, %v7651
  %v8216 = vpack.c.b16 %v7660, %v7656
  %v8217 = vpack.c.b16 %v7661, %v7657
  %v8218 = vpack.c.b16 %v7662, %v7658
  %v8219 = vpack.c.b16 %v7663, %v7659
  %v8220 = vpack.c.b16 %v7668, %v7664
  %v8221 = vpack.c.b16 %v7669, %v7665
  %v8222 = vpack.c.b16 %v7670, %v7666
  %v8223 = vpack.c.b16 %v7671, %v7667
  %v8224 = vpack.c.b16 %v7676, %v7672
  %v8225 = vpack.c.b16 %v7677, %v7673
  %v8226 = vpack.c.b16 %v7678, %v7674
  %v8227 = vpack.c.b16 %v7679, %v7675
  %v8228 = vpack.c.b16 %v7684, %v7680
  %v8229 = vpack.c.b16 %v7685, %v7681
  %v8230 = vpack.c.b16 %v7686, %v7682
  %v8231 = vpack.c.b16 %v7687, %v7683
  %v8232 = vpack.c.b16 %v7692, %v7688
  %v8233 = vpack.c.b16 %v7693, %v7689
  %v8234 = vpack.c.b16 %v7694, %v7690
  %v8235 = vpack.c.b16 %v7695, %v7691
  %v8236 = vpack.c.b16 %v7700, %v7696
  %v8237 = vpack.c.b16 %v7701, %v7697
  %v8238 = vpack.c.b16 %v7702, %v7698
  %v8239 = vpack.c.b16 %v7703, %v7699
  %v8240 = vpack.c.b16 %v7708, %v7704
  %v8241 = vpack.c.b16 %v7709, %v7705
  %v8242 = vpack.c.b16 %v7710, %v7706
  %v8243 = vpack.c.b16 %v7711, %v7707
  %v8244 = vpack.c.b16 %v7716, %v7712
  %v8245 = vpack.c.b16 %v7717, %v7713
  %v8246 = vpack.c.b16 %v7718, %v7714
  %v8247 = vpack.c.b16 %v7719, %v7715
  %v8248 = vpack.c.b16 %v7724, %v7720
  %v8249 = vpack.c.b16 %v7725, %v7721
  %v8250 = vpack.c.b16 %v7726, %v7722
  %v8251 = vpack.c.b16 %v7727, %v7723
  %v8252 = vpack.c.b16 %v7732, %v7728
  %v8253 = vpack.c.b16 %v7733, %v7729
  %v8254 = vpack.c.b16 %v7734, %v7730
  %v8255 = vpack.c.b16 %v7735, %v7731
  %v8256 = vpack.c.b16 %v7740, %v7736
  %v8257 = vpack.c.b16 %v7741, %v7737
  %v8258 = vpack.c.b16 %v7742, %v7738
  %v8259 = vpack.c.b16 %v7743, %v7739
  %v8260 = vpack.c.b16 %v7748, %v7744
  %v8261 = vpack.c.b16 %v7749, %v7745
  %v8262 = vpack.c.b16 %v7750, %v7746
  %v8263 = vpack.c.b16 %v7751, %v7747
  %8776 = vmatprep.subr.bf16.mxu0 %v7781
  %8777 = vmatpush1.bf16.msra.mxu0 %v7780
  %8778 = vmatprep.subr.bf16.mxu0 %v7777
  %8779 = vmatpush1.bf16.msra.mxu0 %v7776
  %8780 = vmatprep.subr.bf16.mxu0 %v7773
  %8781 = vmatpush1.bf16.msra.mxu0 %v7772
  %8782 = vmatprep.subr.bf16.mxu0 %v7769
  %8783 = vmatpush1.bf16.msra.mxu0 %v7768
  %8784 = vmatprep.subr.bf16.mxu0 %v7765
  %8785 = vmatpush1.bf16.msra.mxu0 %v7764
  %8786 = vmatprep.subr.bf16.mxu0 %v7761
  %8787 = vmatpush1.bf16.msra.mxu0 %v7760
  %8788 = vmatprep.subr.bf16.mxu0 %v7757
  %8789 = vmatpush1.bf16.msra.mxu0 %v7756
  %8790 = vmatprep.subr.bf16.mxu0 %v7753
  %8791 = vmatpush1.bf16.msra.mxu0 %v7752
  %8792 = vmatprep.subr.bf16.mxu0 %v7813
  %8793 = vmatpush2.bf16.msra.mxu0 %v7812
  %8794 = vmatprep.subr.bf16.mxu0 %v7809
  %8795 = vmatpush2.bf16.msra.mxu0 %v7808
  %8796 = vmatprep.subr.bf16.mxu0 %v7805
  %8797 = vmatpush2.bf16.msra.mxu0 %v7804
  %8798 = vmatprep.subr.bf16.mxu0 %v7801
  %8799 = vmatpush2.bf16.msra.mxu0 %v7800
  %8800 = vmatprep.subr.bf16.mxu0 %v7797
  %8801 = vmatpush2.bf16.msra.mxu0 %v7796
  %8802 = vmatprep.subr.bf16.mxu0 %v7793
  %8803 = vmatpush2.bf16.msra.mxu0 %v7792
  %8804 = vmatprep.subr.bf16.mxu0 %v7789
  %8805 = vmatpush2.bf16.msra.mxu0 %v7788
  %8806 = vmatprep.subr.bf16.mxu0 %v7785
  %8807 = vmatpush2.bf16.msra.mxu0 %v7784
  %8808 = vmatprep.mubr.bf16.mxu0 %v6185
  %8809 = vmatmul.mubr.bf16.gmra.mxu0 %v6184
  %v8810 = vpop.f32.mrf.mxu0
  %v8811 = vadd.f32 0.0, %v8810
  %v8812 = vpop.f32.mrf.mxu0
  %v8813 = vadd.f32 0.0, %v8812
  %v8814 = vpop.f32.mrf.mxu0
  %v8815 = vpop.f32.mrf.mxu0
  %8816 = vdwg.mxu0
  %8817 = vmatprep.subr.bf16.mxu0 %v7845
  %8818 = vmatpush1.bf16.msra.mxu0 %v7844
  %8819 = vmatprep.subr.bf16.mxu0 %v7841
  %8820 = vmatpush1.bf16.msra.mxu0 %v7840
  %8821 = vmatprep.subr.bf16.mxu0 %v7837
  %8822 = vmatpush1.bf16.msra.mxu0 %v7836
  %8823 = vmatprep.subr.bf16.mxu0 %v7833
  %8824 = vmatpush1.bf16.msra.mxu0 %v7832
  %8825 = vmatprep.subr.bf16.mxu0 %v7829
  %8826 = vmatpush1.bf16.msra.mxu0 %v7828
  %8827 = vmatprep.subr.bf16.mxu0 %v7825
  %8828 = vmatpush1.bf16.msra.mxu0 %v7824
  %8829 = vmatprep.subr.bf16.mxu0 %v7821
  %8830 = vmatpush1.bf16.msra.mxu0 %v7820
  %8831 = vmatprep.subr.bf16.mxu0 %v7817
  %8832 = vmatpush1.bf16.msra.mxu0 %v7816
  %8833 = vmatprep.subr.bf16.mxu0 %v7877
  %8834 = vmatpush2.bf16.msra.mxu0 %v7876
  %8835 = vmatprep.subr.bf16.mxu0 %v7873
  %8836 = vmatpush2.bf16.msra.mxu0 %v7872
  %8837 = vmatprep.subr.bf16.mxu0 %v7869
  %8838 = vmatpush2.bf16.msra.mxu0 %v7868
  %8839 = vmatprep.subr.bf16.mxu0 %v7865
  %8840 = vmatpush2.bf16.msra.mxu0 %v7864
  %8841 = vmatprep.subr.bf16.mxu0 %v7861
  %8842 = vmatpush2.bf16.msra.mxu0 %v7860
  %8843 = vmatprep.subr.bf16.mxu0 %v7857
  %8844 = vmatpush2.bf16.msra.mxu0 %v7856
  %8845 = vmatprep.subr.bf16.mxu0 %v7853
  %8846 = vmatpush2.bf16.msra.mxu0 %v7852
  %8847 = vmatprep.subr.bf16.mxu0 %v7849
  %8848 = vmatpush2.bf16.msra.mxu0 %v7848
  %8849 = vmatprep.mubr.bf16.mxu0 %v6187
  %8850 = vmatmul.mubr.bf16.gmra.mxu0 %v6186
  %v8851 = vpop.f32.mrf.mxu0
  %v8852 = vadd.f32 %v8811, %v8851
  %v8853 = vpop.f32.mrf.mxu0
  %v8854 = vadd.f32 %v8813, %v8853
  %v8855 = vpop.f32.mrf.mxu0
  %v8856 = vpop.f32.mrf.mxu0
  %8857 = vdwg.mxu0
  %8858 = vmatprep.subr.bf16.mxu0 %v7909
  %8859 = vmatpush1.bf16.msra.mxu0 %v7908
  %8860 = vmatprep.subr.bf16.mxu0 %v7905
  %8861 = vmatpush1.bf16.msra.mxu0 %v7904
  %8862 = vmatprep.subr.bf16.mxu0 %v7901
  %8863 = vmatpush1.bf16.msra.mxu0 %v7900
  %8864 = vmatprep.subr.bf16.mxu0 %v7897
  %8865 = vmatpush1.bf16.msra.mxu0 %v7896
  %8866 = vmatprep.subr.bf16.mxu0 %v7893
  %8867 = vmatpush1.bf16.msra.mxu0 %v7892
  %8868 = vmatprep.subr.bf16.mxu0 %v7889
  %8869 = vmatpush1.bf16.msra.mxu0 %v7888
  %8870 = vmatprep.subr.bf16.mxu0 %v7885
  %8871 = vmatpush1.bf16.msra.mxu0 %v7884
  %8872 = vmatprep.subr.bf16.mxu0 %v7881
  %8873 = vmatpush1.bf16.msra.mxu0 %v7880
  %8874 = vmatprep.subr.bf16.mxu0 %v7941
  %8875 = vmatpush2.bf16.msra.mxu0 %v7940
  %8876 = vmatprep.subr.bf16.mxu0 %v7937
  %8877 = vmatpush2.bf16.msra.mxu0 %v7936
  %8878 = vmatprep.subr.bf16.mxu0 %v7933
  %8879 = vmatpush2.bf16.msra.mxu0 %v7932
  %8880 = vmatprep.subr.bf16.mxu0 %v7929
  %8881 = vmatpush2.bf16.msra.mxu0 %v7928
  %8882 = vmatprep.subr.bf16.mxu0 %v7925
  %8883 = vmatpush2.bf16.msra.mxu0 %v7924
  %8884 = vmatprep.subr.bf16.mxu0 %v7921
  %8885 = vmatpush2.bf16.msra.mxu0 %v7920
  %8886 = vmatprep.subr.bf16.mxu0 %v7917
  %8887 = vmatpush2.bf16.msra.mxu0 %v7916
  %8888 = vmatprep.subr.bf16.mxu0 %v7913
  %8889 = vmatpush2.bf16.msra.mxu0 %v7912
  %8890 = vmatprep.mubr.bf16.mxu0 %v6189
  %8891 = vmatmul.mubr.bf16.gmra.mxu0 %v6188
  %v8892 = vpop.f32.mrf.mxu0
  %v8893 = vadd.f32 %v8852, %v8892
  %v8894 = vpop.f32.mrf.mxu0
  %v8895 = vadd.f32 %v8854, %v8894
  %v8896 = vpop.f32.mrf.mxu0
  %v8897 = vpop.f32.mrf.mxu0
  %8898 = vdwg.mxu0
  %8899 = vmatprep.subr.bf16.mxu0 %v7973
  %8900 = vmatpush1.bf16.msra.mxu0 %v7972
  %8901 = vmatprep.subr.bf16.mxu0 %v7969
  %8902 = vmatpush1.bf16.msra.mxu0 %v7968
  %8903 = vmatprep.subr.bf16.mxu0 %v7965
  %8904 = vmatpush1.bf16.msra.mxu0 %v7964
  %8905 = vmatprep.subr.bf16.mxu0 %v7961
  %8906 = vmatpush1.bf16.msra.mxu0 %v7960
  %8907 = vmatprep.subr.bf16.mxu0 %v7957
  %8908 = vmatpush1.bf16.msra.mxu0 %v7956
  %8909 = vmatprep.subr.bf16.mxu0 %v7953
  %8910 = vmatpush1.bf16.msra.mxu0 %v7952
  %8911 = vmatprep.subr.bf16.mxu0 %v7949
  %8912 = vmatpush1.bf16.msra.mxu0 %v7948
  %8913 = vmatprep.subr.bf16.mxu0 %v7945
  %8914 = vmatpush1.bf16.msra.mxu0 %v7944
  %8915 = vmatprep.subr.bf16.mxu0 %v8005
  %8916 = vmatpush2.bf16.msra.mxu0 %v8004
  %8917 = vmatprep.subr.bf16.mxu0 %v8001
  %8918 = vmatpush2.bf16.msra.mxu0 %v8000
  %8919 = vmatprep.subr.bf16.mxu0 %v7997
  %8920 = vmatpush2.bf16.msra.mxu0 %v7996
  %8921 = vmatprep.subr.bf16.mxu0 %v7993
  %8922 = vmatpush2.bf16.msra.mxu0 %v7992
  %8923 = vmatprep.subr.bf16.mxu0 %v7989
  %8924 = vmatpush2.bf16.msra.mxu0 %v7988
  %8925 = vmatprep.subr.bf16.mxu0 %v7985
  %8926 = vmatpush2.bf16.msra.mxu0 %v7984
  %8927 = vmatprep.subr.bf16.mxu0 %v7981
  %8928 = vmatpush2.bf16.msra.mxu0 %v7980
  %8929 = vmatprep.subr.bf16.mxu0 %v7977
  %8930 = vmatpush2.bf16.msra.mxu0 %v7976
  %8931 = vmatprep.mubr.bf16.mxu0 %v6191
  %8932 = vmatmul.mubr.bf16.gmra.mxu0 %v6190
  %v8933 = vpop.f32.mrf.mxu0
  %v8934 = vadd.f32 %v8893, %v8933
  %v8935 = vpop.f32.mrf.mxu0
  %v8936 = vadd.f32 %v8895, %v8935
  %v8937 = vpop.f32.mrf.mxu0
  %v8938 = vpop.f32.mrf.mxu0
  %8939 = vdwg.mxu0
  %8940 = vmatprep.subr.bf16.mxu0 %v8037
  %8941 = vmatpush1.bf16.msra.mxu0 %v8036
  %8942 = vmatprep.subr.bf16.mxu0 %v8033
  %8943 = vmatpush1.bf16.msra.mxu0 %v8032
  %8944 = vmatprep.subr.bf16.mxu0 %v8029
  %8945 = vmatpush1.bf16.msra.mxu0 %v8028
  %8946 = vmatprep.subr.bf16.mxu0 %v8025
  %8947 = vmatpush1.bf16.msra.mxu0 %v8024
  %8948 = vmatprep.subr.bf16.mxu0 %v8021
  %8949 = vmatpush1.bf16.msra.mxu0 %v8020
  %8950 = vmatprep.subr.bf16.mxu0 %v8017
  %8951 = vmatpush1.bf16.msra.mxu0 %v8016
  %8952 = vmatprep.subr.bf16.mxu0 %v8013
  %8953 = vmatpush1.bf16.msra.mxu0 %v8012
  %8954 = vmatprep.subr.bf16.mxu0 %v8009
  %8955 = vmatpush1.bf16.msra.mxu0 %v8008
  %8956 = vmatprep.subr.bf16.mxu0 %v8069
  %8957 = vmatpush2.bf16.msra.mxu0 %v8068
  %8958 = vmatprep.subr.bf16.mxu0 %v8065
  %8959 = vmatpush2.bf16.msra.mxu0 %v8064
  %8960 = vmatprep.subr.bf16.mxu0 %v8061
  %8961 = vmatpush2.bf16.msra.mxu0 %v8060
  %8962 = vmatprep.subr.bf16.mxu0 %v8057
  %8963 = vmatpush2.bf16.msra.mxu0 %v8056
  %8964 = vmatprep.subr.bf16.mxu0 %v8053
  %8965 = vmatpush2.bf16.msra.mxu0 %v8052
  %8966 = vmatprep.subr.bf16.mxu0 %v8049
  %8967 = vmatpush2.bf16.msra.mxu0 %v8048
  %8968 = vmatprep.subr.bf16.mxu0 %v8045
  %8969 = vmatpush2.bf16.msra.mxu0 %v8044
  %8970 = vmatprep.subr.bf16.mxu0 %v8041
  %8971 = vmatpush2.bf16.msra.mxu0 %v8040
  %8972 = vmatprep.mubr.bf16.mxu0 %v6193
  %8973 = vmatmul.mubr.bf16.gmra.mxu0 %v6192
  %v8974 = vpop.f32.mrf.mxu0
  %v8975 = vadd.f32 %v8934, %v8974
  %v8976 = vpop.f32.mrf.mxu0
  %v8977 = vadd.f32 %v8936, %v8976
  %v8978 = vpop.f32.mrf.mxu0
  %v8979 = vpop.f32.mrf.mxu0
  %8980 = vdwg.mxu0
  %8981 = vmatprep.subr.bf16.mxu0 %v8101
  %8982 = vmatpush1.bf16.msra.mxu0 %v8100
  %8983 = vmatprep.subr.bf16.mxu0 %v8097
  %8984 = vmatpush1.bf16.msra.mxu0 %v8096
  %8985 = vmatprep.subr.bf16.mxu0 %v8093
  %8986 = vmatpush1.bf16.msra.mxu0 %v8092
  %8987 = vmatprep.subr.bf16.mxu0 %v8089
  %8988 = vmatpush1.bf16.msra.mxu0 %v8088
  %8989 = vmatprep.subr.bf16.mxu0 %v8085
  %8990 = vmatpush1.bf16.msra.mxu0 %v8084
  %8991 = vmatprep.subr.bf16.mxu0 %v8081
  %8992 = vmatpush1.bf16.msra.mxu0 %v8080
  %8993 = vmatprep.subr.bf16.mxu0 %v8077
  %8994 = vmatpush1.bf16.msra.mxu0 %v8076
  %8995 = vmatprep.subr.bf16.mxu0 %v8073
  %8996 = vmatpush1.bf16.msra.mxu0 %v8072
  %8997 = vmatprep.subr.bf16.mxu0 %v8133
  %8998 = vmatpush2.bf16.msra.mxu0 %v8132
  %8999 = vmatprep.subr.bf16.mxu0 %v8129
  %9000 = vmatpush2.bf16.msra.mxu0 %v8128
  %9001 = vmatprep.subr.bf16.mxu0 %v8125
  %9002 = vmatpush2.bf16.msra.mxu0 %v8124
  %9003 = vmatprep.subr.bf16.mxu0 %v8121
  %9004 = vmatpush2.bf16.msra.mxu0 %v8120
  %9005 = vmatprep.subr.bf16.mxu0 %v8117
  %9006 = vmatpush2.bf16.msra.mxu0 %v8116
  %9007 = vmatprep.subr.bf16.mxu0 %v8113
  %9008 = vmatpush2.bf16.msra.mxu0 %v8112
  %9009 = vmatprep.subr.bf16.mxu0 %v8109
  %9010 = vmatpush2.bf16.msra.mxu0 %v8108
  %9011 = vmatprep.subr.bf16.mxu0 %v8105
  %9012 = vmatpush2.bf16.msra.mxu0 %v8104
  %9013 = vmatprep.mubr.bf16.mxu0 %v6195
  %9014 = vmatmul.mubr.bf16.gmra.mxu0 %v6194
  %v9015 = vpop.f32.mrf.mxu0
  %v9016 = vadd.f32 %v8975, %v9015
  %v9017 = vpop.f32.mrf.mxu0
  %v9018 = vadd.f32 %v8977, %v9017
  %v9019 = vpop.f32.mrf.mxu0
  %v9020 = vpop.f32.mrf.mxu0
  %9021 = vdwg.mxu0
  %9022 = vmatprep.subr.bf16.mxu0 %v8165
  %9023 = vmatpush1.bf16.msra.mxu0 %v8164
  %9024 = vmatprep.subr.bf16.mxu0 %v8161
  %9025 = vmatpush1.bf16.msra.mxu0 %v8160
  %9026 = vmatprep.subr.bf16.mxu0 %v8157
  %9027 = vmatpush1.bf16.msra.mxu0 %v8156
  %9028 = vmatprep.subr.bf16.mxu0 %v8153
  %9029 = vmatpush1.bf16.msra.mxu0 %v8152
  %9030 = vmatprep.subr.bf16.mxu0 %v8149
  %9031 = vmatpush1.bf16.msra.mxu0 %v8148
  %9032 = vmatprep.subr.bf16.mxu0 %v8145
  %9033 = vmatpush1.bf16.msra.mxu0 %v8144
  %9034 = vmatprep.subr.bf16.mxu0 %v8141
  %9035 = vmatpush1.bf16.msra.mxu0 %v8140
  %9036 = vmatprep.subr.bf16.mxu0 %v8137
  %9037 = vmatpush1.bf16.msra.mxu0 %v8136
  %9038 = vmatprep.subr.bf16.mxu0 %v8197
  %9039 = vmatpush2.bf16.msra.mxu0 %v8196
  %9040 = vmatprep.subr.bf16.mxu0 %v8193
  %9041 = vmatpush2.bf16.msra.mxu0 %v8192
  %9042 = vmatprep.subr.bf16.mxu0 %v8189
  %9043 = vmatpush2.bf16.msra.mxu0 %v8188
  %9044 = vmatprep.subr.bf16.mxu0 %v8185
  %9045 = vmatpush2.bf16.msra.mxu0 %v8184
  %9046 = vmatprep.subr.bf16.mxu0 %v8181
  %9047 = vmatpush2.bf16.msra.mxu0 %v8180
  %9048 = vmatprep.subr.bf16.mxu0 %v8177
  %9049 = vmatpush2.bf16.msra.mxu0 %v8176
  %9050 = vmatprep.subr.bf16.mxu0 %v8173
  %9051 = vmatpush2.bf16.msra.mxu0 %v8172
  %9052 = vmatprep.subr.bf16.mxu0 %v8169
  %9053 = vmatpush2.bf16.msra.mxu0 %v8168
  %9054 = vmatprep.mubr.bf16.mxu0 %v6197
  %9055 = vmatmul.mubr.bf16.gmra.mxu0 %v6196
  %v9056 = vpop.f32.mrf.mxu0
  %v9057 = vadd.f32 %v9016, %v9056
  %v9058 = vpop.f32.mrf.mxu0
  %v9059 = vadd.f32 %v9018, %v9058
  %v9060 = vpop.f32.mrf.mxu0
  %v9061 = vpop.f32.mrf.mxu0
  %9062 = vdwg.mxu0
  %9063 = vmatprep.subr.bf16.mxu0 %v8229
  %9064 = vmatpush1.bf16.msra.mxu0 %v8228
  %9065 = vmatprep.subr.bf16.mxu0 %v8225
  %9066 = vmatpush1.bf16.msra.mxu0 %v8224
  %9067 = vmatprep.subr.bf16.mxu0 %v8221
  %9068 = vmatpush1.bf16.msra.mxu0 %v8220
  %9069 = vmatprep.subr.bf16.mxu0 %v8217
  %9070 = vmatpush1.bf16.msra.mxu0 %v8216
  %9071 = vmatprep.subr.bf16.mxu0 %v8213
  %9072 = vmatpush1.bf16.msra.mxu0 %v8212
  %9073 = vmatprep.subr.bf16.mxu0 %v8209
  %9074 = vmatpush1.bf16.msra.mxu0 %v8208
  %9075 = vmatprep.subr.bf16.mxu0 %v8205
  %9076 = vmatpush1.bf16.msra.mxu0 %v8204
  %9077 = vmatprep.subr.bf16.mxu0 %v8201
  %9078 = vmatpush1.bf16.msra.mxu0 %v8200
  %9079 = vmatprep.subr.bf16.mxu0 %v8261
  %9080 = vmatpush2.bf16.msra.mxu0 %v8260
  %9081 = vmatprep.subr.bf16.mxu0 %v8257
  %9082 = vmatpush2.bf16.msra.mxu0 %v8256
  %9083 = vmatprep.subr.bf16.mxu0 %v8253
  %9084 = vmatpush2.bf16.msra.mxu0 %v8252
  %9085 = vmatprep.subr.bf16.mxu0 %v8249
  %9086 = vmatpush2.bf16.msra.mxu0 %v8248
  %9087 = vmatprep.subr.bf16.mxu0 %v8245
  %9088 = vmatpush2.bf16.msra.mxu0 %v8244
  %9089 = vmatprep.subr.bf16.mxu0 %v8241
  %9090 = vmatpush2.bf16.msra.mxu0 %v8240
  %9091 = vmatprep.subr.bf16.mxu0 %v8237
  %9092 = vmatpush2.bf16.msra.mxu0 %v8236
  %9093 = vmatprep.subr.bf16.mxu0 %v8233
  %9094 = vmatpush2.bf16.msra.mxu0 %v8232
  %9095 = vmatprep.mubr.bf16.mxu0 %v6199
  %9096 = vmatmul.mubr.bf16.gmra.mxu0 %v6198
  %v9097 = vpop.f32.mrf.mxu0
  %v9098 = vadd.f32 %v9057, %v9097
  %v9099 = vpop.f32.mrf.mxu0
  %v9100 = vadd.f32 %v9059, %v9099
  %v9101 = vpop.f32.mrf.mxu0
  %v9102 = vpop.f32.mrf.mxu0
  %9103 = vdwg.mxu0
  %9104 = vmatprep.subr.bf16.mxu0 %v7783
  %9105 = vmatpush1.bf16.msra.mxu0 %v7782
  %9106 = vmatprep.subr.bf16.mxu0 %v7779
  %9107 = vmatpush1.bf16.msra.mxu0 %v7778
  %9108 = vmatprep.subr.bf16.mxu0 %v7775
  %9109 = vmatpush1.bf16.msra.mxu0 %v7774
  %9110 = vmatprep.subr.bf16.mxu0 %v7771
  %9111 = vmatpush1.bf16.msra.mxu0 %v7770
  %9112 = vmatprep.subr.bf16.mxu0 %v7767
  %9113 = vmatpush1.bf16.msra.mxu0 %v7766
  %9114 = vmatprep.subr.bf16.mxu0 %v7763
  %9115 = vmatpush1.bf16.msra.mxu0 %v7762
  %9116 = vmatprep.subr.bf16.mxu0 %v7759
  %9117 = vmatpush1.bf16.msra.mxu0 %v7758
  %9118 = vmatprep.subr.bf16.mxu0 %v7755
  %9119 = vmatpush1.bf16.msra.mxu0 %v7754
  %9120 = vmatprep.subr.bf16.mxu0 %v7815
  %9121 = vmatpush2.bf16.msra.mxu0 %v7814
  %9122 = vmatprep.subr.bf16.mxu0 %v7811
  %9123 = vmatpush2.bf16.msra.mxu0 %v7810
  %9124 = vmatprep.subr.bf16.mxu0 %v7807
  %9125 = vmatpush2.bf16.msra.mxu0 %v7806
  %9126 = vmatprep.subr.bf16.mxu0 %v7803
  %9127 = vmatpush2.bf16.msra.mxu0 %v7802
  %9128 = vmatprep.subr.bf16.mxu0 %v7799
  %9129 = vmatpush2.bf16.msra.mxu0 %v7798
  %9130 = vmatprep.subr.bf16.mxu0 %v7795
  %9131 = vmatpush2.bf16.msra.mxu0 %v7794
  %9132 = vmatprep.subr.bf16.mxu0 %v7791
  %9133 = vmatpush2.bf16.msra.mxu0 %v7790
  %9134 = vmatprep.subr.bf16.mxu0 %v7787
  %9135 = vmatpush2.bf16.msra.mxu0 %v7786
  %9136 = vmatprep.mubr.bf16.mxu0 %v6185
  %9137 = vmatmul.mubr.bf16.gmra.mxu0 %v6184
  %v9138 = vpop.f32.mrf.mxu0
  %v9139 = vadd.f32 0.0, %v9138
  %v9140 = vpop.f32.mrf.mxu0
  %v9141 = vadd.f32 0.0, %v9140
  %v9142 = vpop.f32.mrf.mxu0
  %v9143 = vpop.f32.mrf.mxu0
  %9144 = vdwg.mxu0
  %9145 = vmatprep.subr.bf16.mxu0 %v7847
  %9146 = vmatpush1.bf16.msra.mxu0 %v7846
  %9147 = vmatprep.subr.bf16.mxu0 %v7843
  %9148 = vmatpush1.bf16.msra.mxu0 %v7842
  %9149 = vmatprep.subr.bf16.mxu0 %v7839
  %9150 = vmatpush1.bf16.msra.mxu0 %v7838
  %9151 = vmatprep.subr.bf16.mxu0 %v7835
  %9152 = vmatpush1.bf16.msra.mxu0 %v7834
  %9153 = vmatprep.subr.bf16.mxu0 %v7831
  %9154 = vmatpush1.bf16.msra.mxu0 %v7830
  %9155 = vmatprep.subr.bf16.mxu0 %v7827
  %9156 = vmatpush1.bf16.msra.mxu0 %v7826
  %9157 = vmatprep.subr.bf16.mxu0 %v7823
  %9158 = vmatpush1.bf16.msra.mxu0 %v7822
  %9159 = vmatprep.subr.bf16.mxu0 %v7819
  %9160 = vmatpush1.bf16.msra.mxu0 %v7818
  %9161 = vmatprep.subr.bf16.mxu0 %v7879
  %9162 = vmatpush2.bf16.msra.mxu0 %v7878
  %9163 = vmatprep.subr.bf16.mxu0 %v7875
  %9164 = vmatpush2.bf16.msra.mxu0 %v7874
  %9165 = vmatprep.subr.bf16.mxu0 %v7871
  %9166 = vmatpush2.bf16.msra.mxu0 %v7870
  %9167 = vmatprep.subr.bf16.mxu0 %v7867
  %9168 = vmatpush2.bf16.msra.mxu0 %v7866
  %9169 = vmatprep.subr.bf16.mxu0 %v7863
  %9170 = vmatpush2.bf16.msra.mxu0 %v7862
  %9171 = vmatprep.subr.bf16.mxu0 %v7859
  %9172 = vmatpush2.bf16.msra.mxu0 %v7858
  %9173 = vmatprep.subr.bf16.mxu0 %v7855
  %9174 = vmatpush2.bf16.msra.mxu0 %v7854
  %9175 = vmatprep.subr.bf16.mxu0 %v7851
  %9176 = vmatpush2.bf16.msra.mxu0 %v7850
  %9177 = vmatprep.mubr.bf16.mxu0 %v6187
  %9178 = vmatmul.mubr.bf16.gmra.mxu0 %v6186
  %v9179 = vpop.f32.mrf.mxu0
  %v9180 = vadd.f32 %v9139, %v9179
  %v9181 = vpop.f32.mrf.mxu0
  %v9182 = vadd.f32 %v9141, %v9181
  %v9183 = vpop.f32.mrf.mxu0
  %v9184 = vpop.f32.mrf.mxu0
  %9185 = vdwg.mxu0
  %9186 = vmatprep.subr.bf16.mxu0 %v7911
  %9187 = vmatpush1.bf16.msra.mxu0 %v7910
  %9188 = vmatprep.subr.bf16.mxu0 %v7907
  %9189 = vmatpush1.bf16.msra.mxu0 %v7906
  %9190 = vmatprep.subr.bf16.mxu0 %v7903
  %9191 = vmatpush1.bf16.msra.mxu0 %v7902
  %9192 = vmatprep.subr.bf16.mxu0 %v7899
  %9193 = vmatpush1.bf16.msra.mxu0 %v7898
  %9194 = vmatprep.subr.bf16.mxu0 %v7895
  %9195 = vmatpush1.bf16.msra.mxu0 %v7894
  %9196 = vmatprep.subr.bf16.mxu0 %v7891
  %9197 = vmatpush1.bf16.msra.mxu0 %v7890
  %9198 = vmatprep.subr.bf16.mxu0 %v7887
  %9199 = vmatpush1.bf16.msra.mxu0 %v7886
  %9200 = vmatprep.subr.bf16.mxu0 %v7883
  %9201 = vmatpush1.bf16.msra.mxu0 %v7882
  %9202 = vmatprep.subr.bf16.mxu0 %v7943
  %9203 = vmatpush2.bf16.msra.mxu0 %v7942
  %9204 = vmatprep.subr.bf16.mxu0 %v7939
  %9205 = vmatpush2.bf16.msra.mxu0 %v7938
  %9206 = vmatprep.subr.bf16.mxu0 %v7935
  %9207 = vmatpush2.bf16.msra.mxu0 %v7934
  %9208 = vmatprep.subr.bf16.mxu0 %v7931
  %9209 = vmatpush2.bf16.msra.mxu0 %v7930
  %9210 = vmatprep.subr.bf16.mxu0 %v7927
  %9211 = vmatpush2.bf16.msra.mxu0 %v7926
  %9212 = vmatprep.subr.bf16.mxu0 %v7923
  %9213 = vmatpush2.bf16.msra.mxu0 %v7922
  %9214 = vmatprep.subr.bf16.mxu0 %v7919
  %9215 = vmatpush2.bf16.msra.mxu0 %v7918
  %9216 = vmatprep.subr.bf16.mxu0 %v7915
  %9217 = vmatpush2.bf16.msra.mxu0 %v7914
  %9218 = vmatprep.mubr.bf16.mxu0 %v6189
  %9219 = vmatmul.mubr.bf16.gmra.mxu0 %v6188
  %v9220 = vpop.f32.mrf.mxu0
  %v9221 = vadd.f32 %v9180, %v9220
  %v9222 = vpop.f32.mrf.mxu0
  %v9223 = vadd.f32 %v9182, %v9222
  %v9224 = vpop.f32.mrf.mxu0
  %v9225 = vpop.f32.mrf.mxu0
  %9226 = vdwg.mxu0
  %9227 = vmatprep.subr.bf16.mxu0 %v7975
  %9228 = vmatpush1.bf16.msra.mxu0 %v7974
  %9229 = vmatprep.subr.bf16.mxu0 %v7971
  %9230 = vmatpush1.bf16.msra.mxu0 %v7970
  %9231 = vmatprep.subr.bf16.mxu0 %v7967
  %9232 = vmatpush1.bf16.msra.mxu0 %v7966
  %9233 = vmatprep.subr.bf16.mxu0 %v7963
  %9234 = vmatpush1.bf16.msra.mxu0 %v7962
  %9235 = vmatprep.subr.bf16.mxu0 %v7959
  %9236 = vmatpush1.bf16.msra.mxu0 %v7958
  %9237 = vmatprep.subr.bf16.mxu0 %v7955
  %9238 = vmatpush1.bf16.msra.mxu0 %v7954
  %9239 = vmatprep.subr.bf16.mxu0 %v7951
  %9240 = vmatpush1.bf16.msra.mxu0 %v7950
  %9241 = vmatprep.subr.bf16.mxu0 %v7947
  %9242 = vmatpush1.bf16.msra.mxu0 %v7946
  %9243 = vmatprep.subr.bf16.mxu0 %v8007
  %9244 = vmatpush2.bf16.msra.mxu0 %v8006
  %9245 = vmatprep.subr.bf16.mxu0 %v8003
  %9246 = vmatpush2.bf16.msra.mxu0 %v8002
  %9247 = vmatprep.subr.bf16.mxu0 %v7999
  %9248 = vmatpush2.bf16.msra.mxu0 %v7998
  %9249 = vmatprep.subr.bf16.mxu0 %v7995
  %9250 = vmatpush2.bf16.msra.mxu0 %v7994
  %9251 = vmatprep.subr.bf16.mxu0 %v7991
  %9252 = vmatpush2.bf16.msra.mxu0 %v7990
  %9253 = vmatprep.subr.bf16.mxu0 %v7987
  %9254 = vmatpush2.bf16.msra.mxu0 %v7986
  %9255 = vmatprep.subr.bf16.mxu0 %v7983
  %9256 = vmatpush2.bf16.msra.mxu0 %v7982
  %9257 = vmatprep.subr.bf16.mxu0 %v7979
  %9258 = vmatpush2.bf16.msra.mxu0 %v7978
  %9259 = vmatprep.mubr.bf16.mxu0 %v6191
  %9260 = vmatmul.mubr.bf16.gmra.mxu0 %v6190
  %v9261 = vpop.f32.mrf.mxu0
  %v9262 = vadd.f32 %v9221, %v9261
  %v9263 = vpop.f32.mrf.mxu0
  %v9264 = vadd.f32 %v9223, %v9263
  %v9265 = vpop.f32.mrf.mxu0
  %v9266 = vpop.f32.mrf.mxu0
  %9267 = vdwg.mxu0
  %9268 = vmatprep.subr.bf16.mxu0 %v8039
  %9269 = vmatpush1.bf16.msra.mxu0 %v8038
  %9270 = vmatprep.subr.bf16.mxu0 %v8035
  %9271 = vmatpush1.bf16.msra.mxu0 %v8034
  %9272 = vmatprep.subr.bf16.mxu0 %v8031
  %9273 = vmatpush1.bf16.msra.mxu0 %v8030
  %9274 = vmatprep.subr.bf16.mxu0 %v8027
  %9275 = vmatpush1.bf16.msra.mxu0 %v8026
  %9276 = vmatprep.subr.bf16.mxu0 %v8023
  %9277 = vmatpush1.bf16.msra.mxu0 %v8022
  %9278 = vmatprep.subr.bf16.mxu0 %v8019
  %9279 = vmatpush1.bf16.msra.mxu0 %v8018
  %9280 = vmatprep.subr.bf16.mxu0 %v8015
  %9281 = vmatpush1.bf16.msra.mxu0 %v8014
  %9282 = vmatprep.subr.bf16.mxu0 %v8011
  %9283 = vmatpush1.bf16.msra.mxu0 %v8010
  %9284 = vmatprep.subr.bf16.mxu0 %v8071
  %9285 = vmatpush2.bf16.msra.mxu0 %v8070
  %9286 = vmatprep.subr.bf16.mxu0 %v8067
  %9287 = vmatpush2.bf16.msra.mxu0 %v8066
  %9288 = vmatprep.subr.bf16.mxu0 %v8063
  %9289 = vmatpush2.bf16.msra.mxu0 %v8062
  %9290 = vmatprep.subr.bf16.mxu0 %v8059
  %9291 = vmatpush2.bf16.msra.mxu0 %v8058
  %9292 = vmatprep.subr.bf16.mxu0 %v8055
  %9293 = vmatpush2.bf16.msra.mxu0 %v8054
  %9294 = vmatprep.subr.bf16.mxu0 %v8051
  %9295 = vmatpush2.bf16.msra.mxu0 %v8050
  %9296 = vmatprep.subr.bf16.mxu0 %v8047
  %9297 = vmatpush2.bf16.msra.mxu0 %v8046
  %9298 = vmatprep.subr.bf16.mxu0 %v8043
  %9299 = vmatpush2.bf16.msra.mxu0 %v8042
  %9300 = vmatprep.mubr.bf16.mxu0 %v6193
  %9301 = vmatmul.mubr.bf16.gmra.mxu0 %v6192
  %v9302 = vpop.f32.mrf.mxu0
  %v9303 = vadd.f32 %v9262, %v9302
  %v9304 = vpop.f32.mrf.mxu0
  %v9305 = vadd.f32 %v9264, %v9304
  %v9306 = vpop.f32.mrf.mxu0
  %v9307 = vpop.f32.mrf.mxu0
  %9308 = vdwg.mxu0
  %9309 = vmatprep.subr.bf16.mxu0 %v8103
  %9310 = vmatpush1.bf16.msra.mxu0 %v8102
  %9311 = vmatprep.subr.bf16.mxu0 %v8099
  %9312 = vmatpush1.bf16.msra.mxu0 %v8098
  %9313 = vmatprep.subr.bf16.mxu0 %v8095
  %9314 = vmatpush1.bf16.msra.mxu0 %v8094
  %9315 = vmatprep.subr.bf16.mxu0 %v8091
  %9316 = vmatpush1.bf16.msra.mxu0 %v8090
  %9317 = vmatprep.subr.bf16.mxu0 %v8087
  %9318 = vmatpush1.bf16.msra.mxu0 %v8086
  %9319 = vmatprep.subr.bf16.mxu0 %v8083
  %9320 = vmatpush1.bf16.msra.mxu0 %v8082
  %9321 = vmatprep.subr.bf16.mxu0 %v8079
  %9322 = vmatpush1.bf16.msra.mxu0 %v8078
  %9323 = vmatprep.subr.bf16.mxu0 %v8075
  %9324 = vmatpush1.bf16.msra.mxu0 %v8074
  %9325 = vmatprep.subr.bf16.mxu0 %v8135
  %9326 = vmatpush2.bf16.msra.mxu0 %v8134
  %9327 = vmatprep.subr.bf16.mxu0 %v8131
  %9328 = vmatpush2.bf16.msra.mxu0 %v8130
  %9329 = vmatprep.subr.bf16.mxu0 %v8127
  %9330 = vmatpush2.bf16.msra.mxu0 %v8126
  %9331 = vmatprep.subr.bf16.mxu0 %v8123
  %9332 = vmatpush2.bf16.msra.mxu0 %v8122
  %9333 = vmatprep.subr.bf16.mxu0 %v8119
  %9334 = vmatpush2.bf16.msra.mxu0 %v8118
  %9335 = vmatprep.subr.bf16.mxu0 %v8115
  %9336 = vmatpush2.bf16.msra.mxu0 %v8114
  %9337 = vmatprep.subr.bf16.mxu0 %v8111
  %9338 = vmatpush2.bf16.msra.mxu0 %v8110
  %9339 = vmatprep.subr.bf16.mxu0 %v8107
  %9340 = vmatpush2.bf16.msra.mxu0 %v8106
  %9341 = vmatprep.mubr.bf16.mxu0 %v6195
  %9342 = vmatmul.mubr.bf16.gmra.mxu0 %v6194
  %v9343 = vpop.f32.mrf.mxu0
  %v9344 = vadd.f32 %v9303, %v9343
  %v9345 = vpop.f32.mrf.mxu0
  %v9346 = vadd.f32 %v9305, %v9345
  %v9347 = vpop.f32.mrf.mxu0
  %v9348 = vpop.f32.mrf.mxu0
  %9349 = vdwg.mxu0
  %9350 = vmatprep.subr.bf16.mxu0 %v8167
  %9351 = vmatpush1.bf16.msra.mxu0 %v8166
  %9352 = vmatprep.subr.bf16.mxu0 %v8163
  %9353 = vmatpush1.bf16.msra.mxu0 %v8162
  %9354 = vmatprep.subr.bf16.mxu0 %v8159
  %9355 = vmatpush1.bf16.msra.mxu0 %v8158
  %9356 = vmatprep.subr.bf16.mxu0 %v8155
  %9357 = vmatpush1.bf16.msra.mxu0 %v8154
  %9358 = vmatprep.subr.bf16.mxu0 %v8151
  %9359 = vmatpush1.bf16.msra.mxu0 %v8150
  %9360 = vmatprep.subr.bf16.mxu0 %v8147
  %9361 = vmatpush1.bf16.msra.mxu0 %v8146
  %9362 = vmatprep.subr.bf16.mxu0 %v8143
  %9363 = vmatpush1.bf16.msra.mxu0 %v8142
  %9364 = vmatprep.subr.bf16.mxu0 %v8139
  %9365 = vmatpush1.bf16.msra.mxu0 %v8138
  %9366 = vmatprep.subr.bf16.mxu0 %v8199
  %9367 = vmatpush2.bf16.msra.mxu0 %v8198
  %9368 = vmatprep.subr.bf16.mxu0 %v8195
  %9369 = vmatpush2.bf16.msra.mxu0 %v8194
  %9370 = vmatprep.subr.bf16.mxu0 %v8191
  %9371 = vmatpush2.bf16.msra.mxu0 %v8190
  %9372 = vmatprep.subr.bf16.mxu0 %v8187
  %9373 = vmatpush2.bf16.msra.mxu0 %v8186
  %9374 = vmatprep.subr.bf16.mxu0 %v8183
  %9375 = vmatpush2.bf16.msra.mxu0 %v8182
  %9376 = vmatprep.subr.bf16.mxu0 %v8179
  %9377 = vmatpush2.bf16.msra.mxu0 %v8178
  %9378 = vmatprep.subr.bf16.mxu0 %v8175
  %9379 = vmatpush2.bf16.msra.mxu0 %v8174
  %9380 = vmatprep.subr.bf16.mxu0 %v8171
  %9381 = vmatpush2.bf16.msra.mxu0 %v8170
  %9382 = vmatprep.mubr.bf16.mxu0 %v6197
  %9383 = vmatmul.mubr.bf16.gmra.mxu0 %v6196
  %v9384 = vpop.f32.mrf.mxu0
  %v9385 = vadd.f32 %v9344, %v9384
  %v9386 = vpop.f32.mrf.mxu0
  %v9387 = vadd.f32 %v9346, %v9386
  %v9388 = vpop.f32.mrf.mxu0
  %v9389 = vpop.f32.mrf.mxu0
  %9390 = vdwg.mxu0
  %9391 = vmatprep.subr.bf16.mxu0 %v8231
  %9392 = vmatpush1.bf16.msra.mxu0 %v8230
  %9393 = vmatprep.subr.bf16.mxu0 %v8227
  %9394 = vmatpush1.bf16.msra.mxu0 %v8226
  %9395 = vmatprep.subr.bf16.mxu0 %v8223
  %9396 = vmatpush1.bf16.msra.mxu0 %v8222
  %9397 = vmatprep.subr.bf16.mxu0 %v8219
  %9398 = vmatpush1.bf16.msra.mxu0 %v8218
  %9399 = vmatprep.subr.bf16.mxu0 %v8215
  %9400 = vmatpush1.bf16.msra.mxu0 %v8214
  %9401 = vmatprep.subr.bf16.mxu0 %v8211
  %9402 = vmatpush1.bf16.msra.mxu0 %v8210
  %9403 = vmatprep.subr.bf16.mxu0 %v8207
  %9404 = vmatpush1.bf16.msra.mxu0 %v8206
  %9405 = vmatprep.subr.bf16.mxu0 %v8203
  %9406 = vmatpush1.bf16.msra.mxu0 %v8202
  %9407 = vmatprep.subr.bf16.mxu0 %v8263
  %9408 = vmatpush2.bf16.msra.mxu0 %v8262
  %9409 = vmatprep.subr.bf16.mxu0 %v8259
  %9410 = vmatpush2.bf16.msra.mxu0 %v8258
  %9411 = vmatprep.subr.bf16.mxu0 %v8255
  %9412 = vmatpush2.bf16.msra.mxu0 %v8254
  %9413 = vmatprep.subr.bf16.mxu0 %v8251
  %9414 = vmatpush2.bf16.msra.mxu0 %v8250
  %9415 = vmatprep.subr.bf16.mxu0 %v8247
  %9416 = vmatpush2.bf16.msra.mxu0 %v8246
  %9417 = vmatprep.subr.bf16.mxu0 %v8243
  %9418 = vmatpush2.bf16.msra.mxu0 %v8242
  %9419 = vmatprep.subr.bf16.mxu0 %v8239
  %9420 = vmatpush2.bf16.msra.mxu0 %v8238
  %9421 = vmatprep.subr.bf16.mxu0 %v8235
  %9422 = vmatpush2.bf16.msra.mxu0 %v8234
  %9423 = vmatprep.mubr.bf16.mxu0 %v6199
  %9424 = vmatmul.mubr.bf16.gmra.mxu0 %v6198
  %v9425 = vpop.f32.mrf.mxu0
  %v9426 = vadd.f32 %v9385, %v9425
  %v9427 = vpop.f32.mrf.mxu0
  %v9428 = vadd.f32 %v9387, %v9427
  %v9429 = vpop.f32.mrf.mxu0
  %v9430 = vpop.f32.mrf.mxu0
  %9431 = vdwg.mxu0
  %v9432 = vmul.f32 %v9098, 0.020408163
  %v9433 = vmul.f32 %v9100, 0.020408163
  %v9434 = vmul.f32 %v9426, 0.020408163
  %v9435 = vmul.f32 %v9428, 0.020408163
  %v9436 = vld [vmem:[%s2] sm:$0xf]
  %v9438 = vlaneseq
  %v9439 = vshrl.u32 %v9438, 7
  %v9440 = vsub.s32 0, %v9439
  %v9441 = vrot.slane %v9436, %v9440
  %v9442 = vlaneseq
  %v9443 = vshrl.u32 %v9442, 7
  %v9444 = vsub.s32 1, %v9443
  %v9445 = vrot.slane %v9436, %v9444
  %v9446 = vlaneseq
  %v9447 = vshrl.u32 %v9446, 7
  %v9448 = vsub.s32 2, %v9447
  %v9449 = vrot.slane %v9436, %v9448
  %v9450 = vlaneseq
  %v9451 = vshrl.u32 %v9450, 7
  %v9452 = vsub.s32 3, %v9451
  %v9453 = vrot.slane %v9436, %v9452
  %v9458 = vadd.f32 %v9432, %v9441
  %v9459 = vadd.f32 %v9433, %v9445
  %v9460 = vadd.f32 %v9434, %v9449
  %v9461 = vadd.f32 %v9435, %v9453
  %v9462 = vmax.f32 %v9458, 0.0
  %v9463 = vmax.f32 %v9459, 0.0
  %v9464 = vmax.f32 %v9460, 0.0
  %v9465 = vmax.f32 %v9461, 0.0
  %v9466 = vld [vmem:[%s3] sm:$0xf]
  %v9467 = vunpack.c.l.bf16 %v9466
  %v9469 = vlaneseq
  %v9470 = vshrl.u32 %v9469, 7
  %v9471 = vsub.s32 0, %v9470
  %v9472 = vrot.slane %v9467, %v9471
  %v9473 = vlaneseq
  %v9474 = vshrl.u32 %v9473, 7
  %v9475 = vsub.s32 2, %v9474
  %v9476 = vrot.slane %v9467, %v9475
  %v9477 = vlaneseq
  %v9478 = vshrl.u32 %v9477, 7
  %v9479 = vsub.s32 4, %v9478
  %v9480 = vrot.slane %v9467, %v9479
  %v9481 = vlaneseq
  %v9482 = vshrl.u32 %v9481, 7
  %v9483 = vsub.s32 6, %v9482
  %v9484 = vrot.slane %v9467, %v9483
  %v9489 = vlaneseq
  %v9490 = vshrl.u32 %v9489, 7
  %v9491 = vsub.s32 0, %v9490
  %v9492 = vrot.slane %v9472, %v9491
  %v9493 = vlaneseq
  %v9494 = vshrl.u32 %v9493, 7
  %v9495 = vsub.s32 0, %v9494
  %v9496 = vrot.slane %v9476, %v9495
  %v9497 = vlaneseq
  %v9498 = vshrl.u32 %v9497, 7
  %v9499 = vsub.s32 0, %v9498
  %v9500 = vrot.slane %v9480, %v9499
  %v9501 = vlaneseq
  %v9502 = vshrl.u32 %v9501, 7
  %v9503 = vsub.s32 0, %v9502
  %v9504 = vrot.slane %v9484, %v9503
  %v9505 = vmul.f32 %v9462, %v9492
  %v9506 = vmul.f32 %v9463, %v9496
  %v9507 = vmul.f32 %v9464, %v9500
  %v9508 = vmul.f32 %v9465, %v9504
  %vm9509 = vcmask 1041408
  %v9510 = vsel %vm9509, %v9505, 0.0
  %v9511 = vsel %vm9509, %v9506, 0.0
  %v9512 = vadd.f32 %v9510, %v9511
  %v9513 = vsel %vm9509, %v9507, 0.0
  %v9514 = vadd.f32 %v9512, %v9513
  %v9515 = vsel %vm9509, %v9508, 0.0
  %v9516 = vadd.f32 %v9514, %v9515
  %9517 = vadd.xlane.f32.xlu0 %v9516
  %v9518 = vpop.xlane.xlu0 %9517
  %v9519 = vld [vmem:[#allocation2] sm:$0x1]
  %v9521 = vlaneseq
  %v9522 = vshrl.u32 %v9521, 7
  %v9523 = vsub.s32 0, %v9522
  %v9524 = vrot.slane %v9519, %v9523
  %v9526 = vadd.f32 %v9518, %v9524
  %vm9527 = vcmask 1024
  %9528 = vst.msk [vmem:[%s5] sm:$0x3] %vm9527, %v9526
  // Predicated region
  $region22: #{tpu_custom_call.1} parent=0 // pred_check
    _
  $region23: #{tpu_custom_call.1} parent=0 // pred_check_branch
    %9530 = sbr.rel (0) target = $region25
  $region24: #{tpu_custom_call.1} parent=0 // pred_region
    _
  $region25: #{tpu_custom_call.1} parent=0 // pred_fallthru
    _
  // Predicated region
  $region26: #{tpu_custom_call.1} parent=0 // pred_check
    _
  $region27: #{tpu_custom_call.1} parent=0 // pred_check_branch
    %9532 = sbr.rel (0) target = $region29
  $region28: #{tpu_custom_call.1} parent=0 // pred_region
    _
  $region29: #{tpu_custom_call.1} parent=0 // pred_fallthru
    _

</llo_original>
